<compile_context>
chip_gen: v5e
topology: v5e:2x2
jax: 0.10.0
libtpu: 0.0.40
codegen_flags: <defaults>
</compile_context>

<pallas_src>
import functools
import math

import jax
import jax.numpy as jnp
from jax import lax
from jax.experimental import pallas as pl
from jax.experimental.pallas import tpu as pltpu

TM = 128          # RoIs per grid step (MXU row tile, multiple of 8)
OUT_PAD = 128     # lane-dense padded output width: [cls | reg | zeros]


# ----------------------------- Pallas kernels -----------------------------

def _cross_gram_kernel(x_ref, y_ref, g_ref):
    # x_ref, y_ref: (TM, C, HW) bf16 ; g_ref: (TM, C, C) bf16
    # G[n, c1, c2] = sum_hw x[n, c1, hw] * y[n, c2, hw]   (batched matmul, MXU,
    # f32 accumulation; this is the "bilinear" part of compact bilinear pooling)
    g_ref[...] = lax.dot_general(
        x_ref[...], y_ref[...],
        dimension_numbers=(((2,), (2,)), ((0,), (0,))),
        preferred_element_type=jnp.float32,
    ).astype(g_ref.dtype)


def _cbp_heads_kernel(gflat_ref, xflat_ref, sk_ref, wc_ref, wr_ref, b_ref,
                      out_ref):
    # gflat: (TM, C*C) bf16     sk:  (C*C, D) bf16  (signed count-sketch proj.)
    # xflat: (TM, C*HW) bf16    wc:  (D, OUT_PAD) bf16   (fc_cls, zero-padded)
    # wr:    (C*HW, OUT_PAD) bf16 (fc_reg, zero-padded)  b: (1, OUT_PAD) f32
    # out:   (TM, OUT_PAD) f32  — single unmasked lane-dense store.
    cbp = jnp.dot(gflat_ref[...], sk_ref[...],
                  preferred_element_type=jnp.float32)               # (TM, D)
    out = jnp.dot(cbp.astype(jnp.bfloat16), wc_ref[...],
                  preferred_element_type=jnp.float32)               # cls cols
    out = out + jnp.dot(xflat_ref[...], wr_ref[...],
                        preferred_element_type=jnp.float32)         # reg cols
    out_ref[...] = out + b_ref[...]


# ------------------------------- wrapper ----------------------------------

@functools.partial(jax.jit, static_argnames=("n_cls", "n_reg"))
def rgbn_bbox_head_forward(x, noise_stream, params, *, n_cls, n_reg):
    """Forward of RGBNBBoxHead.

    x, noise_stream: (N, C, H, W) float32/bfloat16 (NCHW).
    Returns (cls_score (N, num_classes+1), bbox_pred (N, 4*num_classes)).
    """
    N, C, H, W = x.shape
    HW = H * W
    CHW = C * HW
    D = params["sketch2d"].shape[1]

    # bf16 activations (f32 accumulation happens on the MXU).
    x_bf = x.astype(jnp.bfloat16)
    y_bf = noise_stream.astype(jnp.bfloat16)
    x_chw = x_bf.reshape(N, C, HW)
    y_chw = y_bf.reshape(N, C, HW)
    x_flat = x_bf.reshape(N, CHW)          # bbox_reg_branch = x.view(N, -1)

    # Pad RoIs up to a multiple of the row tile (padded rows are sliced off).
    n_pad = pl.cdiv(N, TM) * TM
    if n_pad != N:
        pad = n_pad - N
        x_chw = jnp.pad(x_chw, ((0, pad), (0, 0), (0, 0)))
        y_chw = jnp.pad(y_chw, ((0, pad), (0, 0), (0, 0)))
        x_flat = jnp.pad(x_flat, ((0, pad), (0, 0)))

    grid = (n_pad // TM,)
    cparams = pltpu.CompilerParams(
        dimension_semantics=("parallel",),          # shard RoI blocks across TCs
        vmem_limit_bytes=32 * 1024 * 1024,          # explicit, portable headroom
    )

    # Kernel A: per-RoI cross-Gram, tiled over RoI blocks.
    gram = pl.pallas_call(
        _cross_gram_kernel,
        out_shape=jax.ShapeDtypeStruct((n_pad, C, C), jnp.bfloat16),
        grid=grid,
        in_specs=[pl.BlockSpec((TM, C, HW), lambda i: (i, 0, 0)),
                  pl.BlockSpec((TM, C, HW), lambda i: (i, 0, 0))],
        out_specs=pl.BlockSpec((TM, C, C), lambda i: (i, 0, 0)),
        compiler_params=cparams,
    )(x_chw, y_chw)

    # Glue: torch.flatten(x_cls, start_dim=1) counterpart — contiguous reshape,
    # no data movement (see fusion TODO above).
    gram_flat = gram.reshape(n_pad, C * C)

    # Kernel B: sketch projection + fc_cls + fc_reg into one lane-dense slab.
    out = pl.pallas_call(
        _cbp_heads_kernel,
        out_shape=jax.ShapeDtypeStruct((n_pad, OUT_PAD), jnp.float32),
        grid=grid,
        in_specs=[pl.BlockSpec((TM, C * C), lambda i: (i, 0)),
                  pl.BlockSpec((TM, CHW), lambda i: (i, 0)),
                  pl.BlockSpec((C * C, D), lambda i: (0, 0)),      # resident
                  pl.BlockSpec((D, OUT_PAD), lambda i: (0, 0)),    # resident
                  pl.BlockSpec((CHW, OUT_PAD), lambda i: (0, 0)),  # resident
                  pl.BlockSpec((1, OUT_PAD), lambda i: (0, 0))],   # resident
        out_specs=pl.BlockSpec((TM, OUT_PAD), lambda i: (i, 0)),
        compiler_params=cparams,
    )(gram_flat, x_flat, params["sketch2d"], params["wc_pad"],
      params["wr_pad"], params["b_pad"])

    cls_score = out[:N, :n_cls]
    bbox_pred = out[:N, n_cls:n_cls + n_reg]
    return cls_score, bbox_pred


# ----------------------- deterministic parameter init ----------------------

def init_params(key, in_channels, roi_feat_size, num_classes, pooling_size):
    C = in_channels
    D = pooling_size
    HW = roi_feat_size * roi_feat_size
    CHW = C * HW
    n_cls = num_classes + 1
    n_reg = 4 * num_classes
    assert n_cls + n_reg <= OUT_PAD

    k_h1, k_h2, k_s1, k_s2, k_wc, k_wr, k_bc, k_br = jax.random.split(key, 8)

    # Count-sketch hash buckets and signs (fixed, non-trainable buffers).
    h1 = jax.random.randint(k_h1, (C,), 0, D)
    h2 = jax.random.randint(k_h2, (C,), 0, D)
    s1 = (jax.random.randint(k_s1, (C,), 0, 2) * 2 - 1).astype(jnp.float32)
    s2 = (jax.random.randint(k_s2, (C,), 0, 2) * 2 - 1).astype(jnp.float32)

    # Signed sparse projection matrix (C*C, D); values in {-1, 0, +1}.
    idx = (h1[:, None] + h2[None, :]) % D
    sign = s1[:, None] * s2[None, :]
    sketch2d = (sign[..., None]
                * jax.nn.one_hot(idx, D, dtype=jnp.float32)).reshape(C * C, D)

    # fc_cls: xavier_uniform weight; fc_reg: normal(0, 0.001) weight.
    bound = math.sqrt(6.0 / (D + n_cls))
    w_cls = jax.random.uniform(k_wc, (n_cls, D),
                               minval=-bound, maxval=bound, dtype=jnp.float32)
    w_reg = 0.001 * jax.random.normal(k_wr, (n_reg, CHW), jnp.float32)
    # init_weights() zeroes the biases; use small nonzero values so the bias
    # wiring through the padded output columns is actually exercised.
    b_cls = 0.01 * jax.random.normal(k_bc, (n_cls,), jnp.float32)
    b_reg = 0.01 * jax.random.normal(k_br, (n_reg,), jnp.float32)

    # Round the trainable weights to bf16 once so kernel (bf16 MXU inputs) and
    # f32 reference use identical effective parameters.
    w_cls = w_cls.astype(jnp.bfloat16).astype(jnp.float32)
    w_reg = w_reg.astype(jnp.bfloat16).astype(jnp.float32)

    # Zero-padded, lane-dense combined head weights / bias (cls cols then reg).
    wc_pad = jnp.zeros((D, OUT_PAD), jnp.float32).at[:, :n_cls].set(w_cls.T)
    wr_pad = jnp.zeros((CHW, OUT_PAD), jnp.float32)
    wr_pad = wr_pad.at[:, n_cls:n_cls + n_reg].set(w_reg.T)
    b_pad = jnp.zeros((1, OUT_PAD), jnp.float32)
    b_pad = b_pad.at[0, :n_cls].set(b_cls).at[0, n_cls:n_cls + n_reg].set(b_reg)

    params = dict(
        sketch2d=sketch2d.astype(jnp.bfloat16),   # {-1,0,+1}: exact in bf16
        wc_pad=wc_pad.astype(jnp.bfloat16),
        wr_pad=wr_pad.astype(jnp.bfloat16),
        b_pad=b_pad,                              # bias added in f32
    )
    buffers = dict(h1=h1, h2=h2, s1=s1, s2=s2,
                   w_cls=w_cls, w_reg=w_reg, b_cls=b_cls, b_reg=b_reg)
    return params, buffers, n_cls, n_reg


# --------------------- plain-JAX FFT reference (check) ---------------------

def reference_forward(x, noise, buffers, D):
    """FFT-based CompactBilinearPooling reference (tensor-sketch convention)."""
    N, C, H, W = x.shape
    h1, h2, s1, s2 = buffers["h1"], buffers["h2"], buffers["s1"], buffers["s2"]
    S1 = s1[:, None] * jax.nn.one_hot(h1, D, dtype=jnp.float32)   # (C, D)
    S2 = s2[:, None] * jax.nn.one_hot(h2, D, dtype=jnp.float32)
    xf = jnp.transpose(x, (0, 2, 3, 1)).reshape(-1, C)
    yf = jnp.transpose(noise, (0, 2, 3, 1)).reshape(-1, C)
    cs1 = xf @ S1
    cs2 = yf @ S2
    f1 = jnp.fft.fft(cs1.astype(jnp.complex64), axis=-1)
    f2 = jnp.fft.fft(cs2.astype(jnp.complex64), axis=-1)
    cbp = jnp.real(jnp.fft.ifft(f1 * f2, axis=-1))                # circular conv
    cbp = cbp.reshape(N, H * W, D).sum(axis=1)                    # sum_pool
    cls = cbp @ buffers["w_cls"].T + buffers["b_cls"]
    reg = x.reshape(N, -1) @ buffers["w_reg"].T + buffers["b_reg"]
    return cls, reg


# ---------------------------------- main -----------------------------------

if __name__ == "__main__":
    # Synthetic config consistent with the module (scaled-down channels / D,
    # but with a realistic RoI batch so the MXU row dimension is filled).
    N = 256             # number of RoIs fed per call
    C = 16              # in_channels
    ROI = 8             # roi_feat_size -> H = W = 8
    NUM_CLASSES = 10    # -> cls out = 11, reg out = 40
    POOLING = 256       # pooling_size (compact bilinear pooling output_dim)

    key = jax.random.PRNGKey(0)
    k_param, k_x, k_n = jax.random.split(key, 3)

    params, buffers, n_cls, n_reg = init_params(
        k_param, C, ROI, NUM_CLASSES, POOLING)

    x = jax.random.normal(k_x, (N, C, ROI, ROI), jnp.float32)
    noise_stream = jax.random.normal(k_n, (N, C, ROI, ROI), jnp.float32)
    # The kernels consume bf16 activations; compare against the same rounding.
    x_q = x.astype(jnp.bfloat16).astype(jnp.float32)
    n_q = noise_stream.astype(jnp.bfloat16).astype(jnp.float32)

    cls_score, bbox_pred = rgbn_bbox_head_forward(
        x_q, n_q, params, n_cls=n_cls, n_reg=n_reg)
    cls_score = jax.block_until_ready(cls_score)
    bbox_pred = jax.block_until_ready(bbox_pred)

    # Validate against the FFT-based CompactBilinearPooling reference.
    ref_cls, ref_reg = reference_forward(x_q, n_q, buffers, POOLING)
    assert cls_score.shape == (N, NUM_CLASSES + 1)
    assert bbox_pred.shape == (N, 4 * NUM_CLASSES)
    assert jnp.allclose(cls_score, ref_cls, rtol=5e-2, atol=3e-1), (
        "cls mismatch, max abs diff "
        f"{float(jnp.max(jnp.abs(cls_score - ref_cls)))}")
    assert jnp.allclose(bbox_pred, ref_reg, rtol=1e-2, atol=1e-3), (
        "reg mismatch, max abs diff "
        f"{float(jnp.max(jnp.abs(bbox_pred - ref_reg)))}")

    print("KERNEL_OK")
</pallas_src>

<mosaic_0001>
module attributes {stable_mosaic.version = 11 : i64} {
  func.func @_cross_gram_kernel(%arg0: i32, %arg1: memref<128x16x64xbf16, #tpu.memory_space<vmem>>, %arg2: memref<128x16x64xbf16, #tpu.memory_space<vmem>>, %arg3: memref<128x16x16xbf16, #tpu.memory_space<vmem>>) attributes {dimension_semantics = [#tpu.dimension_semantics<parallel>], iteration_bounds = array<i64: 2>, scalar_prefetch = 0 : i64, scratch_operands = 0 : i64, tpu.core_type = #tpu.core_type<tc>, window_params = [{transform_indices = @transform_0, window_bounds = array<i64: 128, 16, 64>}, {transform_indices = @transform_1, window_bounds = array<i64: 128, 16, 64>}, {transform_indices = @transform_2, window_bounds = array<i64: 128, 16, 16>}]} {
    %c0 = arith.constant 0 : index
    %c0_0 = arith.constant 0 : index
    %c0_1 = arith.constant 0 : index
    %0 = vector.load %arg1[%c0, %c0_0, %c0_1] : memref<128x16x64xbf16, #tpu.memory_space<vmem>>, vector<128x16x64xbf16>
    %c0_2 = arith.constant 0 : index
    %c0_3 = arith.constant 0 : index
    %c0_4 = arith.constant 0 : index
    %1 = vector.load %arg2[%c0_2, %c0_3, %c0_4] : memref<128x16x64xbf16, #tpu.memory_space<vmem>>, vector<128x16x64xbf16>
    %cst = arith.constant dense<0.000000e+00> : vector<128x16x16xf32>
    %2 = tpu.matmul %0, %1, %cst {dimension_numbers = #tpu.dot_dimension_numbers<[2], [2], [1], [1], [0, 0, 0, 1, 1, 1], [0], [0]>} : vector<128x16x64xbf16>, vector<128x16x64xbf16>, vector<128x16x16xf32> -> vector<128x16x16xf32>
    %3 = arith.truncf %2 : vector<128x16x16xf32> to vector<128x16x16xbf16>
    %c0_5 = arith.constant 0 : index
    %c0_6 = arith.constant 0 : index
    %c0_7 = arith.constant 0 : index
    %4 = vector.load %arg3[%c0_5, %c0_6, %c0_7] : memref<128x16x16xbf16, #tpu.memory_space<vmem>>, vector<128x16x16xbf16>
    tpu.vector_store %arg3[%c0_5, %c0_6, %c0_7], %3 {strides = array<i32>} : memref<128x16x16xbf16, #tpu.memory_space<vmem>>, vector<128x16x16xbf16>,
    return
  }
  func.func @transform_0(%arg0: i32) -> (i32, i32, i32) {
    %c0_i32 = arith.constant 0 : i32
    %c0_i32_0 = arith.constant 0 : i32
    %c0_i32_1 = arith.constant 0 : i32
    return %arg0, %c0_i32, %c0_i32_0 : i32, i32, i32
  }
  func.func @transform_1(%arg0: i32) -> (i32, i32, i32) {
    %c0_i32 = arith.constant 0 : i32
    %c0_i32_0 = arith.constant 0 : i32
    %c0_i32_1 = arith.constant 0 : i32
    return %arg0, %c0_i32, %c0_i32_0 : i32, i32, i32
  }
  func.func @transform_2(%arg0: i32) -> (i32, i32, i32) {
    %c0_i32 = arith.constant 0 : i32
    %c0_i32_0 = arith.constant 0 : i32
    %c0_i32_1 = arith.constant 0 : i32
    return %arg0, %c0_i32, %c0_i32_0 : i32, i32, i32
  }
}

module attributes {stable_mosaic.version = 11 : i64} {
  func.func @_cbp_heads_kernel(%arg0: i32, %arg1: memref<128x256xbf16, #tpu.memory_space<vmem>>, %arg2: memref<128x1024xbf16, #tpu.memory_space<vmem>>, %arg3: memref<256x256xbf16, #tpu.memory_space<vmem>>, %arg4: memref<256x128xbf16, #tpu.memory_space<vmem>>, %arg5: memref<1024x128xbf16, #tpu.memory_space<vmem>>, %arg6: memref<1x128xf32, #tpu.memory_space<vmem>>, %arg7: memref<128x128xf32, #tpu.memory_space<vmem>>) attributes {dimension_semantics = [#tpu.dimension_semantics<parallel>], iteration_bounds = array<i64: 2>, scalar_prefetch = 0 : i64, scratch_operands = 0 : i64, tpu.core_type = #tpu.core_type<tc>, window_params = [{transform_indices = @transform_0, window_bounds = array<i64: 128, 256>}, {transform_indices = @transform_1, window_bounds = array<i64: 128, 1024>}, {pipeline_mode = #tpu.pipeline_mode<synchronous>, transform_indices = @transform_2, window_bounds = array<i64: 256, 256>}, {pipeline_mode = #tpu.pipeline_mode<synchronous>, transform_indices = @transform_3, window_bounds = array<i64: 256, 128>}, {pipeline_mode = #tpu.pipeline_mode<synchronous>, transform_indices = @transform_4, window_bounds = array<i64: 1024, 128>}, {pipeline_mode = #tpu.pipeline_mode<synchronous>, transform_indices = @transform_5, window_bounds = array<i64: 1, 128>}, {transform_indices = @transform_6, window_bounds = array<i64: 128, 128>}]} {
    %c0 = arith.constant 0 : index
    %c0_0 = arith.constant 0 : index
    %0 = vector.load %arg1[%c0, %c0_0] : memref<128x256xbf16, #tpu.memory_space<vmem>>, vector<128x256xbf16>
    %c0_1 = arith.constant 0 : index
    %c0_2 = arith.constant 0 : index
    %1 = vector.load %arg3[%c0_1, %c0_2] : memref<256x256xbf16, #tpu.memory_space<vmem>>, vector<256x256xbf16>
    %cst = arith.constant dense<0.000000e+00> : vector<128x256xf32>
    %2 = tpu.matmul %0, %1, %cst {dimension_numbers = #tpu.dot_dimension_numbers<[1], [0], [0], [1], [0, 0, 1, 1], [], []>} : vector<128x256xbf16>, vector<256x256xbf16>, vector<128x256xf32> -> vector<128x256xf32>
    %3 = arith.truncf %2 : vector<128x256xf32> to vector<128x256xbf16>
    %c0_3 = arith.constant 0 : index
    %c0_4 = arith.constant 0 : index
    %4 = vector.load %arg4[%c0_3, %c0_4] : memref<256x128xbf16, #tpu.memory_space<vmem>>, vector<256x128xbf16>
    %cst_5 = arith.constant dense<0.000000e+00> : vector<128x128xf32>
    %5 = tpu.matmul %3, %4, %cst_5 {dimension_numbers = #tpu.dot_dimension_numbers<[1], [0], [0], [1], [0, 0, 1, 1], [], []>} : vector<128x256xbf16>, vector<256x128xbf16>, vector<128x128xf32> -> vector<128x128xf32>
    %c0_6 = arith.constant 0 : index
    %c0_7 = arith.constant 0 : index
    %6 = vector.load %arg2[%c0_6, %c0_7] : memref<128x1024xbf16, #tpu.memory_space<vmem>>, vector<128x1024xbf16>
    %c0_8 = arith.constant 0 : index
    %c0_9 = arith.constant 0 : index
    %7 = vector.load %arg5[%c0_8, %c0_9] : memref<1024x128xbf16, #tpu.memory_space<vmem>>, vector<1024x128xbf16>
    %cst_10 = arith.constant dense<0.000000e+00> : vector<128x128xf32>
    %8 = tpu.matmul %6, %7, %cst_10 {dimension_numbers = #tpu.dot_dimension_numbers<[1], [0], [0], [1], [0, 0, 1, 1], [], []>} : vector<128x1024xbf16>, vector<1024x128xbf16>, vector<128x128xf32> -> vector<128x128xf32>
    %9 = arith.addf %5, %8 : vector<128x128xf32>
    %c0_11 = arith.constant 0 : index
    %c0_12 = arith.constant 0 : index
    %10 = vector.load %arg6[%c0_11, %c0_12] : memref<1x128xf32, #tpu.memory_space<vmem>>, vector<1x128xf32>
    %11 = vector.broadcast %10 : vector<1x128xf32> to vector<128x128xf32>
    %12 = arith.addf %9, %11 : vector<128x128xf32>
    %c0_13 = arith.constant 0 : index
    %c0_14 = arith.constant 0 : index
    %13 = vector.load %arg7[%c0_13, %c0_14] : memref<128x128xf32, #tpu.memory_space<vmem>>, vector<128x128xf32>
    tpu.vector_store %arg7[%c0_13, %c0_14], %12 {strides = array<i32>} : memref<128x128xf32, #tpu.memory_space<vmem>>, vector<128x128xf32>,
    return
  }
  func.func @transform_0(%arg0: i32) -> (i32, i32) {
    %c0_i32 = arith.constant 0 : i32
    %c0_i32_0 = arith.constant 0 : i32
    return %arg0, %c0_i32 : i32, i32
  }
  func.func @transform_1(%arg0: i32) -> (i32, i32) {
    %c0_i32 = arith.constant 0 : i32
    %c0_i32_0 = arith.constant 0 : i32
    return %arg0, %c0_i32 : i32, i32
  }
  func.func @transform_2(%arg0: i32) -> (i32, i32) {
    %c0_i32 = arith.constant 0 : i32
    %c0_i32_0 = arith.constant 0 : i32
    %c0_i32_1 = arith.constant 0 : i32
    return %c0_i32, %c0_i32_0 : i32, i32
  }
  func.func @transform_3(%arg0: i32) -> (i32, i32) {
    %c0_i32 = arith.constant 0 : i32
    %c0_i32_0 = arith.constant 0 : i32
    %c0_i32_1 = arith.constant 0 : i32
    return %c0_i32, %c0_i32_0 : i32, i32
  }
  func.func @transform_4(%arg0: i32) -> (i32, i32) {
    %c0_i32 = arith.constant 0 : i32
    %c0_i32_0 = arith.constant 0 : i32
    %c0_i32_1 = arith.constant 0 : i32
    return %c0_i32, %c0_i32_0 : i32, i32
  }
  func.func @transform_5(%arg0: i32) -> (i32, i32) {
    %c0_i32 = arith.constant 0 : i32
    %c0_i32_0 = arith.constant 0 : i32
    %c0_i32_1 = arith.constant 0 : i32
    return %c0_i32, %c0_i32_0 : i32, i32
  }
  func.func @transform_6(%arg0: i32) -> (i32, i32) {
    %c0_i32 = arith.constant 0 : i32
    %c0_i32_0 = arith.constant 0 : i32
    return %arg0, %c0_i32 : i32, i32
  }
}

</mosaic_0001>

<llo_original>
// kernel: rgbn_bbox_head_forward.2
$region0: #{rgbn_bbox_head_forward.2}
  #allocation0 [shape = 'u32[]', space=smem, size = 0x4, offset = 0x4, fixed_abs, tag = 'smem constant byte address 0x4 - core index']
  #allocation1 [shape = 'u32[72,128]{1,0:T(1,128)}', space=vmem, size = 0x9000, scoped, tag = 'internal scratch']
  %s0 = inlined_call_operand.vmem [shape: bf16[256,16,64], index: 0, kind: input, shape index: {}]
  %s1 = inlined_call_operand.vmem [shape: bf16[256,16,64], index: 1, kind: input, shape index: {}]
  %s2 = inlined_call_operand.vmem [shape: bf16[256,16,16], index: 2, kind: output, shape index: {}]
  %s3 = sld [smem:[#allocation0]]
  $region41: #{rgbn_bbox_head_forward.2} parent=0
    _
  %s5 = ssub.s32 1, %s3
  %s6 = scalar_select 0, %s5, %s3
  loop: start=0, step=1, limit=4
  $region2: #{rgbn_bbox_head_forward.2} parent=0 // loop_pre_header
    _
  $region3: #{rgbn_bbox_head_forward.2} parent=0 // loop_header
    %s8 = sphi 0, %s12
    %p9 = scmp.ge.s32.totalorder %s8, 4
    %s18 = sphi 0, %s20
    %s21 = sphi 0, %s18
    %s22 = sphi 0, %s21
    %s38 = sphi 0, %s22
    %s44 = sphi 0, %s46
    %s47 = sphi 0, %s44
    %s48 = sphi 0, %s47
    %s64 = sphi 0, %s48
    %s70 = sphi 0, %s72
    %s73 = sphi 0, %s70
    %s74 = sphi 0, %s73
    %s90 = sphi 0, %s74
  $region4: #{rgbn_bbox_head_forward.2} parent=0 // loop_header_branch
    %11 = sbr.rel (%p9) target = $region8
  $region5: #{rgbn_bbox_head_forward.2} parent=0 // loop_body
    %s13 = ssub.s32 %s8, 1
    %s14 = ssub.s32 %s8, 2
    %s15 = sadd.s32 %s8, 1
    %s16 = ssub.s32 %s8, %s15
    %p17 = scmp.eq.s32.totalorder %s16, 0
    %s19 = sadd.s32 %s18, 1
    %s20 = scalar_select %p17, %s18, %s19
    %p23 = pneg %p17
    %p24 = scmp.eq.s32.totalorder %s8, 1
    %p25 = por %p23, %p24
    %p26 = scmp.ne.s32.totalorder %s18, %s21
    %p27 = scmp.eq.s32.totalorder %s8, 0
    %p28 = por %p26, %p27
    %p29 = scmp.ne.s32.totalorder %s18, %s21
    %p30 = scmp.eq.s32.totalorder %s13, 1
    %p31 = por %p29, %p30
    %p32 = scmp.ne.s32.totalorder %s21, %s22
    %p33 = scmp.eq.s32.totalorder %s13, 0
    %p34 = por %p32, %p33
    %p35 = scmp.ne.s32.totalorder %s21, %s22
    %p36 = scmp.eq.s32.totalorder %s14, 1
    %p37 = por %p35, %p36
    %p39 = scmp.ne.s32.totalorder %s22, %s38
    %p40 = scmp.eq.s32.totalorder %s14, 0
    %p41 = por %p39, %p40
    %s42 = ssub.s32 %s8, %s15
    %p43 = scmp.eq.s32.totalorder %s42, 0
    %s45 = sadd.s32 %s44, 1
    %s46 = scalar_select %p43, %s44, %s45
    %p49 = pneg %p43
    %p50 = scmp.eq.s32.totalorder %s8, 1
    %p51 = por %p49, %p50
    %p52 = scmp.ne.s32.totalorder %s44, %s47
    %p53 = scmp.eq.s32.totalorder %s8, 0
    %p54 = por %p52, %p53
    %p55 = scmp.ne.s32.totalorder %s44, %s47
    %p56 = scmp.eq.s32.totalorder %s13, 1
    %p57 = por %p55, %p56
    %p58 = scmp.ne.s32.totalorder %s47, %s48
    %p59 = scmp.eq.s32.totalorder %s13, 0
    %p60 = por %p58, %p59
    %p61 = scmp.ne.s32.totalorder %s47, %s48
    %p62 = scmp.eq.s32.totalorder %s14, 1
    %p63 = por %p61, %p62
    %p65 = scmp.ne.s32.totalorder %s48, %s64
    %p66 = scmp.eq.s32.totalorder %s14, 0
    %p67 = por %p65, %p66
    %s68 = ssub.s32 %s8, %s15
    %p69 = scmp.eq.s32.totalorder %s68, 0
    %s71 = sadd.s32 %s70, 1
    %s72 = scalar_select %p69, %s70, %s71
    %p75 = pneg %p69
    %p76 = scmp.eq.s32.totalorder %s8, 1
    %p77 = por %p75, %p76
    %p78 = scmp.ne.s32.totalorder %s70, %s73
    %p79 = scmp.eq.s32.totalorder %s8, 0
    %p80 = por %p78, %p79
    %p81 = scmp.ne.s32.totalorder %s70, %s73
    %p82 = scmp.eq.s32.totalorder %s13, 1
    %p83 = por %p81, %p82
    %p84 = scmp.ne.s32.totalorder %s73, %s74
    %p85 = scmp.eq.s32.totalorder %s13, 0
    %p86 = por %p84, %p85
    %p87 = scmp.ne.s32.totalorder %s73, %s74
    %p88 = scmp.eq.s32.totalorder %s14, 1
    %p89 = por %p87, %p88
    %p91 = scmp.ne.s32.totalorder %s74, %s90
    %p92 = scmp.eq.s32.totalorder %s14, 0
    %p93 = por %p91, %p92
    %p94 = scmp.le.s32.totalorder 1, %s8
    %p95 = scmp.lt.s32.totalorder %s8, 3
    %p96 = pnand %p94, %p95
    %p97 = pneg %p96
    // Predicated region
    $region9: #{rgbn_bbox_head_forward.2} parent=5 // pred_check
      _
    $region10: #{rgbn_bbox_head_forward.2} parent=5 // pred_check_branch
      %99 = sbr.rel (%p96) target = $region12
    $region11: #{rgbn_bbox_head_forward.2} parent=5 // pred_region
      %s100 = ssub.s32 %s8, 1
    $region12: #{rgbn_bbox_head_forward.2} parent=5 // pred_fallthru
      _
    %p101 = scmp.lt.s32.totalorder %s8, 2
    // Predicated region
    $region13: #{rgbn_bbox_head_forward.2} parent=5 // pred_check
      %p102 = pneg %p101
    $region14: #{rgbn_bbox_head_forward.2} parent=5 // pred_check_branch
      %104 = sbr.rel (%p102) target = $region16
    $region15: #{rgbn_bbox_head_forward.2} parent=5 // pred_region
      // Predicated region
      $region17: #{rgbn_bbox_head_forward.2} parent=15 // pred_check
        %p105 = pneg %p28
      $region18: #{rgbn_bbox_head_forward.2} parent=15 // pred_check_branch
        %107 = sbr.rel (%p105) target = $region20
      $region19: #{rgbn_bbox_head_forward.2} parent=15 // pred_region
        %s108 = smul.u32 128, %s8
        %p109 = scmp.lt.s32.totalorder %s108, 255
        %s110 = scalar_select %p109, %s108, 255
        %s111 = smul.addr %s110, 2
        %s112 = smul.addr %s111, 4
        %s113 = scalar_lea.vmem %s0, %s112
        %s114 = smul.u32 128, %s8
      $region20: #{rgbn_bbox_head_forward.2} parent=15 // pred_fallthru
        _
      // Predicated region
      $region21: #{rgbn_bbox_head_forward.2} parent=15 // pred_check
        %p115 = pneg %p54
      $region22: #{rgbn_bbox_head_forward.2} parent=15 // pred_check_branch
        %117 = sbr.rel (%p115) target = $region24
      $region23: #{rgbn_bbox_head_forward.2} parent=15 // pred_region
        %s118 = smul.u32 128, %s8
        %p119 = scmp.lt.s32.totalorder %s118, 255
        %s120 = scalar_select %p119, %s118, 255
        %s121 = smul.addr %s120, 2
        %s122 = smul.addr %s121, 4
        %s123 = scalar_lea.vmem %s1, %s122
        %s124 = smul.u32 128, %s8
      $region24: #{rgbn_bbox_head_forward.2} parent=15 // pred_fallthru
        _
    $region16: #{rgbn_bbox_head_forward.2} parent=5 // pred_fallthru
      _
    %p125 = scmp.le.s32.totalorder 1, %s8
    %p126 = scmp.lt.s32.totalorder %s8, 3
    %p127 = pnand %p125, %p126
    %p128 = pneg %p127
    // Predicated region
    $region25: #{rgbn_bbox_head_forward.2} parent=5 // pred_check
      _
    $region26: #{rgbn_bbox_head_forward.2} parent=5 // pred_check_branch
      %130 = sbr.rel (%p127) target = $region28
    $region27: #{rgbn_bbox_head_forward.2} parent=5 // pred_region
      %s131 = ssub.s32 %s8, 1
      %s132 = smul.u32 128, %s13
      %p133 = scmp.lt.s32.totalorder %s132, 255
      %s134 = scalar_select %p133, %s132, 255
      %s135 = smul.addr %s134, 2
      %s136 = smul.addr %s135, 4
      %s137 = scalar_lea.vmem %s0, %s136
      %p138 = pneg %p34
      %p139 = pneg %p31
      %s140 = smul.u32 128, %s13
      %p141 = scmp.lt.s32.totalorder %s140, 255
      %s142 = scalar_select %p141, %s140, 255
      %s143 = smul.addr %s142, 2
      %s144 = smul.addr %s143, 4
      %s145 = scalar_lea.vmem %s1, %s144
      %p146 = pneg %p60
      %p147 = pneg %p57
      %p148 = pneg %p86
      %p149 = pneg %p83
      %s150 = smul.u32 128, %s13
      %p151 = scmp.lt.s32.totalorder %s150, 255
      %s152 = scalar_select %p151, %s150, 255
      %s153 = smul.addr %s152, 2
      %s154 = smul.addr %s153, 4
      %s155 = scalar_lea.vmem %s2, %s154
      %s156 = smul.u32 128, %s13
      %p157 = scmp.lt.s32.totalorder %s156, 255
      %s158 = scalar_select %p157, %s156, 255
      %s159 = smul.addr %s158, 2
      %s160 = smul.addr %s159, 4
      %s161 = scalar_lea.vmem %s0, %s160
      %s162 = smul.u32 128, %s13
      %s163 = smul.u32 128, %s13
      %p164 = scmp.lt.s32.totalorder %s163, 255
      %s165 = scalar_select %p164, %s163, 255
      %s166 = smul.addr %s165, 2
      %s167 = smul.addr %s166, 4
      %s168 = scalar_lea.vmem %s1, %s167
      %s169 = smul.u32 128, %s13
      %s170 = smul.u32 128, %s13
      %p171 = scmp.lt.s32.totalorder %s170, 255
      %s172 = scalar_select %p171, %s170, 255
      %s173 = smul.addr %s172, 2
      %s174 = smul.addr %s173, 4
      %s175 = scalar_lea.vmem %s2, %s174
      %s176 = smul.u32 128, %s13
      %v178 = vld [vmem:[%s161] sm:$0xf]
      %v179 = vld [vmem:[%s161 + $0x4] sm:$0xf]
      %v180 = vld [vmem:[%s161 + $0x8] sm:$0xf]
      %v181 = vld [vmem:[%s161 + $0xc] sm:$0xf]
      %v182 = vld [vmem:[%s161 + $0x10] sm:$0xf]
      %v183 = vld [vmem:[%s161 + $0x14] sm:$0xf]
      %v184 = vld [vmem:[%s161 + $0x18] sm:$0xf]
      %v185 = vld [vmem:[%s161 + $0x1c] sm:$0xf]
      %v186 = vld [vmem:[%s161 + $0x20] sm:$0xf]
      %v187 = vld [vmem:[%s161 + $0x24] sm:$0xf]
      %v188 = vld [vmem:[%s161 + $0x28] sm:$0xf]
      %v189 = vld [vmem:[%s161 + $0x2c] sm:$0xf]
      %v190 = vld [vmem:[%s161 + $0x30] sm:$0xf]
      %v191 = vld [vmem:[%s161 + $0x34] sm:$0xf]
      %v192 = vld [vmem:[%s161 + $0x38] sm:$0xf]
      %v193 = vld [vmem:[%s161 + $0x3c] sm:$0xf]
      %v194 = vld [vmem:[%s161 + $0x40] sm:$0xf]
      %v195 = vld [vmem:[%s161 + $0x44] sm:$0xf]
      %v196 = vld [vmem:[%s161 + $0x48] sm:$0xf]
      %v197 = vld [vmem:[%s161 + $0x4c] sm:$0xf]
      %v198 = vld [vmem:[%s161 + $0x50] sm:$0xf]
      %v199 = vld [vmem:[%s161 + $0x54] sm:$0xf]
      %v200 = vld [vmem:[%s161 + $0x58] sm:$0xf]
      %v201 = vld [vmem:[%s161 + $0x5c] sm:$0xf]
      %v202 = vld [vmem:[%s161 + $0x60] sm:$0xf]
      %v203 = vld [vmem:[%s161 + $0x64] sm:$0xf]
      %v204 = vld [vmem:[%s161 + $0x68] sm:$0xf]
      %v205 = vld [vmem:[%s161 + $0x6c] sm:$0xf]
      %v206 = vld [vmem:[%s161 + $0x70] sm:$0xf]
      %v207 = vld [vmem:[%s161 + $0x74] sm:$0xf]
      %v208 = vld [vmem:[%s161 + $0x78] sm:$0xf]
      %v209 = vld [vmem:[%s161 + $0x7c] sm:$0xf]
      %v210 = vld [vmem:[%s161 + $0x80] sm:$0xf]
      %v211 = vld [vmem:[%s161 + $0x84] sm:$0xf]
      %v212 = vld [vmem:[%s161 + $0x88] sm:$0xf]
      %v213 = vld [vmem:[%s161 + $0x8c] sm:$0xf]
      %v214 = vld [vmem:[%s161 + $0x90] sm:$0xf]
      %v215 = vld [vmem:[%s161 + $0x94] sm:$0xf]
      %v216 = vld [vmem:[%s161 + $0x98] sm:$0xf]
      %v217 = vld [vmem:[%s161 + $0x9c] sm:$0xf]
      %v218 = vld [vmem:[%s161 + $0xa0] sm:$0xf]
      %v219 = vld [vmem:[%s161 + $0xa4] sm:$0xf]
      %v220 = vld [vmem:[%s161 + $0xa8] sm:$0xf]
      %v221 = vld [vmem:[%s161 + $0xac] sm:$0xf]
      %v222 = vld [vmem:[%s161 + $0xb0] sm:$0xf]
      %v223 = vld [vmem:[%s161 + $0xb4] sm:$0xf]
      %v224 = vld [vmem:[%s161 + $0xb8] sm:$0xf]
      %v225 = vld [vmem:[%s161 + $0xbc] sm:$0xf]
      %v226 = vld [vmem:[%s161 + $0xc0] sm:$0xf]
      %v227 = vld [vmem:[%s161 + $0xc4] sm:$0xf]
      %v228 = vld [vmem:[%s161 + $0xc8] sm:$0xf]
      %v229 = vld [vmem:[%s161 + $0xcc] sm:$0xf]
      %v230 = vld [vmem:[%s161 + $0xd0] sm:$0xf]
      %v231 = vld [vmem:[%s161 + $0xd4] sm:$0xf]
      %v232 = vld [vmem:[%s161 + $0xd8] sm:$0xf]
      %v233 = vld [vmem:[%s161 + $0xdc] sm:$0xf]
      %v234 = vld [vmem:[%s161 + $0xe0] sm:$0xf]
      %v235 = vld [vmem:[%s161 + $0xe4] sm:$0xf]
      %v236 = vld [vmem:[%s161 + $0xe8] sm:$0xf]
      %v237 = vld [vmem:[%s161 + $0xec] sm:$0xf]
      %v238 = vld [vmem:[%s161 + $0xf0] sm:$0xf]
      %v239 = vld [vmem:[%s161 + $0xf4] sm:$0xf]
      %v240 = vld [vmem:[%s161 + $0xf8] sm:$0xf]
      %v241 = vld [vmem:[%s161 + $0xfc] sm:$0xf]
      %v242 = vld [vmem:[%s161 + $0x100] sm:$0xf]
      %v243 = vld [vmem:[%s161 + $0x104] sm:$0xf]
      %v244 = vld [vmem:[%s161 + $0x108] sm:$0xf]
      %v245 = vld [vmem:[%s161 + $0x10c] sm:$0xf]
      %v246 = vld [vmem:[%s161 + $0x110] sm:$0xf]
      %v247 = vld [vmem:[%s161 + $0x114] sm:$0xf]
      %v248 = vld [vmem:[%s161 + $0x118] sm:$0xf]
      %v249 = vld [vmem:[%s161 + $0x11c] sm:$0xf]
      %v250 = vld [vmem:[%s161 + $0x120] sm:$0xf]
      %v251 = vld [vmem:[%s161 + $0x124] sm:$0xf]
      %v252 = vld [vmem:[%s161 + $0x128] sm:$0xf]
      %v253 = vld [vmem:[%s161 + $0x12c] sm:$0xf]
      %v254 = vld [vmem:[%s161 + $0x130] sm:$0xf]
      %v255 = vld [vmem:[%s161 + $0x134] sm:$0xf]
      %v256 = vld [vmem:[%s161 + $0x138] sm:$0xf]
      %v257 = vld [vmem:[%s161 + $0x13c] sm:$0xf]
      %v258 = vld [vmem:[%s161 + $0x140] sm:$0xf]
      %v259 = vld [vmem:[%s161 + $0x144] sm:$0xf]
      %v260 = vld [vmem:[%s161 + $0x148] sm:$0xf]
      %v261 = vld [vmem:[%s161 + $0x14c] sm:$0xf]
      %v262 = vld [vmem:[%s161 + $0x150] sm:$0xf]
      %v263 = vld [vmem:[%s161 + $0x154] sm:$0xf]
      %v264 = vld [vmem:[%s161 + $0x158] sm:$0xf]
      %v265 = vld [vmem:[%s161 + $0x15c] sm:$0xf]
      %v266 = vld [vmem:[%s161 + $0x160] sm:$0xf]
      %v267 = vld [vmem:[%s161 + $0x164] sm:$0xf]
      %v268 = vld [vmem:[%s161 + $0x168] sm:$0xf]
      %v269 = vld [vmem:[%s161 + $0x16c] sm:$0xf]
      %v270 = vld [vmem:[%s161 + $0x170] sm:$0xf]
      %v271 = vld [vmem:[%s161 + $0x174] sm:$0xf]
      %v272 = vld [vmem:[%s161 + $0x178] sm:$0xf]
      %v273 = vld [vmem:[%s161 + $0x17c] sm:$0xf]
      %v274 = vld [vmem:[%s161 + $0x180] sm:$0xf]
      %v275 = vld [vmem:[%s161 + $0x184] sm:$0xf]
      %v276 = vld [vmem:[%s161 + $0x188] sm:$0xf]
      %v277 = vld [vmem:[%s161 + $0x18c] sm:$0xf]
      %v278 = vld [vmem:[%s161 + $0x190] sm:$0xf]
      %v279 = vld [vmem:[%s161 + $0x194] sm:$0xf]
      %v280 = vld [vmem:[%s161 + $0x198] sm:$0xf]
      %v281 = vld [vmem:[%s161 + $0x19c] sm:$0xf]
      %v282 = vld [vmem:[%s161 + $0x1a0] sm:$0xf]
      %v283 = vld [vmem:[%s161 + $0x1a4] sm:$0xf]
      %v284 = vld [vmem:[%s161 + $0x1a8] sm:$0xf]
      %v285 = vld [vmem:[%s161 + $0x1ac] sm:$0xf]
      %v286 = vld [vmem:[%s161 + $0x1b0] sm:$0xf]
      %v287 = vld [vmem:[%s161 + $0x1b4] sm:$0xf]
      %v288 = vld [vmem:[%s161 + $0x1b8] sm:$0xf]
      %v289 = vld [vmem:[%s161 + $0x1bc] sm:$0xf]
      %v290 = vld [vmem:[%s161 + $0x1c0] sm:$0xf]
      %v291 = vld [vmem:[%s161 + $0x1c4] sm:$0xf]
      %v292 = vld [vmem:[%s161 + $0x1c8] sm:$0xf]
      %v293 = vld [vmem:[%s161 + $0x1cc] sm:$0xf]
      %v294 = vld [vmem:[%s161 + $0x1d0] sm:$0xf]
      %v295 = vld [vmem:[%s161 + $0x1d4] sm:$0xf]
      %v296 = vld [vmem:[%s161 + $0x1d8] sm:$0xf]
      %v297 = vld [vmem:[%s161 + $0x1dc] sm:$0xf]
      %v298 = vld [vmem:[%s161 + $0x1e0] sm:$0xf]
      %v299 = vld [vmem:[%s161 + $0x1e4] sm:$0xf]
      %v300 = vld [vmem:[%s161 + $0x1e8] sm:$0xf]
      %v301 = vld [vmem:[%s161 + $0x1ec] sm:$0xf]
      %v302 = vld [vmem:[%s161 + $0x1f0] sm:$0xf]
      %v303 = vld [vmem:[%s161 + $0x1f4] sm:$0xf]
      %v304 = vld [vmem:[%s161 + $0x1f8] sm:$0xf]
      %v305 = vld [vmem:[%s161 + $0x1fc] sm:$0xf]
      %v306 = vld [vmem:[%s161 + $0x200] sm:$0xf]
      %v307 = vld [vmem:[%s161 + $0x204] sm:$0xf]
      %v308 = vld [vmem:[%s161 + $0x208] sm:$0xf]
      %v309 = vld [vmem:[%s161 + $0x20c] sm:$0xf]
      %v310 = vld [vmem:[%s161 + $0x210] sm:$0xf]
      %v311 = vld [vmem:[%s161 + $0x214] sm:$0xf]
      %v312 = vld [vmem:[%s161 + $0x218] sm:$0xf]
      %v313 = vld [vmem:[%s161 + $0x21c] sm:$0xf]
      %v314 = vld [vmem:[%s161 + $0x220] sm:$0xf]
      %v315 = vld [vmem:[%s161 + $0x224] sm:$0xf]
      %v316 = vld [vmem:[%s161 + $0x228] sm:$0xf]
      %v317 = vld [vmem:[%s161 + $0x22c] sm:$0xf]
      %v318 = vld [vmem:[%s161 + $0x230] sm:$0xf]
      %v319 = vld [vmem:[%s161 + $0x234] sm:$0xf]
      %v320 = vld [vmem:[%s161 + $0x238] sm:$0xf]
      %v321 = vld [vmem:[%s161 + $0x23c] sm:$0xf]
      %v322 = vld [vmem:[%s161 + $0x240] sm:$0xf]
      %v323 = vld [vmem:[%s161 + $0x244] sm:$0xf]
      %v324 = vld [vmem:[%s161 + $0x248] sm:$0xf]
      %v325 = vld [vmem:[%s161 + $0x24c] sm:$0xf]
      %v326 = vld [vmem:[%s161 + $0x250] sm:$0xf]
      %v327 = vld [vmem:[%s161 + $0x254] sm:$0xf]
      %v328 = vld [vmem:[%s161 + $0x258] sm:$0xf]
      %v329 = vld [vmem:[%s161 + $0x25c] sm:$0xf]
      %v330 = vld [vmem:[%s161 + $0x260] sm:$0xf]
      %v331 = vld [vmem:[%s161 + $0x264] sm:$0xf]
      %v332 = vld [vmem:[%s161 + $0x268] sm:$0xf]
      %v333 = vld [vmem:[%s161 + $0x26c] sm:$0xf]
      %v334 = vld [vmem:[%s161 + $0x270] sm:$0xf]
      %v335 = vld [vmem:[%s161 + $0x274] sm:$0xf]
      %v336 = vld [vmem:[%s161 + $0x278] sm:$0xf]
      %v337 = vld [vmem:[%s161 + $0x27c] sm:$0xf]
      %v338 = vld [vmem:[%s161 + $0x280] sm:$0xf]
      %v339 = vld [vmem:[%s161 + $0x284] sm:$0xf]
      %v340 = vld [vmem:[%s161 + $0x288] sm:$0xf]
      %v341 = vld [vmem:[%s161 + $0x28c] sm:$0xf]
      %v342 = vld [vmem:[%s161 + $0x290] sm:$0xf]
      %v343 = vld [vmem:[%s161 + $0x294] sm:$0xf]
      %v344 = vld [vmem:[%s161 + $0x298] sm:$0xf]
      %v345 = vld [vmem:[%s161 + $0x29c] sm:$0xf]
      %v346 = vld [vmem:[%s161 + $0x2a0] sm:$0xf]
      %v347 = vld [vmem:[%s161 + $0x2a4] sm:$0xf]
      %v348 = vld [vmem:[%s161 + $0x2a8] sm:$0xf]
      %v349 = vld [vmem:[%s161 + $0x2ac] sm:$0xf]
      %v350 = vld [vmem:[%s161 + $0x2b0] sm:$0xf]
      %v351 = vld [vmem:[%s161 + $0x2b4] sm:$0xf]
      %v352 = vld [vmem:[%s161 + $0x2b8] sm:$0xf]
      %v353 = vld [vmem:[%s161 + $0x2bc] sm:$0xf]
      %v354 = vld [vmem:[%s161 + $0x2c0] sm:$0xf]
      %v355 = vld [vmem:[%s161 + $0x2c4] sm:$0xf]
      %v356 = vld [vmem:[%s161 + $0x2c8] sm:$0xf]
      %v357 = vld [vmem:[%s161 + $0x2cc] sm:$0xf]
      %v358 = vld [vmem:[%s161 + $0x2d0] sm:$0xf]
      %v359 = vld [vmem:[%s161 + $0x2d4] sm:$0xf]
      %v360 = vld [vmem:[%s161 + $0x2d8] sm:$0xf]
      %v361 = vld [vmem:[%s161 + $0x2dc] sm:$0xf]
      %v362 = vld [vmem:[%s161 + $0x2e0] sm:$0xf]
      %v363 = vld [vmem:[%s161 + $0x2e4] sm:$0xf]
      %v364 = vld [vmem:[%s161 + $0x2e8] sm:$0xf]
      %v365 = vld [vmem:[%s161 + $0x2ec] sm:$0xf]
      %v366 = vld [vmem:[%s161 + $0x2f0] sm:$0xf]
      %v367 = vld [vmem:[%s161 + $0x2f4] sm:$0xf]
      %v368 = vld [vmem:[%s161 + $0x2f8] sm:$0xf]
      %v369 = vld [vmem:[%s161 + $0x2fc] sm:$0xf]
      %v370 = vld [vmem:[%s161 + $0x300] sm:$0xf]
      %v371 = vld [vmem:[%s161 + $0x304] sm:$0xf]
      %v372 = vld [vmem:[%s161 + $0x308] sm:$0xf]
      %v373 = vld [vmem:[%s161 + $0x30c] sm:$0xf]
      %v374 = vld [vmem:[%s161 + $0x310] sm:$0xf]
      %v375 = vld [vmem:[%s161 + $0x314] sm:$0xf]
      %v376 = vld [vmem:[%s161 + $0x318] sm:$0xf]
      %v377 = vld [vmem:[%s161 + $0x31c] sm:$0xf]
      %v378 = vld [vmem:[%s161 + $0x320] sm:$0xf]
      %v379 = vld [vmem:[%s161 + $0x324] sm:$0xf]
      %v380 = vld [vmem:[%s161 + $0x328] sm:$0xf]
      %v381 = vld [vmem:[%s161 + $0x32c] sm:$0xf]
      %v382 = vld [vmem:[%s161 + $0x330] sm:$0xf]
      %v383 = vld [vmem:[%s161 + $0x334] sm:$0xf]
      %v384 = vld [vmem:[%s161 + $0x338] sm:$0xf]
      %v385 = vld [vmem:[%s161 + $0x33c] sm:$0xf]
      %v386 = vld [vmem:[%s161 + $0x340] sm:$0xf]
      %v387 = vld [vmem:[%s161 + $0x344] sm:$0xf]
      %v388 = vld [vmem:[%s161 + $0x348] sm:$0xf]
      %v389 = vld [vmem:[%s161 + $0x34c] sm:$0xf]
      %v390 = vld [vmem:[%s161 + $0x350] sm:$0xf]
      %v391 = vld [vmem:[%s161 + $0x354] sm:$0xf]
      %v392 = vld [vmem:[%s161 + $0x358] sm:$0xf]
      %v393 = vld [vmem:[%s161 + $0x35c] sm:$0xf]
      %v394 = vld [vmem:[%s161 + $0x360] sm:$0xf]
      %v395 = vld [vmem:[%s161 + $0x364] sm:$0xf]
      %v396 = vld [vmem:[%s161 + $0x368] sm:$0xf]
      %v397 = vld [vmem:[%s161 + $0x36c] sm:$0xf]
      %v398 = vld [vmem:[%s161 + $0x370] sm:$0xf]
      %v399 = vld [vmem:[%s161 + $0x374] sm:$0xf]
      %v400 = vld [vmem:[%s161 + $0x378] sm:$0xf]
      %v401 = vld [vmem:[%s161 + $0x37c] sm:$0xf]
      %v402 = vld [vmem:[%s161 + $0x380] sm:$0xf]
      %v403 = vld [vmem:[%s161 + $0x384] sm:$0xf]
      %v404 = vld [vmem:[%s161 + $0x388] sm:$0xf]
      %v405 = vld [vmem:[%s161 + $0x38c] sm:$0xf]
      %v406 = vld [vmem:[%s161 + $0x390] sm:$0xf]
      %v407 = vld [vmem:[%s161 + $0x394] sm:$0xf]
      %v408 = vld [vmem:[%s161 + $0x398] sm:$0xf]
      %v409 = vld [vmem:[%s161 + $0x39c] sm:$0xf]
      %v410 = vld [vmem:[%s161 + $0x3a0] sm:$0xf]
      %v411 = vld [vmem:[%s161 + $0x3a4] sm:$0xf]
      %v412 = vld [vmem:[%s161 + $0x3a8] sm:$0xf]
      %v413 = vld [vmem:[%s161 + $0x3ac] sm:$0xf]
      %v414 = vld [vmem:[%s161 + $0x3b0] sm:$0xf]
      %v415 = vld [vmem:[%s161 + $0x3b4] sm:$0xf]
      %v416 = vld [vmem:[%s161 + $0x3b8] sm:$0xf]
      %v417 = vld [vmem:[%s161 + $0x3bc] sm:$0xf]
      %v418 = vld [vmem:[%s161 + $0x3c0] sm:$0xf]
      %v419 = vld [vmem:[%s161 + $0x3c4] sm:$0xf]
      %v420 = vld [vmem:[%s161 + $0x3c8] sm:$0xf]
      %v421 = vld [vmem:[%s161 + $0x3cc] sm:$0xf]
      %v422 = vld [vmem:[%s161 + $0x3d0] sm:$0xf]
      %v423 = vld [vmem:[%s161 + $0x3d4] sm:$0xf]
      %v424 = vld [vmem:[%s161 + $0x3d8] sm:$0xf]
      %v425 = vld [vmem:[%s161 + $0x3dc] sm:$0xf]
      %v426 = vld [vmem:[%s161 + $0x3e0] sm:$0xf]
      %v427 = vld [vmem:[%s161 + $0x3e4] sm:$0xf]
      %v428 = vld [vmem:[%s161 + $0x3e8] sm:$0xf]
      %v429 = vld [vmem:[%s161 + $0x3ec] sm:$0xf]
      %v430 = vld [vmem:[%s161 + $0x3f0] sm:$0xf]
      %v431 = vld [vmem:[%s161 + $0x3f4] sm:$0xf]
      %v432 = vld [vmem:[%s161 + $0x3f8] sm:$0xf]
      %v433 = vld [vmem:[%s161 + $0x3fc] sm:$0xf]
      %v434 = vld [vmem:[%s168] sm:$0xf]
      %v435 = vld [vmem:[%s168 + $0x4] sm:$0xf]
      %v436 = vld [vmem:[%s168 + $0x8] sm:$0xf]
      %v437 = vld [vmem:[%s168 + $0xc] sm:$0xf]
      %v438 = vld [vmem:[%s168 + $0x10] sm:$0xf]
      %v439 = vld [vmem:[%s168 + $0x14] sm:$0xf]
      %v440 = vld [vmem:[%s168 + $0x18] sm:$0xf]
      %v441 = vld [vmem:[%s168 + $0x1c] sm:$0xf]
      %v442 = vld [vmem:[%s168 + $0x20] sm:$0xf]
      %v443 = vld [vmem:[%s168 + $0x24] sm:$0xf]
      %v444 = vld [vmem:[%s168 + $0x28] sm:$0xf]
      %v445 = vld [vmem:[%s168 + $0x2c] sm:$0xf]
      %v446 = vld [vmem:[%s168 + $0x30] sm:$0xf]
      %v447 = vld [vmem:[%s168 + $0x34] sm:$0xf]
      %v448 = vld [vmem:[%s168 + $0x38] sm:$0xf]
      %v449 = vld [vmem:[%s168 + $0x3c] sm:$0xf]
      %v450 = vld [vmem:[%s168 + $0x40] sm:$0xf]
      %v451 = vld [vmem:[%s168 + $0x44] sm:$0xf]
      %v452 = vld [vmem:[%s168 + $0x48] sm:$0xf]
      %v453 = vld [vmem:[%s168 + $0x4c] sm:$0xf]
      %v454 = vld [vmem:[%s168 + $0x50] sm:$0xf]
      %v455 = vld [vmem:[%s168 + $0x54] sm:$0xf]
      %v456 = vld [vmem:[%s168 + $0x58] sm:$0xf]
      %v457 = vld [vmem:[%s168 + $0x5c] sm:$0xf]
      %v458 = vld [vmem:[%s168 + $0x60] sm:$0xf]
      %v459 = vld [vmem:[%s168 + $0x64] sm:$0xf]
      %v460 = vld [vmem:[%s168 + $0x68] sm:$0xf]
      %v461 = vld [vmem:[%s168 + $0x6c] sm:$0xf]
      %v462 = vld [vmem:[%s168 + $0x70] sm:$0xf]
      %v463 = vld [vmem:[%s168 + $0x74] sm:$0xf]
      %v464 = vld [vmem:[%s168 + $0x78] sm:$0xf]
      %v465 = vld [vmem:[%s168 + $0x7c] sm:$0xf]
      %v466 = vld [vmem:[%s168 + $0x80] sm:$0xf]
      %v467 = vld [vmem:[%s168 + $0x84] sm:$0xf]
      %v468 = vld [vmem:[%s168 + $0x88] sm:$0xf]
      %v469 = vld [vmem:[%s168 + $0x8c] sm:$0xf]
      %v470 = vld [vmem:[%s168 + $0x90] sm:$0xf]
      %v471 = vld [vmem:[%s168 + $0x94] sm:$0xf]
      %v472 = vld [vmem:[%s168 + $0x98] sm:$0xf]
      %v473 = vld [vmem:[%s168 + $0x9c] sm:$0xf]
      %v474 = vld [vmem:[%s168 + $0xa0] sm:$0xf]
      %v475 = vld [vmem:[%s168 + $0xa4] sm:$0xf]
      %v476 = vld [vmem:[%s168 + $0xa8] sm:$0xf]
      %v477 = vld [vmem:[%s168 + $0xac] sm:$0xf]
      %v478 = vld [vmem:[%s168 + $0xb0] sm:$0xf]
      %v479 = vld [vmem:[%s168 + $0xb4] sm:$0xf]
      %v480 = vld [vmem:[%s168 + $0xb8] sm:$0xf]
      %v481 = vld [vmem:[%s168 + $0xbc] sm:$0xf]
      %v482 = vld [vmem:[%s168 + $0xc0] sm:$0xf]
      %v483 = vld [vmem:[%s168 + $0xc4] sm:$0xf]
      %v484 = vld [vmem:[%s168 + $0xc8] sm:$0xf]
      %v485 = vld [vmem:[%s168 + $0xcc] sm:$0xf]
      %v486 = vld [vmem:[%s168 + $0xd0] sm:$0xf]
      %v487 = vld [vmem:[%s168 + $0xd4] sm:$0xf]
      %v488 = vld [vmem:[%s168 + $0xd8] sm:$0xf]
      %v489 = vld [vmem:[%s168 + $0xdc] sm:$0xf]
      %v490 = vld [vmem:[%s168 + $0xe0] sm:$0xf]
      %v491 = vld [vmem:[%s168 + $0xe4] sm:$0xf]
      %v492 = vld [vmem:[%s168 + $0xe8] sm:$0xf]
      %v493 = vld [vmem:[%s168 + $0xec] sm:$0xf]
      %v494 = vld [vmem:[%s168 + $0xf0] sm:$0xf]
      %v495 = vld [vmem:[%s168 + $0xf4] sm:$0xf]
      %v496 = vld [vmem:[%s168 + $0xf8] sm:$0xf]
      %v497 = vld [vmem:[%s168 + $0xfc] sm:$0xf]
      %v498 = vld [vmem:[%s168 + $0x100] sm:$0xf]
      %v499 = vld [vmem:[%s168 + $0x104] sm:$0xf]
      %v500 = vld [vmem:[%s168 + $0x108] sm:$0xf]
      %v501 = vld [vmem:[%s168 + $0x10c] sm:$0xf]
      %v502 = vld [vmem:[%s168 + $0x110] sm:$0xf]
      %v503 = vld [vmem:[%s168 + $0x114] sm:$0xf]
      %v504 = vld [vmem:[%s168 + $0x118] sm:$0xf]
      %v505 = vld [vmem:[%s168 + $0x11c] sm:$0xf]
      %v506 = vld [vmem:[%s168 + $0x120] sm:$0xf]
      %v507 = vld [vmem:[%s168 + $0x124] sm:$0xf]
      %v508 = vld [vmem:[%s168 + $0x128] sm:$0xf]
      %v509 = vld [vmem:[%s168 + $0x12c] sm:$0xf]
      %v510 = vld [vmem:[%s168 + $0x130] sm:$0xf]
      %v511 = vld [vmem:[%s168 + $0x134] sm:$0xf]
      %v512 = vld [vmem:[%s168 + $0x138] sm:$0xf]
      %v513 = vld [vmem:[%s168 + $0x13c] sm:$0xf]
      %v514 = vld [vmem:[%s168 + $0x140] sm:$0xf]
      %v515 = vld [vmem:[%s168 + $0x144] sm:$0xf]
      %v516 = vld [vmem:[%s168 + $0x148] sm:$0xf]
      %v517 = vld [vmem:[%s168 + $0x14c] sm:$0xf]
      %v518 = vld [vmem:[%s168 + $0x150] sm:$0xf]
      %v519 = vld [vmem:[%s168 + $0x154] sm:$0xf]
      %v520 = vld [vmem:[%s168 + $0x158] sm:$0xf]
      %v521 = vld [vmem:[%s168 + $0x15c] sm:$0xf]
      %v522 = vld [vmem:[%s168 + $0x160] sm:$0xf]
      %v523 = vld [vmem:[%s168 + $0x164] sm:$0xf]
      %v524 = vld [vmem:[%s168 + $0x168] sm:$0xf]
      %v525 = vld [vmem:[%s168 + $0x16c] sm:$0xf]
      %v526 = vld [vmem:[%s168 + $0x170] sm:$0xf]
      %v527 = vld [vmem:[%s168 + $0x174] sm:$0xf]
      %v528 = vld [vmem:[%s168 + $0x178] sm:$0xf]
      %v529 = vld [vmem:[%s168 + $0x17c] sm:$0xf]
      %v530 = vld [vmem:[%s168 + $0x180] sm:$0xf]
      %v531 = vld [vmem:[%s168 + $0x184] sm:$0xf]
      %v532 = vld [vmem:[%s168 + $0x188] sm:$0xf]
      %v533 = vld [vmem:[%s168 + $0x18c] sm:$0xf]
      %v534 = vld [vmem:[%s168 + $0x190] sm:$0xf]
      %v535 = vld [vmem:[%s168 + $0x194] sm:$0xf]
      %v536 = vld [vmem:[%s168 + $0x198] sm:$0xf]
      %v537 = vld [vmem:[%s168 + $0x19c] sm:$0xf]
      %v538 = vld [vmem:[%s168 + $0x1a0] sm:$0xf]
      %v539 = vld [vmem:[%s168 + $0x1a4] sm:$0xf]
      %v540 = vld [vmem:[%s168 + $0x1a8] sm:$0xf]
      %v541 = vld [vmem:[%s168 + $0x1ac] sm:$0xf]
      %v542 = vld [vmem:[%s168 + $0x1b0] sm:$0xf]
      %v543 = vld [vmem:[%s168 + $0x1b4] sm:$0xf]
      %v544 = vld [vmem:[%s168 + $0x1b8] sm:$0xf]
      %v545 = vld [vmem:[%s168 + $0x1bc] sm:$0xf]
      %v546 = vld [vmem:[%s168 + $0x1c0] sm:$0xf]
      %v547 = vld [vmem:[%s168 + $0x1c4] sm:$0xf]
      %v548 = vld [vmem:[%s168 + $0x1c8] sm:$0xf]
      %v549 = vld [vmem:[%s168 + $0x1cc] sm:$0xf]
      %v550 = vld [vmem:[%s168 + $0x1d0] sm:$0xf]
      %v551 = vld [vmem:[%s168 + $0x1d4] sm:$0xf]
      %v552 = vld [vmem:[%s168 + $0x1d8] sm:$0xf]
      %v553 = vld [vmem:[%s168 + $0x1dc] sm:$0xf]
      %v554 = vld [vmem:[%s168 + $0x1e0] sm:$0xf]
      %v555 = vld [vmem:[%s168 + $0x1e4] sm:$0xf]
      %v556 = vld [vmem:[%s168 + $0x1e8] sm:$0xf]
      %v557 = vld [vmem:[%s168 + $0x1ec] sm:$0xf]
      %v558 = vld [vmem:[%s168 + $0x1f0] sm:$0xf]
      %v559 = vld [vmem:[%s168 + $0x1f4] sm:$0xf]
      %v560 = vld [vmem:[%s168 + $0x1f8] sm:$0xf]
      %v561 = vld [vmem:[%s168 + $0x1fc] sm:$0xf]
      %v562 = vld [vmem:[%s168 + $0x200] sm:$0xf]
      %v563 = vld [vmem:[%s168 + $0x204] sm:$0xf]
      %v564 = vld [vmem:[%s168 + $0x208] sm:$0xf]
      %v565 = vld [vmem:[%s168 + $0x20c] sm:$0xf]
      %v566 = vld [vmem:[%s168 + $0x210] sm:$0xf]
      %v567 = vld [vmem:[%s168 + $0x214] sm:$0xf]
      %v568 = vld [vmem:[%s168 + $0x218] sm:$0xf]
      %v569 = vld [vmem:[%s168 + $0x21c] sm:$0xf]
      %v570 = vld [vmem:[%s168 + $0x220] sm:$0xf]
      %v571 = vld [vmem:[%s168 + $0x224] sm:$0xf]
      %v572 = vld [vmem:[%s168 + $0x228] sm:$0xf]
      %v573 = vld [vmem:[%s168 + $0x22c] sm:$0xf]
      %v574 = vld [vmem:[%s168 + $0x230] sm:$0xf]
      %v575 = vld [vmem:[%s168 + $0x234] sm:$0xf]
      %v576 = vld [vmem:[%s168 + $0x238] sm:$0xf]
      %v577 = vld [vmem:[%s168 + $0x23c] sm:$0xf]
      %v578 = vld [vmem:[%s168 + $0x240] sm:$0xf]
      %v579 = vld [vmem:[%s168 + $0x244] sm:$0xf]
      %v580 = vld [vmem:[%s168 + $0x248] sm:$0xf]
      %v581 = vld [vmem:[%s168 + $0x24c] sm:$0xf]
      %v582 = vld [vmem:[%s168 + $0x250] sm:$0xf]
      %v583 = vld [vmem:[%s168 + $0x254] sm:$0xf]
      %v584 = vld [vmem:[%s168 + $0x258] sm:$0xf]
      %v585 = vld [vmem:[%s168 + $0x25c] sm:$0xf]
      %v586 = vld [vmem:[%s168 + $0x260] sm:$0xf]
      %v587 = vld [vmem:[%s168 + $0x264] sm:$0xf]
      %v588 = vld [vmem:[%s168 + $0x268] sm:$0xf]
      %v589 = vld [vmem:[%s168 + $0x26c] sm:$0xf]
      %v590 = vld [vmem:[%s168 + $0x270] sm:$0xf]
      %v591 = vld [vmem:[%s168 + $0x274] sm:$0xf]
      %v592 = vld [vmem:[%s168 + $0x278] sm:$0xf]
      %v593 = vld [vmem:[%s168 + $0x27c] sm:$0xf]
      %v594 = vld [vmem:[%s168 + $0x280] sm:$0xf]
      %v595 = vld [vmem:[%s168 + $0x284] sm:$0xf]
      %v596 = vld [vmem:[%s168 + $0x288] sm:$0xf]
      %v597 = vld [vmem:[%s168 + $0x28c] sm:$0xf]
      %v598 = vld [vmem:[%s168 + $0x290] sm:$0xf]
      %v599 = vld [vmem:[%s168 + $0x294] sm:$0xf]
      %v600 = vld [vmem:[%s168 + $0x298] sm:$0xf]
      %v601 = vld [vmem:[%s168 + $0x29c] sm:$0xf]
      %v602 = vld [vmem:[%s168 + $0x2a0] sm:$0xf]
      %v603 = vld [vmem:[%s168 + $0x2a4] sm:$0xf]
      %v604 = vld [vmem:[%s168 + $0x2a8] sm:$0xf]
      %v605 = vld [vmem:[%s168 + $0x2ac] sm:$0xf]
      %v606 = vld [vmem:[%s168 + $0x2b0] sm:$0xf]
      %v607 = vld [vmem:[%s168 + $0x2b4] sm:$0xf]
      %v608 = vld [vmem:[%s168 + $0x2b8] sm:$0xf]
      %v609 = vld [vmem:[%s168 + $0x2bc] sm:$0xf]
      %v610 = vld [vmem:[%s168 + $0x2c0] sm:$0xf]
      %v611 = vld [vmem:[%s168 + $0x2c4] sm:$0xf]
      %v612 = vld [vmem:[%s168 + $0x2c8] sm:$0xf]
      %v613 = vld [vmem:[%s168 + $0x2cc] sm:$0xf]
      %v614 = vld [vmem:[%s168 + $0x2d0] sm:$0xf]
      %v615 = vld [vmem:[%s168 + $0x2d4] sm:$0xf]
      %v616 = vld [vmem:[%s168 + $0x2d8] sm:$0xf]
      %v617 = vld [vmem:[%s168 + $0x2dc] sm:$0xf]
      %v618 = vld [vmem:[%s168 + $0x2e0] sm:$0xf]
      %v619 = vld [vmem:[%s168 + $0x2e4] sm:$0xf]
      %v620 = vld [vmem:[%s168 + $0x2e8] sm:$0xf]
      %v621 = vld [vmem:[%s168 + $0x2ec] sm:$0xf]
      %v622 = vld [vmem:[%s168 + $0x2f0] sm:$0xf]
      %v623 = vld [vmem:[%s168 + $0x2f4] sm:$0xf]
      %v624 = vld [vmem:[%s168 + $0x2f8] sm:$0xf]
      %v625 = vld [vmem:[%s168 + $0x2fc] sm:$0xf]
      %v626 = vld [vmem:[%s168 + $0x300] sm:$0xf]
      %v627 = vld [vmem:[%s168 + $0x304] sm:$0xf]
      %v628 = vld [vmem:[%s168 + $0x308] sm:$0xf]
      %v629 = vld [vmem:[%s168 + $0x30c] sm:$0xf]
      %v630 = vld [vmem:[%s168 + $0x310] sm:$0xf]
      %v631 = vld [vmem:[%s168 + $0x314] sm:$0xf]
      %v632 = vld [vmem:[%s168 + $0x318] sm:$0xf]
      %v633 = vld [vmem:[%s168 + $0x31c] sm:$0xf]
      %v634 = vld [vmem:[%s168 + $0x320] sm:$0xf]
      %v635 = vld [vmem:[%s168 + $0x324] sm:$0xf]
      %v636 = vld [vmem:[%s168 + $0x328] sm:$0xf]
      %v637 = vld [vmem:[%s168 + $0x32c] sm:$0xf]
      %v638 = vld [vmem:[%s168 + $0x330] sm:$0xf]
      %v639 = vld [vmem:[%s168 + $0x334] sm:$0xf]
      %v640 = vld [vmem:[%s168 + $0x338] sm:$0xf]
      %v641 = vld [vmem:[%s168 + $0x33c] sm:$0xf]
      %v642 = vld [vmem:[%s168 + $0x340] sm:$0xf]
      %v643 = vld [vmem:[%s168 + $0x344] sm:$0xf]
      %v644 = vld [vmem:[%s168 + $0x348] sm:$0xf]
      %v645 = vld [vmem:[%s168 + $0x34c] sm:$0xf]
      %v646 = vld [vmem:[%s168 + $0x350] sm:$0xf]
      %v647 = vld [vmem:[%s168 + $0x354] sm:$0xf]
      %v648 = vld [vmem:[%s168 + $0x358] sm:$0xf]
      %v649 = vld [vmem:[%s168 + $0x35c] sm:$0xf]
      %v650 = vld [vmem:[%s168 + $0x360] sm:$0xf]
      %v651 = vld [vmem:[%s168 + $0x364] sm:$0xf]
      %v652 = vld [vmem:[%s168 + $0x368] sm:$0xf]
      %v653 = vld [vmem:[%s168 + $0x36c] sm:$0xf]
      %v654 = vld [vmem:[%s168 + $0x370] sm:$0xf]
      %v655 = vld [vmem:[%s168 + $0x374] sm:$0xf]
      %v656 = vld [vmem:[%s168 + $0x378] sm:$0xf]
      %v657 = vld [vmem:[%s168 + $0x37c] sm:$0xf]
      %v658 = vld [vmem:[%s168 + $0x380] sm:$0xf]
      %v659 = vld [vmem:[%s168 + $0x384] sm:$0xf]
      %v660 = vld [vmem:[%s168 + $0x388] sm:$0xf]
      %v661 = vld [vmem:[%s168 + $0x38c] sm:$0xf]
      %v662 = vld [vmem:[%s168 + $0x390] sm:$0xf]
      %v663 = vld [vmem:[%s168 + $0x394] sm:$0xf]
      %v664 = vld [vmem:[%s168 + $0x398] sm:$0xf]
      %v665 = vld [vmem:[%s168 + $0x39c] sm:$0xf]
      %v666 = vld [vmem:[%s168 + $0x3a0] sm:$0xf]
      %v667 = vld [vmem:[%s168 + $0x3a4] sm:$0xf]
      %v668 = vld [vmem:[%s168 + $0x3a8] sm:$0xf]
      %v669 = vld [vmem:[%s168 + $0x3ac] sm:$0xf]
      %v670 = vld [vmem:[%s168 + $0x3b0] sm:$0xf]
      %v671 = vld [vmem:[%s168 + $0x3b4] sm:$0xf]
      %v672 = vld [vmem:[%s168 + $0x3b8] sm:$0xf]
      %v673 = vld [vmem:[%s168 + $0x3bc] sm:$0xf]
      %v674 = vld [vmem:[%s168 + $0x3c0] sm:$0xf]
      %v675 = vld [vmem:[%s168 + $0x3c4] sm:$0xf]
      %v676 = vld [vmem:[%s168 + $0x3c8] sm:$0xf]
      %v677 = vld [vmem:[%s168 + $0x3cc] sm:$0xf]
      %v678 = vld [vmem:[%s168 + $0x3d0] sm:$0xf]
      %v679 = vld [vmem:[%s168 + $0x3d4] sm:$0xf]
      %v680 = vld [vmem:[%s168 + $0x3d8] sm:$0xf]
      %v681 = vld [vmem:[%s168 + $0x3dc] sm:$0xf]
      %v682 = vld [vmem:[%s168 + $0x3e0] sm:$0xf]
      %v683 = vld [vmem:[%s168 + $0x3e4] sm:$0xf]
      %v684 = vld [vmem:[%s168 + $0x3e8] sm:$0xf]
      %v685 = vld [vmem:[%s168 + $0x3ec] sm:$0xf]
      %v686 = vld [vmem:[%s168 + $0x3f0] sm:$0xf]
      %v687 = vld [vmem:[%s168 + $0x3f4] sm:$0xf]
      %v688 = vld [vmem:[%s168 + $0x3f8] sm:$0xf]
      %v689 = vld [vmem:[%s168 + $0x3fc] sm:$0xf]
      %v692 = vunpack.c.l.b16 %v178
      %v693 = vunpack.c.l.b16 %v179
      %v694 = vpack.c.b16 %v693, %v692
      %v697 = vunpack.c.l.b16 %v434
      %v698 = vunpack.c.l.b16 %v435
      %v699 = vpack.c.b16 %v698, %v697
      %vm700 = vcmask 523264
      %v702 = vsel %vm700, %v694, 0
      %v705 = vsel %vm700, %v699, 0
      %707 = vmatpush.bf16.xpose.msra.mxu0 0
      %708 = vmatpush.bf16.xpose.msra.mxu0 0
      %709 = vmatpush.bf16.xpose.msra.mxu0 0
      %710 = vmatpush.bf16.xpose.msra.mxu0 0
      %711 = vmatpush.bf16.xpose.msra.mxu0 0
      %712 = vmatpush.bf16.xpose.msra.mxu0 0
      %713 = vmatpush.bf16.xpose.msra.mxu0 0
      %714 = vmatpush.bf16.xpose.msra.mxu0 %v705
      %715 = vmatmul.bf16.gmra.mxu0 %v702
      %v716 = vpop.f32.mrf.mxu0
      %v717 = vadd.f32 0.0, %v716
      %v718 = vpop.f32.mrf.mxu0
      %v719 = vadd.f32 0.0, %v718
      %720 = vdwg.mxu0
      %v723 = vunpack.c.l.b16 %v180
      %v724 = vunpack.c.l.b16 %v181
      %v725 = vpack.c.b16 %v724, %v723
      %v728 = vunpack.c.l.b16 %v436
      %v729 = vunpack.c.l.b16 %v437
      %v730 = vpack.c.b16 %v729, %v728
      %v732 = vsel %vm700, %v725, 0
      %v735 = vsel %vm700, %v730, 0
      %737 = vmatpush.bf16.xpose.msra.mxu0 0
      %738 = vmatpush.bf16.xpose.msra.mxu0 0
      %739 = vmatpush.bf16.xpose.msra.mxu0 0
      %740 = vmatpush.bf16.xpose.msra.mxu0 0
      %741 = vmatpush.bf16.xpose.msra.mxu0 0
      %742 = vmatpush.bf16.xpose.msra.mxu0 0
      %743 = vmatpush.bf16.xpose.msra.mxu0 0
      %744 = vmatpush.bf16.xpose.msra.mxu0 %v735
      %745 = vmatmul.bf16.gmra.mxu0 %v732
      %v746 = vpop.f32.mrf.mxu0
      %v747 = vadd.f32 0.0, %v746
      %v748 = vpop.f32.mrf.mxu0
      %v749 = vadd.f32 0.0, %v748
      %750 = vdwg.mxu0
      %v753 = vunpack.c.l.b16 %v182
      %v754 = vunpack.c.l.b16 %v183
      %v755 = vpack.c.b16 %v754, %v753
      %v758 = vunpack.c.l.b16 %v438
      %v759 = vunpack.c.l.b16 %v439
      %v760 = vpack.c.b16 %v759, %v758
      %v762 = vsel %vm700, %v755, 0
      %v765 = vsel %vm700, %v760, 0
      %767 = vmatpush.bf16.xpose.msra.mxu0 0
      %768 = vmatpush.bf16.xpose.msra.mxu0 0
      %769 = vmatpush.bf16.xpose.msra.mxu0 0
      %770 = vmatpush.bf16.xpose.msra.mxu0 0
      %771 = vmatpush.bf16.xpose.msra.mxu0 0
      %772 = vmatpush.bf16.xpose.msra.mxu0 0
      %773 = vmatpush.bf16.xpose.msra.mxu0 0
      %774 = vmatpush.bf16.xpose.msra.mxu0 %v765
      %775 = vmatmul.bf16.gmra.mxu0 %v762
      %v776 = vpop.f32.mrf.mxu0
      %v777 = vadd.f32 0.0, %v776
      %v778 = vpop.f32.mrf.mxu0
      %v779 = vadd.f32 0.0, %v778
      %780 = vdwg.mxu0
      %v783 = vunpack.c.l.b16 %v184
      %v784 = vunpack.c.l.b16 %v185
      %v785 = vpack.c.b16 %v784, %v783
      %v788 = vunpack.c.l.b16 %v440
      %v789 = vunpack.c.l.b16 %v441
      %v790 = vpack.c.b16 %v789, %v788
      %v792 = vsel %vm700, %v785, 0
      %v795 = vsel %vm700, %v790, 0
      %797 = vmatpush.bf16.xpose.msra.mxu0 0
      %798 = vmatpush.bf16.xpose.msra.mxu0 0
      %799 = vmatpush.bf16.xpose.msra.mxu0 0
      %800 = vmatpush.bf16.xpose.msra.mxu0 0
      %801 = vmatpush.bf16.xpose.msra.mxu0 0
      %802 = vmatpush.bf16.xpose.msra.mxu0 0
      %803 = vmatpush.bf16.xpose.msra.mxu0 0
      %804 = vmatpush.bf16.xpose.msra.mxu0 %v795
      %805 = vmatmul.bf16.gmra.mxu0 %v792
      %v806 = vpop.f32.mrf.mxu0
      %v807 = vadd.f32 0.0, %v806
      %v808 = vpop.f32.mrf.mxu0
      %v809 = vadd.f32 0.0, %v808
      %810 = vdwg.mxu0
      %v813 = vunpack.c.l.b16 %v186
      %v814 = vunpack.c.l.b16 %v187
      %v815 = vpack.c.b16 %v814, %v813
      %v818 = vunpack.c.l.b16 %v442
      %v819 = vunpack.c.l.b16 %v443
      %v820 = vpack.c.b16 %v819, %v818
      %v822 = vsel %vm700, %v815, 0
      %v825 = vsel %vm700, %v820, 0
      %827 = vmatpush.bf16.xpose.msra.mxu0 0
      %828 = vmatpush.bf16.xpose.msra.mxu0 0
      %829 = vmatpush.bf16.xpose.msra.mxu0 0
      %830 = vmatpush.bf16.xpose.msra.mxu0 0
      %831 = vmatpush.bf16.xpose.msra.mxu0 0
      %832 = vmatpush.bf16.xpose.msra.mxu0 0
      %833 = vmatpush.bf16.xpose.msra.mxu0 0
      %834 = vmatpush.bf16.xpose.msra.mxu0 %v825
      %835 = vmatmul.bf16.gmra.mxu0 %v822
      %v836 = vpop.f32.mrf.mxu0
      %v837 = vadd.f32 0.0, %v836
      %v838 = vpop.f32.mrf.mxu0
      %v839 = vadd.f32 0.0, %v838
      %840 = vdwg.mxu0
      %v843 = vunpack.c.l.b16 %v188
      %v844 = vunpack.c.l.b16 %v189
      %v845 = vpack.c.b16 %v844, %v843
      %v848 = vunpack.c.l.b16 %v444
      %v849 = vunpack.c.l.b16 %v445
      %v850 = vpack.c.b16 %v849, %v848
      %v852 = vsel %vm700, %v845, 0
      %v855 = vsel %vm700, %v850, 0
      %857 = vmatpush.bf16.xpose.msra.mxu0 0
      %858 = vmatpush.bf16.xpose.msra.mxu0 0
      %859 = vmatpush.bf16.xpose.msra.mxu0 0
      %860 = vmatpush.bf16.xpose.msra.mxu0 0
      %861 = vmatpush.bf16.xpose.msra.mxu0 0
      %862 = vmatpush.bf16.xpose.msra.mxu0 0
      %863 = vmatpush.bf16.xpose.msra.mxu0 0
      %864 = vmatpush.bf16.xpose.msra.mxu0 %v855
      %865 = vmatmul.bf16.gmra.mxu0 %v852
      %v866 = vpop.f32.mrf.mxu0
      %v867 = vadd.f32 0.0, %v866
      %v868 = vpop.f32.mrf.mxu0
      %v869 = vadd.f32 0.0, %v868
      %870 = vdwg.mxu0
      %v873 = vunpack.c.l.b16 %v190
      %v874 = vunpack.c.l.b16 %v191
      %v875 = vpack.c.b16 %v874, %v873
      %v878 = vunpack.c.l.b16 %v446
      %v879 = vunpack.c.l.b16 %v447
      %v880 = vpack.c.b16 %v879, %v878
      %v882 = vsel %vm700, %v875, 0
      %v885 = vsel %vm700, %v880, 0
      %887 = vmatpush.bf16.xpose.msra.mxu0 0
      %888 = vmatpush.bf16.xpose.msra.mxu0 0
      %889 = vmatpush.bf16.xpose.msra.mxu0 0
      %890 = vmatpush.bf16.xpose.msra.mxu0 0
      %891 = vmatpush.bf16.xpose.msra.mxu0 0
      %892 = vmatpush.bf16.xpose.msra.mxu0 0
      %893 = vmatpush.bf16.xpose.msra.mxu0 0
      %894 = vmatpush.bf16.xpose.msra.mxu0 %v885
      %895 = vmatmul.bf16.gmra.mxu0 %v882
      %v896 = vpop.f32.mrf.mxu0
      %v897 = vadd.f32 0.0, %v896
      %v898 = vpop.f32.mrf.mxu0
      %v899 = vadd.f32 0.0, %v898
      %900 = vdwg.mxu0
      %v903 = vunpack.c.l.b16 %v192
      %v904 = vunpack.c.l.b16 %v193
      %v905 = vpack.c.b16 %v904, %v903
      %v908 = vunpack.c.l.b16 %v448
      %v909 = vunpack.c.l.b16 %v449
      %v910 = vpack.c.b16 %v909, %v908
      %v912 = vsel %vm700, %v905, 0
      %v915 = vsel %vm700, %v910, 0
      %917 = vmatpush.bf16.xpose.msra.mxu0 0
      %918 = vmatpush.bf16.xpose.msra.mxu0 0
      %919 = vmatpush.bf16.xpose.msra.mxu0 0
      %920 = vmatpush.bf16.xpose.msra.mxu0 0
      %921 = vmatpush.bf16.xpose.msra.mxu0 0
      %922 = vmatpush.bf16.xpose.msra.mxu0 0
      %923 = vmatpush.bf16.xpose.msra.mxu0 0
      %924 = vmatpush.bf16.xpose.msra.mxu0 %v915
      %925 = vmatmul.bf16.gmra.mxu0 %v912
      %v926 = vpop.f32.mrf.mxu0
      %v927 = vadd.f32 0.0, %v926
      %v928 = vpop.f32.mrf.mxu0
      %v929 = vadd.f32 0.0, %v928
      %930 = vdwg.mxu0
      %v933 = vunpack.c.l.b16 %v194
      %v934 = vunpack.c.l.b16 %v195
      %v935 = vpack.c.b16 %v934, %v933
      %v938 = vunpack.c.l.b16 %v450
      %v939 = vunpack.c.l.b16 %v451
      %v940 = vpack.c.b16 %v939, %v938
      %v942 = vsel %vm700, %v935, 0
      %v945 = vsel %vm700, %v940, 0
      %947 = vmatpush.bf16.xpose.msra.mxu0 0
      %948 = vmatpush.bf16.xpose.msra.mxu0 0
      %949 = vmatpush.bf16.xpose.msra.mxu0 0
      %950 = vmatpush.bf16.xpose.msra.mxu0 0
      %951 = vmatpush.bf16.xpose.msra.mxu0 0
      %952 = vmatpush.bf16.xpose.msra.mxu0 0
      %953 = vmatpush.bf16.xpose.msra.mxu0 0
      %954 = vmatpush.bf16.xpose.msra.mxu0 %v945
      %955 = vmatmul.bf16.gmra.mxu0 %v942
      %v956 = vpop.f32.mrf.mxu0
      %v957 = vadd.f32 0.0, %v956
      %v958 = vpop.f32.mrf.mxu0
      %v959 = vadd.f32 0.0, %v958
      %960 = vdwg.mxu0
      %v963 = vunpack.c.l.b16 %v196
      %v964 = vunpack.c.l.b16 %v197
      %v965 = vpack.c.b16 %v964, %v963
      %v968 = vunpack.c.l.b16 %v452
      %v969 = vunpack.c.l.b16 %v453
      %v970 = vpack.c.b16 %v969, %v968
      %v972 = vsel %vm700, %v965, 0
      %v975 = vsel %vm700, %v970, 0
      %977 = vmatpush.bf16.xpose.msra.mxu0 0
      %978 = vmatpush.bf16.xpose.msra.mxu0 0
      %979 = vmatpush.bf16.xpose.msra.mxu0 0
      %980 = vmatpush.bf16.xpose.msra.mxu0 0
      %981 = vmatpush.bf16.xpose.msra.mxu0 0
      %982 = vmatpush.bf16.xpose.msra.mxu0 0
      %983 = vmatpush.bf16.xpose.msra.mxu0 0
      %984 = vmatpush.bf16.xpose.msra.mxu0 %v975
      %985 = vmatmul.bf16.gmra.mxu0 %v972
      %v986 = vpop.f32.mrf.mxu0
      %v987 = vadd.f32 0.0, %v986
      %v988 = vpop.f32.mrf.mxu0
      %v989 = vadd.f32 0.0, %v988
      %990 = vdwg.mxu0
      %v993 = vunpack.c.l.b16 %v198
      %v994 = vunpack.c.l.b16 %v199
      %v995 = vpack.c.b16 %v994, %v993
      %v998 = vunpack.c.l.b16 %v454
      %v999 = vunpack.c.l.b16 %v455
      %v1000 = vpack.c.b16 %v999, %v998
      %v1002 = vsel %vm700, %v995, 0
      %v1005 = vsel %vm700, %v1000, 0
      %1007 = vmatpush.bf16.xpose.msra.mxu0 0
      %1008 = vmatpush.bf16.xpose.msra.mxu0 0
      %1009 = vmatpush.bf16.xpose.msra.mxu0 0
      %1010 = vmatpush.bf16.xpose.msra.mxu0 0
      %1011 = vmatpush.bf16.xpose.msra.mxu0 0
      %1012 = vmatpush.bf16.xpose.msra.mxu0 0
      %1013 = vmatpush.bf16.xpose.msra.mxu0 0
      %1014 = vmatpush.bf16.xpose.msra.mxu0 %v1005
      %1015 = vmatmul.bf16.gmra.mxu0 %v1002
      %v1016 = vpop.f32.mrf.mxu0
      %v1017 = vadd.f32 0.0, %v1016
      %v1018 = vpop.f32.mrf.mxu0
      %v1019 = vadd.f32 0.0, %v1018
      %1020 = vdwg.mxu0
      %v1023 = vunpack.c.l.b16 %v200
      %v1024 = vunpack.c.l.b16 %v201
      %v1025 = vpack.c.b16 %v1024, %v1023
      %v1028 = vunpack.c.l.b16 %v456
      %v1029 = vunpack.c.l.b16 %v457
      %v1030 = vpack.c.b16 %v1029, %v1028
      %v1032 = vsel %vm700, %v1025, 0
      %v1035 = vsel %vm700, %v1030, 0
      %1037 = vmatpush.bf16.xpose.msra.mxu0 0
      %1038 = vmatpush.bf16.xpose.msra.mxu0 0
      %1039 = vmatpush.bf16.xpose.msra.mxu0 0
      %1040 = vmatpush.bf16.xpose.msra.mxu0 0
      %1041 = vmatpush.bf16.xpose.msra.mxu0 0
      %1042 = vmatpush.bf16.xpose.msra.mxu0 0
      %1043 = vmatpush.bf16.xpose.msra.mxu0 0
      %1044 = vmatpush.bf16.xpose.msra.mxu0 %v1035
      %1045 = vmatmul.bf16.gmra.mxu0 %v1032
      %v1046 = vpop.f32.mrf.mxu0
      %v1047 = vadd.f32 0.0, %v1046
      %v1048 = vpop.f32.mrf.mxu0
      %v1049 = vadd.f32 0.0, %v1048
      %1050 = vdwg.mxu0
      %v1053 = vunpack.c.l.b16 %v202
      %v1054 = vunpack.c.l.b16 %v203
      %v1055 = vpack.c.b16 %v1054, %v1053
      %v1058 = vunpack.c.l.b16 %v458
      %v1059 = vunpack.c.l.b16 %v459
      %v1060 = vpack.c.b16 %v1059, %v1058
      %v1062 = vsel %vm700, %v1055, 0
      %v1065 = vsel %vm700, %v1060, 0
      %1067 = vmatpush.bf16.xpose.msra.mxu0 0
      %1068 = vmatpush.bf16.xpose.msra.mxu0 0
      %1069 = vmatpush.bf16.xpose.msra.mxu0 0
      %1070 = vmatpush.bf16.xpose.msra.mxu0 0
      %1071 = vmatpush.bf16.xpose.msra.mxu0 0
      %1072 = vmatpush.bf16.xpose.msra.mxu0 0
      %1073 = vmatpush.bf16.xpose.msra.mxu0 0
      %1074 = vmatpush.bf16.xpose.msra.mxu0 %v1065
      %1075 = vmatmul.bf16.gmra.mxu0 %v1062
      %v1076 = vpop.f32.mrf.mxu0
      %v1077 = vadd.f32 0.0, %v1076
      %v1078 = vpop.f32.mrf.mxu0
      %v1079 = vadd.f32 0.0, %v1078
      %1080 = vdwg.mxu0
      %v1083 = vunpack.c.l.b16 %v204
      %v1084 = vunpack.c.l.b16 %v205
      %v1085 = vpack.c.b16 %v1084, %v1083
      %v1088 = vunpack.c.l.b16 %v460
      %v1089 = vunpack.c.l.b16 %v461
      %v1090 = vpack.c.b16 %v1089, %v1088
      %v1092 = vsel %vm700, %v1085, 0
      %v1095 = vsel %vm700, %v1090, 0
      %1097 = vmatpush.bf16.xpose.msra.mxu0 0
      %1098 = vmatpush.bf16.xpose.msra.mxu0 0
      %1099 = vmatpush.bf16.xpose.msra.mxu0 0
      %1100 = vmatpush.bf16.xpose.msra.mxu0 0
      %1101 = vmatpush.bf16.xpose.msra.mxu0 0
      %1102 = vmatpush.bf16.xpose.msra.mxu0 0
      %1103 = vmatpush.bf16.xpose.msra.mxu0 0
      %1104 = vmatpush.bf16.xpose.msra.mxu0 %v1095
      %1105 = vmatmul.bf16.gmra.mxu0 %v1092
      %v1106 = vpop.f32.mrf.mxu0
      %v1107 = vadd.f32 0.0, %v1106
      %v1108 = vpop.f32.mrf.mxu0
      %v1109 = vadd.f32 0.0, %v1108
      %1110 = vdwg.mxu0
      %v1113 = vunpack.c.l.b16 %v206
      %v1114 = vunpack.c.l.b16 %v207
      %v1115 = vpack.c.b16 %v1114, %v1113
      %v1118 = vunpack.c.l.b16 %v462
      %v1119 = vunpack.c.l.b16 %v463
      %v1120 = vpack.c.b16 %v1119, %v1118
      %v1122 = vsel %vm700, %v1115, 0
      %v1125 = vsel %vm700, %v1120, 0
      %1127 = vmatpush.bf16.xpose.msra.mxu0 0
      %1128 = vmatpush.bf16.xpose.msra.mxu0 0
      %1129 = vmatpush.bf16.xpose.msra.mxu0 0
      %1130 = vmatpush.bf16.xpose.msra.mxu0 0
      %1131 = vmatpush.bf16.xpose.msra.mxu0 0
      %1132 = vmatpush.bf16.xpose.msra.mxu0 0
      %1133 = vmatpush.bf16.xpose.msra.mxu0 0
      %1134 = vmatpush.bf16.xpose.msra.mxu0 %v1125
      %1135 = vmatmul.bf16.gmra.mxu0 %v1122
      %v1136 = vpop.f32.mrf.mxu0
      %v1137 = vadd.f32 0.0, %v1136
      %v1138 = vpop.f32.mrf.mxu0
      %v1139 = vadd.f32 0.0, %v1138
      %1140 = vdwg.mxu0
      %v1143 = vunpack.c.l.b16 %v208
      %v1144 = vunpack.c.l.b16 %v209
      %v1145 = vpack.c.b16 %v1144, %v1143
      %v1148 = vunpack.c.l.b16 %v464
      %v1149 = vunpack.c.l.b16 %v465
      %v1150 = vpack.c.b16 %v1149, %v1148
      %v1152 = vsel %vm700, %v1145, 0
      %v1155 = vsel %vm700, %v1150, 0
      %1157 = vmatpush.bf16.xpose.msra.mxu0 0
      %1158 = vmatpush.bf16.xpose.msra.mxu0 0
      %1159 = vmatpush.bf16.xpose.msra.mxu0 0
      %1160 = vmatpush.bf16.xpose.msra.mxu0 0
      %1161 = vmatpush.bf16.xpose.msra.mxu0 0
      %1162 = vmatpush.bf16.xpose.msra.mxu0 0
      %1163 = vmatpush.bf16.xpose.msra.mxu0 0
      %1164 = vmatpush.bf16.xpose.msra.mxu0 %v1155
      %1165 = vmatmul.bf16.gmra.mxu0 %v1152
      %v1166 = vpop.f32.mrf.mxu0
      %v1167 = vadd.f32 0.0, %v1166
      %v1168 = vpop.f32.mrf.mxu0
      %v1169 = vadd.f32 0.0, %v1168
      %1170 = vdwg.mxu0
      %v1173 = vunpack.c.l.b16 %v210
      %v1174 = vunpack.c.l.b16 %v211
      %v1175 = vpack.c.b16 %v1174, %v1173
      %v1178 = vunpack.c.l.b16 %v466
      %v1179 = vunpack.c.l.b16 %v467
      %v1180 = vpack.c.b16 %v1179, %v1178
      %v1182 = vsel %vm700, %v1175, 0
      %v1185 = vsel %vm700, %v1180, 0
      %1187 = vmatpush.bf16.xpose.msra.mxu0 0
      %1188 = vmatpush.bf16.xpose.msra.mxu0 0
      %1189 = vmatpush.bf16.xpose.msra.mxu0 0
      %1190 = vmatpush.bf16.xpose.msra.mxu0 0
      %1191 = vmatpush.bf16.xpose.msra.mxu0 0
      %1192 = vmatpush.bf16.xpose.msra.mxu0 0
      %1193 = vmatpush.bf16.xpose.msra.mxu0 0
      %1194 = vmatpush.bf16.xpose.msra.mxu0 %v1185
      %1195 = vmatmul.bf16.gmra.mxu0 %v1182
      %v1196 = vpop.f32.mrf.mxu0
      %v1197 = vadd.f32 0.0, %v1196
      %v1198 = vpop.f32.mrf.mxu0
      %v1199 = vadd.f32 0.0, %v1198
      %1200 = vdwg.mxu0
      %v1203 = vunpack.c.l.b16 %v212
      %v1204 = vunpack.c.l.b16 %v213
      %v1205 = vpack.c.b16 %v1204, %v1203
      %v1208 = vunpack.c.l.b16 %v468
      %v1209 = vunpack.c.l.b16 %v469
      %v1210 = vpack.c.b16 %v1209, %v1208
      %v1212 = vsel %vm700, %v1205, 0
      %v1215 = vsel %vm700, %v1210, 0
      %1217 = vmatpush.bf16.xpose.msra.mxu0 0
      %1218 = vmatpush.bf16.xpose.msra.mxu0 0
      %1219 = vmatpush.bf16.xpose.msra.mxu0 0
      %1220 = vmatpush.bf16.xpose.msra.mxu0 0
      %1221 = vmatpush.bf16.xpose.msra.mxu0 0
      %1222 = vmatpush.bf16.xpose.msra.mxu0 0
      %1223 = vmatpush.bf16.xpose.msra.mxu0 0
      %1224 = vmatpush.bf16.xpose.msra.mxu0 %v1215
      %1225 = vmatmul.bf16.gmra.mxu0 %v1212
      %v1226 = vpop.f32.mrf.mxu0
      %v1227 = vadd.f32 0.0, %v1226
      %v1228 = vpop.f32.mrf.mxu0
      %v1229 = vadd.f32 0.0, %v1228
      %1230 = vdwg.mxu0
      %v1233 = vunpack.c.l.b16 %v214
      %v1234 = vunpack.c.l.b16 %v215
      %v1235 = vpack.c.b16 %v1234, %v1233
      %v1238 = vunpack.c.l.b16 %v470
      %v1239 = vunpack.c.l.b16 %v471
      %v1240 = vpack.c.b16 %v1239, %v1238
      %v1242 = vsel %vm700, %v1235, 0
      %v1245 = vsel %vm700, %v1240, 0
      %1247 = vmatpush.bf16.xpose.msra.mxu0 0
      %1248 = vmatpush.bf16.xpose.msra.mxu0 0
      %1249 = vmatpush.bf16.xpose.msra.mxu0 0
      %1250 = vmatpush.bf16.xpose.msra.mxu0 0
      %1251 = vmatpush.bf16.xpose.msra.mxu0 0
      %1252 = vmatpush.bf16.xpose.msra.mxu0 0
      %1253 = vmatpush.bf16.xpose.msra.mxu0 0
      %1254 = vmatpush.bf16.xpose.msra.mxu0 %v1245
      %1255 = vmatmul.bf16.gmra.mxu0 %v1242
      %v1256 = vpop.f32.mrf.mxu0
      %v1257 = vadd.f32 0.0, %v1256
      %v1258 = vpop.f32.mrf.mxu0
      %v1259 = vadd.f32 0.0, %v1258
      %1260 = vdwg.mxu0
      %v1263 = vunpack.c.l.b16 %v216
      %v1264 = vunpack.c.l.b16 %v217
      %v1265 = vpack.c.b16 %v1264, %v1263
      %v1268 = vunpack.c.l.b16 %v472
      %v1269 = vunpack.c.l.b16 %v473
      %v1270 = vpack.c.b16 %v1269, %v1268
      %v1272 = vsel %vm700, %v1265, 0
      %v1275 = vsel %vm700, %v1270, 0
      %1277 = vmatpush.bf16.xpose.msra.mxu0 0
      %1278 = vmatpush.bf16.xpose.msra.mxu0 0
      %1279 = vmatpush.bf16.xpose.msra.mxu0 0
      %1280 = vmatpush.bf16.xpose.msra.mxu0 0
      %1281 = vmatpush.bf16.xpose.msra.mxu0 0
      %1282 = vmatpush.bf16.xpose.msra.mxu0 0
      %1283 = vmatpush.bf16.xpose.msra.mxu0 0
      %1284 = vmatpush.bf16.xpose.msra.mxu0 %v1275
      %1285 = vmatmul.bf16.gmra.mxu0 %v1272
      %v1286 = vpop.f32.mrf.mxu0
      %v1287 = vadd.f32 0.0, %v1286
      %v1288 = vpop.f32.mrf.mxu0
      %v1289 = vadd.f32 0.0, %v1288
      %1290 = vdwg.mxu0
      %v1293 = vunpack.c.l.b16 %v218
      %v1294 = vunpack.c.l.b16 %v219
      %v1295 = vpack.c.b16 %v1294, %v1293
      %v1298 = vunpack.c.l.b16 %v474
      %v1299 = vunpack.c.l.b16 %v475
      %v1300 = vpack.c.b16 %v1299, %v1298
      %v1302 = vsel %vm700, %v1295, 0
      %v1305 = vsel %vm700, %v1300, 0
      %1307 = vmatpush.bf16.xpose.msra.mxu0 0
      %1308 = vmatpush.bf16.xpose.msra.mxu0 0
      %1309 = vmatpush.bf16.xpose.msra.mxu0 0
      %1310 = vmatpush.bf16.xpose.msra.mxu0 0
      %1311 = vmatpush.bf16.xpose.msra.mxu0 0
      %1312 = vmatpush.bf16.xpose.msra.mxu0 0
      %1313 = vmatpush.bf16.xpose.msra.mxu0 0
      %1314 = vmatpush.bf16.xpose.msra.mxu0 %v1305
      %1315 = vmatmul.bf16.gmra.mxu0 %v1302
      %v1316 = vpop.f32.mrf.mxu0
      %v1317 = vadd.f32 0.0, %v1316
      %v1318 = vpop.f32.mrf.mxu0
      %v1319 = vadd.f32 0.0, %v1318
      %1320 = vdwg.mxu0
      %v1323 = vunpack.c.l.b16 %v220
      %v1324 = vunpack.c.l.b16 %v221
      %v1325 = vpack.c.b16 %v1324, %v1323
      %v1328 = vunpack.c.l.b16 %v476
      %v1329 = vunpack.c.l.b16 %v477
      %v1330 = vpack.c.b16 %v1329, %v1328
      %v1332 = vsel %vm700, %v1325, 0
      %v1335 = vsel %vm700, %v1330, 0
      %1337 = vmatpush.bf16.xpose.msra.mxu0 0
      %1338 = vmatpush.bf16.xpose.msra.mxu0 0
      %1339 = vmatpush.bf16.xpose.msra.mxu0 0
      %1340 = vmatpush.bf16.xpose.msra.mxu0 0
      %1341 = vmatpush.bf16.xpose.msra.mxu0 0
      %1342 = vmatpush.bf16.xpose.msra.mxu0 0
      %1343 = vmatpush.bf16.xpose.msra.mxu0 0
      %1344 = vmatpush.bf16.xpose.msra.mxu0 %v1335
      %1345 = vmatmul.bf16.gmra.mxu0 %v1332
      %v1346 = vpop.f32.mrf.mxu0
      %v1347 = vadd.f32 0.0, %v1346
      %v1348 = vpop.f32.mrf.mxu0
      %v1349 = vadd.f32 0.0, %v1348
      %1350 = vdwg.mxu0
      %v1353 = vunpack.c.l.b16 %v222
      %v1354 = vunpack.c.l.b16 %v223
      %v1355 = vpack.c.b16 %v1354, %v1353
      %v1358 = vunpack.c.l.b16 %v478
      %v1359 = vunpack.c.l.b16 %v479
      %v1360 = vpack.c.b16 %v1359, %v1358
      %v1362 = vsel %vm700, %v1355, 0
      %v1365 = vsel %vm700, %v1360, 0
      %1367 = vmatpush.bf16.xpose.msra.mxu0 0
      %1368 = vmatpush.bf16.xpose.msra.mxu0 0
      %1369 = vmatpush.bf16.xpose.msra.mxu0 0
      %1370 = vmatpush.bf16.xpose.msra.mxu0 0
      %1371 = vmatpush.bf16.xpose.msra.mxu0 0
      %1372 = vmatpush.bf16.xpose.msra.mxu0 0
      %1373 = vmatpush.bf16.xpose.msra.mxu0 0
      %1374 = vmatpush.bf16.xpose.msra.mxu0 %v1365
      %1375 = vmatmul.bf16.gmra.mxu0 %v1362
      %v1376 = vpop.f32.mrf.mxu0
      %v1377 = vadd.f32 0.0, %v1376
      %v1378 = vpop.f32.mrf.mxu0
      %v1379 = vadd.f32 0.0, %v1378
      %1380 = vdwg.mxu0
      %v1383 = vunpack.c.l.b16 %v224
      %v1384 = vunpack.c.l.b16 %v225
      %v1385 = vpack.c.b16 %v1384, %v1383
      %v1388 = vunpack.c.l.b16 %v480
      %v1389 = vunpack.c.l.b16 %v481
      %v1390 = vpack.c.b16 %v1389, %v1388
      %v1392 = vsel %vm700, %v1385, 0
      %v1395 = vsel %vm700, %v1390, 0
      %1397 = vmatpush.bf16.xpose.msra.mxu0 0
      %1398 = vmatpush.bf16.xpose.msra.mxu0 0
      %1399 = vmatpush.bf16.xpose.msra.mxu0 0
      %1400 = vmatpush.bf16.xpose.msra.mxu0 0
      %1401 = vmatpush.bf16.xpose.msra.mxu0 0
      %1402 = vmatpush.bf16.xpose.msra.mxu0 0
      %1403 = vmatpush.bf16.xpose.msra.mxu0 0
      %1404 = vmatpush.bf16.xpose.msra.mxu0 %v1395
      %1405 = vmatmul.bf16.gmra.mxu0 %v1392
      %v1406 = vpop.f32.mrf.mxu0
      %v1407 = vadd.f32 0.0, %v1406
      %v1408 = vpop.f32.mrf.mxu0
      %v1409 = vadd.f32 0.0, %v1408
      %1410 = vdwg.mxu0
      %v1413 = vunpack.c.l.b16 %v226
      %v1414 = vunpack.c.l.b16 %v227
      %v1415 = vpack.c.b16 %v1414, %v1413
      %v1418 = vunpack.c.l.b16 %v482
      %v1419 = vunpack.c.l.b16 %v483
      %v1420 = vpack.c.b16 %v1419, %v1418
      %v1422 = vsel %vm700, %v1415, 0
      %v1425 = vsel %vm700, %v1420, 0
      %1427 = vmatpush.bf16.xpose.msra.mxu0 0
      %1428 = vmatpush.bf16.xpose.msra.mxu0 0
      %1429 = vmatpush.bf16.xpose.msra.mxu0 0
      %1430 = vmatpush.bf16.xpose.msra.mxu0 0
      %1431 = vmatpush.bf16.xpose.msra.mxu0 0
      %1432 = vmatpush.bf16.xpose.msra.mxu0 0
      %1433 = vmatpush.bf16.xpose.msra.mxu0 0
      %1434 = vmatpush.bf16.xpose.msra.mxu0 %v1425
      %1435 = vmatmul.bf16.gmra.mxu0 %v1422
      %v1436 = vpop.f32.mrf.mxu0
      %v1437 = vadd.f32 0.0, %v1436
      %v1438 = vpop.f32.mrf.mxu0
      %v1439 = vadd.f32 0.0, %v1438
      %1440 = vdwg.mxu0
      %v1443 = vunpack.c.l.b16 %v228
      %v1444 = vunpack.c.l.b16 %v229
      %v1445 = vpack.c.b16 %v1444, %v1443
      %v1448 = vunpack.c.l.b16 %v484
      %v1449 = vunpack.c.l.b16 %v485
      %v1450 = vpack.c.b16 %v1449, %v1448
      %v1452 = vsel %vm700, %v1445, 0
      %v1455 = vsel %vm700, %v1450, 0
      %1457 = vmatpush.bf16.xpose.msra.mxu0 0
      %1458 = vmatpush.bf16.xpose.msra.mxu0 0
      %1459 = vmatpush.bf16.xpose.msra.mxu0 0
      %1460 = vmatpush.bf16.xpose.msra.mxu0 0
      %1461 = vmatpush.bf16.xpose.msra.mxu0 0
      %1462 = vmatpush.bf16.xpose.msra.mxu0 0
      %1463 = vmatpush.bf16.xpose.msra.mxu0 0
      %1464 = vmatpush.bf16.xpose.msra.mxu0 %v1455
      %1465 = vmatmul.bf16.gmra.mxu0 %v1452
      %v1466 = vpop.f32.mrf.mxu0
      %v1467 = vadd.f32 0.0, %v1466
      %v1468 = vpop.f32.mrf.mxu0
      %v1469 = vadd.f32 0.0, %v1468
      %1470 = vdwg.mxu0
      %v1473 = vunpack.c.l.b16 %v230
      %v1474 = vunpack.c.l.b16 %v231
      %v1475 = vpack.c.b16 %v1474, %v1473
      %v1478 = vunpack.c.l.b16 %v486
      %v1479 = vunpack.c.l.b16 %v487
      %v1480 = vpack.c.b16 %v1479, %v1478
      %v1482 = vsel %vm700, %v1475, 0
      %v1485 = vsel %vm700, %v1480, 0
      %1487 = vmatpush.bf16.xpose.msra.mxu0 0
      %1488 = vmatpush.bf16.xpose.msra.mxu0 0
      %1489 = vmatpush.bf16.xpose.msra.mxu0 0
      %1490 = vmatpush.bf16.xpose.msra.mxu0 0
      %1491 = vmatpush.bf16.xpose.msra.mxu0 0
      %1492 = vmatpush.bf16.xpose.msra.mxu0 0
      %1493 = vmatpush.bf16.xpose.msra.mxu0 0
      %1494 = vmatpush.bf16.xpose.msra.mxu0 %v1485
      %1495 = vmatmul.bf16.gmra.mxu0 %v1482
      %v1496 = vpop.f32.mrf.mxu0
      %v1497 = vadd.f32 0.0, %v1496
      %v1498 = vpop.f32.mrf.mxu0
      %v1499 = vadd.f32 0.0, %v1498
      %1500 = vdwg.mxu0
      %v1503 = vunpack.c.l.b16 %v232
      %v1504 = vunpack.c.l.b16 %v233
      %v1505 = vpack.c.b16 %v1504, %v1503
      %v1508 = vunpack.c.l.b16 %v488
      %v1509 = vunpack.c.l.b16 %v489
      %v1510 = vpack.c.b16 %v1509, %v1508
      %v1512 = vsel %vm700, %v1505, 0
      %v1515 = vsel %vm700, %v1510, 0
      %1517 = vmatpush.bf16.xpose.msra.mxu0 0
      %1518 = vmatpush.bf16.xpose.msra.mxu0 0
      %1519 = vmatpush.bf16.xpose.msra.mxu0 0
      %1520 = vmatpush.bf16.xpose.msra.mxu0 0
      %1521 = vmatpush.bf16.xpose.msra.mxu0 0
      %1522 = vmatpush.bf16.xpose.msra.mxu0 0
      %1523 = vmatpush.bf16.xpose.msra.mxu0 0
      %1524 = vmatpush.bf16.xpose.msra.mxu0 %v1515
      %1525 = vmatmul.bf16.gmra.mxu0 %v1512
      %v1526 = vpop.f32.mrf.mxu0
      %v1527 = vadd.f32 0.0, %v1526
      %v1528 = vpop.f32.mrf.mxu0
      %v1529 = vadd.f32 0.0, %v1528
      %1530 = vdwg.mxu0
      %v1533 = vunpack.c.l.b16 %v234
      %v1534 = vunpack.c.l.b16 %v235
      %v1535 = vpack.c.b16 %v1534, %v1533
      %v1538 = vunpack.c.l.b16 %v490
      %v1539 = vunpack.c.l.b16 %v491
      %v1540 = vpack.c.b16 %v1539, %v1538
      %v1542 = vsel %vm700, %v1535, 0
      %v1545 = vsel %vm700, %v1540, 0
      %1547 = vmatpush.bf16.xpose.msra.mxu0 0
      %1548 = vmatpush.bf16.xpose.msra.mxu0 0
      %1549 = vmatpush.bf16.xpose.msra.mxu0 0
      %1550 = vmatpush.bf16.xpose.msra.mxu0 0
      %1551 = vmatpush.bf16.xpose.msra.mxu0 0
      %1552 = vmatpush.bf16.xpose.msra.mxu0 0
      %1553 = vmatpush.bf16.xpose.msra.mxu0 0
      %1554 = vmatpush.bf16.xpose.msra.mxu0 %v1545
      %1555 = vmatmul.bf16.gmra.mxu0 %v1542
      %v1556 = vpop.f32.mrf.mxu0
      %v1557 = vadd.f32 0.0, %v1556
      %v1558 = vpop.f32.mrf.mxu0
      %v1559 = vadd.f32 0.0, %v1558
      %1560 = vdwg.mxu0
      %v1563 = vunpack.c.l.b16 %v236
      %v1564 = vunpack.c.l.b16 %v237
      %v1565 = vpack.c.b16 %v1564, %v1563
      %v1568 = vunpack.c.l.b16 %v492
      %v1569 = vunpack.c.l.b16 %v493
      %v1570 = vpack.c.b16 %v1569, %v1568
      %v1572 = vsel %vm700, %v1565, 0
      %v1575 = vsel %vm700, %v1570, 0
      %1577 = vmatpush.bf16.xpose.msra.mxu0 0
      %1578 = vmatpush.bf16.xpose.msra.mxu0 0
      %1579 = vmatpush.bf16.xpose.msra.mxu0 0
      %1580 = vmatpush.bf16.xpose.msra.mxu0 0
      %1581 = vmatpush.bf16.xpose.msra.mxu0 0
      %1582 = vmatpush.bf16.xpose.msra.mxu0 0
      %1583 = vmatpush.bf16.xpose.msra.mxu0 0
      %1584 = vmatpush.bf16.xpose.msra.mxu0 %v1575
      %1585 = vmatmul.bf16.gmra.mxu0 %v1572
      %v1586 = vpop.f32.mrf.mxu0
      %v1587 = vadd.f32 0.0, %v1586
      %v1588 = vpop.f32.mrf.mxu0
      %v1589 = vadd.f32 0.0, %v1588
      %1590 = vdwg.mxu0
      %v1593 = vunpack.c.l.b16 %v238
      %v1594 = vunpack.c.l.b16 %v239
      %v1595 = vpack.c.b16 %v1594, %v1593
      %v1598 = vunpack.c.l.b16 %v494
      %v1599 = vunpack.c.l.b16 %v495
      %v1600 = vpack.c.b16 %v1599, %v1598
      %v1602 = vsel %vm700, %v1595, 0
      %v1605 = vsel %vm700, %v1600, 0
      %1607 = vmatpush.bf16.xpose.msra.mxu0 0
      %1608 = vmatpush.bf16.xpose.msra.mxu0 0
      %1609 = vmatpush.bf16.xpose.msra.mxu0 0
      %1610 = vmatpush.bf16.xpose.msra.mxu0 0
      %1611 = vmatpush.bf16.xpose.msra.mxu0 0
      %1612 = vmatpush.bf16.xpose.msra.mxu0 0
      %1613 = vmatpush.bf16.xpose.msra.mxu0 0
      %1614 = vmatpush.bf16.xpose.msra.mxu0 %v1605
      %1615 = vmatmul.bf16.gmra.mxu0 %v1602
      %v1616 = vpop.f32.mrf.mxu0
      %v1617 = vadd.f32 0.0, %v1616
      %v1618 = vpop.f32.mrf.mxu0
      %v1619 = vadd.f32 0.0, %v1618
      %1620 = vdwg.mxu0
      %v1623 = vunpack.c.l.b16 %v240
      %v1624 = vunpack.c.l.b16 %v241
      %v1625 = vpack.c.b16 %v1624, %v1623
      %v1628 = vunpack.c.l.b16 %v496
      %v1629 = vunpack.c.l.b16 %v497
      %v1630 = vpack.c.b16 %v1629, %v1628
      %v1632 = vsel %vm700, %v1625, 0
      %v1635 = vsel %vm700, %v1630, 0
      %1637 = vmatpush.bf16.xpose.msra.mxu0 0
      %1638 = vmatpush.bf16.xpose.msra.mxu0 0
      %1639 = vmatpush.bf16.xpose.msra.mxu0 0
      %1640 = vmatpush.bf16.xpose.msra.mxu0 0
      %1641 = vmatpush.bf16.xpose.msra.mxu0 0
      %1642 = vmatpush.bf16.xpose.msra.mxu0 0
      %1643 = vmatpush.bf16.xpose.msra.mxu0 0
      %1644 = vmatpush.bf16.xpose.msra.mxu0 %v1635
      %1645 = vmatmul.bf16.gmra.mxu0 %v1632
      %v1646 = vpop.f32.mrf.mxu0
      %v1647 = vadd.f32 0.0, %v1646
      %v1648 = vpop.f32.mrf.mxu0
      %v1649 = vadd.f32 0.0, %v1648
      %1650 = vdwg.mxu0
      %v1653 = vunpack.c.l.b16 %v242
      %v1654 = vunpack.c.l.b16 %v243
      %v1655 = vpack.c.b16 %v1654, %v1653
      %v1658 = vunpack.c.l.b16 %v498
      %v1659 = vunpack.c.l.b16 %v499
      %v1660 = vpack.c.b16 %v1659, %v1658
      %v1662 = vsel %vm700, %v1655, 0
      %v1665 = vsel %vm700, %v1660, 0
      %1667 = vmatpush.bf16.xpose.msra.mxu0 0
      %1668 = vmatpush.bf16.xpose.msra.mxu0 0
      %1669 = vmatpush.bf16.xpose.msra.mxu0 0
      %1670 = vmatpush.bf16.xpose.msra.mxu0 0
      %1671 = vmatpush.bf16.xpose.msra.mxu0 0
      %1672 = vmatpush.bf16.xpose.msra.mxu0 0
      %1673 = vmatpush.bf16.xpose.msra.mxu0 0
      %1674 = vmatpush.bf16.xpose.msra.mxu0 %v1665
      %1675 = vmatmul.bf16.gmra.mxu0 %v1662
      %v1676 = vpop.f32.mrf.mxu0
      %v1677 = vadd.f32 0.0, %v1676
      %v1678 = vpop.f32.mrf.mxu0
      %v1679 = vadd.f32 0.0, %v1678
      %1680 = vdwg.mxu0
      %v1683 = vunpack.c.l.b16 %v244
      %v1684 = vunpack.c.l.b16 %v245
      %v1685 = vpack.c.b16 %v1684, %v1683
      %v1688 = vunpack.c.l.b16 %v500
      %v1689 = vunpack.c.l.b16 %v501
      %v1690 = vpack.c.b16 %v1689, %v1688
      %v1692 = vsel %vm700, %v1685, 0
      %v1695 = vsel %vm700, %v1690, 0
      %1697 = vmatpush.bf16.xpose.msra.mxu0 0
      %1698 = vmatpush.bf16.xpose.msra.mxu0 0
      %1699 = vmatpush.bf16.xpose.msra.mxu0 0
      %1700 = vmatpush.bf16.xpose.msra.mxu0 0
      %1701 = vmatpush.bf16.xpose.msra.mxu0 0
      %1702 = vmatpush.bf16.xpose.msra.mxu0 0
      %1703 = vmatpush.bf16.xpose.msra.mxu0 0
      %1704 = vmatpush.bf16.xpose.msra.mxu0 %v1695
      %1705 = vmatmul.bf16.gmra.mxu0 %v1692
      %v1706 = vpop.f32.mrf.mxu0
      %v1707 = vadd.f32 0.0, %v1706
      %v1708 = vpop.f32.mrf.mxu0
      %v1709 = vadd.f32 0.0, %v1708
      %1710 = vdwg.mxu0
      %v1713 = vunpack.c.l.b16 %v246
      %v1714 = vunpack.c.l.b16 %v247
      %v1715 = vpack.c.b16 %v1714, %v1713
      %v1718 = vunpack.c.l.b16 %v502
      %v1719 = vunpack.c.l.b16 %v503
      %v1720 = vpack.c.b16 %v1719, %v1718
      %v1722 = vsel %vm700, %v1715, 0
      %v1725 = vsel %vm700, %v1720, 0
      %1727 = vmatpush.bf16.xpose.msra.mxu0 0
      %1728 = vmatpush.bf16.xpose.msra.mxu0 0
      %1729 = vmatpush.bf16.xpose.msra.mxu0 0
      %1730 = vmatpush.bf16.xpose.msra.mxu0 0
      %1731 = vmatpush.bf16.xpose.msra.mxu0 0
      %1732 = vmatpush.bf16.xpose.msra.mxu0 0
      %1733 = vmatpush.bf16.xpose.msra.mxu0 0
      %1734 = vmatpush.bf16.xpose.msra.mxu0 %v1725
      %1735 = vmatmul.bf16.gmra.mxu0 %v1722
      %v1736 = vpop.f32.mrf.mxu0
      %v1737 = vadd.f32 0.0, %v1736
      %v1738 = vpop.f32.mrf.mxu0
      %v1739 = vadd.f32 0.0, %v1738
      %1740 = vdwg.mxu0
      %v1743 = vunpack.c.l.b16 %v248
      %v1744 = vunpack.c.l.b16 %v249
      %v1745 = vpack.c.b16 %v1744, %v1743
      %v1748 = vunpack.c.l.b16 %v504
      %v1749 = vunpack.c.l.b16 %v505
      %v1750 = vpack.c.b16 %v1749, %v1748
      %v1752 = vsel %vm700, %v1745, 0
      %v1755 = vsel %vm700, %v1750, 0
      %1757 = vmatpush.bf16.xpose.msra.mxu0 0
      %1758 = vmatpush.bf16.xpose.msra.mxu0 0
      %1759 = vmatpush.bf16.xpose.msra.mxu0 0
      %1760 = vmatpush.bf16.xpose.msra.mxu0 0
      %1761 = vmatpush.bf16.xpose.msra.mxu0 0
      %1762 = vmatpush.bf16.xpose.msra.mxu0 0
      %1763 = vmatpush.bf16.xpose.msra.mxu0 0
      %1764 = vmatpush.bf16.xpose.msra.mxu0 %v1755
      %1765 = vmatmul.bf16.gmra.mxu0 %v1752
      %v1766 = vpop.f32.mrf.mxu0
      %v1767 = vadd.f32 0.0, %v1766
      %v1768 = vpop.f32.mrf.mxu0
      %v1769 = vadd.f32 0.0, %v1768
      %1770 = vdwg.mxu0
      %v1773 = vunpack.c.l.b16 %v250
      %v1774 = vunpack.c.l.b16 %v251
      %v1775 = vpack.c.b16 %v1774, %v1773
      %v1778 = vunpack.c.l.b16 %v506
      %v1779 = vunpack.c.l.b16 %v507
      %v1780 = vpack.c.b16 %v1779, %v1778
      %v1782 = vsel %vm700, %v1775, 0
      %v1785 = vsel %vm700, %v1780, 0
      %1787 = vmatpush.bf16.xpose.msra.mxu0 0
      %1788 = vmatpush.bf16.xpose.msra.mxu0 0
      %1789 = vmatpush.bf16.xpose.msra.mxu0 0
      %1790 = vmatpush.bf16.xpose.msra.mxu0 0
      %1791 = vmatpush.bf16.xpose.msra.mxu0 0
      %1792 = vmatpush.bf16.xpose.msra.mxu0 0
      %1793 = vmatpush.bf16.xpose.msra.mxu0 0
      %1794 = vmatpush.bf16.xpose.msra.mxu0 %v1785
      %1795 = vmatmul.bf16.gmra.mxu0 %v1782
      %v1796 = vpop.f32.mrf.mxu0
      %v1797 = vadd.f32 0.0, %v1796
      %v1798 = vpop.f32.mrf.mxu0
      %v1799 = vadd.f32 0.0, %v1798
      %1800 = vdwg.mxu0
      %v1803 = vunpack.c.l.b16 %v252
      %v1804 = vunpack.c.l.b16 %v253
      %v1805 = vpack.c.b16 %v1804, %v1803
      %v1808 = vunpack.c.l.b16 %v508
      %v1809 = vunpack.c.l.b16 %v509
      %v1810 = vpack.c.b16 %v1809, %v1808
      %v1812 = vsel %vm700, %v1805, 0
      %v1815 = vsel %vm700, %v1810, 0
      %1817 = vmatpush.bf16.xpose.msra.mxu0 0
      %1818 = vmatpush.bf16.xpose.msra.mxu0 0
      %1819 = vmatpush.bf16.xpose.msra.mxu0 0
      %1820 = vmatpush.bf16.xpose.msra.mxu0 0
      %1821 = vmatpush.bf16.xpose.msra.mxu0 0
      %1822 = vmatpush.bf16.xpose.msra.mxu0 0
      %1823 = vmatpush.bf16.xpose.msra.mxu0 0
      %1824 = vmatpush.bf16.xpose.msra.mxu0 %v1815
      %1825 = vmatmul.bf16.gmra.mxu0 %v1812
      %v1826 = vpop.f32.mrf.mxu0
      %v1827 = vadd.f32 0.0, %v1826
      %v1828 = vpop.f32.mrf.mxu0
      %v1829 = vadd.f32 0.0, %v1828
      %1830 = vdwg.mxu0
      %v1833 = vunpack.c.l.b16 %v254
      %v1834 = vunpack.c.l.b16 %v255
      %v1835 = vpack.c.b16 %v1834, %v1833
      %v1838 = vunpack.c.l.b16 %v510
      %v1839 = vunpack.c.l.b16 %v511
      %v1840 = vpack.c.b16 %v1839, %v1838
      %v1842 = vsel %vm700, %v1835, 0
      %v1845 = vsel %vm700, %v1840, 0
      %1847 = vmatpush.bf16.xpose.msra.mxu0 0
      %1848 = vmatpush.bf16.xpose.msra.mxu0 0
      %1849 = vmatpush.bf16.xpose.msra.mxu0 0
      %1850 = vmatpush.bf16.xpose.msra.mxu0 0
      %1851 = vmatpush.bf16.xpose.msra.mxu0 0
      %1852 = vmatpush.bf16.xpose.msra.mxu0 0
      %1853 = vmatpush.bf16.xpose.msra.mxu0 0
      %1854 = vmatpush.bf16.xpose.msra.mxu0 %v1845
      %1855 = vmatmul.bf16.gmra.mxu0 %v1842
      %v1856 = vpop.f32.mrf.mxu0
      %v1857 = vadd.f32 0.0, %v1856
      %v1858 = vpop.f32.mrf.mxu0
      %v1859 = vadd.f32 0.0, %v1858
      %1860 = vdwg.mxu0
      %v1863 = vunpack.c.l.b16 %v256
      %v1864 = vunpack.c.l.b16 %v257
      %v1865 = vpack.c.b16 %v1864, %v1863
      %v1868 = vunpack.c.l.b16 %v512
      %v1869 = vunpack.c.l.b16 %v513
      %v1870 = vpack.c.b16 %v1869, %v1868
      %v1872 = vsel %vm700, %v1865, 0
      %v1875 = vsel %vm700, %v1870, 0
      %1877 = vmatpush.bf16.xpose.msra.mxu0 0
      %1878 = vmatpush.bf16.xpose.msra.mxu0 0
      %1879 = vmatpush.bf16.xpose.msra.mxu0 0
      %1880 = vmatpush.bf16.xpose.msra.mxu0 0
      %1881 = vmatpush.bf16.xpose.msra.mxu0 0
      %1882 = vmatpush.bf16.xpose.msra.mxu0 0
      %1883 = vmatpush.bf16.xpose.msra.mxu0 0
      %1884 = vmatpush.bf16.xpose.msra.mxu0 %v1875
      %1885 = vmatmul.bf16.gmra.mxu0 %v1872
      %v1886 = vpop.f32.mrf.mxu0
      %v1887 = vadd.f32 0.0, %v1886
      %v1888 = vpop.f32.mrf.mxu0
      %v1889 = vadd.f32 0.0, %v1888
      %1890 = vdwg.mxu0
      %v1893 = vunpack.c.l.b16 %v258
      %v1894 = vunpack.c.l.b16 %v259
      %v1895 = vpack.c.b16 %v1894, %v1893
      %v1898 = vunpack.c.l.b16 %v514
      %v1899 = vunpack.c.l.b16 %v515
      %v1900 = vpack.c.b16 %v1899, %v1898
      %v1902 = vsel %vm700, %v1895, 0
      %v1905 = vsel %vm700, %v1900, 0
      %1907 = vmatpush.bf16.xpose.msra.mxu0 0
      %1908 = vmatpush.bf16.xpose.msra.mxu0 0
      %1909 = vmatpush.bf16.xpose.msra.mxu0 0
      %1910 = vmatpush.bf16.xpose.msra.mxu0 0
      %1911 = vmatpush.bf16.xpose.msra.mxu0 0
      %1912 = vmatpush.bf16.xpose.msra.mxu0 0
      %1913 = vmatpush.bf16.xpose.msra.mxu0 0
      %1914 = vmatpush.bf16.xpose.msra.mxu0 %v1905
      %1915 = vmatmul.bf16.gmra.mxu0 %v1902
      %v1916 = vpop.f32.mrf.mxu0
      %v1917 = vadd.f32 0.0, %v1916
      %v1918 = vpop.f32.mrf.mxu0
      %v1919 = vadd.f32 0.0, %v1918
      %1920 = vdwg.mxu0
      %v1923 = vunpack.c.l.b16 %v260
      %v1924 = vunpack.c.l.b16 %v261
      %v1925 = vpack.c.b16 %v1924, %v1923
      %v1928 = vunpack.c.l.b16 %v516
      %v1929 = vunpack.c.l.b16 %v517
      %v1930 = vpack.c.b16 %v1929, %v1928
      %v1932 = vsel %vm700, %v1925, 0
      %v1935 = vsel %vm700, %v1930, 0
      %1937 = vmatpush.bf16.xpose.msra.mxu0 0
      %1938 = vmatpush.bf16.xpose.msra.mxu0 0
      %1939 = vmatpush.bf16.xpose.msra.mxu0 0
      %1940 = vmatpush.bf16.xpose.msra.mxu0 0
      %1941 = vmatpush.bf16.xpose.msra.mxu0 0
      %1942 = vmatpush.bf16.xpose.msra.mxu0 0
      %1943 = vmatpush.bf16.xpose.msra.mxu0 0
      %1944 = vmatpush.bf16.xpose.msra.mxu0 %v1935
      %1945 = vmatmul.bf16.gmra.mxu0 %v1932
      %v1946 = vpop.f32.mrf.mxu0
      %v1947 = vadd.f32 0.0, %v1946
      %v1948 = vpop.f32.mrf.mxu0
      %v1949 = vadd.f32 0.0, %v1948
      %1950 = vdwg.mxu0
      %v1953 = vunpack.c.l.b16 %v262
      %v1954 = vunpack.c.l.b16 %v263
      %v1955 = vpack.c.b16 %v1954, %v1953
      %v1958 = vunpack.c.l.b16 %v518
      %v1959 = vunpack.c.l.b16 %v519
      %v1960 = vpack.c.b16 %v1959, %v1958
      %v1962 = vsel %vm700, %v1955, 0
      %v1965 = vsel %vm700, %v1960, 0
      %1967 = vmatpush.bf16.xpose.msra.mxu0 0
      %1968 = vmatpush.bf16.xpose.msra.mxu0 0
      %1969 = vmatpush.bf16.xpose.msra.mxu0 0
      %1970 = vmatpush.bf16.xpose.msra.mxu0 0
      %1971 = vmatpush.bf16.xpose.msra.mxu0 0
      %1972 = vmatpush.bf16.xpose.msra.mxu0 0
      %1973 = vmatpush.bf16.xpose.msra.mxu0 0
      %1974 = vmatpush.bf16.xpose.msra.mxu0 %v1965
      %1975 = vmatmul.bf16.gmra.mxu0 %v1962
      %v1976 = vpop.f32.mrf.mxu0
      %v1977 = vadd.f32 0.0, %v1976
      %v1978 = vpop.f32.mrf.mxu0
      %v1979 = vadd.f32 0.0, %v1978
      %1980 = vdwg.mxu0
      %v1983 = vunpack.c.l.b16 %v264
      %v1984 = vunpack.c.l.b16 %v265
      %v1985 = vpack.c.b16 %v1984, %v1983
      %v1988 = vunpack.c.l.b16 %v520
      %v1989 = vunpack.c.l.b16 %v521
      %v1990 = vpack.c.b16 %v1989, %v1988
      %v1992 = vsel %vm700, %v1985, 0
      %v1995 = vsel %vm700, %v1990, 0
      %1997 = vmatpush.bf16.xpose.msra.mxu0 0
      %1998 = vmatpush.bf16.xpose.msra.mxu0 0
      %1999 = vmatpush.bf16.xpose.msra.mxu0 0
      %2000 = vmatpush.bf16.xpose.msra.mxu0 0
      %2001 = vmatpush.bf16.xpose.msra.mxu0 0
      %2002 = vmatpush.bf16.xpose.msra.mxu0 0
      %2003 = vmatpush.bf16.xpose.msra.mxu0 0
      %2004 = vmatpush.bf16.xpose.msra.mxu0 %v1995
      %2005 = vmatmul.bf16.gmra.mxu0 %v1992
      %v2006 = vpop.f32.mrf.mxu0
      %v2007 = vadd.f32 0.0, %v2006
      %v2008 = vpop.f32.mrf.mxu0
      %v2009 = vadd.f32 0.0, %v2008
      %2010 = vdwg.mxu0
      %v2013 = vunpack.c.l.b16 %v266
      %v2014 = vunpack.c.l.b16 %v267
      %v2015 = vpack.c.b16 %v2014, %v2013
      %v2018 = vunpack.c.l.b16 %v522
      %v2019 = vunpack.c.l.b16 %v523
      %v2020 = vpack.c.b16 %v2019, %v2018
      %v2022 = vsel %vm700, %v2015, 0
      %v2025 = vsel %vm700, %v2020, 0
      %2027 = vmatpush.bf16.xpose.msra.mxu0 0
      %2028 = vmatpush.bf16.xpose.msra.mxu0 0
      %2029 = vmatpush.bf16.xpose.msra.mxu0 0
      %2030 = vmatpush.bf16.xpose.msra.mxu0 0
      %2031 = vmatpush.bf16.xpose.msra.mxu0 0
      %2032 = vmatpush.bf16.xpose.msra.mxu0 0
      %2033 = vmatpush.bf16.xpose.msra.mxu0 0
      %2034 = vmatpush.bf16.xpose.msra.mxu0 %v2025
      %2035 = vmatmul.bf16.gmra.mxu0 %v2022
      %v2036 = vpop.f32.mrf.mxu0
      %v2037 = vadd.f32 0.0, %v2036
      %v2038 = vpop.f32.mrf.mxu0
      %v2039 = vadd.f32 0.0, %v2038
      %2040 = vdwg.mxu0
      %v2043 = vunpack.c.l.b16 %v268
      %v2044 = vunpack.c.l.b16 %v269
      %v2045 = vpack.c.b16 %v2044, %v2043
      %v2048 = vunpack.c.l.b16 %v524
      %v2049 = vunpack.c.l.b16 %v525
      %v2050 = vpack.c.b16 %v2049, %v2048
      %v2052 = vsel %vm700, %v2045, 0
      %v2055 = vsel %vm700, %v2050, 0
      %2057 = vmatpush.bf16.xpose.msra.mxu0 0
      %2058 = vmatpush.bf16.xpose.msra.mxu0 0
      %2059 = vmatpush.bf16.xpose.msra.mxu0 0
      %2060 = vmatpush.bf16.xpose.msra.mxu0 0
      %2061 = vmatpush.bf16.xpose.msra.mxu0 0
      %2062 = vmatpush.bf16.xpose.msra.mxu0 0
      %2063 = vmatpush.bf16.xpose.msra.mxu0 0
      %2064 = vmatpush.bf16.xpose.msra.mxu0 %v2055
      %2065 = vmatmul.bf16.gmra.mxu0 %v2052
      %v2066 = vpop.f32.mrf.mxu0
      %v2067 = vadd.f32 0.0, %v2066
      %v2068 = vpop.f32.mrf.mxu0
      %v2069 = vadd.f32 0.0, %v2068
      %2070 = vdwg.mxu0
      %v2073 = vunpack.c.l.b16 %v270
      %v2074 = vunpack.c.l.b16 %v271
      %v2075 = vpack.c.b16 %v2074, %v2073
      %v2078 = vunpack.c.l.b16 %v526
      %v2079 = vunpack.c.l.b16 %v527
      %v2080 = vpack.c.b16 %v2079, %v2078
      %v2082 = vsel %vm700, %v2075, 0
      %v2085 = vsel %vm700, %v2080, 0
      %2087 = vmatpush.bf16.xpose.msra.mxu0 0
      %2088 = vmatpush.bf16.xpose.msra.mxu0 0
      %2089 = vmatpush.bf16.xpose.msra.mxu0 0
      %2090 = vmatpush.bf16.xpose.msra.mxu0 0
      %2091 = vmatpush.bf16.xpose.msra.mxu0 0
      %2092 = vmatpush.bf16.xpose.msra.mxu0 0
      %2093 = vmatpush.bf16.xpose.msra.mxu0 0
      %2094 = vmatpush.bf16.xpose.msra.mxu0 %v2085
      %2095 = vmatmul.bf16.gmra.mxu0 %v2082
      %v2096 = vpop.f32.mrf.mxu0
      %v2097 = vadd.f32 0.0, %v2096
      %v2098 = vpop.f32.mrf.mxu0
      %v2099 = vadd.f32 0.0, %v2098
      %2100 = vdwg.mxu0
      %v2103 = vunpack.c.l.b16 %v272
      %v2104 = vunpack.c.l.b16 %v273
      %v2105 = vpack.c.b16 %v2104, %v2103
      %v2108 = vunpack.c.l.b16 %v528
      %v2109 = vunpack.c.l.b16 %v529
      %v2110 = vpack.c.b16 %v2109, %v2108
      %v2112 = vsel %vm700, %v2105, 0
      %v2115 = vsel %vm700, %v2110, 0
      %2117 = vmatpush.bf16.xpose.msra.mxu0 0
      %2118 = vmatpush.bf16.xpose.msra.mxu0 0
      %2119 = vmatpush.bf16.xpose.msra.mxu0 0
      %2120 = vmatpush.bf16.xpose.msra.mxu0 0
      %2121 = vmatpush.bf16.xpose.msra.mxu0 0
      %2122 = vmatpush.bf16.xpose.msra.mxu0 0
      %2123 = vmatpush.bf16.xpose.msra.mxu0 0
      %2124 = vmatpush.bf16.xpose.msra.mxu0 %v2115
      %2125 = vmatmul.bf16.gmra.mxu0 %v2112
      %v2126 = vpop.f32.mrf.mxu0
      %v2127 = vadd.f32 0.0, %v2126
      %v2128 = vpop.f32.mrf.mxu0
      %v2129 = vadd.f32 0.0, %v2128
      %2130 = vdwg.mxu0
      %v2133 = vunpack.c.l.b16 %v274
      %v2134 = vunpack.c.l.b16 %v275
      %v2135 = vpack.c.b16 %v2134, %v2133
      %v2138 = vunpack.c.l.b16 %v530
      %v2139 = vunpack.c.l.b16 %v531
      %v2140 = vpack.c.b16 %v2139, %v2138
      %v2142 = vsel %vm700, %v2135, 0
      %v2145 = vsel %vm700, %v2140, 0
      %2147 = vmatpush.bf16.xpose.msra.mxu0 0
      %2148 = vmatpush.bf16.xpose.msra.mxu0 0
      %2149 = vmatpush.bf16.xpose.msra.mxu0 0
      %2150 = vmatpush.bf16.xpose.msra.mxu0 0
      %2151 = vmatpush.bf16.xpose.msra.mxu0 0
      %2152 = vmatpush.bf16.xpose.msra.mxu0 0
      %2153 = vmatpush.bf16.xpose.msra.mxu0 0
      %2154 = vmatpush.bf16.xpose.msra.mxu0 %v2145
      %2155 = vmatmul.bf16.gmra.mxu0 %v2142
      %v2156 = vpop.f32.mrf.mxu0
      %v2157 = vadd.f32 0.0, %v2156
      %v2158 = vpop.f32.mrf.mxu0
      %v2159 = vadd.f32 0.0, %v2158
      %2160 = vdwg.mxu0
      %v2163 = vunpack.c.l.b16 %v276
      %v2164 = vunpack.c.l.b16 %v277
      %v2165 = vpack.c.b16 %v2164, %v2163
      %v2168 = vunpack.c.l.b16 %v532
      %v2169 = vunpack.c.l.b16 %v533
      %v2170 = vpack.c.b16 %v2169, %v2168
      %v2172 = vsel %vm700, %v2165, 0
      %v2175 = vsel %vm700, %v2170, 0
      %2177 = vmatpush.bf16.xpose.msra.mxu0 0
      %2178 = vmatpush.bf16.xpose.msra.mxu0 0
      %2179 = vmatpush.bf16.xpose.msra.mxu0 0
      %2180 = vmatpush.bf16.xpose.msra.mxu0 0
      %2181 = vmatpush.bf16.xpose.msra.mxu0 0
      %2182 = vmatpush.bf16.xpose.msra.mxu0 0
      %2183 = vmatpush.bf16.xpose.msra.mxu0 0
      %2184 = vmatpush.bf16.xpose.msra.mxu0 %v2175
      %2185 = vmatmul.bf16.gmra.mxu0 %v2172
      %v2186 = vpop.f32.mrf.mxu0
      %v2187 = vadd.f32 0.0, %v2186
      %v2188 = vpop.f32.mrf.mxu0
      %v2189 = vadd.f32 0.0, %v2188
      %2190 = vdwg.mxu0
      %v2193 = vunpack.c.l.b16 %v278
      %v2194 = vunpack.c.l.b16 %v279
      %v2195 = vpack.c.b16 %v2194, %v2193
      %v2198 = vunpack.c.l.b16 %v534
      %v2199 = vunpack.c.l.b16 %v535
      %v2200 = vpack.c.b16 %v2199, %v2198
      %v2202 = vsel %vm700, %v2195, 0
      %v2205 = vsel %vm700, %v2200, 0
      %2207 = vmatpush.bf16.xpose.msra.mxu0 0
      %2208 = vmatpush.bf16.xpose.msra.mxu0 0
      %2209 = vmatpush.bf16.xpose.msra.mxu0 0
      %2210 = vmatpush.bf16.xpose.msra.mxu0 0
      %2211 = vmatpush.bf16.xpose.msra.mxu0 0
      %2212 = vmatpush.bf16.xpose.msra.mxu0 0
      %2213 = vmatpush.bf16.xpose.msra.mxu0 0
      %2214 = vmatpush.bf16.xpose.msra.mxu0 %v2205
      %2215 = vmatmul.bf16.gmra.mxu0 %v2202
      %v2216 = vpop.f32.mrf.mxu0
      %v2217 = vadd.f32 0.0, %v2216
      %v2218 = vpop.f32.mrf.mxu0
      %v2219 = vadd.f32 0.0, %v2218
      %2220 = vdwg.mxu0
      %v2223 = vunpack.c.l.b16 %v280
      %v2224 = vunpack.c.l.b16 %v281
      %v2225 = vpack.c.b16 %v2224, %v2223
      %v2228 = vunpack.c.l.b16 %v536
      %v2229 = vunpack.c.l.b16 %v537
      %v2230 = vpack.c.b16 %v2229, %v2228
      %v2232 = vsel %vm700, %v2225, 0
      %v2235 = vsel %vm700, %v2230, 0
      %2237 = vmatpush.bf16.xpose.msra.mxu0 0
      %2238 = vmatpush.bf16.xpose.msra.mxu0 0
      %2239 = vmatpush.bf16.xpose.msra.mxu0 0
      %2240 = vmatpush.bf16.xpose.msra.mxu0 0
      %2241 = vmatpush.bf16.xpose.msra.mxu0 0
      %2242 = vmatpush.bf16.xpose.msra.mxu0 0
      %2243 = vmatpush.bf16.xpose.msra.mxu0 0
      %2244 = vmatpush.bf16.xpose.msra.mxu0 %v2235
      %2245 = vmatmul.bf16.gmra.mxu0 %v2232
      %v2246 = vpop.f32.mrf.mxu0
      %v2247 = vadd.f32 0.0, %v2246
      %v2248 = vpop.f32.mrf.mxu0
      %v2249 = vadd.f32 0.0, %v2248
      %2250 = vdwg.mxu0
      %v2253 = vunpack.c.l.b16 %v282
      %v2254 = vunpack.c.l.b16 %v283
      %v2255 = vpack.c.b16 %v2254, %v2253
      %v2258 = vunpack.c.l.b16 %v538
      %v2259 = vunpack.c.l.b16 %v539
      %v2260 = vpack.c.b16 %v2259, %v2258
      %v2262 = vsel %vm700, %v2255, 0
      %v2265 = vsel %vm700, %v2260, 0
      %2267 = vmatpush.bf16.xpose.msra.mxu0 0
      %2268 = vmatpush.bf16.xpose.msra.mxu0 0
      %2269 = vmatpush.bf16.xpose.msra.mxu0 0
      %2270 = vmatpush.bf16.xpose.msra.mxu0 0
      %2271 = vmatpush.bf16.xpose.msra.mxu0 0
      %2272 = vmatpush.bf16.xpose.msra.mxu0 0
      %2273 = vmatpush.bf16.xpose.msra.mxu0 0
      %2274 = vmatpush.bf16.xpose.msra.mxu0 %v2265
      %2275 = vmatmul.bf16.gmra.mxu0 %v2262
      %v2276 = vpop.f32.mrf.mxu0
      %v2277 = vadd.f32 0.0, %v2276
      %v2278 = vpop.f32.mrf.mxu0
      %v2279 = vadd.f32 0.0, %v2278
      %2280 = vdwg.mxu0
      %v2283 = vunpack.c.l.b16 %v284
      %v2284 = vunpack.c.l.b16 %v285
      %v2285 = vpack.c.b16 %v2284, %v2283
      %v2288 = vunpack.c.l.b16 %v540
      %v2289 = vunpack.c.l.b16 %v541
      %v2290 = vpack.c.b16 %v2289, %v2288
      %v2292 = vsel %vm700, %v2285, 0
      %v2295 = vsel %vm700, %v2290, 0
      %2297 = vmatpush.bf16.xpose.msra.mxu0 0
      %2298 = vmatpush.bf16.xpose.msra.mxu0 0
      %2299 = vmatpush.bf16.xpose.msra.mxu0 0
      %2300 = vmatpush.bf16.xpose.msra.mxu0 0
      %2301 = vmatpush.bf16.xpose.msra.mxu0 0
      %2302 = vmatpush.bf16.xpose.msra.mxu0 0
      %2303 = vmatpush.bf16.xpose.msra.mxu0 0
      %2304 = vmatpush.bf16.xpose.msra.mxu0 %v2295
      %2305 = vmatmul.bf16.gmra.mxu0 %v2292
      %v2306 = vpop.f32.mrf.mxu0
      %v2307 = vadd.f32 0.0, %v2306
      %v2308 = vpop.f32.mrf.mxu0
      %v2309 = vadd.f32 0.0, %v2308
      %2310 = vdwg.mxu0
      %v2313 = vunpack.c.l.b16 %v286
      %v2314 = vunpack.c.l.b16 %v287
      %v2315 = vpack.c.b16 %v2314, %v2313
      %v2318 = vunpack.c.l.b16 %v542
      %v2319 = vunpack.c.l.b16 %v543
      %v2320 = vpack.c.b16 %v2319, %v2318
      %v2322 = vsel %vm700, %v2315, 0
      %v2325 = vsel %vm700, %v2320, 0
      %2327 = vmatpush.bf16.xpose.msra.mxu0 0
      %2328 = vmatpush.bf16.xpose.msra.mxu0 0
      %2329 = vmatpush.bf16.xpose.msra.mxu0 0
      %2330 = vmatpush.bf16.xpose.msra.mxu0 0
      %2331 = vmatpush.bf16.xpose.msra.mxu0 0
      %2332 = vmatpush.bf16.xpose.msra.mxu0 0
      %2333 = vmatpush.bf16.xpose.msra.mxu0 0
      %2334 = vmatpush.bf16.xpose.msra.mxu0 %v2325
      %2335 = vmatmul.bf16.gmra.mxu0 %v2322
      %v2336 = vpop.f32.mrf.mxu0
      %v2337 = vadd.f32 0.0, %v2336
      %v2338 = vpop.f32.mrf.mxu0
      %v2339 = vadd.f32 0.0, %v2338
      %2340 = vdwg.mxu0
      %v2343 = vunpack.c.l.b16 %v288
      %v2344 = vunpack.c.l.b16 %v289
      %v2345 = vpack.c.b16 %v2344, %v2343
      %v2348 = vunpack.c.l.b16 %v544
      %v2349 = vunpack.c.l.b16 %v545
      %v2350 = vpack.c.b16 %v2349, %v2348
      %v2352 = vsel %vm700, %v2345, 0
      %v2355 = vsel %vm700, %v2350, 0
      %2357 = vmatpush.bf16.xpose.msra.mxu0 0
      %2358 = vmatpush.bf16.xpose.msra.mxu0 0
      %2359 = vmatpush.bf16.xpose.msra.mxu0 0
      %2360 = vmatpush.bf16.xpose.msra.mxu0 0
      %2361 = vmatpush.bf16.xpose.msra.mxu0 0
      %2362 = vmatpush.bf16.xpose.msra.mxu0 0
      %2363 = vmatpush.bf16.xpose.msra.mxu0 0
      %2364 = vmatpush.bf16.xpose.msra.mxu0 %v2355
      %2365 = vmatmul.bf16.gmra.mxu0 %v2352
      %v2366 = vpop.f32.mrf.mxu0
      %v2367 = vadd.f32 0.0, %v2366
      %v2368 = vpop.f32.mrf.mxu0
      %v2369 = vadd.f32 0.0, %v2368
      %2370 = vdwg.mxu0
      %v2373 = vunpack.c.l.b16 %v290
      %v2374 = vunpack.c.l.b16 %v291
      %v2375 = vpack.c.b16 %v2374, %v2373
      %v2378 = vunpack.c.l.b16 %v546
      %v2379 = vunpack.c.l.b16 %v547
      %v2380 = vpack.c.b16 %v2379, %v2378
      %v2382 = vsel %vm700, %v2375, 0
      %v2385 = vsel %vm700, %v2380, 0
      %2387 = vmatpush.bf16.xpose.msra.mxu0 0
      %2388 = vmatpush.bf16.xpose.msra.mxu0 0
      %2389 = vmatpush.bf16.xpose.msra.mxu0 0
      %2390 = vmatpush.bf16.xpose.msra.mxu0 0
      %2391 = vmatpush.bf16.xpose.msra.mxu0 0
      %2392 = vmatpush.bf16.xpose.msra.mxu0 0
      %2393 = vmatpush.bf16.xpose.msra.mxu0 0
      %2394 = vmatpush.bf16.xpose.msra.mxu0 %v2385
      %2395 = vmatmul.bf16.gmra.mxu0 %v2382
      %v2396 = vpop.f32.mrf.mxu0
      %v2397 = vadd.f32 0.0, %v2396
      %v2398 = vpop.f32.mrf.mxu0
      %v2399 = vadd.f32 0.0, %v2398
      %2400 = vdwg.mxu0
      %v2403 = vunpack.c.l.b16 %v292
      %v2404 = vunpack.c.l.b16 %v293
      %v2405 = vpack.c.b16 %v2404, %v2403
      %v2408 = vunpack.c.l.b16 %v548
      %v2409 = vunpack.c.l.b16 %v549
      %v2410 = vpack.c.b16 %v2409, %v2408
      %v2412 = vsel %vm700, %v2405, 0
      %v2415 = vsel %vm700, %v2410, 0
      %2417 = vmatpush.bf16.xpose.msra.mxu0 0
      %2418 = vmatpush.bf16.xpose.msra.mxu0 0
      %2419 = vmatpush.bf16.xpose.msra.mxu0 0
      %2420 = vmatpush.bf16.xpose.msra.mxu0 0
      %2421 = vmatpush.bf16.xpose.msra.mxu0 0
      %2422 = vmatpush.bf16.xpose.msra.mxu0 0
      %2423 = vmatpush.bf16.xpose.msra.mxu0 0
      %2424 = vmatpush.bf16.xpose.msra.mxu0 %v2415
      %2425 = vmatmul.bf16.gmra.mxu0 %v2412
      %v2426 = vpop.f32.mrf.mxu0
      %v2427 = vadd.f32 0.0, %v2426
      %v2428 = vpop.f32.mrf.mxu0
      %v2429 = vadd.f32 0.0, %v2428
      %2430 = vdwg.mxu0
      %v2433 = vunpack.c.l.b16 %v294
      %v2434 = vunpack.c.l.b16 %v295
      %v2435 = vpack.c.b16 %v2434, %v2433
      %v2438 = vunpack.c.l.b16 %v550
      %v2439 = vunpack.c.l.b16 %v551
      %v2440 = vpack.c.b16 %v2439, %v2438
      %v2442 = vsel %vm700, %v2435, 0
      %v2445 = vsel %vm700, %v2440, 0
      %2447 = vmatpush.bf16.xpose.msra.mxu0 0
      %2448 = vmatpush.bf16.xpose.msra.mxu0 0
      %2449 = vmatpush.bf16.xpose.msra.mxu0 0
      %2450 = vmatpush.bf16.xpose.msra.mxu0 0
      %2451 = vmatpush.bf16.xpose.msra.mxu0 0
      %2452 = vmatpush.bf16.xpose.msra.mxu0 0
      %2453 = vmatpush.bf16.xpose.msra.mxu0 0
      %2454 = vmatpush.bf16.xpose.msra.mxu0 %v2445
      %2455 = vmatmul.bf16.gmra.mxu0 %v2442
      %v2456 = vpop.f32.mrf.mxu0
      %v2457 = vadd.f32 0.0, %v2456
      %v2458 = vpop.f32.mrf.mxu0
      %v2459 = vadd.f32 0.0, %v2458
      %2460 = vdwg.mxu0
      %v2463 = vunpack.c.l.b16 %v296
      %v2464 = vunpack.c.l.b16 %v297
      %v2465 = vpack.c.b16 %v2464, %v2463
      %v2468 = vunpack.c.l.b16 %v552
      %v2469 = vunpack.c.l.b16 %v553
      %v2470 = vpack.c.b16 %v2469, %v2468
      %v2472 = vsel %vm700, %v2465, 0
      %v2475 = vsel %vm700, %v2470, 0
      %2477 = vmatpush.bf16.xpose.msra.mxu0 0
      %2478 = vmatpush.bf16.xpose.msra.mxu0 0
      %2479 = vmatpush.bf16.xpose.msra.mxu0 0
      %2480 = vmatpush.bf16.xpose.msra.mxu0 0
      %2481 = vmatpush.bf16.xpose.msra.mxu0 0
      %2482 = vmatpush.bf16.xpose.msra.mxu0 0
      %2483 = vmatpush.bf16.xpose.msra.mxu0 0
      %2484 = vmatpush.bf16.xpose.msra.mxu0 %v2475
      %2485 = vmatmul.bf16.gmra.mxu0 %v2472
      %v2486 = vpop.f32.mrf.mxu0
      %v2487 = vadd.f32 0.0, %v2486
      %v2488 = vpop.f32.mrf.mxu0
      %v2489 = vadd.f32 0.0, %v2488
      %2490 = vdwg.mxu0
      %v2493 = vunpack.c.l.b16 %v298
      %v2494 = vunpack.c.l.b16 %v299
      %v2495 = vpack.c.b16 %v2494, %v2493
      %v2498 = vunpack.c.l.b16 %v554
      %v2499 = vunpack.c.l.b16 %v555
      %v2500 = vpack.c.b16 %v2499, %v2498
      %v2502 = vsel %vm700, %v2495, 0
      %v2505 = vsel %vm700, %v2500, 0
      %2507 = vmatpush.bf16.xpose.msra.mxu0 0
      %2508 = vmatpush.bf16.xpose.msra.mxu0 0
      %2509 = vmatpush.bf16.xpose.msra.mxu0 0
      %2510 = vmatpush.bf16.xpose.msra.mxu0 0
      %2511 = vmatpush.bf16.xpose.msra.mxu0 0
      %2512 = vmatpush.bf16.xpose.msra.mxu0 0
      %2513 = vmatpush.bf16.xpose.msra.mxu0 0
      %2514 = vmatpush.bf16.xpose.msra.mxu0 %v2505
      %2515 = vmatmul.bf16.gmra.mxu0 %v2502
      %v2516 = vpop.f32.mrf.mxu0
      %v2517 = vadd.f32 0.0, %v2516
      %v2518 = vpop.f32.mrf.mxu0
      %v2519 = vadd.f32 0.0, %v2518
      %2520 = vdwg.mxu0
      %v2523 = vunpack.c.l.b16 %v300
      %v2524 = vunpack.c.l.b16 %v301
      %v2525 = vpack.c.b16 %v2524, %v2523
      %v2528 = vunpack.c.l.b16 %v556
      %v2529 = vunpack.c.l.b16 %v557
      %v2530 = vpack.c.b16 %v2529, %v2528
      %v2532 = vsel %vm700, %v2525, 0
      %v2535 = vsel %vm700, %v2530, 0
      %2537 = vmatpush.bf16.xpose.msra.mxu0 0
      %2538 = vmatpush.bf16.xpose.msra.mxu0 0
      %2539 = vmatpush.bf16.xpose.msra.mxu0 0
      %2540 = vmatpush.bf16.xpose.msra.mxu0 0
      %2541 = vmatpush.bf16.xpose.msra.mxu0 0
      %2542 = vmatpush.bf16.xpose.msra.mxu0 0
      %2543 = vmatpush.bf16.xpose.msra.mxu0 0
      %2544 = vmatpush.bf16.xpose.msra.mxu0 %v2535
      %2545 = vmatmul.bf16.gmra.mxu0 %v2532
      %v2546 = vpop.f32.mrf.mxu0
      %v2547 = vadd.f32 0.0, %v2546
      %v2548 = vpop.f32.mrf.mxu0
      %v2549 = vadd.f32 0.0, %v2548
      %2550 = vdwg.mxu0
      %v2553 = vunpack.c.l.b16 %v302
      %v2554 = vunpack.c.l.b16 %v303
      %v2555 = vpack.c.b16 %v2554, %v2553
      %v2558 = vunpack.c.l.b16 %v558
      %v2559 = vunpack.c.l.b16 %v559
      %v2560 = vpack.c.b16 %v2559, %v2558
      %v2562 = vsel %vm700, %v2555, 0
      %v2565 = vsel %vm700, %v2560, 0
      %2567 = vmatpush.bf16.xpose.msra.mxu0 0
      %2568 = vmatpush.bf16.xpose.msra.mxu0 0
      %2569 = vmatpush.bf16.xpose.msra.mxu0 0
      %2570 = vmatpush.bf16.xpose.msra.mxu0 0
      %2571 = vmatpush.bf16.xpose.msra.mxu0 0
      %2572 = vmatpush.bf16.xpose.msra.mxu0 0
      %2573 = vmatpush.bf16.xpose.msra.mxu0 0
      %2574 = vmatpush.bf16.xpose.msra.mxu0 %v2565
      %2575 = vmatmul.bf16.gmra.mxu0 %v2562
      %v2576 = vpop.f32.mrf.mxu0
      %v2577 = vadd.f32 0.0, %v2576
      %v2578 = vpop.f32.mrf.mxu0
      %v2579 = vadd.f32 0.0, %v2578
      %2580 = vdwg.mxu0
      %v2583 = vunpack.c.l.b16 %v304
      %v2584 = vunpack.c.l.b16 %v305
      %v2585 = vpack.c.b16 %v2584, %v2583
      %v2588 = vunpack.c.l.b16 %v560
      %v2589 = vunpack.c.l.b16 %v561
      %v2590 = vpack.c.b16 %v2589, %v2588
      %v2592 = vsel %vm700, %v2585, 0
      %v2595 = vsel %vm700, %v2590, 0
      %2597 = vmatpush.bf16.xpose.msra.mxu0 0
      %2598 = vmatpush.bf16.xpose.msra.mxu0 0
      %2599 = vmatpush.bf16.xpose.msra.mxu0 0
      %2600 = vmatpush.bf16.xpose.msra.mxu0 0
      %2601 = vmatpush.bf16.xpose.msra.mxu0 0
      %2602 = vmatpush.bf16.xpose.msra.mxu0 0
      %2603 = vmatpush.bf16.xpose.msra.mxu0 0
      %2604 = vmatpush.bf16.xpose.msra.mxu0 %v2595
      %2605 = vmatmul.bf16.gmra.mxu0 %v2592
      %v2606 = vpop.f32.mrf.mxu0
      %v2607 = vadd.f32 0.0, %v2606
      %v2608 = vpop.f32.mrf.mxu0
      %v2609 = vadd.f32 0.0, %v2608
      %2610 = vdwg.mxu0
      %v2613 = vunpack.c.l.b16 %v306
      %v2614 = vunpack.c.l.b16 %v307
      %v2615 = vpack.c.b16 %v2614, %v2613
      %v2618 = vunpack.c.l.b16 %v562
      %v2619 = vunpack.c.l.b16 %v563
      %v2620 = vpack.c.b16 %v2619, %v2618
      %v2622 = vsel %vm700, %v2615, 0
      %v2625 = vsel %vm700, %v2620, 0
      %2627 = vmatpush.bf16.xpose.msra.mxu0 0
      %2628 = vmatpush.bf16.xpose.msra.mxu0 0
      %2629 = vmatpush.bf16.xpose.msra.mxu0 0
      %2630 = vmatpush.bf16.xpose.msra.mxu0 0
      %2631 = vmatpush.bf16.xpose.msra.mxu0 0
      %2632 = vmatpush.bf16.xpose.msra.mxu0 0
      %2633 = vmatpush.bf16.xpose.msra.mxu0 0
      %2634 = vmatpush.bf16.xpose.msra.mxu0 %v2625
      %2635 = vmatmul.bf16.gmra.mxu0 %v2622
      %v2636 = vpop.f32.mrf.mxu0
      %v2637 = vadd.f32 0.0, %v2636
      %v2638 = vpop.f32.mrf.mxu0
      %v2639 = vadd.f32 0.0, %v2638
      %2640 = vdwg.mxu0
      %v2643 = vunpack.c.l.b16 %v308
      %v2644 = vunpack.c.l.b16 %v309
      %v2645 = vpack.c.b16 %v2644, %v2643
      %v2648 = vunpack.c.l.b16 %v564
      %v2649 = vunpack.c.l.b16 %v565
      %v2650 = vpack.c.b16 %v2649, %v2648
      %v2652 = vsel %vm700, %v2645, 0
      %v2655 = vsel %vm700, %v2650, 0
      %2657 = vmatpush.bf16.xpose.msra.mxu0 0
      %2658 = vmatpush.bf16.xpose.msra.mxu0 0
      %2659 = vmatpush.bf16.xpose.msra.mxu0 0
      %2660 = vmatpush.bf16.xpose.msra.mxu0 0
      %2661 = vmatpush.bf16.xpose.msra.mxu0 0
      %2662 = vmatpush.bf16.xpose.msra.mxu0 0
      %2663 = vmatpush.bf16.xpose.msra.mxu0 0
      %2664 = vmatpush.bf16.xpose.msra.mxu0 %v2655
      %2665 = vmatmul.bf16.gmra.mxu0 %v2652
      %v2666 = vpop.f32.mrf.mxu0
      %v2667 = vadd.f32 0.0, %v2666
      %v2668 = vpop.f32.mrf.mxu0
      %v2669 = vadd.f32 0.0, %v2668
      %2670 = vdwg.mxu0
      %v2673 = vunpack.c.l.b16 %v310
      %v2674 = vunpack.c.l.b16 %v311
      %v2675 = vpack.c.b16 %v2674, %v2673
      %v2678 = vunpack.c.l.b16 %v566
      %v2679 = vunpack.c.l.b16 %v567
      %v2680 = vpack.c.b16 %v2679, %v2678
      %v2682 = vsel %vm700, %v2675, 0
      %v2685 = vsel %vm700, %v2680, 0
      %2687 = vmatpush.bf16.xpose.msra.mxu0 0
      %2688 = vmatpush.bf16.xpose.msra.mxu0 0
      %2689 = vmatpush.bf16.xpose.msra.mxu0 0
      %2690 = vmatpush.bf16.xpose.msra.mxu0 0
      %2691 = vmatpush.bf16.xpose.msra.mxu0 0
      %2692 = vmatpush.bf16.xpose.msra.mxu0 0
      %2693 = vmatpush.bf16.xpose.msra.mxu0 0
      %2694 = vmatpush.bf16.xpose.msra.mxu0 %v2685
      %2695 = vmatmul.bf16.gmra.mxu0 %v2682
      %v2696 = vpop.f32.mrf.mxu0
      %v2697 = vadd.f32 0.0, %v2696
      %v2698 = vpop.f32.mrf.mxu0
      %v2699 = vadd.f32 0.0, %v2698
      %2700 = vdwg.mxu0
      %v2703 = vunpack.c.l.b16 %v312
      %v2704 = vunpack.c.l.b16 %v313
      %v2705 = vpack.c.b16 %v2704, %v2703
      %v2708 = vunpack.c.l.b16 %v568
      %v2709 = vunpack.c.l.b16 %v569
      %v2710 = vpack.c.b16 %v2709, %v2708
      %v2712 = vsel %vm700, %v2705, 0
      %v2715 = vsel %vm700, %v2710, 0
      %2717 = vmatpush.bf16.xpose.msra.mxu0 0
      %2718 = vmatpush.bf16.xpose.msra.mxu0 0
      %2719 = vmatpush.bf16.xpose.msra.mxu0 0
      %2720 = vmatpush.bf16.xpose.msra.mxu0 0
      %2721 = vmatpush.bf16.xpose.msra.mxu0 0
      %2722 = vmatpush.bf16.xpose.msra.mxu0 0
      %2723 = vmatpush.bf16.xpose.msra.mxu0 0
      %2724 = vmatpush.bf16.xpose.msra.mxu0 %v2715
      %2725 = vmatmul.bf16.gmra.mxu0 %v2712
      %v2726 = vpop.f32.mrf.mxu0
      %v2727 = vadd.f32 0.0, %v2726
      %v2728 = vpop.f32.mrf.mxu0
      %v2729 = vadd.f32 0.0, %v2728
      %2730 = vdwg.mxu0
      %v2733 = vunpack.c.l.b16 %v314
      %v2734 = vunpack.c.l.b16 %v315
      %v2735 = vpack.c.b16 %v2734, %v2733
      %v2738 = vunpack.c.l.b16 %v570
      %v2739 = vunpack.c.l.b16 %v571
      %v2740 = vpack.c.b16 %v2739, %v2738
      %v2742 = vsel %vm700, %v2735, 0
      %v2745 = vsel %vm700, %v2740, 0
      %2747 = vmatpush.bf16.xpose.msra.mxu0 0
      %2748 = vmatpush.bf16.xpose.msra.mxu0 0
      %2749 = vmatpush.bf16.xpose.msra.mxu0 0
      %2750 = vmatpush.bf16.xpose.msra.mxu0 0
      %2751 = vmatpush.bf16.xpose.msra.mxu0 0
      %2752 = vmatpush.bf16.xpose.msra.mxu0 0
      %2753 = vmatpush.bf16.xpose.msra.mxu0 0
      %2754 = vmatpush.bf16.xpose.msra.mxu0 %v2745
      %2755 = vmatmul.bf16.gmra.mxu0 %v2742
      %v2756 = vpop.f32.mrf.mxu0
      %v2757 = vadd.f32 0.0, %v2756
      %v2758 = vpop.f32.mrf.mxu0
      %v2759 = vadd.f32 0.0, %v2758
      %2760 = vdwg.mxu0
      %v2763 = vunpack.c.l.b16 %v316
      %v2764 = vunpack.c.l.b16 %v317
      %v2765 = vpack.c.b16 %v2764, %v2763
      %v2768 = vunpack.c.l.b16 %v572
      %v2769 = vunpack.c.l.b16 %v573
      %v2770 = vpack.c.b16 %v2769, %v2768
      %v2772 = vsel %vm700, %v2765, 0
      %v2775 = vsel %vm700, %v2770, 0
      %2777 = vmatpush.bf16.xpose.msra.mxu0 0
      %2778 = vmatpush.bf16.xpose.msra.mxu0 0
      %2779 = vmatpush.bf16.xpose.msra.mxu0 0
      %2780 = vmatpush.bf16.xpose.msra.mxu0 0
      %2781 = vmatpush.bf16.xpose.msra.mxu0 0
      %2782 = vmatpush.bf16.xpose.msra.mxu0 0
      %2783 = vmatpush.bf16.xpose.msra.mxu0 0
      %2784 = vmatpush.bf16.xpose.msra.mxu0 %v2775
      %2785 = vmatmul.bf16.gmra.mxu0 %v2772
      %v2786 = vpop.f32.mrf.mxu0
      %v2787 = vadd.f32 0.0, %v2786
      %v2788 = vpop.f32.mrf.mxu0
      %v2789 = vadd.f32 0.0, %v2788
      %2790 = vdwg.mxu0
      %v2793 = vunpack.c.l.b16 %v318
      %v2794 = vunpack.c.l.b16 %v319
      %v2795 = vpack.c.b16 %v2794, %v2793
      %v2798 = vunpack.c.l.b16 %v574
      %v2799 = vunpack.c.l.b16 %v575
      %v2800 = vpack.c.b16 %v2799, %v2798
      %v2802 = vsel %vm700, %v2795, 0
      %v2805 = vsel %vm700, %v2800, 0
      %2807 = vmatpush.bf16.xpose.msra.mxu0 0
      %2808 = vmatpush.bf16.xpose.msra.mxu0 0
      %2809 = vmatpush.bf16.xpose.msra.mxu0 0
      %2810 = vmatpush.bf16.xpose.msra.mxu0 0
      %2811 = vmatpush.bf16.xpose.msra.mxu0 0
      %2812 = vmatpush.bf16.xpose.msra.mxu0 0
      %2813 = vmatpush.bf16.xpose.msra.mxu0 0
      %2814 = vmatpush.bf16.xpose.msra.mxu0 %v2805
      %2815 = vmatmul.bf16.gmra.mxu0 %v2802
      %v2816 = vpop.f32.mrf.mxu0
      %v2817 = vadd.f32 0.0, %v2816
      %v2818 = vpop.f32.mrf.mxu0
      %v2819 = vadd.f32 0.0, %v2818
      %2820 = vdwg.mxu0
      %v2823 = vunpack.c.l.b16 %v320
      %v2824 = vunpack.c.l.b16 %v321
      %v2825 = vpack.c.b16 %v2824, %v2823
      %v2828 = vunpack.c.l.b16 %v576
      %v2829 = vunpack.c.l.b16 %v577
      %v2830 = vpack.c.b16 %v2829, %v2828
      %v2832 = vsel %vm700, %v2825, 0
      %v2835 = vsel %vm700, %v2830, 0
      %2837 = vmatpush.bf16.xpose.msra.mxu0 0
      %2838 = vmatpush.bf16.xpose.msra.mxu0 0
      %2839 = vmatpush.bf16.xpose.msra.mxu0 0
      %2840 = vmatpush.bf16.xpose.msra.mxu0 0
      %2841 = vmatpush.bf16.xpose.msra.mxu0 0
      %2842 = vmatpush.bf16.xpose.msra.mxu0 0
      %2843 = vmatpush.bf16.xpose.msra.mxu0 0
      %2844 = vmatpush.bf16.xpose.msra.mxu0 %v2835
      %2845 = vmatmul.bf16.gmra.mxu0 %v2832
      %v2846 = vpop.f32.mrf.mxu0
      %v2847 = vadd.f32 0.0, %v2846
      %v2848 = vpop.f32.mrf.mxu0
      %v2849 = vadd.f32 0.0, %v2848
      %2850 = vdwg.mxu0
      %v2853 = vunpack.c.l.b16 %v322
      %v2854 = vunpack.c.l.b16 %v323
      %v2855 = vpack.c.b16 %v2854, %v2853
      %v2858 = vunpack.c.l.b16 %v578
      %v2859 = vunpack.c.l.b16 %v579
      %v2860 = vpack.c.b16 %v2859, %v2858
      %v2862 = vsel %vm700, %v2855, 0
      %v2865 = vsel %vm700, %v2860, 0
      %2867 = vmatpush.bf16.xpose.msra.mxu0 0
      %2868 = vmatpush.bf16.xpose.msra.mxu0 0
      %2869 = vmatpush.bf16.xpose.msra.mxu0 0
      %2870 = vmatpush.bf16.xpose.msra.mxu0 0
      %2871 = vmatpush.bf16.xpose.msra.mxu0 0
      %2872 = vmatpush.bf16.xpose.msra.mxu0 0
      %2873 = vmatpush.bf16.xpose.msra.mxu0 0
      %2874 = vmatpush.bf16.xpose.msra.mxu0 %v2865
      %2875 = vmatmul.bf16.gmra.mxu0 %v2862
      %v2876 = vpop.f32.mrf.mxu0
      %v2877 = vadd.f32 0.0, %v2876
      %v2878 = vpop.f32.mrf.mxu0
      %v2879 = vadd.f32 0.0, %v2878
      %2880 = vdwg.mxu0
      %v2883 = vunpack.c.l.b16 %v324
      %v2884 = vunpack.c.l.b16 %v325
      %v2885 = vpack.c.b16 %v2884, %v2883
      %v2888 = vunpack.c.l.b16 %v580
      %v2889 = vunpack.c.l.b16 %v581
      %v2890 = vpack.c.b16 %v2889, %v2888
      %v2892 = vsel %vm700, %v2885, 0
      %v2895 = vsel %vm700, %v2890, 0
      %2897 = vmatpush.bf16.xpose.msra.mxu0 0
      %2898 = vmatpush.bf16.xpose.msra.mxu0 0
      %2899 = vmatpush.bf16.xpose.msra.mxu0 0
      %2900 = vmatpush.bf16.xpose.msra.mxu0 0
      %2901 = vmatpush.bf16.xpose.msra.mxu0 0
      %2902 = vmatpush.bf16.xpose.msra.mxu0 0
      %2903 = vmatpush.bf16.xpose.msra.mxu0 0
      %2904 = vmatpush.bf16.xpose.msra.mxu0 %v2895
      %2905 = vmatmul.bf16.gmra.mxu0 %v2892
      %v2906 = vpop.f32.mrf.mxu0
      %v2907 = vadd.f32 0.0, %v2906
      %v2908 = vpop.f32.mrf.mxu0
      %v2909 = vadd.f32 0.0, %v2908
      %2910 = vdwg.mxu0
      %v2913 = vunpack.c.l.b16 %v326
      %v2914 = vunpack.c.l.b16 %v327
      %v2915 = vpack.c.b16 %v2914, %v2913
      %v2918 = vunpack.c.l.b16 %v582
      %v2919 = vunpack.c.l.b16 %v583
      %v2920 = vpack.c.b16 %v2919, %v2918
      %v2922 = vsel %vm700, %v2915, 0
      %v2925 = vsel %vm700, %v2920, 0
      %2927 = vmatpush.bf16.xpose.msra.mxu0 0
      %2928 = vmatpush.bf16.xpose.msra.mxu0 0
      %2929 = vmatpush.bf16.xpose.msra.mxu0 0
      %2930 = vmatpush.bf16.xpose.msra.mxu0 0
      %2931 = vmatpush.bf16.xpose.msra.mxu0 0
      %2932 = vmatpush.bf16.xpose.msra.mxu0 0
      %2933 = vmatpush.bf16.xpose.msra.mxu0 0
      %2934 = vmatpush.bf16.xpose.msra.mxu0 %v2925
      %2935 = vmatmul.bf16.gmra.mxu0 %v2922
      %v2936 = vpop.f32.mrf.mxu0
      %v2937 = vadd.f32 0.0, %v2936
      %v2938 = vpop.f32.mrf.mxu0
      %v2939 = vadd.f32 0.0, %v2938
      %2940 = vdwg.mxu0
      %v2943 = vunpack.c.l.b16 %v328
      %v2944 = vunpack.c.l.b16 %v329
      %v2945 = vpack.c.b16 %v2944, %v2943
      %v2948 = vunpack.c.l.b16 %v584
      %v2949 = vunpack.c.l.b16 %v585
      %v2950 = vpack.c.b16 %v2949, %v2948
      %v2952 = vsel %vm700, %v2945, 0
      %v2955 = vsel %vm700, %v2950, 0
      %2957 = vmatpush.bf16.xpose.msra.mxu0 0
      %2958 = vmatpush.bf16.xpose.msra.mxu0 0
      %2959 = vmatpush.bf16.xpose.msra.mxu0 0
      %2960 = vmatpush.bf16.xpose.msra.mxu0 0
      %2961 = vmatpush.bf16.xpose.msra.mxu0 0
      %2962 = vmatpush.bf16.xpose.msra.mxu0 0
      %2963 = vmatpush.bf16.xpose.msra.mxu0 0
      %2964 = vmatpush.bf16.xpose.msra.mxu0 %v2955
      %2965 = vmatmul.bf16.gmra.mxu0 %v2952
      %v2966 = vpop.f32.mrf.mxu0
      %v2967 = vadd.f32 0.0, %v2966
      %v2968 = vpop.f32.mrf.mxu0
      %v2969 = vadd.f32 0.0, %v2968
      %2970 = vdwg.mxu0
      %v2973 = vunpack.c.l.b16 %v330
      %v2974 = vunpack.c.l.b16 %v331
      %v2975 = vpack.c.b16 %v2974, %v2973
      %v2978 = vunpack.c.l.b16 %v586
      %v2979 = vunpack.c.l.b16 %v587
      %v2980 = vpack.c.b16 %v2979, %v2978
      %v2982 = vsel %vm700, %v2975, 0
      %v2985 = vsel %vm700, %v2980, 0
      %2987 = vmatpush.bf16.xpose.msra.mxu0 0
      %2988 = vmatpush.bf16.xpose.msra.mxu0 0
      %2989 = vmatpush.bf16.xpose.msra.mxu0 0
      %2990 = vmatpush.bf16.xpose.msra.mxu0 0
      %2991 = vmatpush.bf16.xpose.msra.mxu0 0
      %2992 = vmatpush.bf16.xpose.msra.mxu0 0
      %2993 = vmatpush.bf16.xpose.msra.mxu0 0
      %2994 = vmatpush.bf16.xpose.msra.mxu0 %v2985
      %2995 = vmatmul.bf16.gmra.mxu0 %v2982
      %v2996 = vpop.f32.mrf.mxu0
      %v2997 = vadd.f32 0.0, %v2996
      %v2998 = vpop.f32.mrf.mxu0
      %v2999 = vadd.f32 0.0, %v2998
      %3000 = vdwg.mxu0
      %v3003 = vunpack.c.l.b16 %v332
      %v3004 = vunpack.c.l.b16 %v333
      %v3005 = vpack.c.b16 %v3004, %v3003
      %v3008 = vunpack.c.l.b16 %v588
      %v3009 = vunpack.c.l.b16 %v589
      %v3010 = vpack.c.b16 %v3009, %v3008
      %v3012 = vsel %vm700, %v3005, 0
      %v3015 = vsel %vm700, %v3010, 0
      %3017 = vmatpush.bf16.xpose.msra.mxu0 0
      %3018 = vmatpush.bf16.xpose.msra.mxu0 0
      %3019 = vmatpush.bf16.xpose.msra.mxu0 0
      %3020 = vmatpush.bf16.xpose.msra.mxu0 0
      %3021 = vmatpush.bf16.xpose.msra.mxu0 0
      %3022 = vmatpush.bf16.xpose.msra.mxu0 0
      %3023 = vmatpush.bf16.xpose.msra.mxu0 0
      %3024 = vmatpush.bf16.xpose.msra.mxu0 %v3015
      %3025 = vmatmul.bf16.gmra.mxu0 %v3012
      %v3026 = vpop.f32.mrf.mxu0
      %v3027 = vadd.f32 0.0, %v3026
      %v3028 = vpop.f32.mrf.mxu0
      %v3029 = vadd.f32 0.0, %v3028
      %3030 = vdwg.mxu0
      %v3033 = vunpack.c.l.b16 %v334
      %v3034 = vunpack.c.l.b16 %v335
      %v3035 = vpack.c.b16 %v3034, %v3033
      %v3038 = vunpack.c.l.b16 %v590
      %v3039 = vunpack.c.l.b16 %v591
      %v3040 = vpack.c.b16 %v3039, %v3038
      %v3042 = vsel %vm700, %v3035, 0
      %v3045 = vsel %vm700, %v3040, 0
      %3047 = vmatpush.bf16.xpose.msra.mxu0 0
      %3048 = vmatpush.bf16.xpose.msra.mxu0 0
      %3049 = vmatpush.bf16.xpose.msra.mxu0 0
      %3050 = vmatpush.bf16.xpose.msra.mxu0 0
      %3051 = vmatpush.bf16.xpose.msra.mxu0 0
      %3052 = vmatpush.bf16.xpose.msra.mxu0 0
      %3053 = vmatpush.bf16.xpose.msra.mxu0 0
      %3054 = vmatpush.bf16.xpose.msra.mxu0 %v3045
      %3055 = vmatmul.bf16.gmra.mxu0 %v3042
      %v3056 = vpop.f32.mrf.mxu0
      %v3057 = vadd.f32 0.0, %v3056
      %v3058 = vpop.f32.mrf.mxu0
      %v3059 = vadd.f32 0.0, %v3058
      %3060 = vdwg.mxu0
      %v3063 = vunpack.c.l.b16 %v336
      %v3064 = vunpack.c.l.b16 %v337
      %v3065 = vpack.c.b16 %v3064, %v3063
      %v3068 = vunpack.c.l.b16 %v592
      %v3069 = vunpack.c.l.b16 %v593
      %v3070 = vpack.c.b16 %v3069, %v3068
      %v3072 = vsel %vm700, %v3065, 0
      %v3075 = vsel %vm700, %v3070, 0
      %3077 = vmatpush.bf16.xpose.msra.mxu0 0
      %3078 = vmatpush.bf16.xpose.msra.mxu0 0
      %3079 = vmatpush.bf16.xpose.msra.mxu0 0
      %3080 = vmatpush.bf16.xpose.msra.mxu0 0
      %3081 = vmatpush.bf16.xpose.msra.mxu0 0
      %3082 = vmatpush.bf16.xpose.msra.mxu0 0
      %3083 = vmatpush.bf16.xpose.msra.mxu0 0
      %3084 = vmatpush.bf16.xpose.msra.mxu0 %v3075
      %3085 = vmatmul.bf16.gmra.mxu0 %v3072
      %v3086 = vpop.f32.mrf.mxu0
      %v3087 = vadd.f32 0.0, %v3086
      %v3088 = vpop.f32.mrf.mxu0
      %v3089 = vadd.f32 0.0, %v3088
      %3090 = vdwg.mxu0
      %v3093 = vunpack.c.l.b16 %v338
      %v3094 = vunpack.c.l.b16 %v339
      %v3095 = vpack.c.b16 %v3094, %v3093
      %v3098 = vunpack.c.l.b16 %v594
      %v3099 = vunpack.c.l.b16 %v595
      %v3100 = vpack.c.b16 %v3099, %v3098
      %v3102 = vsel %vm700, %v3095, 0
      %v3105 = vsel %vm700, %v3100, 0
      %3107 = vmatpush.bf16.xpose.msra.mxu0 0
      %3108 = vmatpush.bf16.xpose.msra.mxu0 0
      %3109 = vmatpush.bf16.xpose.msra.mxu0 0
      %3110 = vmatpush.bf16.xpose.msra.mxu0 0
      %3111 = vmatpush.bf16.xpose.msra.mxu0 0
      %3112 = vmatpush.bf16.xpose.msra.mxu0 0
      %3113 = vmatpush.bf16.xpose.msra.mxu0 0
      %3114 = vmatpush.bf16.xpose.msra.mxu0 %v3105
      %3115 = vmatmul.bf16.gmra.mxu0 %v3102
      %v3116 = vpop.f32.mrf.mxu0
      %v3117 = vadd.f32 0.0, %v3116
      %v3118 = vpop.f32.mrf.mxu0
      %v3119 = vadd.f32 0.0, %v3118
      %3120 = vdwg.mxu0
      %v3123 = vunpack.c.l.b16 %v340
      %v3124 = vunpack.c.l.b16 %v341
      %v3125 = vpack.c.b16 %v3124, %v3123
      %v3128 = vunpack.c.l.b16 %v596
      %v3129 = vunpack.c.l.b16 %v597
      %v3130 = vpack.c.b16 %v3129, %v3128
      %v3132 = vsel %vm700, %v3125, 0
      %v3135 = vsel %vm700, %v3130, 0
      %3137 = vmatpush.bf16.xpose.msra.mxu0 0
      %3138 = vmatpush.bf16.xpose.msra.mxu0 0
      %3139 = vmatpush.bf16.xpose.msra.mxu0 0
      %3140 = vmatpush.bf16.xpose.msra.mxu0 0
      %3141 = vmatpush.bf16.xpose.msra.mxu0 0
      %3142 = vmatpush.bf16.xpose.msra.mxu0 0
      %3143 = vmatpush.bf16.xpose.msra.mxu0 0
      %3144 = vmatpush.bf16.xpose.msra.mxu0 %v3135
      %3145 = vmatmul.bf16.gmra.mxu0 %v3132
      %v3146 = vpop.f32.mrf.mxu0
      %v3147 = vadd.f32 0.0, %v3146
      %v3148 = vpop.f32.mrf.mxu0
      %v3149 = vadd.f32 0.0, %v3148
      %3150 = vdwg.mxu0
      %v3153 = vunpack.c.l.b16 %v342
      %v3154 = vunpack.c.l.b16 %v343
      %v3155 = vpack.c.b16 %v3154, %v3153
      %v3158 = vunpack.c.l.b16 %v598
      %v3159 = vunpack.c.l.b16 %v599
      %v3160 = vpack.c.b16 %v3159, %v3158
      %v3162 = vsel %vm700, %v3155, 0
      %v3165 = vsel %vm700, %v3160, 0
      %3167 = vmatpush.bf16.xpose.msra.mxu0 0
      %3168 = vmatpush.bf16.xpose.msra.mxu0 0
      %3169 = vmatpush.bf16.xpose.msra.mxu0 0
      %3170 = vmatpush.bf16.xpose.msra.mxu0 0
      %3171 = vmatpush.bf16.xpose.msra.mxu0 0
      %3172 = vmatpush.bf16.xpose.msra.mxu0 0
      %3173 = vmatpush.bf16.xpose.msra.mxu0 0
      %3174 = vmatpush.bf16.xpose.msra.mxu0 %v3165
      %3175 = vmatmul.bf16.gmra.mxu0 %v3162
      %v3176 = vpop.f32.mrf.mxu0
      %v3177 = vadd.f32 0.0, %v3176
      %v3178 = vpop.f32.mrf.mxu0
      %v3179 = vadd.f32 0.0, %v3178
      %3180 = vdwg.mxu0
      %v3183 = vunpack.c.l.b16 %v344
      %v3184 = vunpack.c.l.b16 %v345
      %v3185 = vpack.c.b16 %v3184, %v3183
      %v3188 = vunpack.c.l.b16 %v600
      %v3189 = vunpack.c.l.b16 %v601
      %v3190 = vpack.c.b16 %v3189, %v3188
      %v3192 = vsel %vm700, %v3185, 0
      %v3195 = vsel %vm700, %v3190, 0
      %3197 = vmatpush.bf16.xpose.msra.mxu0 0
      %3198 = vmatpush.bf16.xpose.msra.mxu0 0
      %3199 = vmatpush.bf16.xpose.msra.mxu0 0
      %3200 = vmatpush.bf16.xpose.msra.mxu0 0
      %3201 = vmatpush.bf16.xpose.msra.mxu0 0
      %3202 = vmatpush.bf16.xpose.msra.mxu0 0
      %3203 = vmatpush.bf16.xpose.msra.mxu0 0
      %3204 = vmatpush.bf16.xpose.msra.mxu0 %v3195
      %3205 = vmatmul.bf16.gmra.mxu0 %v3192
      %v3206 = vpop.f32.mrf.mxu0
      %v3207 = vadd.f32 0.0, %v3206
      %v3208 = vpop.f32.mrf.mxu0
      %v3209 = vadd.f32 0.0, %v3208
      %3210 = vdwg.mxu0
      %v3213 = vunpack.c.l.b16 %v346
      %v3214 = vunpack.c.l.b16 %v347
      %v3215 = vpack.c.b16 %v3214, %v3213
      %v3218 = vunpack.c.l.b16 %v602
      %v3219 = vunpack.c.l.b16 %v603
      %v3220 = vpack.c.b16 %v3219, %v3218
      %v3222 = vsel %vm700, %v3215, 0
      %v3225 = vsel %vm700, %v3220, 0
      %3227 = vmatpush.bf16.xpose.msra.mxu0 0
      %3228 = vmatpush.bf16.xpose.msra.mxu0 0
      %3229 = vmatpush.bf16.xpose.msra.mxu0 0
      %3230 = vmatpush.bf16.xpose.msra.mxu0 0
      %3231 = vmatpush.bf16.xpose.msra.mxu0 0
      %3232 = vmatpush.bf16.xpose.msra.mxu0 0
      %3233 = vmatpush.bf16.xpose.msra.mxu0 0
      %3234 = vmatpush.bf16.xpose.msra.mxu0 %v3225
      %3235 = vmatmul.bf16.gmra.mxu0 %v3222
      %v3236 = vpop.f32.mrf.mxu0
      %v3237 = vadd.f32 0.0, %v3236
      %v3238 = vpop.f32.mrf.mxu0
      %v3239 = vadd.f32 0.0, %v3238
      %3240 = vdwg.mxu0
      %v3243 = vunpack.c.l.b16 %v348
      %v3244 = vunpack.c.l.b16 %v349
      %v3245 = vpack.c.b16 %v3244, %v3243
      %v3248 = vunpack.c.l.b16 %v604
      %v3249 = vunpack.c.l.b16 %v605
      %v3250 = vpack.c.b16 %v3249, %v3248
      %v3252 = vsel %vm700, %v3245, 0
      %v3255 = vsel %vm700, %v3250, 0
      %3257 = vmatpush.bf16.xpose.msra.mxu0 0
      %3258 = vmatpush.bf16.xpose.msra.mxu0 0
      %3259 = vmatpush.bf16.xpose.msra.mxu0 0
      %3260 = vmatpush.bf16.xpose.msra.mxu0 0
      %3261 = vmatpush.bf16.xpose.msra.mxu0 0
      %3262 = vmatpush.bf16.xpose.msra.mxu0 0
      %3263 = vmatpush.bf16.xpose.msra.mxu0 0
      %3264 = vmatpush.bf16.xpose.msra.mxu0 %v3255
      %3265 = vmatmul.bf16.gmra.mxu0 %v3252
      %v3266 = vpop.f32.mrf.mxu0
      %v3267 = vadd.f32 0.0, %v3266
      %v3268 = vpop.f32.mrf.mxu0
      %v3269 = vadd.f32 0.0, %v3268
      %3270 = vdwg.mxu0
      %v3273 = vunpack.c.l.b16 %v350
      %v3274 = vunpack.c.l.b16 %v351
      %v3275 = vpack.c.b16 %v3274, %v3273
      %v3278 = vunpack.c.l.b16 %v606
      %v3279 = vunpack.c.l.b16 %v607
      %v3280 = vpack.c.b16 %v3279, %v3278
      %v3282 = vsel %vm700, %v3275, 0
      %v3285 = vsel %vm700, %v3280, 0
      %3287 = vmatpush.bf16.xpose.msra.mxu0 0
      %3288 = vmatpush.bf16.xpose.msra.mxu0 0
      %3289 = vmatpush.bf16.xpose.msra.mxu0 0
      %3290 = vmatpush.bf16.xpose.msra.mxu0 0
      %3291 = vmatpush.bf16.xpose.msra.mxu0 0
      %3292 = vmatpush.bf16.xpose.msra.mxu0 0
      %3293 = vmatpush.bf16.xpose.msra.mxu0 0
      %3294 = vmatpush.bf16.xpose.msra.mxu0 %v3285
      %3295 = vmatmul.bf16.gmra.mxu0 %v3282
      %v3296 = vpop.f32.mrf.mxu0
      %v3297 = vadd.f32 0.0, %v3296
      %v3298 = vpop.f32.mrf.mxu0
      %v3299 = vadd.f32 0.0, %v3298
      %3300 = vdwg.mxu0
      %v3303 = vunpack.c.l.b16 %v352
      %v3304 = vunpack.c.l.b16 %v353
      %v3305 = vpack.c.b16 %v3304, %v3303
      %v3308 = vunpack.c.l.b16 %v608
      %v3309 = vunpack.c.l.b16 %v609
      %v3310 = vpack.c.b16 %v3309, %v3308
      %v3312 = vsel %vm700, %v3305, 0
      %v3315 = vsel %vm700, %v3310, 0
      %3317 = vmatpush.bf16.xpose.msra.mxu0 0
      %3318 = vmatpush.bf16.xpose.msra.mxu0 0
      %3319 = vmatpush.bf16.xpose.msra.mxu0 0
      %3320 = vmatpush.bf16.xpose.msra.mxu0 0
      %3321 = vmatpush.bf16.xpose.msra.mxu0 0
      %3322 = vmatpush.bf16.xpose.msra.mxu0 0
      %3323 = vmatpush.bf16.xpose.msra.mxu0 0
      %3324 = vmatpush.bf16.xpose.msra.mxu0 %v3315
      %3325 = vmatmul.bf16.gmra.mxu0 %v3312
      %v3326 = vpop.f32.mrf.mxu0
      %v3327 = vadd.f32 0.0, %v3326
      %v3328 = vpop.f32.mrf.mxu0
      %v3329 = vadd.f32 0.0, %v3328
      %3330 = vdwg.mxu0
      %v3333 = vunpack.c.l.b16 %v354
      %v3334 = vunpack.c.l.b16 %v355
      %v3335 = vpack.c.b16 %v3334, %v3333
      %v3338 = vunpack.c.l.b16 %v610
      %v3339 = vunpack.c.l.b16 %v611
      %v3340 = vpack.c.b16 %v3339, %v3338
      %v3342 = vsel %vm700, %v3335, 0
      %v3345 = vsel %vm700, %v3340, 0
      %3347 = vmatpush.bf16.xpose.msra.mxu0 0
      %3348 = vmatpush.bf16.xpose.msra.mxu0 0
      %3349 = vmatpush.bf16.xpose.msra.mxu0 0
      %3350 = vmatpush.bf16.xpose.msra.mxu0 0
      %3351 = vmatpush.bf16.xpose.msra.mxu0 0
      %3352 = vmatpush.bf16.xpose.msra.mxu0 0
      %3353 = vmatpush.bf16.xpose.msra.mxu0 0
      %3354 = vmatpush.bf16.xpose.msra.mxu0 %v3345
      %3355 = vmatmul.bf16.gmra.mxu0 %v3342
      %v3356 = vpop.f32.mrf.mxu0
      %v3357 = vadd.f32 0.0, %v3356
      %v3358 = vpop.f32.mrf.mxu0
      %v3359 = vadd.f32 0.0, %v3358
      %3360 = vdwg.mxu0
      %v3363 = vunpack.c.l.b16 %v356
      %v3364 = vunpack.c.l.b16 %v357
      %v3365 = vpack.c.b16 %v3364, %v3363
      %v3368 = vunpack.c.l.b16 %v612
      %v3369 = vunpack.c.l.b16 %v613
      %v3370 = vpack.c.b16 %v3369, %v3368
      %v3372 = vsel %vm700, %v3365, 0
      %v3375 = vsel %vm700, %v3370, 0
      %3377 = vmatpush.bf16.xpose.msra.mxu0 0
      %3378 = vmatpush.bf16.xpose.msra.mxu0 0
      %3379 = vmatpush.bf16.xpose.msra.mxu0 0
      %3380 = vmatpush.bf16.xpose.msra.mxu0 0
      %3381 = vmatpush.bf16.xpose.msra.mxu0 0
      %3382 = vmatpush.bf16.xpose.msra.mxu0 0
      %3383 = vmatpush.bf16.xpose.msra.mxu0 0
      %3384 = vmatpush.bf16.xpose.msra.mxu0 %v3375
      %3385 = vmatmul.bf16.gmra.mxu0 %v3372
      %v3386 = vpop.f32.mrf.mxu0
      %v3387 = vadd.f32 0.0, %v3386
      %v3388 = vpop.f32.mrf.mxu0
      %v3389 = vadd.f32 0.0, %v3388
      %3390 = vdwg.mxu0
      %v3393 = vunpack.c.l.b16 %v358
      %v3394 = vunpack.c.l.b16 %v359
      %v3395 = vpack.c.b16 %v3394, %v3393
      %v3398 = vunpack.c.l.b16 %v614
      %v3399 = vunpack.c.l.b16 %v615
      %v3400 = vpack.c.b16 %v3399, %v3398
      %v3402 = vsel %vm700, %v3395, 0
      %v3405 = vsel %vm700, %v3400, 0
      %3407 = vmatpush.bf16.xpose.msra.mxu0 0
      %3408 = vmatpush.bf16.xpose.msra.mxu0 0
      %3409 = vmatpush.bf16.xpose.msra.mxu0 0
      %3410 = vmatpush.bf16.xpose.msra.mxu0 0
      %3411 = vmatpush.bf16.xpose.msra.mxu0 0
      %3412 = vmatpush.bf16.xpose.msra.mxu0 0
      %3413 = vmatpush.bf16.xpose.msra.mxu0 0
      %3414 = vmatpush.bf16.xpose.msra.mxu0 %v3405
      %3415 = vmatmul.bf16.gmra.mxu0 %v3402
      %v3416 = vpop.f32.mrf.mxu0
      %v3417 = vadd.f32 0.0, %v3416
      %v3418 = vpop.f32.mrf.mxu0
      %v3419 = vadd.f32 0.0, %v3418
      %3420 = vdwg.mxu0
      %v3423 = vunpack.c.l.b16 %v360
      %v3424 = vunpack.c.l.b16 %v361
      %v3425 = vpack.c.b16 %v3424, %v3423
      %v3428 = vunpack.c.l.b16 %v616
      %v3429 = vunpack.c.l.b16 %v617
      %v3430 = vpack.c.b16 %v3429, %v3428
      %v3432 = vsel %vm700, %v3425, 0
      %v3435 = vsel %vm700, %v3430, 0
      %3437 = vmatpush.bf16.xpose.msra.mxu0 0
      %3438 = vmatpush.bf16.xpose.msra.mxu0 0
      %3439 = vmatpush.bf16.xpose.msra.mxu0 0
      %3440 = vmatpush.bf16.xpose.msra.mxu0 0
      %3441 = vmatpush.bf16.xpose.msra.mxu0 0
      %3442 = vmatpush.bf16.xpose.msra.mxu0 0
      %3443 = vmatpush.bf16.xpose.msra.mxu0 0
      %3444 = vmatpush.bf16.xpose.msra.mxu0 %v3435
      %3445 = vmatmul.bf16.gmra.mxu0 %v3432
      %v3446 = vpop.f32.mrf.mxu0
      %v3447 = vadd.f32 0.0, %v3446
      %v3448 = vpop.f32.mrf.mxu0
      %v3449 = vadd.f32 0.0, %v3448
      %3450 = vdwg.mxu0
      %v3453 = vunpack.c.l.b16 %v362
      %v3454 = vunpack.c.l.b16 %v363
      %v3455 = vpack.c.b16 %v3454, %v3453
      %v3458 = vunpack.c.l.b16 %v618
      %v3459 = vunpack.c.l.b16 %v619
      %v3460 = vpack.c.b16 %v3459, %v3458
      %v3462 = vsel %vm700, %v3455, 0
      %v3465 = vsel %vm700, %v3460, 0
      %3467 = vmatpush.bf16.xpose.msra.mxu0 0
      %3468 = vmatpush.bf16.xpose.msra.mxu0 0
      %3469 = vmatpush.bf16.xpose.msra.mxu0 0
      %3470 = vmatpush.bf16.xpose.msra.mxu0 0
      %3471 = vmatpush.bf16.xpose.msra.mxu0 0
      %3472 = vmatpush.bf16.xpose.msra.mxu0 0
      %3473 = vmatpush.bf16.xpose.msra.mxu0 0
      %3474 = vmatpush.bf16.xpose.msra.mxu0 %v3465
      %3475 = vmatmul.bf16.gmra.mxu0 %v3462
      %v3476 = vpop.f32.mrf.mxu0
      %v3477 = vadd.f32 0.0, %v3476
      %v3478 = vpop.f32.mrf.mxu0
      %v3479 = vadd.f32 0.0, %v3478
      %3480 = vdwg.mxu0
      %v3483 = vunpack.c.l.b16 %v364
      %v3484 = vunpack.c.l.b16 %v365
      %v3485 = vpack.c.b16 %v3484, %v3483
      %v3488 = vunpack.c.l.b16 %v620
      %v3489 = vunpack.c.l.b16 %v621
      %v3490 = vpack.c.b16 %v3489, %v3488
      %v3492 = vsel %vm700, %v3485, 0
      %v3495 = vsel %vm700, %v3490, 0
      %3497 = vmatpush.bf16.xpose.msra.mxu0 0
      %3498 = vmatpush.bf16.xpose.msra.mxu0 0
      %3499 = vmatpush.bf16.xpose.msra.mxu0 0
      %3500 = vmatpush.bf16.xpose.msra.mxu0 0
      %3501 = vmatpush.bf16.xpose.msra.mxu0 0
      %3502 = vmatpush.bf16.xpose.msra.mxu0 0
      %3503 = vmatpush.bf16.xpose.msra.mxu0 0
      %3504 = vmatpush.bf16.xpose.msra.mxu0 %v3495
      %3505 = vmatmul.bf16.gmra.mxu0 %v3492
      %v3506 = vpop.f32.mrf.mxu0
      %v3507 = vadd.f32 0.0, %v3506
      %v3508 = vpop.f32.mrf.mxu0
      %v3509 = vadd.f32 0.0, %v3508
      %3510 = vdwg.mxu0
      %v3513 = vunpack.c.l.b16 %v366
      %v3514 = vunpack.c.l.b16 %v367
      %v3515 = vpack.c.b16 %v3514, %v3513
      %v3518 = vunpack.c.l.b16 %v622
      %v3519 = vunpack.c.l.b16 %v623
      %v3520 = vpack.c.b16 %v3519, %v3518
      %v3522 = vsel %vm700, %v3515, 0
      %v3525 = vsel %vm700, %v3520, 0
      %3527 = vmatpush.bf16.xpose.msra.mxu0 0
      %3528 = vmatpush.bf16.xpose.msra.mxu0 0
      %3529 = vmatpush.bf16.xpose.msra.mxu0 0
      %3530 = vmatpush.bf16.xpose.msra.mxu0 0
      %3531 = vmatpush.bf16.xpose.msra.mxu0 0
      %3532 = vmatpush.bf16.xpose.msra.mxu0 0
      %3533 = vmatpush.bf16.xpose.msra.mxu0 0
      %3534 = vmatpush.bf16.xpose.msra.mxu0 %v3525
      %3535 = vmatmul.bf16.gmra.mxu0 %v3522
      %v3536 = vpop.f32.mrf.mxu0
      %v3537 = vadd.f32 0.0, %v3536
      %v3538 = vpop.f32.mrf.mxu0
      %v3539 = vadd.f32 0.0, %v3538
      %3540 = vdwg.mxu0
      %v3543 = vunpack.c.l.b16 %v368
      %v3544 = vunpack.c.l.b16 %v369
      %v3545 = vpack.c.b16 %v3544, %v3543
      %v3548 = vunpack.c.l.b16 %v624
      %v3549 = vunpack.c.l.b16 %v625
      %v3550 = vpack.c.b16 %v3549, %v3548
      %v3552 = vsel %vm700, %v3545, 0
      %v3555 = vsel %vm700, %v3550, 0
      %3557 = vmatpush.bf16.xpose.msra.mxu0 0
      %3558 = vmatpush.bf16.xpose.msra.mxu0 0
      %3559 = vmatpush.bf16.xpose.msra.mxu0 0
      %3560 = vmatpush.bf16.xpose.msra.mxu0 0
      %3561 = vmatpush.bf16.xpose.msra.mxu0 0
      %3562 = vmatpush.bf16.xpose.msra.mxu0 0
      %3563 = vmatpush.bf16.xpose.msra.mxu0 0
      %3564 = vmatpush.bf16.xpose.msra.mxu0 %v3555
      %3565 = vmatmul.bf16.gmra.mxu0 %v3552
      %v3566 = vpop.f32.mrf.mxu0
      %v3567 = vadd.f32 0.0, %v3566
      %v3568 = vpop.f32.mrf.mxu0
      %v3569 = vadd.f32 0.0, %v3568
      %3570 = vdwg.mxu0
      %v3573 = vunpack.c.l.b16 %v370
      %v3574 = vunpack.c.l.b16 %v371
      %v3575 = vpack.c.b16 %v3574, %v3573
      %v3578 = vunpack.c.l.b16 %v626
      %v3579 = vunpack.c.l.b16 %v627
      %v3580 = vpack.c.b16 %v3579, %v3578
      %v3582 = vsel %vm700, %v3575, 0
      %v3585 = vsel %vm700, %v3580, 0
      %3587 = vmatpush.bf16.xpose.msra.mxu0 0
      %3588 = vmatpush.bf16.xpose.msra.mxu0 0
      %3589 = vmatpush.bf16.xpose.msra.mxu0 0
      %3590 = vmatpush.bf16.xpose.msra.mxu0 0
      %3591 = vmatpush.bf16.xpose.msra.mxu0 0
      %3592 = vmatpush.bf16.xpose.msra.mxu0 0
      %3593 = vmatpush.bf16.xpose.msra.mxu0 0
      %3594 = vmatpush.bf16.xpose.msra.mxu0 %v3585
      %3595 = vmatmul.bf16.gmra.mxu0 %v3582
      %v3596 = vpop.f32.mrf.mxu0
      %v3597 = vadd.f32 0.0, %v3596
      %v3598 = vpop.f32.mrf.mxu0
      %v3599 = vadd.f32 0.0, %v3598
      %3600 = vdwg.mxu0
      %v3603 = vunpack.c.l.b16 %v372
      %v3604 = vunpack.c.l.b16 %v373
      %v3605 = vpack.c.b16 %v3604, %v3603
      %v3608 = vunpack.c.l.b16 %v628
      %v3609 = vunpack.c.l.b16 %v629
      %v3610 = vpack.c.b16 %v3609, %v3608
      %v3612 = vsel %vm700, %v3605, 0
      %v3615 = vsel %vm700, %v3610, 0
      %3617 = vmatpush.bf16.xpose.msra.mxu0 0
      %3618 = vmatpush.bf16.xpose.msra.mxu0 0
      %3619 = vmatpush.bf16.xpose.msra.mxu0 0
      %3620 = vmatpush.bf16.xpose.msra.mxu0 0
      %3621 = vmatpush.bf16.xpose.msra.mxu0 0
      %3622 = vmatpush.bf16.xpose.msra.mxu0 0
      %3623 = vmatpush.bf16.xpose.msra.mxu0 0
      %3624 = vmatpush.bf16.xpose.msra.mxu0 %v3615
      %3625 = vmatmul.bf16.gmra.mxu0 %v3612
      %v3626 = vpop.f32.mrf.mxu0
      %v3627 = vadd.f32 0.0, %v3626
      %v3628 = vpop.f32.mrf.mxu0
      %v3629 = vadd.f32 0.0, %v3628
      %3630 = vdwg.mxu0
      %v3633 = vunpack.c.l.b16 %v374
      %v3634 = vunpack.c.l.b16 %v375
      %v3635 = vpack.c.b16 %v3634, %v3633
      %v3638 = vunpack.c.l.b16 %v630
      %v3639 = vunpack.c.l.b16 %v631
      %v3640 = vpack.c.b16 %v3639, %v3638
      %v3642 = vsel %vm700, %v3635, 0
      %v3645 = vsel %vm700, %v3640, 0
      %3647 = vmatpush.bf16.xpose.msra.mxu0 0
      %3648 = vmatpush.bf16.xpose.msra.mxu0 0
      %3649 = vmatpush.bf16.xpose.msra.mxu0 0
      %3650 = vmatpush.bf16.xpose.msra.mxu0 0
      %3651 = vmatpush.bf16.xpose.msra.mxu0 0
      %3652 = vmatpush.bf16.xpose.msra.mxu0 0
      %3653 = vmatpush.bf16.xpose.msra.mxu0 0
      %3654 = vmatpush.bf16.xpose.msra.mxu0 %v3645
      %3655 = vmatmul.bf16.gmra.mxu0 %v3642
      %v3656 = vpop.f32.mrf.mxu0
      %v3657 = vadd.f32 0.0, %v3656
      %v3658 = vpop.f32.mrf.mxu0
      %v3659 = vadd.f32 0.0, %v3658
      %3660 = vdwg.mxu0
      %v3663 = vunpack.c.l.b16 %v376
      %v3664 = vunpack.c.l.b16 %v377
      %v3665 = vpack.c.b16 %v3664, %v3663
      %v3668 = vunpack.c.l.b16 %v632
      %v3669 = vunpack.c.l.b16 %v633
      %v3670 = vpack.c.b16 %v3669, %v3668
      %v3672 = vsel %vm700, %v3665, 0
      %v3675 = vsel %vm700, %v3670, 0
      %3677 = vmatpush.bf16.xpose.msra.mxu0 0
      %3678 = vmatpush.bf16.xpose.msra.mxu0 0
      %3679 = vmatpush.bf16.xpose.msra.mxu0 0
      %3680 = vmatpush.bf16.xpose.msra.mxu0 0
      %3681 = vmatpush.bf16.xpose.msra.mxu0 0
      %3682 = vmatpush.bf16.xpose.msra.mxu0 0
      %3683 = vmatpush.bf16.xpose.msra.mxu0 0
      %3684 = vmatpush.bf16.xpose.msra.mxu0 %v3675
      %3685 = vmatmul.bf16.gmra.mxu0 %v3672
      %v3686 = vpop.f32.mrf.mxu0
      %v3687 = vadd.f32 0.0, %v3686
      %v3688 = vpop.f32.mrf.mxu0
      %v3689 = vadd.f32 0.0, %v3688
      %3690 = vdwg.mxu0
      %v3693 = vunpack.c.l.b16 %v378
      %v3694 = vunpack.c.l.b16 %v379
      %v3695 = vpack.c.b16 %v3694, %v3693
      %v3698 = vunpack.c.l.b16 %v634
      %v3699 = vunpack.c.l.b16 %v635
      %v3700 = vpack.c.b16 %v3699, %v3698
      %v3702 = vsel %vm700, %v3695, 0
      %v3705 = vsel %vm700, %v3700, 0
      %3707 = vmatpush.bf16.xpose.msra.mxu0 0
      %3708 = vmatpush.bf16.xpose.msra.mxu0 0
      %3709 = vmatpush.bf16.xpose.msra.mxu0 0
      %3710 = vmatpush.bf16.xpose.msra.mxu0 0
      %3711 = vmatpush.bf16.xpose.msra.mxu0 0
      %3712 = vmatpush.bf16.xpose.msra.mxu0 0
      %3713 = vmatpush.bf16.xpose.msra.mxu0 0
      %3714 = vmatpush.bf16.xpose.msra.mxu0 %v3705
      %3715 = vmatmul.bf16.gmra.mxu0 %v3702
      %v3716 = vpop.f32.mrf.mxu0
      %v3717 = vadd.f32 0.0, %v3716
      %v3718 = vpop.f32.mrf.mxu0
      %v3719 = vadd.f32 0.0, %v3718
      %3720 = vdwg.mxu0
      %v3723 = vunpack.c.l.b16 %v380
      %v3724 = vunpack.c.l.b16 %v381
      %v3725 = vpack.c.b16 %v3724, %v3723
      %v3728 = vunpack.c.l.b16 %v636
      %v3729 = vunpack.c.l.b16 %v637
      %v3730 = vpack.c.b16 %v3729, %v3728
      %v3732 = vsel %vm700, %v3725, 0
      %v3735 = vsel %vm700, %v3730, 0
      %3737 = vmatpush.bf16.xpose.msra.mxu0 0
      %3738 = vmatpush.bf16.xpose.msra.mxu0 0
      %3739 = vmatpush.bf16.xpose.msra.mxu0 0
      %3740 = vmatpush.bf16.xpose.msra.mxu0 0
      %3741 = vmatpush.bf16.xpose.msra.mxu0 0
      %3742 = vmatpush.bf16.xpose.msra.mxu0 0
      %3743 = vmatpush.bf16.xpose.msra.mxu0 0
      %3744 = vmatpush.bf16.xpose.msra.mxu0 %v3735
      %3745 = vmatmul.bf16.gmra.mxu0 %v3732
      %v3746 = vpop.f32.mrf.mxu0
      %v3747 = vadd.f32 0.0, %v3746
      %v3748 = vpop.f32.mrf.mxu0
      %v3749 = vadd.f32 0.0, %v3748
      %3750 = vdwg.mxu0
      %v3753 = vunpack.c.l.b16 %v382
      %v3754 = vunpack.c.l.b16 %v383
      %v3755 = vpack.c.b16 %v3754, %v3753
      %v3758 = vunpack.c.l.b16 %v638
      %v3759 = vunpack.c.l.b16 %v639
      %v3760 = vpack.c.b16 %v3759, %v3758
      %v3762 = vsel %vm700, %v3755, 0
      %v3765 = vsel %vm700, %v3760, 0
      %3767 = vmatpush.bf16.xpose.msra.mxu0 0
      %3768 = vmatpush.bf16.xpose.msra.mxu0 0
      %3769 = vmatpush.bf16.xpose.msra.mxu0 0
      %3770 = vmatpush.bf16.xpose.msra.mxu0 0
      %3771 = vmatpush.bf16.xpose.msra.mxu0 0
      %3772 = vmatpush.bf16.xpose.msra.mxu0 0
      %3773 = vmatpush.bf16.xpose.msra.mxu0 0
      %3774 = vmatpush.bf16.xpose.msra.mxu0 %v3765
      %3775 = vmatmul.bf16.gmra.mxu0 %v3762
      %v3776 = vpop.f32.mrf.mxu0
      %v3777 = vadd.f32 0.0, %v3776
      %v3778 = vpop.f32.mrf.mxu0
      %v3779 = vadd.f32 0.0, %v3778
      %3780 = vdwg.mxu0
      %v3783 = vunpack.c.l.b16 %v384
      %v3784 = vunpack.c.l.b16 %v385
      %v3785 = vpack.c.b16 %v3784, %v3783
      %v3788 = vunpack.c.l.b16 %v640
      %v3789 = vunpack.c.l.b16 %v641
      %v3790 = vpack.c.b16 %v3789, %v3788
      %v3792 = vsel %vm700, %v3785, 0
      %v3795 = vsel %vm700, %v3790, 0
      %3797 = vmatpush.bf16.xpose.msra.mxu0 0
      %3798 = vmatpush.bf16.xpose.msra.mxu0 0
      %3799 = vmatpush.bf16.xpose.msra.mxu0 0
      %3800 = vmatpush.bf16.xpose.msra.mxu0 0
      %3801 = vmatpush.bf16.xpose.msra.mxu0 0
      %3802 = vmatpush.bf16.xpose.msra.mxu0 0
      %3803 = vmatpush.bf16.xpose.msra.mxu0 0
      %3804 = vmatpush.bf16.xpose.msra.mxu0 %v3795
      %3805 = vmatmul.bf16.gmra.mxu0 %v3792
      %v3806 = vpop.f32.mrf.mxu0
      %v3807 = vadd.f32 0.0, %v3806
      %v3808 = vpop.f32.mrf.mxu0
      %v3809 = vadd.f32 0.0, %v3808
      %3810 = vdwg.mxu0
      %v3813 = vunpack.c.l.b16 %v386
      %v3814 = vunpack.c.l.b16 %v387
      %v3815 = vpack.c.b16 %v3814, %v3813
      %v3818 = vunpack.c.l.b16 %v642
      %v3819 = vunpack.c.l.b16 %v643
      %v3820 = vpack.c.b16 %v3819, %v3818
      %v3822 = vsel %vm700, %v3815, 0
      %v3825 = vsel %vm700, %v3820, 0
      %3827 = vmatpush.bf16.xpose.msra.mxu0 0
      %3828 = vmatpush.bf16.xpose.msra.mxu0 0
      %3829 = vmatpush.bf16.xpose.msra.mxu0 0
      %3830 = vmatpush.bf16.xpose.msra.mxu0 0
      %3831 = vmatpush.bf16.xpose.msra.mxu0 0
      %3832 = vmatpush.bf16.xpose.msra.mxu0 0
      %3833 = vmatpush.bf16.xpose.msra.mxu0 0
      %3834 = vmatpush.bf16.xpose.msra.mxu0 %v3825
      %3835 = vmatmul.bf16.gmra.mxu0 %v3822
      %v3836 = vpop.f32.mrf.mxu0
      %v3837 = vadd.f32 0.0, %v3836
      %v3838 = vpop.f32.mrf.mxu0
      %v3839 = vadd.f32 0.0, %v3838
      %3840 = vdwg.mxu0
      %v3843 = vunpack.c.l.b16 %v388
      %v3844 = vunpack.c.l.b16 %v389
      %v3845 = vpack.c.b16 %v3844, %v3843
      %v3848 = vunpack.c.l.b16 %v644
      %v3849 = vunpack.c.l.b16 %v645
      %v3850 = vpack.c.b16 %v3849, %v3848
      %v3852 = vsel %vm700, %v3845, 0
      %v3855 = vsel %vm700, %v3850, 0
      %3857 = vmatpush.bf16.xpose.msra.mxu0 0
      %3858 = vmatpush.bf16.xpose.msra.mxu0 0
      %3859 = vmatpush.bf16.xpose.msra.mxu0 0
      %3860 = vmatpush.bf16.xpose.msra.mxu0 0
      %3861 = vmatpush.bf16.xpose.msra.mxu0 0
      %3862 = vmatpush.bf16.xpose.msra.mxu0 0
      %3863 = vmatpush.bf16.xpose.msra.mxu0 0
      %3864 = vmatpush.bf16.xpose.msra.mxu0 %v3855
      %3865 = vmatmul.bf16.gmra.mxu0 %v3852
      %v3866 = vpop.f32.mrf.mxu0
      %v3867 = vadd.f32 0.0, %v3866
      %v3868 = vpop.f32.mrf.mxu0
      %v3869 = vadd.f32 0.0, %v3868
      %3870 = vdwg.mxu0
      %v3873 = vunpack.c.l.b16 %v390
      %v3874 = vunpack.c.l.b16 %v391
      %v3875 = vpack.c.b16 %v3874, %v3873
      %v3878 = vunpack.c.l.b16 %v646
      %v3879 = vunpack.c.l.b16 %v647
      %v3880 = vpack.c.b16 %v3879, %v3878
      %v3882 = vsel %vm700, %v3875, 0
      %v3885 = vsel %vm700, %v3880, 0
      %3887 = vmatpush.bf16.xpose.msra.mxu0 0
      %3888 = vmatpush.bf16.xpose.msra.mxu0 0
      %3889 = vmatpush.bf16.xpose.msra.mxu0 0
      %3890 = vmatpush.bf16.xpose.msra.mxu0 0
      %3891 = vmatpush.bf16.xpose.msra.mxu0 0
      %3892 = vmatpush.bf16.xpose.msra.mxu0 0
      %3893 = vmatpush.bf16.xpose.msra.mxu0 0
      %3894 = vmatpush.bf16.xpose.msra.mxu0 %v3885
      %3895 = vmatmul.bf16.gmra.mxu0 %v3882
      %v3896 = vpop.f32.mrf.mxu0
      %v3897 = vadd.f32 0.0, %v3896
      %v3898 = vpop.f32.mrf.mxu0
      %v3899 = vadd.f32 0.0, %v3898
      %3900 = vdwg.mxu0
      %v3903 = vunpack.c.l.b16 %v392
      %v3904 = vunpack.c.l.b16 %v393
      %v3905 = vpack.c.b16 %v3904, %v3903
      %v3908 = vunpack.c.l.b16 %v648
      %v3909 = vunpack.c.l.b16 %v649
      %v3910 = vpack.c.b16 %v3909, %v3908
      %v3912 = vsel %vm700, %v3905, 0
      %v3915 = vsel %vm700, %v3910, 0
      %3917 = vmatpush.bf16.xpose.msra.mxu0 0
      %3918 = vmatpush.bf16.xpose.msra.mxu0 0
      %3919 = vmatpush.bf16.xpose.msra.mxu0 0
      %3920 = vmatpush.bf16.xpose.msra.mxu0 0
      %3921 = vmatpush.bf16.xpose.msra.mxu0 0
      %3922 = vmatpush.bf16.xpose.msra.mxu0 0
      %3923 = vmatpush.bf16.xpose.msra.mxu0 0
      %3924 = vmatpush.bf16.xpose.msra.mxu0 %v3915
      %3925 = vmatmul.bf16.gmra.mxu0 %v3912
      %v3926 = vpop.f32.mrf.mxu0
      %v3927 = vadd.f32 0.0, %v3926
      %v3928 = vpop.f32.mrf.mxu0
      %v3929 = vadd.f32 0.0, %v3928
      %3930 = vdwg.mxu0
      %v3933 = vunpack.c.l.b16 %v394
      %v3934 = vunpack.c.l.b16 %v395
      %v3935 = vpack.c.b16 %v3934, %v3933
      %v3938 = vunpack.c.l.b16 %v650
      %v3939 = vunpack.c.l.b16 %v651
      %v3940 = vpack.c.b16 %v3939, %v3938
      %v3942 = vsel %vm700, %v3935, 0
      %v3945 = vsel %vm700, %v3940, 0
      %3947 = vmatpush.bf16.xpose.msra.mxu0 0
      %3948 = vmatpush.bf16.xpose.msra.mxu0 0
      %3949 = vmatpush.bf16.xpose.msra.mxu0 0
      %3950 = vmatpush.bf16.xpose.msra.mxu0 0
      %3951 = vmatpush.bf16.xpose.msra.mxu0 0
      %3952 = vmatpush.bf16.xpose.msra.mxu0 0
      %3953 = vmatpush.bf16.xpose.msra.mxu0 0
      %3954 = vmatpush.bf16.xpose.msra.mxu0 %v3945
      %3955 = vmatmul.bf16.gmra.mxu0 %v3942
      %v3956 = vpop.f32.mrf.mxu0
      %v3957 = vadd.f32 0.0, %v3956
      %v3958 = vpop.f32.mrf.mxu0
      %v3959 = vadd.f32 0.0, %v3958
      %3960 = vdwg.mxu0
      %v3963 = vunpack.c.l.b16 %v396
      %v3964 = vunpack.c.l.b16 %v397
      %v3965 = vpack.c.b16 %v3964, %v3963
      %v3968 = vunpack.c.l.b16 %v652
      %v3969 = vunpack.c.l.b16 %v653
      %v3970 = vpack.c.b16 %v3969, %v3968
      %v3972 = vsel %vm700, %v3965, 0
      %v3975 = vsel %vm700, %v3970, 0
      %3977 = vmatpush.bf16.xpose.msra.mxu0 0
      %3978 = vmatpush.bf16.xpose.msra.mxu0 0
      %3979 = vmatpush.bf16.xpose.msra.mxu0 0
      %3980 = vmatpush.bf16.xpose.msra.mxu0 0
      %3981 = vmatpush.bf16.xpose.msra.mxu0 0
      %3982 = vmatpush.bf16.xpose.msra.mxu0 0
      %3983 = vmatpush.bf16.xpose.msra.mxu0 0
      %3984 = vmatpush.bf16.xpose.msra.mxu0 %v3975
      %3985 = vmatmul.bf16.gmra.mxu0 %v3972
      %v3986 = vpop.f32.mrf.mxu0
      %v3987 = vadd.f32 0.0, %v3986
      %v3988 = vpop.f32.mrf.mxu0
      %v3989 = vadd.f32 0.0, %v3988
      %3990 = vdwg.mxu0
      %v3993 = vunpack.c.l.b16 %v398
      %v3994 = vunpack.c.l.b16 %v399
      %v3995 = vpack.c.b16 %v3994, %v3993
      %v3998 = vunpack.c.l.b16 %v654
      %v3999 = vunpack.c.l.b16 %v655
      %v4000 = vpack.c.b16 %v3999, %v3998
      %v4002 = vsel %vm700, %v3995, 0
      %v4005 = vsel %vm700, %v4000, 0
      %4007 = vmatpush.bf16.xpose.msra.mxu0 0
      %4008 = vmatpush.bf16.xpose.msra.mxu0 0
      %4009 = vmatpush.bf16.xpose.msra.mxu0 0
      %4010 = vmatpush.bf16.xpose.msra.mxu0 0
      %4011 = vmatpush.bf16.xpose.msra.mxu0 0
      %4012 = vmatpush.bf16.xpose.msra.mxu0 0
      %4013 = vmatpush.bf16.xpose.msra.mxu0 0
      %4014 = vmatpush.bf16.xpose.msra.mxu0 %v4005
      %4015 = vmatmul.bf16.gmra.mxu0 %v4002
      %v4016 = vpop.f32.mrf.mxu0
      %v4017 = vadd.f32 0.0, %v4016
      %v4018 = vpop.f32.mrf.mxu0
      %v4019 = vadd.f32 0.0, %v4018
      %4020 = vdwg.mxu0
      %v4023 = vunpack.c.l.b16 %v400
      %v4024 = vunpack.c.l.b16 %v401
      %v4025 = vpack.c.b16 %v4024, %v4023
      %v4028 = vunpack.c.l.b16 %v656
      %v4029 = vunpack.c.l.b16 %v657
      %v4030 = vpack.c.b16 %v4029, %v4028
      %v4032 = vsel %vm700, %v4025, 0
      %v4035 = vsel %vm700, %v4030, 0
      %4037 = vmatpush.bf16.xpose.msra.mxu0 0
      %4038 = vmatpush.bf16.xpose.msra.mxu0 0
      %4039 = vmatpush.bf16.xpose.msra.mxu0 0
      %4040 = vmatpush.bf16.xpose.msra.mxu0 0
      %4041 = vmatpush.bf16.xpose.msra.mxu0 0
      %4042 = vmatpush.bf16.xpose.msra.mxu0 0
      %4043 = vmatpush.bf16.xpose.msra.mxu0 0
      %4044 = vmatpush.bf16.xpose.msra.mxu0 %v4035
      %4045 = vmatmul.bf16.gmra.mxu0 %v4032
      %v4046 = vpop.f32.mrf.mxu0
      %v4047 = vadd.f32 0.0, %v4046
      %v4048 = vpop.f32.mrf.mxu0
      %v4049 = vadd.f32 0.0, %v4048
      %4050 = vdwg.mxu0
      %v4053 = vunpack.c.l.b16 %v402
      %v4054 = vunpack.c.l.b16 %v403
      %v4055 = vpack.c.b16 %v4054, %v4053
      %v4058 = vunpack.c.l.b16 %v658
      %v4059 = vunpack.c.l.b16 %v659
      %v4060 = vpack.c.b16 %v4059, %v4058
      %v4062 = vsel %vm700, %v4055, 0
      %v4065 = vsel %vm700, %v4060, 0
      %4067 = vmatpush.bf16.xpose.msra.mxu0 0
      %4068 = vmatpush.bf16.xpose.msra.mxu0 0
      %4069 = vmatpush.bf16.xpose.msra.mxu0 0
      %4070 = vmatpush.bf16.xpose.msra.mxu0 0
      %4071 = vmatpush.bf16.xpose.msra.mxu0 0
      %4072 = vmatpush.bf16.xpose.msra.mxu0 0
      %4073 = vmatpush.bf16.xpose.msra.mxu0 0
      %4074 = vmatpush.bf16.xpose.msra.mxu0 %v4065
      %4075 = vmatmul.bf16.gmra.mxu0 %v4062
      %v4076 = vpop.f32.mrf.mxu0
      %v4077 = vadd.f32 0.0, %v4076
      %v4078 = vpop.f32.mrf.mxu0
      %v4079 = vadd.f32 0.0, %v4078
      %4080 = vdwg.mxu0
      %v4083 = vunpack.c.l.b16 %v404
      %v4084 = vunpack.c.l.b16 %v405
      %v4085 = vpack.c.b16 %v4084, %v4083
      %v4088 = vunpack.c.l.b16 %v660
      %v4089 = vunpack.c.l.b16 %v661
      %v4090 = vpack.c.b16 %v4089, %v4088
      %v4092 = vsel %vm700, %v4085, 0
      %v4095 = vsel %vm700, %v4090, 0
      %4097 = vmatpush.bf16.xpose.msra.mxu0 0
      %4098 = vmatpush.bf16.xpose.msra.mxu0 0
      %4099 = vmatpush.bf16.xpose.msra.mxu0 0
      %4100 = vmatpush.bf16.xpose.msra.mxu0 0
      %4101 = vmatpush.bf16.xpose.msra.mxu0 0
      %4102 = vmatpush.bf16.xpose.msra.mxu0 0
      %4103 = vmatpush.bf16.xpose.msra.mxu0 0
      %4104 = vmatpush.bf16.xpose.msra.mxu0 %v4095
      %4105 = vmatmul.bf16.gmra.mxu0 %v4092
      %v4106 = vpop.f32.mrf.mxu0
      %v4107 = vadd.f32 0.0, %v4106
      %v4108 = vpop.f32.mrf.mxu0
      %v4109 = vadd.f32 0.0, %v4108
      %4110 = vdwg.mxu0
      %v4113 = vunpack.c.l.b16 %v406
      %v4114 = vunpack.c.l.b16 %v407
      %v4115 = vpack.c.b16 %v4114, %v4113
      %v4118 = vunpack.c.l.b16 %v662
      %v4119 = vunpack.c.l.b16 %v663
      %v4120 = vpack.c.b16 %v4119, %v4118
      %v4122 = vsel %vm700, %v4115, 0
      %v4125 = vsel %vm700, %v4120, 0
      %4127 = vmatpush.bf16.xpose.msra.mxu0 0
      %4128 = vmatpush.bf16.xpose.msra.mxu0 0
      %4129 = vmatpush.bf16.xpose.msra.mxu0 0
      %4130 = vmatpush.bf16.xpose.msra.mxu0 0
      %4131 = vmatpush.bf16.xpose.msra.mxu0 0
      %4132 = vmatpush.bf16.xpose.msra.mxu0 0
      %4133 = vmatpush.bf16.xpose.msra.mxu0 0
      %4134 = vmatpush.bf16.xpose.msra.mxu0 %v4125
      %4135 = vmatmul.bf16.gmra.mxu0 %v4122
      %v4136 = vpop.f32.mrf.mxu0
      %v4137 = vadd.f32 0.0, %v4136
      %v4138 = vpop.f32.mrf.mxu0
      %v4139 = vadd.f32 0.0, %v4138
      %4140 = vdwg.mxu0
      %v4143 = vunpack.c.l.b16 %v408
      %v4144 = vunpack.c.l.b16 %v409
      %v4145 = vpack.c.b16 %v4144, %v4143
      %v4148 = vunpack.c.l.b16 %v664
      %v4149 = vunpack.c.l.b16 %v665
      %v4150 = vpack.c.b16 %v4149, %v4148
      %v4152 = vsel %vm700, %v4145, 0
      %v4155 = vsel %vm700, %v4150, 0
      %4157 = vmatpush.bf16.xpose.msra.mxu0 0
      %4158 = vmatpush.bf16.xpose.msra.mxu0 0
      %4159 = vmatpush.bf16.xpose.msra.mxu0 0
      %4160 = vmatpush.bf16.xpose.msra.mxu0 0
      %4161 = vmatpush.bf16.xpose.msra.mxu0 0
      %4162 = vmatpush.bf16.xpose.msra.mxu0 0
      %4163 = vmatpush.bf16.xpose.msra.mxu0 0
      %4164 = vmatpush.bf16.xpose.msra.mxu0 %v4155
      %4165 = vmatmul.bf16.gmra.mxu0 %v4152
      %v4166 = vpop.f32.mrf.mxu0
      %v4167 = vadd.f32 0.0, %v4166
      %v4168 = vpop.f32.mrf.mxu0
      %v4169 = vadd.f32 0.0, %v4168
      %4170 = vdwg.mxu0
      %v4173 = vunpack.c.l.b16 %v410
      %v4174 = vunpack.c.l.b16 %v411
      %v4175 = vpack.c.b16 %v4174, %v4173
      %v4178 = vunpack.c.l.b16 %v666
      %v4179 = vunpack.c.l.b16 %v667
      %v4180 = vpack.c.b16 %v4179, %v4178
      %v4182 = vsel %vm700, %v4175, 0
      %v4185 = vsel %vm700, %v4180, 0
      %4187 = vmatpush.bf16.xpose.msra.mxu0 0
      %4188 = vmatpush.bf16.xpose.msra.mxu0 0
      %4189 = vmatpush.bf16.xpose.msra.mxu0 0
      %4190 = vmatpush.bf16.xpose.msra.mxu0 0
      %4191 = vmatpush.bf16.xpose.msra.mxu0 0
      %4192 = vmatpush.bf16.xpose.msra.mxu0 0
      %4193 = vmatpush.bf16.xpose.msra.mxu0 0
      %4194 = vmatpush.bf16.xpose.msra.mxu0 %v4185
      %4195 = vmatmul.bf16.gmra.mxu0 %v4182
      %v4196 = vpop.f32.mrf.mxu0
      %v4197 = vadd.f32 0.0, %v4196
      %v4198 = vpop.f32.mrf.mxu0
      %v4199 = vadd.f32 0.0, %v4198
      %4200 = vdwg.mxu0
      %v4203 = vunpack.c.l.b16 %v412
      %v4204 = vunpack.c.l.b16 %v413
      %v4205 = vpack.c.b16 %v4204, %v4203
      %v4208 = vunpack.c.l.b16 %v668
      %v4209 = vunpack.c.l.b16 %v669
      %v4210 = vpack.c.b16 %v4209, %v4208
      %v4212 = vsel %vm700, %v4205, 0
      %v4215 = vsel %vm700, %v4210, 0
      %4217 = vmatpush.bf16.xpose.msra.mxu0 0
      %4218 = vmatpush.bf16.xpose.msra.mxu0 0
      %4219 = vmatpush.bf16.xpose.msra.mxu0 0
      %4220 = vmatpush.bf16.xpose.msra.mxu0 0
      %4221 = vmatpush.bf16.xpose.msra.mxu0 0
      %4222 = vmatpush.bf16.xpose.msra.mxu0 0
      %4223 = vmatpush.bf16.xpose.msra.mxu0 0
      %4224 = vmatpush.bf16.xpose.msra.mxu0 %v4215
      %4225 = vmatmul.bf16.gmra.mxu0 %v4212
      %v4226 = vpop.f32.mrf.mxu0
      %v4227 = vadd.f32 0.0, %v4226
      %v4228 = vpop.f32.mrf.mxu0
      %v4229 = vadd.f32 0.0, %v4228
      %4230 = vdwg.mxu0
      %v4233 = vunpack.c.l.b16 %v414
      %v4234 = vunpack.c.l.b16 %v415
      %v4235 = vpack.c.b16 %v4234, %v4233
      %v4238 = vunpack.c.l.b16 %v670
      %v4239 = vunpack.c.l.b16 %v671
      %v4240 = vpack.c.b16 %v4239, %v4238
      %v4242 = vsel %vm700, %v4235, 0
      %v4245 = vsel %vm700, %v4240, 0
      %4247 = vmatpush.bf16.xpose.msra.mxu0 0
      %4248 = vmatpush.bf16.xpose.msra.mxu0 0
      %4249 = vmatpush.bf16.xpose.msra.mxu0 0
      %4250 = vmatpush.bf16.xpose.msra.mxu0 0
      %4251 = vmatpush.bf16.xpose.msra.mxu0 0
      %4252 = vmatpush.bf16.xpose.msra.mxu0 0
      %4253 = vmatpush.bf16.xpose.msra.mxu0 0
      %4254 = vmatpush.bf16.xpose.msra.mxu0 %v4245
      %4255 = vmatmul.bf16.gmra.mxu0 %v4242
      %v4256 = vpop.f32.mrf.mxu0
      %v4257 = vadd.f32 0.0, %v4256
      %v4258 = vpop.f32.mrf.mxu0
      %v4259 = vadd.f32 0.0, %v4258
      %4260 = vdwg.mxu0
      %v4263 = vunpack.c.l.b16 %v416
      %v4264 = vunpack.c.l.b16 %v417
      %v4265 = vpack.c.b16 %v4264, %v4263
      %v4268 = vunpack.c.l.b16 %v672
      %v4269 = vunpack.c.l.b16 %v673
      %v4270 = vpack.c.b16 %v4269, %v4268
      %v4272 = vsel %vm700, %v4265, 0
      %v4275 = vsel %vm700, %v4270, 0
      %4277 = vmatpush.bf16.xpose.msra.mxu0 0
      %4278 = vmatpush.bf16.xpose.msra.mxu0 0
      %4279 = vmatpush.bf16.xpose.msra.mxu0 0
      %4280 = vmatpush.bf16.xpose.msra.mxu0 0
      %4281 = vmatpush.bf16.xpose.msra.mxu0 0
      %4282 = vmatpush.bf16.xpose.msra.mxu0 0
      %4283 = vmatpush.bf16.xpose.msra.mxu0 0
      %4284 = vmatpush.bf16.xpose.msra.mxu0 %v4275
      %4285 = vmatmul.bf16.gmra.mxu0 %v4272
      %v4286 = vpop.f32.mrf.mxu0
      %v4287 = vadd.f32 0.0, %v4286
      %v4288 = vpop.f32.mrf.mxu0
      %v4289 = vadd.f32 0.0, %v4288
      %4290 = vdwg.mxu0
      %v4293 = vunpack.c.l.b16 %v418
      %v4294 = vunpack.c.l.b16 %v419
      %v4295 = vpack.c.b16 %v4294, %v4293
      %v4298 = vunpack.c.l.b16 %v674
      %v4299 = vunpack.c.l.b16 %v675
      %v4300 = vpack.c.b16 %v4299, %v4298
      %v4302 = vsel %vm700, %v4295, 0
      %v4305 = vsel %vm700, %v4300, 0
      %4307 = vmatpush.bf16.xpose.msra.mxu0 0
      %4308 = vmatpush.bf16.xpose.msra.mxu0 0
      %4309 = vmatpush.bf16.xpose.msra.mxu0 0
      %4310 = vmatpush.bf16.xpose.msra.mxu0 0
      %4311 = vmatpush.bf16.xpose.msra.mxu0 0
      %4312 = vmatpush.bf16.xpose.msra.mxu0 0
      %4313 = vmatpush.bf16.xpose.msra.mxu0 0
      %4314 = vmatpush.bf16.xpose.msra.mxu0 %v4305
      %4315 = vmatmul.bf16.gmra.mxu0 %v4302
      %v4316 = vpop.f32.mrf.mxu0
      %v4317 = vadd.f32 0.0, %v4316
      %v4318 = vpop.f32.mrf.mxu0
      %v4319 = vadd.f32 0.0, %v4318
      %4320 = vdwg.mxu0
      %v4323 = vunpack.c.l.b16 %v420
      %v4324 = vunpack.c.l.b16 %v421
      %v4325 = vpack.c.b16 %v4324, %v4323
      %v4328 = vunpack.c.l.b16 %v676
      %v4329 = vunpack.c.l.b16 %v677
      %v4330 = vpack.c.b16 %v4329, %v4328
      %v4332 = vsel %vm700, %v4325, 0
      %v4335 = vsel %vm700, %v4330, 0
      %4337 = vmatpush.bf16.xpose.msra.mxu0 0
      %4338 = vmatpush.bf16.xpose.msra.mxu0 0
      %4339 = vmatpush.bf16.xpose.msra.mxu0 0
      %4340 = vmatpush.bf16.xpose.msra.mxu0 0
      %4341 = vmatpush.bf16.xpose.msra.mxu0 0
      %4342 = vmatpush.bf16.xpose.msra.mxu0 0
      %4343 = vmatpush.bf16.xpose.msra.mxu0 0
      %4344 = vmatpush.bf16.xpose.msra.mxu0 %v4335
      %4345 = vmatmul.bf16.gmra.mxu0 %v4332
      %v4346 = vpop.f32.mrf.mxu0
      %v4347 = vadd.f32 0.0, %v4346
      %v4348 = vpop.f32.mrf.mxu0
      %v4349 = vadd.f32 0.0, %v4348
      %4350 = vdwg.mxu0
      %v4353 = vunpack.c.l.b16 %v422
      %v4354 = vunpack.c.l.b16 %v423
      %v4355 = vpack.c.b16 %v4354, %v4353
      %v4358 = vunpack.c.l.b16 %v678
      %v4359 = vunpack.c.l.b16 %v679
      %v4360 = vpack.c.b16 %v4359, %v4358
      %v4362 = vsel %vm700, %v4355, 0
      %v4365 = vsel %vm700, %v4360, 0
      %4367 = vmatpush.bf16.xpose.msra.mxu0 0
      %4368 = vmatpush.bf16.xpose.msra.mxu0 0
      %4369 = vmatpush.bf16.xpose.msra.mxu0 0
      %4370 = vmatpush.bf16.xpose.msra.mxu0 0
      %4371 = vmatpush.bf16.xpose.msra.mxu0 0
      %4372 = vmatpush.bf16.xpose.msra.mxu0 0
      %4373 = vmatpush.bf16.xpose.msra.mxu0 0
      %4374 = vmatpush.bf16.xpose.msra.mxu0 %v4365
      %4375 = vmatmul.bf16.gmra.mxu0 %v4362
      %v4376 = vpop.f32.mrf.mxu0
      %v4377 = vadd.f32 0.0, %v4376
      %v4378 = vpop.f32.mrf.mxu0
      %v4379 = vadd.f32 0.0, %v4378
      %4380 = vdwg.mxu0
      %v4383 = vunpack.c.l.b16 %v424
      %v4384 = vunpack.c.l.b16 %v425
      %v4385 = vpack.c.b16 %v4384, %v4383
      %v4388 = vunpack.c.l.b16 %v680
      %v4389 = vunpack.c.l.b16 %v681
      %v4390 = vpack.c.b16 %v4389, %v4388
      %v4392 = vsel %vm700, %v4385, 0
      %v4395 = vsel %vm700, %v4390, 0
      %4397 = vmatpush.bf16.xpose.msra.mxu0 0
      %4398 = vmatpush.bf16.xpose.msra.mxu0 0
      %4399 = vmatpush.bf16.xpose.msra.mxu0 0
      %4400 = vmatpush.bf16.xpose.msra.mxu0 0
      %4401 = vmatpush.bf16.xpose.msra.mxu0 0
      %4402 = vmatpush.bf16.xpose.msra.mxu0 0
      %4403 = vmatpush.bf16.xpose.msra.mxu0 0
      %4404 = vmatpush.bf16.xpose.msra.mxu0 %v4395
      %4405 = vmatmul.bf16.gmra.mxu0 %v4392
      %v4406 = vpop.f32.mrf.mxu0
      %v4407 = vadd.f32 0.0, %v4406
      %v4408 = vpop.f32.mrf.mxu0
      %v4409 = vadd.f32 0.0, %v4408
      %4410 = vdwg.mxu0
      %v4413 = vunpack.c.l.b16 %v426
      %v4414 = vunpack.c.l.b16 %v427
      %v4415 = vpack.c.b16 %v4414, %v4413
      %v4418 = vunpack.c.l.b16 %v682
      %v4419 = vunpack.c.l.b16 %v683
      %v4420 = vpack.c.b16 %v4419, %v4418
      %v4422 = vsel %vm700, %v4415, 0
      %v4425 = vsel %vm700, %v4420, 0
      %4427 = vmatpush.bf16.xpose.msra.mxu0 0
      %4428 = vmatpush.bf16.xpose.msra.mxu0 0
      %4429 = vmatpush.bf16.xpose.msra.mxu0 0
      %4430 = vmatpush.bf16.xpose.msra.mxu0 0
      %4431 = vmatpush.bf16.xpose.msra.mxu0 0
      %4432 = vmatpush.bf16.xpose.msra.mxu0 0
      %4433 = vmatpush.bf16.xpose.msra.mxu0 0
      %4434 = vmatpush.bf16.xpose.msra.mxu0 %v4425
      %4435 = vmatmul.bf16.gmra.mxu0 %v4422
      %v4436 = vpop.f32.mrf.mxu0
      %v4437 = vadd.f32 0.0, %v4436
      %v4438 = vpop.f32.mrf.mxu0
      %v4439 = vadd.f32 0.0, %v4438
      %4440 = vdwg.mxu0
      %v4443 = vunpack.c.l.b16 %v428
      %v4444 = vunpack.c.l.b16 %v429
      %v4445 = vpack.c.b16 %v4444, %v4443
      %v4448 = vunpack.c.l.b16 %v684
      %v4449 = vunpack.c.l.b16 %v685
      %v4450 = vpack.c.b16 %v4449, %v4448
      %v4452 = vsel %vm700, %v4445, 0
      %v4455 = vsel %vm700, %v4450, 0
      %4457 = vmatpush.bf16.xpose.msra.mxu0 0
      %4458 = vmatpush.bf16.xpose.msra.mxu0 0
      %4459 = vmatpush.bf16.xpose.msra.mxu0 0
      %4460 = vmatpush.bf16.xpose.msra.mxu0 0
      %4461 = vmatpush.bf16.xpose.msra.mxu0 0
      %4462 = vmatpush.bf16.xpose.msra.mxu0 0
      %4463 = vmatpush.bf16.xpose.msra.mxu0 0
      %4464 = vmatpush.bf16.xpose.msra.mxu0 %v4455
      %4465 = vmatmul.bf16.gmra.mxu0 %v4452
      %v4466 = vpop.f32.mrf.mxu0
      %v4467 = vadd.f32 0.0, %v4466
      %v4468 = vpop.f32.mrf.mxu0
      %v4469 = vadd.f32 0.0, %v4468
      %4470 = vdwg.mxu0
      %v4473 = vunpack.c.l.b16 %v430
      %v4474 = vunpack.c.l.b16 %v431
      %v4475 = vpack.c.b16 %v4474, %v4473
      %v4478 = vunpack.c.l.b16 %v686
      %v4479 = vunpack.c.l.b16 %v687
      %v4480 = vpack.c.b16 %v4479, %v4478
      %v4482 = vsel %vm700, %v4475, 0
      %v4485 = vsel %vm700, %v4480, 0
      %4487 = vmatpush.bf16.xpose.msra.mxu0 0
      %4488 = vmatpush.bf16.xpose.msra.mxu0 0
      %4489 = vmatpush.bf16.xpose.msra.mxu0 0
      %4490 = vmatpush.bf16.xpose.msra.mxu0 0
      %4491 = vmatpush.bf16.xpose.msra.mxu0 0
      %4492 = vmatpush.bf16.xpose.msra.mxu0 0
      %4493 = vmatpush.bf16.xpose.msra.mxu0 0
      %4494 = vmatpush.bf16.xpose.msra.mxu0 %v4485
      %4495 = vmatmul.bf16.gmra.mxu0 %v4482
      %v4496 = vpop.f32.mrf.mxu0
      %v4497 = vadd.f32 0.0, %v4496
      %v4498 = vpop.f32.mrf.mxu0
      %v4499 = vadd.f32 0.0, %v4498
      %4500 = vdwg.mxu0
      %v4503 = vunpack.c.l.b16 %v432
      %v4504 = vunpack.c.l.b16 %v433
      %v4505 = vpack.c.b16 %v4504, %v4503
      %v4508 = vunpack.c.l.b16 %v688
      %v4509 = vunpack.c.l.b16 %v689
      %v4510 = vpack.c.b16 %v4509, %v4508
      %v4512 = vsel %vm700, %v4505, 0
      %v4515 = vsel %vm700, %v4510, 0
      %4517 = vmatpush.bf16.xpose.msra.mxu0 0
      %4518 = vmatpush.bf16.xpose.msra.mxu0 0
      %4519 = vmatpush.bf16.xpose.msra.mxu0 0
      %4520 = vmatpush.bf16.xpose.msra.mxu0 0
      %4521 = vmatpush.bf16.xpose.msra.mxu0 0
      %4522 = vmatpush.bf16.xpose.msra.mxu0 0
      %4523 = vmatpush.bf16.xpose.msra.mxu0 0
      %4524 = vmatpush.bf16.xpose.msra.mxu0 %v4515
      %4525 = vmatmul.bf16.gmra.mxu0 %v4512
      %v4526 = vpop.f32.mrf.mxu0
      %v4527 = vadd.f32 0.0, %v4526
      %v4528 = vpop.f32.mrf.mxu0
      %v4529 = vadd.f32 0.0, %v4528
      %4530 = vdwg.mxu0
      %v4531 = vpack.c.bf16 %v717, %v717
      %v4532 = vpack.c.bf16 %v719, %v719
      %v4533 = vpack.c.bf16 %v747, %v747
      %v4534 = vpack.c.bf16 %v749, %v749
      %v4535 = vpack.c.bf16 %v777, %v777
      %v4536 = vpack.c.bf16 %v779, %v779
      %v4537 = vpack.c.bf16 %v807, %v807
      %v4538 = vpack.c.bf16 %v809, %v809
      %v4539 = vpack.c.bf16 %v837, %v837
      %v4540 = vpack.c.bf16 %v839, %v839
      %v4541 = vpack.c.bf16 %v867, %v867
      %v4542 = vpack.c.bf16 %v869, %v869
      %v4543 = vpack.c.bf16 %v897, %v897
      %v4544 = vpack.c.bf16 %v899, %v899
      %v4545 = vpack.c.bf16 %v927, %v927
      %v4546 = vpack.c.bf16 %v929, %v929
      %v4547 = vpack.c.bf16 %v957, %v957
      %v4548 = vpack.c.bf16 %v959, %v959
      %v4549 = vpack.c.bf16 %v987, %v987
      %v4550 = vpack.c.bf16 %v989, %v989
      %v4551 = vpack.c.bf16 %v1017, %v1017
      %v4552 = vpack.c.bf16 %v1019, %v1019
      %v4553 = vpack.c.bf16 %v1047, %v1047
      %v4554 = vpack.c.bf16 %v1049, %v1049
      %v4555 = vpack.c.bf16 %v1077, %v1077
      %v4556 = vpack.c.bf16 %v1079, %v1079
      %v4557 = vpack.c.bf16 %v1107, %v1107
      %v4558 = vpack.c.bf16 %v1109, %v1109
      %v4559 = vpack.c.bf16 %v1137, %v1137
      %v4560 = vpack.c.bf16 %v1139, %v1139
      %v4561 = vpack.c.bf16 %v1167, %v1167
      %v4562 = vpack.c.bf16 %v1169, %v1169
      %v4563 = vpack.c.bf16 %v1197, %v1197
      %v4564 = vpack.c.bf16 %v1199, %v1199
      %v4565 = vpack.c.bf16 %v1227, %v1227
      %v4566 = vpack.c.bf16 %v1229, %v1229
      %v4567 = vpack.c.bf16 %v1257, %v1257
      %v4568 = vpack.c.bf16 %v1259, %v1259
      %v4569 = vpack.c.bf16 %v1287, %v1287
      %v4570 = vpack.c.bf16 %v1289, %v1289
      %v4571 = vpack.c.bf16 %v1317, %v1317
      %v4572 = vpack.c.bf16 %v1319, %v1319
      %v4573 = vpack.c.bf16 %v1347, %v1347
      %v4574 = vpack.c.bf16 %v1349, %v1349
      %v4575 = vpack.c.bf16 %v1377, %v1377
      %v4576 = vpack.c.bf16 %v1379, %v1379
      %v4577 = vpack.c.bf16 %v1407, %v1407
      %v4578 = vpack.c.bf16 %v1409, %v1409
      %v4579 = vpack.c.bf16 %v1437, %v1437
      %v4580 = vpack.c.bf16 %v1439, %v1439
      %v4581 = vpack.c.bf16 %v1467, %v1467
      %v4582 = vpack.c.bf16 %v1469, %v1469
      %v4583 = vpack.c.bf16 %v1497, %v1497
      %v4584 = vpack.c.bf16 %v1499, %v1499
      %v4585 = vpack.c.bf16 %v1527, %v1527
      %v4586 = vpack.c.bf16 %v1529, %v1529
      %v4587 = vpack.c.bf16 %v1557, %v1557
      %v4588 = vpack.c.bf16 %v1559, %v1559
      %v4589 = vpack.c.bf16 %v1587, %v1587
      %v4590 = vpack.c.bf16 %v1589, %v1589
      %v4591 = vpack.c.bf16 %v1617, %v1617
      %v4592 = vpack.c.bf16 %v1619, %v1619
      %v4593 = vpack.c.bf16 %v1647, %v1647
      %v4594 = vpack.c.bf16 %v1649, %v1649
      %v4595 = vpack.c.bf16 %v1677, %v1677
      %v4596 = vpack.c.bf16 %v1679, %v1679
      %v4597 = vpack.c.bf16 %v1707, %v1707
      %v4598 = vpack.c.bf16 %v1709, %v1709
      %v4599 = vpack.c.bf16 %v1737, %v1737
      %v4600 = vpack.c.bf16 %v1739, %v1739
      %v4601 = vpack.c.bf16 %v1767, %v1767
      %v4602 = vpack.c.bf16 %v1769, %v1769
      %v4603 = vpack.c.bf16 %v1797, %v1797
      %v4604 = vpack.c.bf16 %v1799, %v1799
      %v4605 = vpack.c.bf16 %v1827, %v1827
      %v4606 = vpack.c.bf16 %v1829, %v1829
      %v4607 = vpack.c.bf16 %v1857, %v1857
      %v4608 = vpack.c.bf16 %v1859, %v1859
      %v4609 = vpack.c.bf16 %v1887, %v1887
      %v4610 = vpack.c.bf16 %v1889, %v1889
      %v4611 = vpack.c.bf16 %v1917, %v1917
      %v4612 = vpack.c.bf16 %v1919, %v1919
      %v4613 = vpack.c.bf16 %v1947, %v1947
      %v4614 = vpack.c.bf16 %v1949, %v1949
      %v4615 = vpack.c.bf16 %v1977, %v1977
      %v4616 = vpack.c.bf16 %v1979, %v1979
      %v4617 = vpack.c.bf16 %v2007, %v2007
      %v4618 = vpack.c.bf16 %v2009, %v2009
      %v4619 = vpack.c.bf16 %v2037, %v2037
      %v4620 = vpack.c.bf16 %v2039, %v2039
      %v4621 = vpack.c.bf16 %v2067, %v2067
      %v4622 = vpack.c.bf16 %v2069, %v2069
      %v4623 = vpack.c.bf16 %v2097, %v2097
      %v4624 = vpack.c.bf16 %v2099, %v2099
      %v4625 = vpack.c.bf16 %v2127, %v2127
      %v4626 = vpack.c.bf16 %v2129, %v2129
      %v4627 = vpack.c.bf16 %v2157, %v2157
      %v4628 = vpack.c.bf16 %v2159, %v2159
      %v4629 = vpack.c.bf16 %v2187, %v2187
      %v4630 = vpack.c.bf16 %v2189, %v2189
      %v4631 = vpack.c.bf16 %v2217, %v2217
      %v4632 = vpack.c.bf16 %v2219, %v2219
      %v4633 = vpack.c.bf16 %v2247, %v2247
      %v4634 = vpack.c.bf16 %v2249, %v2249
      %v4635 = vpack.c.bf16 %v2277, %v2277
      %v4636 = vpack.c.bf16 %v2279, %v2279
      %v4637 = vpack.c.bf16 %v2307, %v2307
      %v4638 = vpack.c.bf16 %v2309, %v2309
      %v4639 = vpack.c.bf16 %v2337, %v2337
      %v4640 = vpack.c.bf16 %v2339, %v2339
      %v4641 = vpack.c.bf16 %v2367, %v2367
      %v4642 = vpack.c.bf16 %v2369, %v2369
      %v4643 = vpack.c.bf16 %v2397, %v2397
      %v4644 = vpack.c.bf16 %v2399, %v2399
      %v4645 = vpack.c.bf16 %v2427, %v2427
      %v4646 = vpack.c.bf16 %v2429, %v2429
      %v4647 = vpack.c.bf16 %v2457, %v2457
      %v4648 = vpack.c.bf16 %v2459, %v2459
      %v4649 = vpack.c.bf16 %v2487, %v2487
      %v4650 = vpack.c.bf16 %v2489, %v2489
      %v4651 = vpack.c.bf16 %v2517, %v2517
      %v4652 = vpack.c.bf16 %v2519, %v2519
      %v4653 = vpack.c.bf16 %v2547, %v2547
      %v4654 = vpack.c.bf16 %v2549, %v2549
      %v4655 = vpack.c.bf16 %v2577, %v2577
      %v4656 = vpack.c.bf16 %v2579, %v2579
      %v4657 = vpack.c.bf16 %v2607, %v2607
      %v4658 = vpack.c.bf16 %v2609, %v2609
      %v4659 = vpack.c.bf16 %v2637, %v2637
      %v4660 = vpack.c.bf16 %v2639, %v2639
      %v4661 = vpack.c.bf16 %v2667, %v2667
      %v4662 = vpack.c.bf16 %v2669, %v2669
      %v4663 = vpack.c.bf16 %v2697, %v2697
      %v4664 = vpack.c.bf16 %v2699, %v2699
      %v4665 = vpack.c.bf16 %v2727, %v2727
      %v4666 = vpack.c.bf16 %v2729, %v2729
      %v4667 = vpack.c.bf16 %v2757, %v2757
      %v4668 = vpack.c.bf16 %v2759, %v2759
      %v4669 = vpack.c.bf16 %v2787, %v2787
      %v4670 = vpack.c.bf16 %v2789, %v2789
      %v4671 = vpack.c.bf16 %v2817, %v2817
      %v4672 = vpack.c.bf16 %v2819, %v2819
      %v4673 = vpack.c.bf16 %v2847, %v2847
      %v4674 = vpack.c.bf16 %v2849, %v2849
      %v4675 = vpack.c.bf16 %v2877, %v2877
      %v4676 = vpack.c.bf16 %v2879, %v2879
      %v4677 = vpack.c.bf16 %v2907, %v2907
      %v4678 = vpack.c.bf16 %v2909, %v2909
      %v4679 = vpack.c.bf16 %v2937, %v2937
      %v4680 = vpack.c.bf16 %v2939, %v2939
      %v4681 = vpack.c.bf16 %v2967, %v2967
      %v4682 = vpack.c.bf16 %v2969, %v2969
      %v4683 = vpack.c.bf16 %v2997, %v2997
      %v4684 = vpack.c.bf16 %v2999, %v2999
      %v4685 = vpack.c.bf16 %v3027, %v3027
      %v4686 = vpack.c.bf16 %v3029, %v3029
      %v4687 = vpack.c.bf16 %v3057, %v3057
      %v4688 = vpack.c.bf16 %v3059, %v3059
      %v4689 = vpack.c.bf16 %v3087, %v3087
      %v4690 = vpack.c.bf16 %v3089, %v3089
      %v4691 = vpack.c.bf16 %v3117, %v3117
      %v4692 = vpack.c.bf16 %v3119, %v3119
      %v4693 = vpack.c.bf16 %v3147, %v3147
      %v4694 = vpack.c.bf16 %v3149, %v3149
      %v4695 = vpack.c.bf16 %v3177, %v3177
      %v4696 = vpack.c.bf16 %v3179, %v3179
      %v4697 = vpack.c.bf16 %v3207, %v3207
      %v4698 = vpack.c.bf16 %v3209, %v3209
      %v4699 = vpack.c.bf16 %v3237, %v3237
      %v4700 = vpack.c.bf16 %v3239, %v3239
      %v4701 = vpack.c.bf16 %v3267, %v3267
      %v4702 = vpack.c.bf16 %v3269, %v3269
      %v4703 = vpack.c.bf16 %v3297, %v3297
      %v4704 = vpack.c.bf16 %v3299, %v3299
      %v4705 = vpack.c.bf16 %v3327, %v3327
      %v4706 = vpack.c.bf16 %v3329, %v3329
      %v4707 = vpack.c.bf16 %v3357, %v3357
      %v4708 = vpack.c.bf16 %v3359, %v3359
      %v4709 = vpack.c.bf16 %v3387, %v3387
      %v4710 = vpack.c.bf16 %v3389, %v3389
      %v4711 = vpack.c.bf16 %v3417, %v3417
      %v4712 = vpack.c.bf16 %v3419, %v3419
      %v4713 = vpack.c.bf16 %v3447, %v3447
      %v4714 = vpack.c.bf16 %v3449, %v3449
      %v4715 = vpack.c.bf16 %v3477, %v3477
      %v4716 = vpack.c.bf16 %v3479, %v3479
      %v4717 = vpack.c.bf16 %v3507, %v3507
      %v4718 = vpack.c.bf16 %v3509, %v3509
      %v4719 = vpack.c.bf16 %v3537, %v3537
      %v4720 = vpack.c.bf16 %v3539, %v3539
      %v4721 = vpack.c.bf16 %v3567, %v3567
      %v4722 = vpack.c.bf16 %v3569, %v3569
      %v4723 = vpack.c.bf16 %v3597, %v3597
      %v4724 = vpack.c.bf16 %v3599, %v3599
      %v4725 = vpack.c.bf16 %v3627, %v3627
      %v4726 = vpack.c.bf16 %v3629, %v3629
      %v4727 = vpack.c.bf16 %v3657, %v3657
      %v4728 = vpack.c.bf16 %v3659, %v3659
      %v4729 = vpack.c.bf16 %v3687, %v3687
      %v4730 = vpack.c.bf16 %v3689, %v3689
      %v4731 = vpack.c.bf16 %v3717, %v3717
      %v4732 = vpack.c.bf16 %v3719, %v3719
      %v4733 = vpack.c.bf16 %v3747, %v3747
      %v4734 = vpack.c.bf16 %v3749, %v3749
      %v4735 = vpack.c.bf16 %v3777, %v3777
      %v4736 = vpack.c.bf16 %v3779, %v3779
      %v4737 = vpack.c.bf16 %v3807, %v3807
      %v4738 = vpack.c.bf16 %v3809, %v3809
      %v4739 = vpack.c.bf16 %v3837, %v3837
      %v4740 = vpack.c.bf16 %v3839, %v3839
      %v4741 = vpack.c.bf16 %v3867, %v3867
      %v4742 = vpack.c.bf16 %v3869, %v3869
      %v4743 = vpack.c.bf16 %v3897, %v3897
      %v4744 = vpack.c.bf16 %v3899, %v3899
      %v4745 = vpack.c.bf16 %v3927, %v3927
      %v4746 = vpack.c.bf16 %v3929, %v3929
      %v4747 = vpack.c.bf16 %v3957, %v3957
      %v4748 = vpack.c.bf16 %v3959, %v3959
      %v4749 = vpack.c.bf16 %v3987, %v3987
      %v4750 = vpack.c.bf16 %v3989, %v3989
      %v4751 = vpack.c.bf16 %v4017, %v4017
      %v4752 = vpack.c.bf16 %v4019, %v4019
      %v4753 = vpack.c.bf16 %v4047, %v4047
      %v4754 = vpack.c.bf16 %v4049, %v4049
      %v4755 = vpack.c.bf16 %v4077, %v4077
      %v4756 = vpack.c.bf16 %v4079, %v4079
      %v4757 = vpack.c.bf16 %v4107, %v4107
      %v4758 = vpack.c.bf16 %v4109, %v4109
      %v4759 = vpack.c.bf16 %v4137, %v4137
      %v4760 = vpack.c.bf16 %v4139, %v4139
      %v4761 = vpack.c.bf16 %v4167, %v4167
      %v4762 = vpack.c.bf16 %v4169, %v4169
      %v4763 = vpack.c.bf16 %v4197, %v4197
      %v4764 = vpack.c.bf16 %v4199, %v4199
      %v4765 = vpack.c.bf16 %v4227, %v4227
      %v4766 = vpack.c.bf16 %v4229, %v4229
      %v4767 = vpack.c.bf16 %v4257, %v4257
      %v4768 = vpack.c.bf16 %v4259, %v4259
      %v4769 = vpack.c.bf16 %v4287, %v4287
      %v4770 = vpack.c.bf16 %v4289, %v4289
      %v4771 = vpack.c.bf16 %v4317, %v4317
      %v4772 = vpack.c.bf16 %v4319, %v4319
      %v4773 = vpack.c.bf16 %v4347, %v4347
      %v4774 = vpack.c.bf16 %v4349, %v4349
      %v4775 = vpack.c.bf16 %v4377, %v4377
      %v4776 = vpack.c.bf16 %v4379, %v4379
      %v4777 = vpack.c.bf16 %v4407, %v4407
      %v4778 = vpack.c.bf16 %v4409, %v4409
      %v4779 = vpack.c.bf16 %v4437, %v4437
      %v4780 = vpack.c.bf16 %v4439, %v4439
      %v4781 = vpack.c.bf16 %v4467, %v4467
      %v4782 = vpack.c.bf16 %v4469, %v4469
      %v4783 = vpack.c.bf16 %v4497, %v4497
      %v4784 = vpack.c.bf16 %v4499, %v4499
      %v4785 = vpack.c.bf16 %v4527, %v4527
      %v4786 = vpack.c.bf16 %v4529, %v4529
      %vm4787 = vcmask 125952
      %4788 = vst.msk [vmem:[%s175] sm:$0xf] %vm4787, %v4531
      %4789 = vst.msk [vmem:[%s175 + $0x4] sm:$0xf] %vm4787, %v4532
      %4790 = vst.msk [vmem:[%s175 + $0x8] sm:$0xf] %vm4787, %v4533
      %4791 = vst.msk [vmem:[%s175 + $0xc] sm:$0xf] %vm4787, %v4534
      %4792 = vst.msk [vmem:[%s175 + $0x10] sm:$0xf] %vm4787, %v4535
      %4793 = vst.msk [vmem:[%s175 + $0x14] sm:$0xf] %vm4787, %v4536
      %4794 = vst.msk [vmem:[%s175 + $0x18] sm:$0xf] %vm4787, %v4537
      %4795 = vst.msk [vmem:[%s175 + $0x1c] sm:$0xf] %vm4787, %v4538
      %4796 = vst.msk [vmem:[%s175 + $0x20] sm:$0xf] %vm4787, %v4539
      %4797 = vst.msk [vmem:[%s175 + $0x24] sm:$0xf] %vm4787, %v4540
      %4798 = vst.msk [vmem:[%s175 + $0x28] sm:$0xf] %vm4787, %v4541
      %4799 = vst.msk [vmem:[%s175 + $0x2c] sm:$0xf] %vm4787, %v4542
      %4800 = vst.msk [vmem:[%s175 + $0x30] sm:$0xf] %vm4787, %v4543
      %4801 = vst.msk [vmem:[%s175 + $0x34] sm:$0xf] %vm4787, %v4544
      %4802 = vst.msk [vmem:[%s175 + $0x38] sm:$0xf] %vm4787, %v4545
      %4803 = vst.msk [vmem:[%s175 + $0x3c] sm:$0xf] %vm4787, %v4546
      %4804 = vst.msk [vmem:[%s175 + $0x40] sm:$0xf] %vm4787, %v4547
      %4805 = vst.msk [vmem:[%s175 + $0x44] sm:$0xf] %vm4787, %v4548
      %4806 = vst.msk [vmem:[%s175 + $0x48] sm:$0xf] %vm4787, %v4549
      %4807 = vst.msk [vmem:[%s175 + $0x4c] sm:$0xf] %vm4787, %v4550
      %4808 = vst.msk [vmem:[%s175 + $0x50] sm:$0xf] %vm4787, %v4551
      %4809 = vst.msk [vmem:[%s175 + $0x54] sm:$0xf] %vm4787, %v4552
      %4810 = vst.msk [vmem:[%s175 + $0x58] sm:$0xf] %vm4787, %v4553
      %4811 = vst.msk [vmem:[%s175 + $0x5c] sm:$0xf] %vm4787, %v4554
      %4812 = vst.msk [vmem:[%s175 + $0x60] sm:$0xf] %vm4787, %v4555
      %4813 = vst.msk [vmem:[%s175 + $0x64] sm:$0xf] %vm4787, %v4556
      %4814 = vst.msk [vmem:[%s175 + $0x68] sm:$0xf] %vm4787, %v4557
      %4815 = vst.msk [vmem:[%s175 + $0x6c] sm:$0xf] %vm4787, %v4558
      %4816 = vst.msk [vmem:[%s175 + $0x70] sm:$0xf] %vm4787, %v4559
      %4817 = vst.msk [vmem:[%s175 + $0x74] sm:$0xf] %vm4787, %v4560
      %4818 = vst.msk [vmem:[%s175 + $0x78] sm:$0xf] %vm4787, %v4561
      %4819 = vst.msk [vmem:[%s175 + $0x7c] sm:$0xf] %vm4787, %v4562
      %4820 = vst.msk [vmem:[%s175 + $0x80] sm:$0xf] %vm4787, %v4563
      %4821 = vst.msk [vmem:[%s175 + $0x84] sm:$0xf] %vm4787, %v4564
      %4822 = vst.msk [vmem:[%s175 + $0x88] sm:$0xf] %vm4787, %v4565
      %4823 = vst.msk [vmem:[%s175 + $0x8c] sm:$0xf] %vm4787, %v4566
      %4824 = vst.msk [vmem:[%s175 + $0x90] sm:$0xf] %vm4787, %v4567
      %4825 = vst.msk [vmem:[%s175 + $0x94] sm:$0xf] %vm4787, %v4568
      %4826 = vst.msk [vmem:[%s175 + $0x98] sm:$0xf] %vm4787, %v4569
      %4827 = vst.msk [vmem:[%s175 + $0x9c] sm:$0xf] %vm4787, %v4570
      %4828 = vst.msk [vmem:[%s175 + $0xa0] sm:$0xf] %vm4787, %v4571
      %4829 = vst.msk [vmem:[%s175 + $0xa4] sm:$0xf] %vm4787, %v4572
      %4830 = vst.msk [vmem:[%s175 + $0xa8] sm:$0xf] %vm4787, %v4573
      %4831 = vst.msk [vmem:[%s175 + $0xac] sm:$0xf] %vm4787, %v4574
      %4832 = vst.msk [vmem:[%s175 + $0xb0] sm:$0xf] %vm4787, %v4575
      %4833 = vst.msk [vmem:[%s175 + $0xb4] sm:$0xf] %vm4787, %v4576
      %4834 = vst.msk [vmem:[%s175 + $0xb8] sm:$0xf] %vm4787, %v4577
      %4835 = vst.msk [vmem:[%s175 + $0xbc] sm:$0xf] %vm4787, %v4578
      %4836 = vst.msk [vmem:[%s175 + $0xc0] sm:$0xf] %vm4787, %v4579
      %4837 = vst.msk [vmem:[%s175 + $0xc4] sm:$0xf] %vm4787, %v4580
      %4838 = vst.msk [vmem:[%s175 + $0xc8] sm:$0xf] %vm4787, %v4581
      %4839 = vst.msk [vmem:[%s175 + $0xcc] sm:$0xf] %vm4787, %v4582
      %4840 = vst.msk [vmem:[%s175 + $0xd0] sm:$0xf] %vm4787, %v4583
      %4841 = vst.msk [vmem:[%s175 + $0xd4] sm:$0xf] %vm4787, %v4584
      %4842 = vst.msk [vmem:[%s175 + $0xd8] sm:$0xf] %vm4787, %v4585
      %4843 = vst.msk [vmem:[%s175 + $0xdc] sm:$0xf] %vm4787, %v4586
      %4844 = vst.msk [vmem:[%s175 + $0xe0] sm:$0xf] %vm4787, %v4587
      %4845 = vst.msk [vmem:[%s175 + $0xe4] sm:$0xf] %vm4787, %v4588
      %4846 = vst.msk [vmem:[%s175 + $0xe8] sm:$0xf] %vm4787, %v4589
      %4847 = vst.msk [vmem:[%s175 + $0xec] sm:$0xf] %vm4787, %v4590
      %4848 = vst.msk [vmem:[%s175 + $0xf0] sm:$0xf] %vm4787, %v4591
      %4849 = vst.msk [vmem:[%s175 + $0xf4] sm:$0xf] %vm4787, %v4592
      %4850 = vst.msk [vmem:[%s175 + $0xf8] sm:$0xf] %vm4787, %v4593
      %4851 = vst.msk [vmem:[%s175 + $0xfc] sm:$0xf] %vm4787, %v4594
      %4852 = vst.msk [vmem:[%s175 + $0x100] sm:$0xf] %vm4787, %v4595
      %4853 = vst.msk [vmem:[%s175 + $0x104] sm:$0xf] %vm4787, %v4596
      %4854 = vst.msk [vmem:[%s175 + $0x108] sm:$0xf] %vm4787, %v4597
      %4855 = vst.msk [vmem:[%s175 + $0x10c] sm:$0xf] %vm4787, %v4598
      %4856 = vst.msk [vmem:[%s175 + $0x110] sm:$0xf] %vm4787, %v4599
      %4857 = vst.msk [vmem:[%s175 + $0x114] sm:$0xf] %vm4787, %v4600
      %4858 = vst.msk [vmem:[%s175 + $0x118] sm:$0xf] %vm4787, %v4601
      %4859 = vst.msk [vmem:[%s175 + $0x11c] sm:$0xf] %vm4787, %v4602
      %4860 = vst.msk [vmem:[%s175 + $0x120] sm:$0xf] %vm4787, %v4603
      %4861 = vst.msk [vmem:[%s175 + $0x124] sm:$0xf] %vm4787, %v4604
      %4862 = vst.msk [vmem:[%s175 + $0x128] sm:$0xf] %vm4787, %v4605
      %4863 = vst.msk [vmem:[%s175 + $0x12c] sm:$0xf] %vm4787, %v4606
      %4864 = vst.msk [vmem:[%s175 + $0x130] sm:$0xf] %vm4787, %v4607
      %4865 = vst.msk [vmem:[%s175 + $0x134] sm:$0xf] %vm4787, %v4608
      %4866 = vst.msk [vmem:[%s175 + $0x138] sm:$0xf] %vm4787, %v4609
      %4867 = vst.msk [vmem:[%s175 + $0x13c] sm:$0xf] %vm4787, %v4610
      %4868 = vst.msk [vmem:[%s175 + $0x140] sm:$0xf] %vm4787, %v4611
      %4869 = vst.msk [vmem:[%s175 + $0x144] sm:$0xf] %vm4787, %v4612
      %4870 = vst.msk [vmem:[%s175 + $0x148] sm:$0xf] %vm4787, %v4613
      %4871 = vst.msk [vmem:[%s175 + $0x14c] sm:$0xf] %vm4787, %v4614
      %4872 = vst.msk [vmem:[%s175 + $0x150] sm:$0xf] %vm4787, %v4615
      %4873 = vst.msk [vmem:[%s175 + $0x154] sm:$0xf] %vm4787, %v4616
      %4874 = vst.msk [vmem:[%s175 + $0x158] sm:$0xf] %vm4787, %v4617
      %4875 = vst.msk [vmem:[%s175 + $0x15c] sm:$0xf] %vm4787, %v4618
      %4876 = vst.msk [vmem:[%s175 + $0x160] sm:$0xf] %vm4787, %v4619
      %4877 = vst.msk [vmem:[%s175 + $0x164] sm:$0xf] %vm4787, %v4620
      %4878 = vst.msk [vmem:[%s175 + $0x168] sm:$0xf] %vm4787, %v4621
      %4879 = vst.msk [vmem:[%s175 + $0x16c] sm:$0xf] %vm4787, %v4622
      %4880 = vst.msk [vmem:[%s175 + $0x170] sm:$0xf] %vm4787, %v4623
      %4881 = vst.msk [vmem:[%s175 + $0x174] sm:$0xf] %vm4787, %v4624
      %4882 = vst.msk [vmem:[%s175 + $0x178] sm:$0xf] %vm4787, %v4625
      %4883 = vst.msk [vmem:[%s175 + $0x17c] sm:$0xf] %vm4787, %v4626
      %4884 = vst.msk [vmem:[%s175 + $0x180] sm:$0xf] %vm4787, %v4627
      %4885 = vst.msk [vmem:[%s175 + $0x184] sm:$0xf] %vm4787, %v4628
      %4886 = vst.msk [vmem:[%s175 + $0x188] sm:$0xf] %vm4787, %v4629
      %4887 = vst.msk [vmem:[%s175 + $0x18c] sm:$0xf] %vm4787, %v4630
      %4888 = vst.msk [vmem:[%s175 + $0x190] sm:$0xf] %vm4787, %v4631
      %4889 = vst.msk [vmem:[%s175 + $0x194] sm:$0xf] %vm4787, %v4632
      %4890 = vst.msk [vmem:[%s175 + $0x198] sm:$0xf] %vm4787, %v4633
      %4891 = vst.msk [vmem:[%s175 + $0x19c] sm:$0xf] %vm4787, %v4634
      %4892 = vst.msk [vmem:[%s175 + $0x1a0] sm:$0xf] %vm4787, %v4635
      %4893 = vst.msk [vmem:[%s175 + $0x1a4] sm:$0xf] %vm4787, %v4636
      %4894 = vst.msk [vmem:[%s175 + $0x1a8] sm:$0xf] %vm4787, %v4637
      %4895 = vst.msk [vmem:[%s175 + $0x1ac] sm:$0xf] %vm4787, %v4638
      %4896 = vst.msk [vmem:[%s175 + $0x1b0] sm:$0xf] %vm4787, %v4639
      %4897 = vst.msk [vmem:[%s175 + $0x1b4] sm:$0xf] %vm4787, %v4640
      %4898 = vst.msk [vmem:[%s175 + $0x1b8] sm:$0xf] %vm4787, %v4641
      %4899 = vst.msk [vmem:[%s175 + $0x1bc] sm:$0xf] %vm4787, %v4642
      %4900 = vst.msk [vmem:[%s175 + $0x1c0] sm:$0xf] %vm4787, %v4643
      %4901 = vst.msk [vmem:[%s175 + $0x1c4] sm:$0xf] %vm4787, %v4644
      %4902 = vst.msk [vmem:[%s175 + $0x1c8] sm:$0xf] %vm4787, %v4645
      %4903 = vst.msk [vmem:[%s175 + $0x1cc] sm:$0xf] %vm4787, %v4646
      %4904 = vst.msk [vmem:[%s175 + $0x1d0] sm:$0xf] %vm4787, %v4647
      %4905 = vst.msk [vmem:[%s175 + $0x1d4] sm:$0xf] %vm4787, %v4648
      %4906 = vst.msk [vmem:[%s175 + $0x1d8] sm:$0xf] %vm4787, %v4649
      %4907 = vst.msk [vmem:[%s175 + $0x1dc] sm:$0xf] %vm4787, %v4650
      %4908 = vst.msk [vmem:[%s175 + $0x1e0] sm:$0xf] %vm4787, %v4651
      %4909 = vst.msk [vmem:[%s175 + $0x1e4] sm:$0xf] %vm4787, %v4652
      %4910 = vst.msk [vmem:[%s175 + $0x1e8] sm:$0xf] %vm4787, %v4653
      %4911 = vst.msk [vmem:[%s175 + $0x1ec] sm:$0xf] %vm4787, %v4654
      %4912 = vst.msk [vmem:[%s175 + $0x1f0] sm:$0xf] %vm4787, %v4655
      %4913 = vst.msk [vmem:[%s175 + $0x1f4] sm:$0xf] %vm4787, %v4656
      %4914 = vst.msk [vmem:[%s175 + $0x1f8] sm:$0xf] %vm4787, %v4657
      %4915 = vst.msk [vmem:[%s175 + $0x1fc] sm:$0xf] %vm4787, %v4658
      %4916 = vst.msk [vmem:[%s175 + $0x200] sm:$0xf] %vm4787, %v4659
      %4917 = vst.msk [vmem:[%s175 + $0x204] sm:$0xf] %vm4787, %v4660
      %4918 = vst.msk [vmem:[%s175 + $0x208] sm:$0xf] %vm4787, %v4661
      %4919 = vst.msk [vmem:[%s175 + $0x20c] sm:$0xf] %vm4787, %v4662
      %4920 = vst.msk [vmem:[%s175 + $0x210] sm:$0xf] %vm4787, %v4663
      %4921 = vst.msk [vmem:[%s175 + $0x214] sm:$0xf] %vm4787, %v4664
      %4922 = vst.msk [vmem:[%s175 + $0x218] sm:$0xf] %vm4787, %v4665
      %4923 = vst.msk [vmem:[%s175 + $0x21c] sm:$0xf] %vm4787, %v4666
      %4924 = vst.msk [vmem:[%s175 + $0x220] sm:$0xf] %vm4787, %v4667
      %4925 = vst.msk [vmem:[%s175 + $0x224] sm:$0xf] %vm4787, %v4668
      %4926 = vst.msk [vmem:[%s175 + $0x228] sm:$0xf] %vm4787, %v4669
      %4927 = vst.msk [vmem:[%s175 + $0x22c] sm:$0xf] %vm4787, %v4670
      %4928 = vst.msk [vmem:[%s175 + $0x230] sm:$0xf] %vm4787, %v4671
      %4929 = vst.msk [vmem:[%s175 + $0x234] sm:$0xf] %vm4787, %v4672
      %4930 = vst.msk [vmem:[%s175 + $0x238] sm:$0xf] %vm4787, %v4673
      %4931 = vst.msk [vmem:[%s175 + $0x23c] sm:$0xf] %vm4787, %v4674
      %4932 = vst.msk [vmem:[%s175 + $0x240] sm:$0xf] %vm4787, %v4675
      %4933 = vst.msk [vmem:[%s175 + $0x244] sm:$0xf] %vm4787, %v4676
      %4934 = vst.msk [vmem:[%s175 + $0x248] sm:$0xf] %vm4787, %v4677
      %4935 = vst.msk [vmem:[%s175 + $0x24c] sm:$0xf] %vm4787, %v4678
      %4936 = vst.msk [vmem:[%s175 + $0x250] sm:$0xf] %vm4787, %v4679
      %4937 = vst.msk [vmem:[%s175 + $0x254] sm:$0xf] %vm4787, %v4680
      %4938 = vst.msk [vmem:[%s175 + $0x258] sm:$0xf] %vm4787, %v4681
      %4939 = vst.msk [vmem:[%s175 + $0x25c] sm:$0xf] %vm4787, %v4682
      %4940 = vst.msk [vmem:[%s175 + $0x260] sm:$0xf] %vm4787, %v4683
      %4941 = vst.msk [vmem:[%s175 + $0x264] sm:$0xf] %vm4787, %v4684
      %4942 = vst.msk [vmem:[%s175 + $0x268] sm:$0xf] %vm4787, %v4685
      %4943 = vst.msk [vmem:[%s175 + $0x26c] sm:$0xf] %vm4787, %v4686
      %4944 = vst.msk [vmem:[%s175 + $0x270] sm:$0xf] %vm4787, %v4687
      %4945 = vst.msk [vmem:[%s175 + $0x274] sm:$0xf] %vm4787, %v4688
      %4946 = vst.msk [vmem:[%s175 + $0x278] sm:$0xf] %vm4787, %v4689
      %4947 = vst.msk [vmem:[%s175 + $0x27c] sm:$0xf] %vm4787, %v4690
      %4948 = vst.msk [vmem:[%s175 + $0x280] sm:$0xf] %vm4787, %v4691
      %4949 = vst.msk [vmem:[%s175 + $0x284] sm:$0xf] %vm4787, %v4692
      %4950 = vst.msk [vmem:[%s175 + $0x288] sm:$0xf] %vm4787, %v4693
      %4951 = vst.msk [vmem:[%s175 + $0x28c] sm:$0xf] %vm4787, %v4694
      %4952 = vst.msk [vmem:[%s175 + $0x290] sm:$0xf] %vm4787, %v4695
      %4953 = vst.msk [vmem:[%s175 + $0x294] sm:$0xf] %vm4787, %v4696
      %4954 = vst.msk [vmem:[%s175 + $0x298] sm:$0xf] %vm4787, %v4697
      %4955 = vst.msk [vmem:[%s175 + $0x29c] sm:$0xf] %vm4787, %v4698
      %4956 = vst.msk [vmem:[%s175 + $0x2a0] sm:$0xf] %vm4787, %v4699
      %4957 = vst.msk [vmem:[%s175 + $0x2a4] sm:$0xf] %vm4787, %v4700
      %4958 = vst.msk [vmem:[%s175 + $0x2a8] sm:$0xf] %vm4787, %v4701
      %4959 = vst.msk [vmem:[%s175 + $0x2ac] sm:$0xf] %vm4787, %v4702
      %4960 = vst.msk [vmem:[%s175 + $0x2b0] sm:$0xf] %vm4787, %v4703
      %4961 = vst.msk [vmem:[%s175 + $0x2b4] sm:$0xf] %vm4787, %v4704
      %4962 = vst.msk [vmem:[%s175 + $0x2b8] sm:$0xf] %vm4787, %v4705
      %4963 = vst.msk [vmem:[%s175 + $0x2bc] sm:$0xf] %vm4787, %v4706
      %4964 = vst.msk [vmem:[%s175 + $0x2c0] sm:$0xf] %vm4787, %v4707
      %4965 = vst.msk [vmem:[%s175 + $0x2c4] sm:$0xf] %vm4787, %v4708
      %4966 = vst.msk [vmem:[%s175 + $0x2c8] sm:$0xf] %vm4787, %v4709
      %4967 = vst.msk [vmem:[%s175 + $0x2cc] sm:$0xf] %vm4787, %v4710
      %4968 = vst.msk [vmem:[%s175 + $0x2d0] sm:$0xf] %vm4787, %v4711
      %4969 = vst.msk [vmem:[%s175 + $0x2d4] sm:$0xf] %vm4787, %v4712
      %4970 = vst.msk [vmem:[%s175 + $0x2d8] sm:$0xf] %vm4787, %v4713
      %4971 = vst.msk [vmem:[%s175 + $0x2dc] sm:$0xf] %vm4787, %v4714
      %4972 = vst.msk [vmem:[%s175 + $0x2e0] sm:$0xf] %vm4787, %v4715
      %4973 = vst.msk [vmem:[%s175 + $0x2e4] sm:$0xf] %vm4787, %v4716
      %4974 = vst.msk [vmem:[%s175 + $0x2e8] sm:$0xf] %vm4787, %v4717
      %4975 = vst.msk [vmem:[%s175 + $0x2ec] sm:$0xf] %vm4787, %v4718
      %4976 = vst.msk [vmem:[%s175 + $0x2f0] sm:$0xf] %vm4787, %v4719
      %4977 = vst.msk [vmem:[%s175 + $0x2f4] sm:$0xf] %vm4787, %v4720
      %4978 = vst.msk [vmem:[%s175 + $0x2f8] sm:$0xf] %vm4787, %v4721
      %4979 = vst.msk [vmem:[%s175 + $0x2fc] sm:$0xf] %vm4787, %v4722
      %4980 = vst.msk [vmem:[%s175 + $0x300] sm:$0xf] %vm4787, %v4723
      %4981 = vst.msk [vmem:[%s175 + $0x304] sm:$0xf] %vm4787, %v4724
      %4982 = vst.msk [vmem:[%s175 + $0x308] sm:$0xf] %vm4787, %v4725
      %4983 = vst.msk [vmem:[%s175 + $0x30c] sm:$0xf] %vm4787, %v4726
      %4984 = vst.msk [vmem:[%s175 + $0x310] sm:$0xf] %vm4787, %v4727
      %4985 = vst.msk [vmem:[%s175 + $0x314] sm:$0xf] %vm4787, %v4728
      %4986 = vst.msk [vmem:[%s175 + $0x318] sm:$0xf] %vm4787, %v4729
      %4987 = vst.msk [vmem:[%s175 + $0x31c] sm:$0xf] %vm4787, %v4730
      %4988 = vst.msk [vmem:[%s175 + $0x320] sm:$0xf] %vm4787, %v4731
      %4989 = vst.msk [vmem:[%s175 + $0x324] sm:$0xf] %vm4787, %v4732
      %4990 = vst.msk [vmem:[%s175 + $0x328] sm:$0xf] %vm4787, %v4733
      %4991 = vst.msk [vmem:[%s175 + $0x32c] sm:$0xf] %vm4787, %v4734
      %4992 = vst.msk [vmem:[%s175 + $0x330] sm:$0xf] %vm4787, %v4735
      %4993 = vst.msk [vmem:[%s175 + $0x334] sm:$0xf] %vm4787, %v4736
      %4994 = vst.msk [vmem:[%s175 + $0x338] sm:$0xf] %vm4787, %v4737
      %4995 = vst.msk [vmem:[%s175 + $0x33c] sm:$0xf] %vm4787, %v4738
      %4996 = vst.msk [vmem:[%s175 + $0x340] sm:$0xf] %vm4787, %v4739
      %4997 = vst.msk [vmem:[%s175 + $0x344] sm:$0xf] %vm4787, %v4740
      %4998 = vst.msk [vmem:[%s175 + $0x348] sm:$0xf] %vm4787, %v4741
      %4999 = vst.msk [vmem:[%s175 + $0x34c] sm:$0xf] %vm4787, %v4742
      %5000 = vst.msk [vmem:[%s175 + $0x350] sm:$0xf] %vm4787, %v4743
      %5001 = vst.msk [vmem:[%s175 + $0x354] sm:$0xf] %vm4787, %v4744
      %5002 = vst.msk [vmem:[%s175 + $0x358] sm:$0xf] %vm4787, %v4745
      %5003 = vst.msk [vmem:[%s175 + $0x35c] sm:$0xf] %vm4787, %v4746
      %5004 = vst.msk [vmem:[%s175 + $0x360] sm:$0xf] %vm4787, %v4747
      %5005 = vst.msk [vmem:[%s175 + $0x364] sm:$0xf] %vm4787, %v4748
      %5006 = vst.msk [vmem:[%s175 + $0x368] sm:$0xf] %vm4787, %v4749
      %5007 = vst.msk [vmem:[%s175 + $0x36c] sm:$0xf] %vm4787, %v4750
      %5008 = vst.msk [vmem:[%s175 + $0x370] sm:$0xf] %vm4787, %v4751
      %5009 = vst.msk [vmem:[%s175 + $0x374] sm:$0xf] %vm4787, %v4752
      %5010 = vst.msk [vmem:[%s175 + $0x378] sm:$0xf] %vm4787, %v4753
      %5011 = vst.msk [vmem:[%s175 + $0x37c] sm:$0xf] %vm4787, %v4754
      %5012 = vst.msk [vmem:[%s175 + $0x380] sm:$0xf] %vm4787, %v4755
      %5013 = vst.msk [vmem:[%s175 + $0x384] sm:$0xf] %vm4787, %v4756
      %5014 = vst.msk [vmem:[%s175 + $0x388] sm:$0xf] %vm4787, %v4757
      %5015 = vst.msk [vmem:[%s175 + $0x38c] sm:$0xf] %vm4787, %v4758
      %5016 = vst.msk [vmem:[%s175 + $0x390] sm:$0xf] %vm4787, %v4759
      %5017 = vst.msk [vmem:[%s175 + $0x394] sm:$0xf] %vm4787, %v4760
      %5018 = vst.msk [vmem:[%s175 + $0x398] sm:$0xf] %vm4787, %v4761
      %5019 = vst.msk [vmem:[%s175 + $0x39c] sm:$0xf] %vm4787, %v4762
      %5020 = vst.msk [vmem:[%s175 + $0x3a0] sm:$0xf] %vm4787, %v4763
      %5021 = vst.msk [vmem:[%s175 + $0x3a4] sm:$0xf] %vm4787, %v4764
      %5022 = vst.msk [vmem:[%s175 + $0x3a8] sm:$0xf] %vm4787, %v4765
      %5023 = vst.msk [vmem:[%s175 + $0x3ac] sm:$0xf] %vm4787, %v4766
      %5024 = vst.msk [vmem:[%s175 + $0x3b0] sm:$0xf] %vm4787, %v4767
      %5025 = vst.msk [vmem:[%s175 + $0x3b4] sm:$0xf] %vm4787, %v4768
      %5026 = vst.msk [vmem:[%s175 + $0x3b8] sm:$0xf] %vm4787, %v4769
      %5027 = vst.msk [vmem:[%s175 + $0x3bc] sm:$0xf] %vm4787, %v4770
      %5028 = vst.msk [vmem:[%s175 + $0x3c0] sm:$0xf] %vm4787, %v4771
      %5029 = vst.msk [vmem:[%s175 + $0x3c4] sm:$0xf] %vm4787, %v4772
      %5030 = vst.msk [vmem:[%s175 + $0x3c8] sm:$0xf] %vm4787, %v4773
      %5031 = vst.msk [vmem:[%s175 + $0x3cc] sm:$0xf] %vm4787, %v4774
      %5032 = vst.msk [vmem:[%s175 + $0x3d0] sm:$0xf] %vm4787, %v4775
      %5033 = vst.msk [vmem:[%s175 + $0x3d4] sm:$0xf] %vm4787, %v4776
      %5034 = vst.msk [vmem:[%s175 + $0x3d8] sm:$0xf] %vm4787, %v4777
      %5035 = vst.msk [vmem:[%s175 + $0x3dc] sm:$0xf] %vm4787, %v4778
      %5036 = vst.msk [vmem:[%s175 + $0x3e0] sm:$0xf] %vm4787, %v4779
      %5037 = vst.msk [vmem:[%s175 + $0x3e4] sm:$0xf] %vm4787, %v4780
      %5038 = vst.msk [vmem:[%s175 + $0x3e8] sm:$0xf] %vm4787, %v4781
      %5039 = vst.msk [vmem:[%s175 + $0x3ec] sm:$0xf] %vm4787, %v4782
      %5040 = vst.msk [vmem:[%s175 + $0x3f0] sm:$0xf] %vm4787, %v4783
      %5041 = vst.msk [vmem:[%s175 + $0x3f4] sm:$0xf] %vm4787, %v4784
      %5042 = vst.msk [vmem:[%s175 + $0x3f8] sm:$0xf] %vm4787, %v4785
      %5043 = vst.msk [vmem:[%s175 + $0x3fc] sm:$0xf] %vm4787, %v4786
      %s5044 = smul.u32 128, %s13
      %p5045 = scmp.lt.s32.totalorder %s5044, 255
      %s5046 = scalar_select %p5045, %s5044, 255
      %s5047 = smul.addr %s5046, 2
      %s5048 = smul.addr %s5047, 4
      %s5049 = scalar_lea.vmem %s2, %s5048
      // Predicated region
      $region29: #{rgbn_bbox_head_forward.2} parent=27 // pred_check
        %p5050 = pneg %p83
      $region30: #{rgbn_bbox_head_forward.2} parent=27 // pred_check_branch
        %5052 = sbr.rel (%p5050) target = $region32
      $region31: #{rgbn_bbox_head_forward.2} parent=27 // pred_region
        %s5053 = smul.u32 128, %s13
      $region32: #{rgbn_bbox_head_forward.2} parent=27 // pred_fallthru
        _
    $region28: #{rgbn_bbox_head_forward.2} parent=5 // pred_fallthru
      _
    %p5054 = scmp.le.s32.totalorder 2, %s8
    // Predicated region
    $region33: #{rgbn_bbox_head_forward.2} parent=5 // pred_check
      %p5055 = pneg %p5054
    $region34: #{rgbn_bbox_head_forward.2} parent=5 // pred_check_branch
      %5057 = sbr.rel (%p5055) target = $region36
    $region35: #{rgbn_bbox_head_forward.2} parent=5 // pred_region
      %s5058 = ssub.s32 %s8, 2
      // Predicated region
      $region37: #{rgbn_bbox_head_forward.2} parent=35 // pred_check
        %p5059 = pneg %p89
      $region38: #{rgbn_bbox_head_forward.2} parent=35 // pred_check_branch
        %5061 = sbr.rel (%p5059) target = $region40
      $region39: #{rgbn_bbox_head_forward.2} parent=35 // pred_region
        %s5062 = smul.u32 128, %s14
        %p5063 = scmp.lt.s32.totalorder %s5062, 255
        %s5064 = scalar_select %p5063, %s5062, 255
        %s5065 = smul.addr %s5064, 2
        %s5066 = smul.addr %s5065, 4
        %s5067 = scalar_lea.vmem %s2, %s5066
      $region40: #{rgbn_bbox_head_forward.2} parent=35 // pred_fallthru
        _
    $region36: #{rgbn_bbox_head_forward.2} parent=5 // pred_fallthru
      _
  $region6: #{rgbn_bbox_head_forward.2} parent=0 // loop_footer
    %s12 = sadd.s32 1, %s8
  $region7: #{rgbn_bbox_head_forward.2} parent=0 // loop_footer_branch
    %7 = sbr.rel target = $region3
  $region8: #{rgbn_bbox_head_forward.2} parent=0 // loop_exit
    _

// kernel: rgbn_bbox_head_forward.3
$region0: #{rgbn_bbox_head_forward.3}
  #allocation0 [shape = 'u32[]', space=smem, size = 0x4, offset = 0x4, fixed_abs, tag = 'smem constant byte address 0x4 - core index']
  #allocation1 [shape = 'u32[72,128]{1,0:T(1,128)}', space=vmem, size = 0x9000, scoped, tag = 'internal scratch']
  %s0 = inlined_call_operand.vmem [shape: bf16[256,256], index: 0, kind: input, shape index: {}]
  %s1 = inlined_call_operand.vmem [shape: bf16[256,1024], index: 1, kind: input, shape index: {}]
  %s2 = inlined_call_operand.vmem [shape: bf16[256,256], index: 2, kind: input, shape index: {}]
  %s3 = inlined_call_operand.vmem [shape: bf16[256,128], index: 3, kind: input, shape index: {}]
  %s4 = inlined_call_operand.vmem [shape: bf16[1024,128], index: 4, kind: input, shape index: {}]
  %s5 = inlined_call_operand.vmem [shape: f32[1,128], index: 5, kind: input, shape index: {}]
  %s6 = inlined_call_operand.vmem [shape: f32[256,128], index: 6, kind: output, shape index: {}]
  %s7 = sld [smem:[#allocation0]]
  $region57: #{rgbn_bbox_head_forward.3} parent=0
    _
  %s9 = ssub.s32 1, %s7
  %s10 = scalar_select 0, %s9, %s7
  loop: start=0, step=1, limit=4
  $region2: #{rgbn_bbox_head_forward.3} parent=0 // loop_pre_header
    _
  $region3: #{rgbn_bbox_head_forward.3} parent=0 // loop_header
    %s12 = sphi 0, %s16
    %p13 = scmp.ge.s32.totalorder %s12, 4
    %s22 = sphi 0, %s24
    %s25 = sphi 0, %s22
    %s26 = sphi 0, %s25
    %s42 = sphi 0, %s26
    %s48 = sphi 0, %s50
    %s51 = sphi 0, %s48
    %s52 = sphi 0, %s51
    %s68 = sphi 0, %s52
    %s72 = sphi 0, %s72
    %s74 = sphi 0, %s72
    %s75 = sphi 0, %s74
    %s89 = sphi 0, %s75
    %s93 = sphi 0, %s93
    %s95 = sphi 0, %s93
    %s96 = sphi 0, %s95
    %s110 = sphi 0, %s96
    %s114 = sphi 0, %s114
    %s116 = sphi 0, %s114
    %s117 = sphi 0, %s116
    %s131 = sphi 0, %s117
    %s135 = sphi 0, %s135
    %s137 = sphi 0, %s135
    %s138 = sphi 0, %s137
    %s152 = sphi 0, %s138
    %s158 = sphi 0, %s160
    %s161 = sphi 0, %s158
    %s162 = sphi 0, %s161
    %s178 = sphi 0, %s162
  $region4: #{rgbn_bbox_head_forward.3} parent=0 // loop_header_branch
    %15 = sbr.rel (%p13) target = $region8
  $region5: #{rgbn_bbox_head_forward.3} parent=0 // loop_body
    %s17 = ssub.s32 %s12, 1
    %s18 = ssub.s32 %s12, 2
    %s19 = sadd.s32 %s12, 1
    %s20 = ssub.s32 %s12, %s19
    %p21 = scmp.eq.s32.totalorder %s20, 0
    %s23 = sadd.s32 %s22, 1
    %s24 = scalar_select %p21, %s22, %s23
    %p27 = pneg %p21
    %p28 = scmp.eq.s32.totalorder %s12, 1
    %p29 = por %p27, %p28
    %p30 = scmp.ne.s32.totalorder %s22, %s25
    %p31 = scmp.eq.s32.totalorder %s12, 0
    %p32 = por %p30, %p31
    %p33 = scmp.ne.s32.totalorder %s22, %s25
    %p34 = scmp.eq.s32.totalorder %s17, 1
    %p35 = por %p33, %p34
    %p36 = scmp.ne.s32.totalorder %s25, %s26
    %p37 = scmp.eq.s32.totalorder %s17, 0
    %p38 = por %p36, %p37
    %p39 = scmp.ne.s32.totalorder %s25, %s26
    %p40 = scmp.eq.s32.totalorder %s18, 1
    %p41 = por %p39, %p40
    %p43 = scmp.ne.s32.totalorder %s26, %s42
    %p44 = scmp.eq.s32.totalorder %s18, 0
    %p45 = por %p43, %p44
    %s46 = ssub.s32 %s12, %s19
    %p47 = scmp.eq.s32.totalorder %s46, 0
    %s49 = sadd.s32 %s48, 1
    %s50 = scalar_select %p47, %s48, %s49
    %p53 = pneg %p47
    %p54 = scmp.eq.s32.totalorder %s12, 1
    %p55 = por %p53, %p54
    %p56 = scmp.ne.s32.totalorder %s48, %s51
    %p57 = scmp.eq.s32.totalorder %s12, 0
    %p58 = por %p56, %p57
    %p59 = scmp.ne.s32.totalorder %s48, %s51
    %p60 = scmp.eq.s32.totalorder %s17, 1
    %p61 = por %p59, %p60
    %p62 = scmp.ne.s32.totalorder %s51, %s52
    %p63 = scmp.eq.s32.totalorder %s17, 0
    %p64 = por %p62, %p63
    %p65 = scmp.ne.s32.totalorder %s51, %s52
    %p66 = scmp.eq.s32.totalorder %s18, 1
    %p67 = por %p65, %p66
    %p69 = scmp.ne.s32.totalorder %s52, %s68
    %p70 = scmp.eq.s32.totalorder %s18, 0
    %p71 = por %p69, %p70
    %s73 = sadd.s32 %s72, 1
    %p76 = scmp.eq.s32.totalorder %s12, 1
    %p77 = scmp.ne.s32.totalorder %s72, %s74
    %p78 = scmp.eq.s32.totalorder %s12, 0
    %p79 = por %p77, %p78
    %p80 = scmp.ne.s32.totalorder %s72, %s74
    %p81 = scmp.eq.s32.totalorder %s17, 1
    %p82 = por %p80, %p81
    %p83 = scmp.ne.s32.totalorder %s74, %s75
    %p84 = scmp.eq.s32.totalorder %s17, 0
    %p85 = por %p83, %p84
    %p86 = scmp.ne.s32.totalorder %s74, %s75
    %p87 = scmp.eq.s32.totalorder %s18, 1
    %p88 = por %p86, %p87
    %p90 = scmp.ne.s32.totalorder %s75, %s89
    %p91 = scmp.eq.s32.totalorder %s18, 0
    %p92 = por %p90, %p91
    %s94 = sadd.s32 %s93, 1
    %p97 = scmp.eq.s32.totalorder %s12, 1
    %p98 = scmp.ne.s32.totalorder %s93, %s95
    %p99 = scmp.eq.s32.totalorder %s12, 0
    %p100 = por %p98, %p99
    %p101 = scmp.ne.s32.totalorder %s93, %s95
    %p102 = scmp.eq.s32.totalorder %s17, 1
    %p103 = por %p101, %p102
    %p104 = scmp.ne.s32.totalorder %s95, %s96
    %p105 = scmp.eq.s32.totalorder %s17, 0
    %p106 = por %p104, %p105
    %p107 = scmp.ne.s32.totalorder %s95, %s96
    %p108 = scmp.eq.s32.totalorder %s18, 1
    %p109 = por %p107, %p108
    %p111 = scmp.ne.s32.totalorder %s96, %s110
    %p112 = scmp.eq.s32.totalorder %s18, 0
    %p113 = por %p111, %p112
    %s115 = sadd.s32 %s114, 1
    %p118 = scmp.eq.s32.totalorder %s12, 1
    %p119 = scmp.ne.s32.totalorder %s114, %s116
    %p120 = scmp.eq.s32.totalorder %s12, 0
    %p121 = por %p119, %p120
    %p122 = scmp.ne.s32.totalorder %s114, %s116
    %p123 = scmp.eq.s32.totalorder %s17, 1
    %p124 = por %p122, %p123
    %p125 = scmp.ne.s32.totalorder %s116, %s117
    %p126 = scmp.eq.s32.totalorder %s17, 0
    %p127 = por %p125, %p126
    %p128 = scmp.ne.s32.totalorder %s116, %s117
    %p129 = scmp.eq.s32.totalorder %s18, 1
    %p130 = por %p128, %p129
    %p132 = scmp.ne.s32.totalorder %s117, %s131
    %p133 = scmp.eq.s32.totalorder %s18, 0
    %p134 = por %p132, %p133
    %s136 = sadd.s32 %s135, 1
    %p139 = scmp.eq.s32.totalorder %s12, 1
    %p140 = scmp.ne.s32.totalorder %s135, %s137
    %p141 = scmp.eq.s32.totalorder %s12, 0
    %p142 = por %p140, %p141
    %p143 = scmp.ne.s32.totalorder %s135, %s137
    %p144 = scmp.eq.s32.totalorder %s17, 1
    %p145 = por %p143, %p144
    %p146 = scmp.ne.s32.totalorder %s137, %s138
    %p147 = scmp.eq.s32.totalorder %s17, 0
    %p148 = por %p146, %p147
    %p149 = scmp.ne.s32.totalorder %s137, %s138
    %p150 = scmp.eq.s32.totalorder %s18, 1
    %p151 = por %p149, %p150
    %p153 = scmp.ne.s32.totalorder %s138, %s152
    %p154 = scmp.eq.s32.totalorder %s18, 0
    %p155 = por %p153, %p154
    %s156 = ssub.s32 %s12, %s19
    %p157 = scmp.eq.s32.totalorder %s156, 0
    %s159 = sadd.s32 %s158, 1
    %s160 = scalar_select %p157, %s158, %s159
    %p163 = pneg %p157
    %p164 = scmp.eq.s32.totalorder %s12, 1
    %p165 = por %p163, %p164
    %p166 = scmp.ne.s32.totalorder %s158, %s161
    %p167 = scmp.eq.s32.totalorder %s12, 0
    %p168 = por %p166, %p167
    %p169 = scmp.ne.s32.totalorder %s158, %s161
    %p170 = scmp.eq.s32.totalorder %s17, 1
    %p171 = por %p169, %p170
    %p172 = scmp.ne.s32.totalorder %s161, %s162
    %p173 = scmp.eq.s32.totalorder %s17, 0
    %p174 = por %p172, %p173
    %p175 = scmp.ne.s32.totalorder %s161, %s162
    %p176 = scmp.eq.s32.totalorder %s18, 1
    %p177 = por %p175, %p176
    %p179 = scmp.ne.s32.totalorder %s162, %s178
    %p180 = scmp.eq.s32.totalorder %s18, 0
    %p181 = por %p179, %p180
    %p182 = scmp.le.s32.totalorder 1, %s12
    %p183 = scmp.lt.s32.totalorder %s12, 3
    %p184 = pnand %p182, %p183
    %p185 = pneg %p184
    // Predicated region
    $region9: #{rgbn_bbox_head_forward.3} parent=5 // pred_check
      _
    $region10: #{rgbn_bbox_head_forward.3} parent=5 // pred_check_branch
      %187 = sbr.rel (%p184) target = $region12
    $region11: #{rgbn_bbox_head_forward.3} parent=5 // pred_region
      %s188 = ssub.s32 %s12, 1
      // Predicated region
      $region13: #{rgbn_bbox_head_forward.3} parent=11 // pred_check
        %p189 = pneg %p85
      $region14: #{rgbn_bbox_head_forward.3} parent=11 // pred_check_branch
        %191 = sbr.rel (%p189) target = $region16
      $region15: #{rgbn_bbox_head_forward.3} parent=11 // pred_region
        _
      $region16: #{rgbn_bbox_head_forward.3} parent=11 // pred_fallthru
        _
      // Predicated region
      $region17: #{rgbn_bbox_head_forward.3} parent=11 // pred_check
        %p192 = pneg %p106
      $region18: #{rgbn_bbox_head_forward.3} parent=11 // pred_check_branch
        %194 = sbr.rel (%p192) target = $region20
      $region19: #{rgbn_bbox_head_forward.3} parent=11 // pred_region
        _
      $region20: #{rgbn_bbox_head_forward.3} parent=11 // pred_fallthru
        _
      // Predicated region
      $region21: #{rgbn_bbox_head_forward.3} parent=11 // pred_check
        %p195 = pneg %p127
      $region22: #{rgbn_bbox_head_forward.3} parent=11 // pred_check_branch
        %197 = sbr.rel (%p195) target = $region24
      $region23: #{rgbn_bbox_head_forward.3} parent=11 // pred_region
        _
      $region24: #{rgbn_bbox_head_forward.3} parent=11 // pred_fallthru
        _
      // Predicated region
      $region25: #{rgbn_bbox_head_forward.3} parent=11 // pred_check
        %p198 = pneg %p148
      $region26: #{rgbn_bbox_head_forward.3} parent=11 // pred_check_branch
        %200 = sbr.rel (%p198) target = $region28
      $region27: #{rgbn_bbox_head_forward.3} parent=11 // pred_region
        _
      $region28: #{rgbn_bbox_head_forward.3} parent=11 // pred_fallthru
        _
    $region12: #{rgbn_bbox_head_forward.3} parent=5 // pred_fallthru
      _
    %p201 = scmp.lt.s32.totalorder %s12, 2
    // Predicated region
    $region29: #{rgbn_bbox_head_forward.3} parent=5 // pred_check
      %p202 = pneg %p201
    $region30: #{rgbn_bbox_head_forward.3} parent=5 // pred_check_branch
      %204 = sbr.rel (%p202) target = $region32
    $region31: #{rgbn_bbox_head_forward.3} parent=5 // pred_region
      // Predicated region
      $region33: #{rgbn_bbox_head_forward.3} parent=31 // pred_check
        %p205 = pneg %p32
      $region34: #{rgbn_bbox_head_forward.3} parent=31 // pred_check_branch
        %207 = sbr.rel (%p205) target = $region36
      $region35: #{rgbn_bbox_head_forward.3} parent=31 // pred_region
        %s208 = smul.u32 16, %s12
        %p209 = scmp.lt.s32.totalorder %s208, 31
        %s210 = scalar_select %p209, %s208, 31
        %s211 = smul.addr %s210, 2
        %s212 = smul.addr %s211, 4
        %s213 = scalar_lea.vmem %s0, %s212
        %s214 = smul.u32 16, %s12
      $region36: #{rgbn_bbox_head_forward.3} parent=31 // pred_fallthru
        _
      // Predicated region
      $region37: #{rgbn_bbox_head_forward.3} parent=31 // pred_check
        %p215 = pneg %p58
      $region38: #{rgbn_bbox_head_forward.3} parent=31 // pred_check_branch
        %217 = sbr.rel (%p215) target = $region40
      $region39: #{rgbn_bbox_head_forward.3} parent=31 // pred_region
        %s218 = smul.u32 16, %s12
        %p219 = scmp.lt.s32.totalorder %s218, 31
        %s220 = scalar_select %p219, %s218, 31
        %s221 = smul.addr %s220, 8
        %s222 = smul.addr %s221, 4
        %s223 = scalar_lea.vmem %s1, %s222
        %s224 = smul.u32 16, %s12
      $region40: #{rgbn_bbox_head_forward.3} parent=31 // pred_fallthru
        _
    $region32: #{rgbn_bbox_head_forward.3} parent=5 // pred_fallthru
      _
    %p225 = scmp.le.s32.totalorder 1, %s12
    %p226 = scmp.lt.s32.totalorder %s12, 3
    %p227 = pnand %p225, %p226
    %p228 = pneg %p227
    // Predicated region
    $region41: #{rgbn_bbox_head_forward.3} parent=5 // pred_check
      _
    $region42: #{rgbn_bbox_head_forward.3} parent=5 // pred_check_branch
      %230 = sbr.rel (%p227) target = $region44
    $region43: #{rgbn_bbox_head_forward.3} parent=5 // pred_region
      %s231 = ssub.s32 %s12, 1
      %s232 = smul.u32 16, %s17
      %p233 = scmp.lt.s32.totalorder %s232, 31
      %s234 = scalar_select %p233, %s232, 31
      %s235 = smul.addr %s234, 2
      %s236 = smul.addr %s235, 4
      %s237 = scalar_lea.vmem %s0, %s236
      %p238 = pneg %p38
      %p239 = pneg %p35
      %s240 = smul.u32 16, %s17
      %p241 = scmp.lt.s32.totalorder %s240, 31
      %s242 = scalar_select %p241, %s240, 31
      %s243 = smul.addr %s242, 8
      %s244 = smul.addr %s243, 4
      %s245 = scalar_lea.vmem %s1, %s244
      %p246 = pneg %p64
      %p247 = pneg %p61
      %p248 = pneg %p85
      %p249 = pneg %p82
      %p250 = pneg %p106
      %p251 = pneg %p103
      %p252 = pneg %p127
      %p253 = pneg %p124
      %p254 = pneg %p148
      %p255 = pneg %p145
      %p256 = pneg %p174
      %p257 = pneg %p171
      %s258 = smul.u32 16, %s17
      %p259 = scmp.lt.s32.totalorder %s258, 31
      %s260 = scalar_select %p259, %s258, 31
      %s261 = smul.addr %s260, 8
      %s262 = scalar_lea.vmem %s6, %s261
      %s263 = smul.u32 16, %s17
      %p264 = scmp.lt.s32.totalorder %s263, 31
      %s265 = scalar_select %p264, %s263, 31
      %s266 = smul.addr %s265, 2
      %s267 = smul.addr %s266, 4
      %s268 = scalar_lea.vmem %s0, %s267
      %s269 = smul.u32 16, %s17
      %s270 = smul.u32 16, %s17
      %p271 = scmp.lt.s32.totalorder %s270, 31
      %s272 = scalar_select %p271, %s270, 31
      %s273 = smul.addr %s272, 8
      %s274 = smul.addr %s273, 4
      %s275 = scalar_lea.vmem %s1, %s274
      %s276 = smul.u32 16, %s17
      %s277 = smul.u32 16, %s17
      %p278 = scmp.lt.s32.totalorder %s277, 31
      %s279 = scalar_select %p278, %s277, 31
      %s280 = smul.addr %s279, 8
      %s281 = scalar_lea.vmem %s6, %s280
      %s282 = smul.u32 16, %s17
      %v283 = vld [vmem:[%s268] sm:$0xff]
      %v284 = vld [vmem:[%s268 + $0x8] sm:$0xff]
      %v285 = vld [vmem:[%s268 + $0x10] sm:$0xff]
      %v286 = vld [vmem:[%s268 + $0x18] sm:$0xff]
      %v287 = vld [vmem:[%s268 + $0x20] sm:$0xff]
      %v288 = vld [vmem:[%s268 + $0x28] sm:$0xff]
      %v289 = vld [vmem:[%s268 + $0x30] sm:$0xff]
      %v290 = vld [vmem:[%s268 + $0x38] sm:$0xff]
      %v291 = vld [vmem:[%s268 + $0x40] sm:$0xff]
      %v292 = vld [vmem:[%s268 + $0x48] sm:$0xff]
      %v293 = vld [vmem:[%s268 + $0x50] sm:$0xff]
      %v294 = vld [vmem:[%s268 + $0x58] sm:$0xff]
      %v295 = vld [vmem:[%s268 + $0x60] sm:$0xff]
      %v296 = vld [vmem:[%s268 + $0x68] sm:$0xff]
      %v297 = vld [vmem:[%s268 + $0x70] sm:$0xff]
      %v298 = vld [vmem:[%s268 + $0x78] sm:$0xff]
      %v299 = vld [vmem:[%s2] sm:$0xff]
      %v300 = vld [vmem:[%s2 + $0x8] sm:$0xff]
      %v301 = vld [vmem:[%s2 + $0x10] sm:$0xff]
      %v302 = vld [vmem:[%s2 + $0x18] sm:$0xff]
      %v303 = vld [vmem:[%s2 + $0x20] sm:$0xff]
      %v304 = vld [vmem:[%s2 + $0x28] sm:$0xff]
      %v305 = vld [vmem:[%s2 + $0x30] sm:$0xff]
      %v306 = vld [vmem:[%s2 + $0x38] sm:$0xff]
      %v307 = vld [vmem:[%s2 + $0x40] sm:$0xff]
      %v308 = vld [vmem:[%s2 + $0x48] sm:$0xff]
      %v309 = vld [vmem:[%s2 + $0x50] sm:$0xff]
      %v310 = vld [vmem:[%s2 + $0x58] sm:$0xff]
      %v311 = vld [vmem:[%s2 + $0x60] sm:$0xff]
      %v312 = vld [vmem:[%s2 + $0x68] sm:$0xff]
      %v313 = vld [vmem:[%s2 + $0x70] sm:$0xff]
      %v314 = vld [vmem:[%s2 + $0x78] sm:$0xff]
      %v315 = vld [vmem:[%s2 + $0x80] sm:$0xff]
      %v316 = vld [vmem:[%s2 + $0x88] sm:$0xff]
      %v317 = vld [vmem:[%s2 + $0x90] sm:$0xff]
      %v318 = vld [vmem:[%s2 + $0x98] sm:$0xff]
      %v319 = vld [vmem:[%s2 + $0xa0] sm:$0xff]
      %v320 = vld [vmem:[%s2 + $0xa8] sm:$0xff]
      %v321 = vld [vmem:[%s2 + $0xb0] sm:$0xff]
      %v322 = vld [vmem:[%s2 + $0xb8] sm:$0xff]
      %v323 = vld [vmem:[%s2 + $0xc0] sm:$0xff]
      %v324 = vld [vmem:[%s2 + $0xc8] sm:$0xff]
      %v325 = vld [vmem:[%s2 + $0xd0] sm:$0xff]
      %v326 = vld [vmem:[%s2 + $0xd8] sm:$0xff]
      %v327 = vld [vmem:[%s2 + $0xe0] sm:$0xff]
      %v328 = vld [vmem:[%s2 + $0xe8] sm:$0xff]
      %v329 = vld [vmem:[%s2 + $0xf0] sm:$0xff]
      %v330 = vld [vmem:[%s2 + $0xf8] sm:$0xff]
      %v347 = vunpack.c.l.b16 %v283
      %v348 = vunpack.c.h.b16 %v283
      %v349 = vunpack.c.l.b16 %v284
      %v350 = vunpack.c.h.b16 %v284
      %v351 = vunpack.c.l.b16 %v285
      %v352 = vunpack.c.h.b16 %v285
      %v353 = vunpack.c.l.b16 %v286
      %v354 = vunpack.c.h.b16 %v286
      %v355 = vunpack.c.l.b16 %v287
      %v356 = vunpack.c.h.b16 %v287
      %v357 = vunpack.c.l.b16 %v288
      %v358 = vunpack.c.h.b16 %v288
      %v359 = vunpack.c.l.b16 %v289
      %v360 = vunpack.c.h.b16 %v289
      %v361 = vunpack.c.l.b16 %v290
      %v362 = vunpack.c.h.b16 %v290
      %v363 = vunpack.c.l.b16 %v291
      %v364 = vunpack.c.h.b16 %v291
      %v365 = vunpack.c.l.b16 %v292
      %v366 = vunpack.c.h.b16 %v292
      %v367 = vunpack.c.l.b16 %v293
      %v368 = vunpack.c.h.b16 %v293
      %v369 = vunpack.c.l.b16 %v294
      %v370 = vunpack.c.h.b16 %v294
      %v371 = vunpack.c.l.b16 %v295
      %v372 = vunpack.c.h.b16 %v295
      %v373 = vunpack.c.l.b16 %v296
      %v374 = vunpack.c.h.b16 %v296
      %v375 = vunpack.c.l.b16 %v297
      %v376 = vunpack.c.h.b16 %v297
      %v377 = vunpack.c.l.b16 %v298
      %v378 = vunpack.c.h.b16 %v298
      %v379 = vpack.c.b16 %v349, %v347
      %v380 = vpack.c.b16 %v350, %v348
      %v381 = vpack.c.b16 %v353, %v351
      %v382 = vpack.c.b16 %v354, %v352
      %v383 = vpack.c.b16 %v357, %v355
      %v384 = vpack.c.b16 %v358, %v356
      %v385 = vpack.c.b16 %v361, %v359
      %v386 = vpack.c.b16 %v362, %v360
      %v387 = vpack.c.b16 %v365, %v363
      %v388 = vpack.c.b16 %v366, %v364
      %v389 = vpack.c.b16 %v369, %v367
      %v390 = vpack.c.b16 %v370, %v368
      %v391 = vpack.c.b16 %v373, %v371
      %v392 = vpack.c.b16 %v374, %v372
      %v393 = vpack.c.b16 %v377, %v375
      %v394 = vpack.c.b16 %v378, %v376
      %v443 = vunpack.c.l.b16 %v299
      %v444 = vunpack.c.h.b16 %v299
      %v445 = vunpack.c.l.b16 %v300
      %v446 = vunpack.c.h.b16 %v300
      %v447 = vunpack.c.l.b16 %v301
      %v448 = vunpack.c.h.b16 %v301
      %v449 = vunpack.c.l.b16 %v302
      %v450 = vunpack.c.h.b16 %v302
      %v451 = vunpack.c.l.b16 %v303
      %v452 = vunpack.c.h.b16 %v303
      %v453 = vunpack.c.l.b16 %v304
      %v454 = vunpack.c.h.b16 %v304
      %v455 = vunpack.c.l.b16 %v305
      %v456 = vunpack.c.h.b16 %v305
      %v457 = vunpack.c.l.b16 %v306
      %v458 = vunpack.c.h.b16 %v306
      %v459 = vunpack.c.l.b16 %v307
      %v460 = vunpack.c.h.b16 %v307
      %v461 = vunpack.c.l.b16 %v308
      %v462 = vunpack.c.h.b16 %v308
      %v463 = vunpack.c.l.b16 %v309
      %v464 = vunpack.c.h.b16 %v309
      %v465 = vunpack.c.l.b16 %v310
      %v466 = vunpack.c.h.b16 %v310
      %v467 = vunpack.c.l.b16 %v311
      %v468 = vunpack.c.h.b16 %v311
      %v469 = vunpack.c.l.b16 %v312
      %v470 = vunpack.c.h.b16 %v312
      %v471 = vunpack.c.l.b16 %v313
      %v472 = vunpack.c.h.b16 %v313
      %v473 = vunpack.c.l.b16 %v314
      %v474 = vunpack.c.h.b16 %v314
      %v475 = vunpack.c.l.b16 %v315
      %v476 = vunpack.c.h.b16 %v315
      %v477 = vunpack.c.l.b16 %v316
      %v478 = vunpack.c.h.b16 %v316
      %v479 = vunpack.c.l.b16 %v317
      %v480 = vunpack.c.h.b16 %v317
      %v481 = vunpack.c.l.b16 %v318
      %v482 = vunpack.c.h.b16 %v318
      %v483 = vunpack.c.l.b16 %v319
      %v484 = vunpack.c.h.b16 %v319
      %v485 = vunpack.c.l.b16 %v320
      %v486 = vunpack.c.h.b16 %v320
      %v487 = vunpack.c.l.b16 %v321
      %v488 = vunpack.c.h.b16 %v321
      %v489 = vunpack.c.l.b16 %v322
      %v490 = vunpack.c.h.b16 %v322
      %v491 = vunpack.c.l.b16 %v323
      %v492 = vunpack.c.h.b16 %v323
      %v493 = vunpack.c.l.b16 %v324
      %v494 = vunpack.c.h.b16 %v324
      %v495 = vunpack.c.l.b16 %v325
      %v496 = vunpack.c.h.b16 %v325
      %v497 = vunpack.c.l.b16 %v326
      %v498 = vunpack.c.h.b16 %v326
      %v499 = vunpack.c.l.b16 %v327
      %v500 = vunpack.c.h.b16 %v327
      %v501 = vunpack.c.l.b16 %v328
      %v502 = vunpack.c.h.b16 %v328
      %v503 = vunpack.c.l.b16 %v329
      %v504 = vunpack.c.h.b16 %v329
      %v505 = vunpack.c.l.b16 %v330
      %v506 = vunpack.c.h.b16 %v330
      %v507 = vpack.c.b16 %v445, %v443
      %v508 = vpack.c.b16 %v446, %v444
      %v509 = vpack.c.b16 %v449, %v447
      %v510 = vpack.c.b16 %v450, %v448
      %v511 = vpack.c.b16 %v453, %v451
      %v512 = vpack.c.b16 %v454, %v452
      %v513 = vpack.c.b16 %v457, %v455
      %v514 = vpack.c.b16 %v458, %v456
      %v515 = vpack.c.b16 %v461, %v459
      %v516 = vpack.c.b16 %v462, %v460
      %v517 = vpack.c.b16 %v465, %v463
      %v518 = vpack.c.b16 %v466, %v464
      %v519 = vpack.c.b16 %v469, %v467
      %v520 = vpack.c.b16 %v470, %v468
      %v521 = vpack.c.b16 %v473, %v471
      %v522 = vpack.c.b16 %v474, %v472
      %v523 = vpack.c.b16 %v477, %v475
      %v524 = vpack.c.b16 %v478, %v476
      %v525 = vpack.c.b16 %v481, %v479
      %v526 = vpack.c.b16 %v482, %v480
      %v527 = vpack.c.b16 %v485, %v483
      %v528 = vpack.c.b16 %v486, %v484
      %v529 = vpack.c.b16 %v489, %v487
      %v530 = vpack.c.b16 %v490, %v488
      %v531 = vpack.c.b16 %v493, %v491
      %v532 = vpack.c.b16 %v494, %v492
      %v533 = vpack.c.b16 %v497, %v495
      %v534 = vpack.c.b16 %v498, %v496
      %v535 = vpack.c.b16 %v501, %v499
      %v536 = vpack.c.b16 %v502, %v500
      %v537 = vpack.c.b16 %v505, %v503
      %v538 = vpack.c.b16 %v506, %v504
      %571 = vmatpush.bf16.msra.mxu0 %v521
      %572 = vmatpush.bf16.msra.mxu0 %v519
      %573 = vmatpush.bf16.msra.mxu0 %v517
      %574 = vmatpush.bf16.msra.mxu0 %v515
      %575 = vmatpush.bf16.msra.mxu0 %v513
      %576 = vmatpush.bf16.msra.mxu0 %v511
      %577 = vmatpush.bf16.msra.mxu0 %v509
      %578 = vmatpush.bf16.msra.mxu0 %v507
      %579 = vmatmul.bf16.gmra.mxu0 %v379
      %v580 = vpop.f32.mrf.mxu0
      %v581 = vadd.f32 0.0, %v580
      %v582 = vpop.f32.mrf.mxu0
      %v583 = vadd.f32 0.0, %v582
      %584 = vmatmul.bf16.gmra.mxu0 %v381
      %v585 = vpop.f32.mrf.mxu0
      %v586 = vadd.f32 0.0, %v585
      %v587 = vpop.f32.mrf.mxu0
      %v588 = vadd.f32 0.0, %v587
      %589 = vmatmul.bf16.gmra.mxu0 %v383
      %v590 = vpop.f32.mrf.mxu0
      %v591 = vadd.f32 0.0, %v590
      %v592 = vpop.f32.mrf.mxu0
      %v593 = vadd.f32 0.0, %v592
      %594 = vmatmul.bf16.gmra.mxu0 %v385
      %v595 = vpop.f32.mrf.mxu0
      %v596 = vadd.f32 0.0, %v595
      %v597 = vpop.f32.mrf.mxu0
      %v598 = vadd.f32 0.0, %v597
      %599 = vmatmul.bf16.gmra.mxu0 %v387
      %v600 = vpop.f32.mrf.mxu0
      %v601 = vadd.f32 0.0, %v600
      %v602 = vpop.f32.mrf.mxu0
      %v603 = vadd.f32 0.0, %v602
      %604 = vmatmul.bf16.gmra.mxu0 %v389
      %v605 = vpop.f32.mrf.mxu0
      %v606 = vadd.f32 0.0, %v605
      %v607 = vpop.f32.mrf.mxu0
      %v608 = vadd.f32 0.0, %v607
      %609 = vmatmul.bf16.gmra.mxu0 %v391
      %v610 = vpop.f32.mrf.mxu0
      %v611 = vadd.f32 0.0, %v610
      %v612 = vpop.f32.mrf.mxu0
      %v613 = vadd.f32 0.0, %v612
      %614 = vmatmul.bf16.gmra.mxu0 %v393
      %v615 = vpop.f32.mrf.mxu0
      %v616 = vadd.f32 0.0, %v615
      %v617 = vpop.f32.mrf.mxu0
      %v618 = vadd.f32 0.0, %v617
      %619 = vdwg.mxu0
      %620 = vmatpush.bf16.msra.mxu0 %v537
      %621 = vmatpush.bf16.msra.mxu0 %v535
      %622 = vmatpush.bf16.msra.mxu0 %v533
      %623 = vmatpush.bf16.msra.mxu0 %v531
      %624 = vmatpush.bf16.msra.mxu0 %v529
      %625 = vmatpush.bf16.msra.mxu0 %v527
      %626 = vmatpush.bf16.msra.mxu0 %v525
      %627 = vmatpush.bf16.msra.mxu0 %v523
      %628 = vmatmul.bf16.gmra.mxu0 %v380
      %v629 = vpop.f32.mrf.mxu0
      %v630 = vadd.f32 %v581, %v629
      %v631 = vpop.f32.mrf.mxu0
      %v632 = vadd.f32 %v583, %v631
      %633 = vmatmul.bf16.gmra.mxu0 %v382
      %v634 = vpop.f32.mrf.mxu0
      %v635 = vadd.f32 %v586, %v634
      %v636 = vpop.f32.mrf.mxu0
      %v637 = vadd.f32 %v588, %v636
      %638 = vmatmul.bf16.gmra.mxu0 %v384
      %v639 = vpop.f32.mrf.mxu0
      %v640 = vadd.f32 %v591, %v639
      %v641 = vpop.f32.mrf.mxu0
      %v642 = vadd.f32 %v593, %v641
      %643 = vmatmul.bf16.gmra.mxu0 %v386
      %v644 = vpop.f32.mrf.mxu0
      %v645 = vadd.f32 %v596, %v644
      %v646 = vpop.f32.mrf.mxu0
      %v647 = vadd.f32 %v598, %v646
      %648 = vmatmul.bf16.gmra.mxu0 %v388
      %v649 = vpop.f32.mrf.mxu0
      %v650 = vadd.f32 %v601, %v649
      %v651 = vpop.f32.mrf.mxu0
      %v652 = vadd.f32 %v603, %v651
      %653 = vmatmul.bf16.gmra.mxu0 %v390
      %v654 = vpop.f32.mrf.mxu0
      %v655 = vadd.f32 %v606, %v654
      %v656 = vpop.f32.mrf.mxu0
      %v657 = vadd.f32 %v608, %v656
      %658 = vmatmul.bf16.gmra.mxu0 %v392
      %v659 = vpop.f32.mrf.mxu0
      %v660 = vadd.f32 %v611, %v659
      %v661 = vpop.f32.mrf.mxu0
      %v662 = vadd.f32 %v613, %v661
      %663 = vmatmul.bf16.gmra.mxu0 %v394
      %v664 = vpop.f32.mrf.mxu0
      %v665 = vadd.f32 %v616, %v664
      %v666 = vpop.f32.mrf.mxu0
      %v667 = vadd.f32 %v618, %v666
      %668 = vdwg.mxu0
      %669 = vmatpush.bf16.msra.mxu0 %v522
      %670 = vmatpush.bf16.msra.mxu0 %v520
      %671 = vmatpush.bf16.msra.mxu0 %v518
      %672 = vmatpush.bf16.msra.mxu0 %v516
      %673 = vmatpush.bf16.msra.mxu0 %v514
      %674 = vmatpush.bf16.msra.mxu0 %v512
      %675 = vmatpush.bf16.msra.mxu0 %v510
      %676 = vmatpush.bf16.msra.mxu0 %v508
      %677 = vmatmul.bf16.gmra.mxu0 %v379
      %v678 = vpop.f32.mrf.mxu0
      %v679 = vadd.f32 0.0, %v678
      %v680 = vpop.f32.mrf.mxu0
      %v681 = vadd.f32 0.0, %v680
      %682 = vmatmul.bf16.gmra.mxu0 %v381
      %v683 = vpop.f32.mrf.mxu0
      %v684 = vadd.f32 0.0, %v683
      %v685 = vpop.f32.mrf.mxu0
      %v686 = vadd.f32 0.0, %v685
      %687 = vmatmul.bf16.gmra.mxu0 %v383
      %v688 = vpop.f32.mrf.mxu0
      %v689 = vadd.f32 0.0, %v688
      %v690 = vpop.f32.mrf.mxu0
      %v691 = vadd.f32 0.0, %v690
      %692 = vmatmul.bf16.gmra.mxu0 %v385
      %v693 = vpop.f32.mrf.mxu0
      %v694 = vadd.f32 0.0, %v693
      %v695 = vpop.f32.mrf.mxu0
      %v696 = vadd.f32 0.0, %v695
      %697 = vmatmul.bf16.gmra.mxu0 %v387
      %v698 = vpop.f32.mrf.mxu0
      %v699 = vadd.f32 0.0, %v698
      %v700 = vpop.f32.mrf.mxu0
      %v701 = vadd.f32 0.0, %v700
      %702 = vmatmul.bf16.gmra.mxu0 %v389
      %v703 = vpop.f32.mrf.mxu0
      %v704 = vadd.f32 0.0, %v703
      %v705 = vpop.f32.mrf.mxu0
      %v706 = vadd.f32 0.0, %v705
      %707 = vmatmul.bf16.gmra.mxu0 %v391
      %v708 = vpop.f32.mrf.mxu0
      %v709 = vadd.f32 0.0, %v708
      %v710 = vpop.f32.mrf.mxu0
      %v711 = vadd.f32 0.0, %v710
      %712 = vmatmul.bf16.gmra.mxu0 %v393
      %v713 = vpop.f32.mrf.mxu0
      %v714 = vadd.f32 0.0, %v713
      %v715 = vpop.f32.mrf.mxu0
      %v716 = vadd.f32 0.0, %v715
      %717 = vdwg.mxu0
      %718 = vmatpush.bf16.msra.mxu0 %v538
      %719 = vmatpush.bf16.msra.mxu0 %v536
      %720 = vmatpush.bf16.msra.mxu0 %v534
      %721 = vmatpush.bf16.msra.mxu0 %v532
      %722 = vmatpush.bf16.msra.mxu0 %v530
      %723 = vmatpush.bf16.msra.mxu0 %v528
      %724 = vmatpush.bf16.msra.mxu0 %v526
      %725 = vmatpush.bf16.msra.mxu0 %v524
      %726 = vmatmul.bf16.gmra.mxu0 %v380
      %v727 = vpop.f32.mrf.mxu0
      %v728 = vadd.f32 %v679, %v727
      %v729 = vpop.f32.mrf.mxu0
      %v730 = vadd.f32 %v681, %v729
      %731 = vmatmul.bf16.gmra.mxu0 %v382
      %v732 = vpop.f32.mrf.mxu0
      %v733 = vadd.f32 %v684, %v732
      %v734 = vpop.f32.mrf.mxu0
      %v735 = vadd.f32 %v686, %v734
      %736 = vmatmul.bf16.gmra.mxu0 %v384
      %v737 = vpop.f32.mrf.mxu0
      %v738 = vadd.f32 %v689, %v737
      %v739 = vpop.f32.mrf.mxu0
      %v740 = vadd.f32 %v691, %v739
      %741 = vmatmul.bf16.gmra.mxu0 %v386
      %v742 = vpop.f32.mrf.mxu0
      %v743 = vadd.f32 %v694, %v742
      %v744 = vpop.f32.mrf.mxu0
      %v745 = vadd.f32 %v696, %v744
      %746 = vmatmul.bf16.gmra.mxu0 %v388
      %v747 = vpop.f32.mrf.mxu0
      %v748 = vadd.f32 %v699, %v747
      %v749 = vpop.f32.mrf.mxu0
      %v750 = vadd.f32 %v701, %v749
      %751 = vmatmul.bf16.gmra.mxu0 %v390
      %v752 = vpop.f32.mrf.mxu0
      %v753 = vadd.f32 %v704, %v752
      %v754 = vpop.f32.mrf.mxu0
      %v755 = vadd.f32 %v706, %v754
      %756 = vmatmul.bf16.gmra.mxu0 %v392
      %v757 = vpop.f32.mrf.mxu0
      %v758 = vadd.f32 %v709, %v757
      %v759 = vpop.f32.mrf.mxu0
      %v760 = vadd.f32 %v711, %v759
      %761 = vmatmul.bf16.gmra.mxu0 %v394
      %v762 = vpop.f32.mrf.mxu0
      %v763 = vadd.f32 %v714, %v762
      %v764 = vpop.f32.mrf.mxu0
      %v765 = vadd.f32 %v716, %v764
      %766 = vdwg.mxu0
      %v767 = vpack.c.bf16 %v632, %v630
      %v768 = vpack.c.bf16 %v730, %v728
      %v769 = vpack.c.bf16 %v637, %v635
      %v770 = vpack.c.bf16 %v735, %v733
      %v771 = vpack.c.bf16 %v642, %v640
      %v772 = vpack.c.bf16 %v740, %v738
      %v773 = vpack.c.bf16 %v647, %v645
      %v774 = vpack.c.bf16 %v745, %v743
      %v775 = vpack.c.bf16 %v652, %v650
      %v776 = vpack.c.bf16 %v750, %v748
      %v777 = vpack.c.bf16 %v657, %v655
      %v778 = vpack.c.bf16 %v755, %v753
      %v779 = vpack.c.bf16 %v662, %v660
      %v780 = vpack.c.bf16 %v760, %v758
      %v781 = vpack.c.bf16 %v667, %v665
      %v782 = vpack.c.bf16 %v765, %v763
      %v783 = vld [vmem:[%s3] sm:$0xf]
      %v784 = vld [vmem:[%s3 + $0x4] sm:$0xf]
      %v785 = vld [vmem:[%s3 + $0x8] sm:$0xf]
      %v786 = vld [vmem:[%s3 + $0xc] sm:$0xf]
      %v787 = vld [vmem:[%s3 + $0x10] sm:$0xf]
      %v788 = vld [vmem:[%s3 + $0x14] sm:$0xf]
      %v789 = vld [vmem:[%s3 + $0x18] sm:$0xf]
      %v790 = vld [vmem:[%s3 + $0x1c] sm:$0xf]
      %v791 = vld [vmem:[%s3 + $0x20] sm:$0xf]
      %v792 = vld [vmem:[%s3 + $0x24] sm:$0xf]
      %v793 = vld [vmem:[%s3 + $0x28] sm:$0xf]
      %v794 = vld [vmem:[%s3 + $0x2c] sm:$0xf]
      %v795 = vld [vmem:[%s3 + $0x30] sm:$0xf]
      %v796 = vld [vmem:[%s3 + $0x34] sm:$0xf]
      %v797 = vld [vmem:[%s3 + $0x38] sm:$0xf]
      %v798 = vld [vmem:[%s3 + $0x3c] sm:$0xf]
      %v799 = vld [vmem:[%s3 + $0x40] sm:$0xf]
      %v800 = vld [vmem:[%s3 + $0x44] sm:$0xf]
      %v801 = vld [vmem:[%s3 + $0x48] sm:$0xf]
      %v802 = vld [vmem:[%s3 + $0x4c] sm:$0xf]
      %v803 = vld [vmem:[%s3 + $0x50] sm:$0xf]
      %v804 = vld [vmem:[%s3 + $0x54] sm:$0xf]
      %v805 = vld [vmem:[%s3 + $0x58] sm:$0xf]
      %v806 = vld [vmem:[%s3 + $0x5c] sm:$0xf]
      %v807 = vld [vmem:[%s3 + $0x60] sm:$0xf]
      %v808 = vld [vmem:[%s3 + $0x64] sm:$0xf]
      %v809 = vld [vmem:[%s3 + $0x68] sm:$0xf]
      %v810 = vld [vmem:[%s3 + $0x6c] sm:$0xf]
      %v811 = vld [vmem:[%s3 + $0x70] sm:$0xf]
      %v812 = vld [vmem:[%s3 + $0x74] sm:$0xf]
      %v813 = vld [vmem:[%s3 + $0x78] sm:$0xf]
      %v814 = vld [vmem:[%s3 + $0x7c] sm:$0xf]
      %v815 = vld [vmem:[%s275] sm:$0xff]
      %v816 = vld [vmem:[%s275 + $0x8] sm:$0xff]
      %v817 = vld [vmem:[%s275 + $0x10] sm:$0xff]
      %v818 = vld [vmem:[%s275 + $0x18] sm:$0xff]
      %v819 = vld [vmem:[%s275 + $0x20] sm:$0xff]
      %v820 = vld [vmem:[%s275 + $0x28] sm:$0xff]
      %v821 = vld [vmem:[%s275 + $0x30] sm:$0xff]
      %v822 = vld [vmem:[%s275 + $0x38] sm:$0xff]
      %v823 = vld [vmem:[%s275 + $0x40] sm:$0xff]
      %v824 = vld [vmem:[%s275 + $0x48] sm:$0xff]
      %v825 = vld [vmem:[%s275 + $0x50] sm:$0xff]
      %v826 = vld [vmem:[%s275 + $0x58] sm:$0xff]
      %v827 = vld [vmem:[%s275 + $0x60] sm:$0xff]
      %v828 = vld [vmem:[%s275 + $0x68] sm:$0xff]
      %v829 = vld [vmem:[%s275 + $0x70] sm:$0xff]
      %v830 = vld [vmem:[%s275 + $0x78] sm:$0xff]
      %v831 = vld [vmem:[%s275 + $0x80] sm:$0xff]
      %v832 = vld [vmem:[%s275 + $0x88] sm:$0xff]
      %v833 = vld [vmem:[%s275 + $0x90] sm:$0xff]
      %v834 = vld [vmem:[%s275 + $0x98] sm:$0xff]
      %v835 = vld [vmem:[%s275 + $0xa0] sm:$0xff]
      %v836 = vld [vmem:[%s275 + $0xa8] sm:$0xff]
      %v837 = vld [vmem:[%s275 + $0xb0] sm:$0xff]
      %v838 = vld [vmem:[%s275 + $0xb8] sm:$0xff]
      %v839 = vld [vmem:[%s275 + $0xc0] sm:$0xff]
      %v840 = vld [vmem:[%s275 + $0xc8] sm:$0xff]
      %v841 = vld [vmem:[%s275 + $0xd0] sm:$0xff]
      %v842 = vld [vmem:[%s275 + $0xd8] sm:$0xff]
      %v843 = vld [vmem:[%s275 + $0xe0] sm:$0xff]
      %v844 = vld [vmem:[%s275 + $0xe8] sm:$0xff]
      %v845 = vld [vmem:[%s275 + $0xf0] sm:$0xff]
      %v846 = vld [vmem:[%s275 + $0xf8] sm:$0xff]
      %v847 = vld [vmem:[%s275 + $0x100] sm:$0xff]
      %v848 = vld [vmem:[%s275 + $0x108] sm:$0xff]
      %v849 = vld [vmem:[%s275 + $0x110] sm:$0xff]
      %v850 = vld [vmem:[%s275 + $0x118] sm:$0xff]
      %v851 = vld [vmem:[%s275 + $0x120] sm:$0xff]
      %v852 = vld [vmem:[%s275 + $0x128] sm:$0xff]
      %v853 = vld [vmem:[%s275 + $0x130] sm:$0xff]
      %v854 = vld [vmem:[%s275 + $0x138] sm:$0xff]
      %v855 = vld [vmem:[%s275 + $0x140] sm:$0xff]
      %v856 = vld [vmem:[%s275 + $0x148] sm:$0xff]
      %v857 = vld [vmem:[%s275 + $0x150] sm:$0xff]
      %v858 = vld [vmem:[%s275 + $0x158] sm:$0xff]
      %v859 = vld [vmem:[%s275 + $0x160] sm:$0xff]
      %v860 = vld [vmem:[%s275 + $0x168] sm:$0xff]
      %v861 = vld [vmem:[%s275 + $0x170] sm:$0xff]
      %v862 = vld [vmem:[%s275 + $0x178] sm:$0xff]
      %v863 = vld [vmem:[%s275 + $0x180] sm:$0xff]
      %v864 = vld [vmem:[%s275 + $0x188] sm:$0xff]
      %v865 = vld [vmem:[%s275 + $0x190] sm:$0xff]
      %v866 = vld [vmem:[%s275 + $0x198] sm:$0xff]
      %v867 = vld [vmem:[%s275 + $0x1a0] sm:$0xff]
      %v868 = vld [vmem:[%s275 + $0x1a8] sm:$0xff]
      %v869 = vld [vmem:[%s275 + $0x1b0] sm:$0xff]
      %v870 = vld [vmem:[%s275 + $0x1b8] sm:$0xff]
      %v871 = vld [vmem:[%s275 + $0x1c0] sm:$0xff]
      %v872 = vld [vmem:[%s275 + $0x1c8] sm:$0xff]
      %v873 = vld [vmem:[%s275 + $0x1d0] sm:$0xff]
      %v874 = vld [vmem:[%s275 + $0x1d8] sm:$0xff]
      %v875 = vld [vmem:[%s275 + $0x1e0] sm:$0xff]
      %v876 = vld [vmem:[%s275 + $0x1e8] sm:$0xff]
      %v877 = vld [vmem:[%s275 + $0x1f0] sm:$0xff]
      %v878 = vld [vmem:[%s275 + $0x1f8] sm:$0xff]
      %v879 = vld [vmem:[%s4] sm:$0xf]
      %v880 = vld [vmem:[%s4 + $0x4] sm:$0xf]
      %v881 = vld [vmem:[%s4 + $0x8] sm:$0xf]
      %v882 = vld [vmem:[%s4 + $0xc] sm:$0xf]
      %v883 = vld [vmem:[%s4 + $0x10] sm:$0xf]
      %v884 = vld [vmem:[%s4 + $0x14] sm:$0xf]
      %v885 = vld [vmem:[%s4 + $0x18] sm:$0xf]
      %v886 = vld [vmem:[%s4 + $0x1c] sm:$0xf]
      %v887 = vld [vmem:[%s4 + $0x20] sm:$0xf]
      %v888 = vld [vmem:[%s4 + $0x24] sm:$0xf]
      %v889 = vld [vmem:[%s4 + $0x28] sm:$0xf]
      %v890 = vld [vmem:[%s4 + $0x2c] sm:$0xf]
      %v891 = vld [vmem:[%s4 + $0x30] sm:$0xf]
      %v892 = vld [vmem:[%s4 + $0x34] sm:$0xf]
      %v893 = vld [vmem:[%s4 + $0x38] sm:$0xf]
      %v894 = vld [vmem:[%s4 + $0x3c] sm:$0xf]
      %v895 = vld [vmem:[%s4 + $0x40] sm:$0xf]
      %v896 = vld [vmem:[%s4 + $0x44] sm:$0xf]
      %v897 = vld [vmem:[%s4 + $0x48] sm:$0xf]
      %v898 = vld [vmem:[%s4 + $0x4c] sm:$0xf]
      %v899 = vld [vmem:[%s4 + $0x50] sm:$0xf]
      %v900 = vld [vmem:[%s4 + $0x54] sm:$0xf]
      %v901 = vld [vmem:[%s4 + $0x58] sm:$0xf]
      %v902 = vld [vmem:[%s4 + $0x5c] sm:$0xf]
      %v903 = vld [vmem:[%s4 + $0x60] sm:$0xf]
      %v904 = vld [vmem:[%s4 + $0x64] sm:$0xf]
      %v905 = vld [vmem:[%s4 + $0x68] sm:$0xf]
      %v906 = vld [vmem:[%s4 + $0x6c] sm:$0xf]
      %v907 = vld [vmem:[%s4 + $0x70] sm:$0xf]
      %v908 = vld [vmem:[%s4 + $0x74] sm:$0xf]
      %v909 = vld [vmem:[%s4 + $0x78] sm:$0xf]
      %v910 = vld [vmem:[%s4 + $0x7c] sm:$0xf]
      %v911 = vld [vmem:[%s4 + $0x80] sm:$0xf]
      %v912 = vld [vmem:[%s4 + $0x84] sm:$0xf]
      %v913 = vld [vmem:[%s4 + $0x88] sm:$0xf]
      %v914 = vld [vmem:[%s4 + $0x8c] sm:$0xf]
      %v915 = vld [vmem:[%s4 + $0x90] sm:$0xf]
      %v916 = vld [vmem:[%s4 + $0x94] sm:$0xf]
      %v917 = vld [vmem:[%s4 + $0x98] sm:$0xf]
      %v918 = vld [vmem:[%s4 + $0x9c] sm:$0xf]
      %v919 = vld [vmem:[%s4 + $0xa0] sm:$0xf]
      %v920 = vld [vmem:[%s4 + $0xa4] sm:$0xf]
      %v921 = vld [vmem:[%s4 + $0xa8] sm:$0xf]
      %v922 = vld [vmem:[%s4 + $0xac] sm:$0xf]
      %v923 = vld [vmem:[%s4 + $0xb0] sm:$0xf]
      %v924 = vld [vmem:[%s4 + $0xb4] sm:$0xf]
      %v925 = vld [vmem:[%s4 + $0xb8] sm:$0xf]
      %v926 = vld [vmem:[%s4 + $0xbc] sm:$0xf]
      %v927 = vld [vmem:[%s4 + $0xc0] sm:$0xf]
      %v928 = vld [vmem:[%s4 + $0xc4] sm:$0xf]
      %v929 = vld [vmem:[%s4 + $0xc8] sm:$0xf]
      %v930 = vld [vmem:[%s4 + $0xcc] sm:$0xf]
      %v931 = vld [vmem:[%s4 + $0xd0] sm:$0xf]
      %v932 = vld [vmem:[%s4 + $0xd4] sm:$0xf]
      %v933 = vld [vmem:[%s4 + $0xd8] sm:$0xf]
      %v934 = vld [vmem:[%s4 + $0xdc] sm:$0xf]
      %v935 = vld [vmem:[%s4 + $0xe0] sm:$0xf]
      %v936 = vld [vmem:[%s4 + $0xe4] sm:$0xf]
      %v937 = vld [vmem:[%s4 + $0xe8] sm:$0xf]
      %v938 = vld [vmem:[%s4 + $0xec] sm:$0xf]
      %v939 = vld [vmem:[%s4 + $0xf0] sm:$0xf]
      %v940 = vld [vmem:[%s4 + $0xf4] sm:$0xf]
      %v941 = vld [vmem:[%s4 + $0xf8] sm:$0xf]
      %v942 = vld [vmem:[%s4 + $0xfc] sm:$0xf]
      %v943 = vld [vmem:[%s4 + $0x100] sm:$0xf]
      %v944 = vld [vmem:[%s4 + $0x104] sm:$0xf]
      %v945 = vld [vmem:[%s4 + $0x108] sm:$0xf]
      %v946 = vld [vmem:[%s4 + $0x10c] sm:$0xf]
      %v947 = vld [vmem:[%s4 + $0x110] sm:$0xf]
      %v948 = vld [vmem:[%s4 + $0x114] sm:$0xf]
      %v949 = vld [vmem:[%s4 + $0x118] sm:$0xf]
      %v950 = vld [vmem:[%s4 + $0x11c] sm:$0xf]
      %v951 = vld [vmem:[%s4 + $0x120] sm:$0xf]
      %v952 = vld [vmem:[%s4 + $0x124] sm:$0xf]
      %v953 = vld [vmem:[%s4 + $0x128] sm:$0xf]
      %v954 = vld [vmem:[%s4 + $0x12c] sm:$0xf]
      %v955 = vld [vmem:[%s4 + $0x130] sm:$0xf]
      %v956 = vld [vmem:[%s4 + $0x134] sm:$0xf]
      %v957 = vld [vmem:[%s4 + $0x138] sm:$0xf]
      %v958 = vld [vmem:[%s4 + $0x13c] sm:$0xf]
      %v959 = vld [vmem:[%s4 + $0x140] sm:$0xf]
      %v960 = vld [vmem:[%s4 + $0x144] sm:$0xf]
      %v961 = vld [vmem:[%s4 + $0x148] sm:$0xf]
      %v962 = vld [vmem:[%s4 + $0x14c] sm:$0xf]
      %v963 = vld [vmem:[%s4 + $0x150] sm:$0xf]
      %v964 = vld [vmem:[%s4 + $0x154] sm:$0xf]
      %v965 = vld [vmem:[%s4 + $0x158] sm:$0xf]
      %v966 = vld [vmem:[%s4 + $0x15c] sm:$0xf]
      %v967 = vld [vmem:[%s4 + $0x160] sm:$0xf]
      %v968 = vld [vmem:[%s4 + $0x164] sm:$0xf]
      %v969 = vld [vmem:[%s4 + $0x168] sm:$0xf]
      %v970 = vld [vmem:[%s4 + $0x16c] sm:$0xf]
      %v971 = vld [vmem:[%s4 + $0x170] sm:$0xf]
      %v972 = vld [vmem:[%s4 + $0x174] sm:$0xf]
      %v973 = vld [vmem:[%s4 + $0x178] sm:$0xf]
      %v974 = vld [vmem:[%s4 + $0x17c] sm:$0xf]
      %v975 = vld [vmem:[%s4 + $0x180] sm:$0xf]
      %v976 = vld [vmem:[%s4 + $0x184] sm:$0xf]
      %v977 = vld [vmem:[%s4 + $0x188] sm:$0xf]
      %v978 = vld [vmem:[%s4 + $0x18c] sm:$0xf]
      %v979 = vld [vmem:[%s4 + $0x190] sm:$0xf]
      %v980 = vld [vmem:[%s4 + $0x194] sm:$0xf]
      %v981 = vld [vmem:[%s4 + $0x198] sm:$0xf]
      %v982 = vld [vmem:[%s4 + $0x19c] sm:$0xf]
      %v983 = vld [vmem:[%s4 + $0x1a0] sm:$0xf]
      %v984 = vld [vmem:[%s4 + $0x1a4] sm:$0xf]
      %v985 = vld [vmem:[%s4 + $0x1a8] sm:$0xf]
      %v986 = vld [vmem:[%s4 + $0x1ac] sm:$0xf]
      %v987 = vld [vmem:[%s4 + $0x1b0] sm:$0xf]
      %v988 = vld [vmem:[%s4 + $0x1b4] sm:$0xf]
      %v989 = vld [vmem:[%s4 + $0x1b8] sm:$0xf]
      %v990 = vld [vmem:[%s4 + $0x1bc] sm:$0xf]
      %v991 = vld [vmem:[%s4 + $0x1c0] sm:$0xf]
      %v992 = vld [vmem:[%s4 + $0x1c4] sm:$0xf]
      %v993 = vld [vmem:[%s4 + $0x1c8] sm:$0xf]
      %v994 = vld [vmem:[%s4 + $0x1cc] sm:$0xf]
      %v995 = vld [vmem:[%s4 + $0x1d0] sm:$0xf]
      %v996 = vld [vmem:[%s4 + $0x1d4] sm:$0xf]
      %v997 = vld [vmem:[%s4 + $0x1d8] sm:$0xf]
      %v998 = vld [vmem:[%s4 + $0x1dc] sm:$0xf]
      %v999 = vld [vmem:[%s4 + $0x1e0] sm:$0xf]
      %v1000 = vld [vmem:[%s4 + $0x1e4] sm:$0xf]
      %v1001 = vld [vmem:[%s4 + $0x1e8] sm:$0xf]
      %v1002 = vld [vmem:[%s4 + $0x1ec] sm:$0xf]
      %v1003 = vld [vmem:[%s4 + $0x1f0] sm:$0xf]
      %v1004 = vld [vmem:[%s4 + $0x1f4] sm:$0xf]
      %v1005 = vld [vmem:[%s4 + $0x1f8] sm:$0xf]
      %v1006 = vld [vmem:[%s4 + $0x1fc] sm:$0xf]
      %v1071 = vunpack.c.l.b16 %v815
      %v1072 = vunpack.c.h.b16 %v815
      %v1073 = vunpack.c.l.b16 %v816
      %v1074 = vunpack.c.h.b16 %v816
      %v1075 = vunpack.c.l.b16 %v817
      %v1076 = vunpack.c.h.b16 %v817
      %v1077 = vunpack.c.l.b16 %v818
      %v1078 = vunpack.c.h.b16 %v818
      %v1079 = vunpack.c.l.b16 %v819
      %v1080 = vunpack.c.h.b16 %v819
      %v1081 = vunpack.c.l.b16 %v820
      %v1082 = vunpack.c.h.b16 %v820
      %v1083 = vunpack.c.l.b16 %v821
      %v1084 = vunpack.c.h.b16 %v821
      %v1085 = vunpack.c.l.b16 %v822
      %v1086 = vunpack.c.h.b16 %v822
      %v1087 = vunpack.c.l.b16 %v823
      %v1088 = vunpack.c.h.b16 %v823
      %v1089 = vunpack.c.l.b16 %v824
      %v1090 = vunpack.c.h.b16 %v824
      %v1091 = vunpack.c.l.b16 %v825
      %v1092 = vunpack.c.h.b16 %v825
      %v1093 = vunpack.c.l.b16 %v826
      %v1094 = vunpack.c.h.b16 %v826
      %v1095 = vunpack.c.l.b16 %v827
      %v1096 = vunpack.c.h.b16 %v827
      %v1097 = vunpack.c.l.b16 %v828
      %v1098 = vunpack.c.h.b16 %v828
      %v1099 = vunpack.c.l.b16 %v829
      %v1100 = vunpack.c.h.b16 %v829
      %v1101 = vunpack.c.l.b16 %v830
      %v1102 = vunpack.c.h.b16 %v830
      %v1103 = vunpack.c.l.b16 %v831
      %v1104 = vunpack.c.h.b16 %v831
      %v1105 = vunpack.c.l.b16 %v832
      %v1106 = vunpack.c.h.b16 %v832
      %v1107 = vunpack.c.l.b16 %v833
      %v1108 = vunpack.c.h.b16 %v833
      %v1109 = vunpack.c.l.b16 %v834
      %v1110 = vunpack.c.h.b16 %v834
      %v1111 = vunpack.c.l.b16 %v835
      %v1112 = vunpack.c.h.b16 %v835
      %v1113 = vunpack.c.l.b16 %v836
      %v1114 = vunpack.c.h.b16 %v836
      %v1115 = vunpack.c.l.b16 %v837
      %v1116 = vunpack.c.h.b16 %v837
      %v1117 = vunpack.c.l.b16 %v838
      %v1118 = vunpack.c.h.b16 %v838
      %v1119 = vunpack.c.l.b16 %v839
      %v1120 = vunpack.c.h.b16 %v839
      %v1121 = vunpack.c.l.b16 %v840
      %v1122 = vunpack.c.h.b16 %v840
      %v1123 = vunpack.c.l.b16 %v841
      %v1124 = vunpack.c.h.b16 %v841
      %v1125 = vunpack.c.l.b16 %v842
      %v1126 = vunpack.c.h.b16 %v842
      %v1127 = vunpack.c.l.b16 %v843
      %v1128 = vunpack.c.h.b16 %v843
      %v1129 = vunpack.c.l.b16 %v844
      %v1130 = vunpack.c.h.b16 %v844
      %v1131 = vunpack.c.l.b16 %v845
      %v1132 = vunpack.c.h.b16 %v845
      %v1133 = vunpack.c.l.b16 %v846
      %v1134 = vunpack.c.h.b16 %v846
      %v1135 = vunpack.c.l.b16 %v847
      %v1136 = vunpack.c.h.b16 %v847
      %v1137 = vunpack.c.l.b16 %v848
      %v1138 = vunpack.c.h.b16 %v848
      %v1139 = vunpack.c.l.b16 %v849
      %v1140 = vunpack.c.h.b16 %v849
      %v1141 = vunpack.c.l.b16 %v850
      %v1142 = vunpack.c.h.b16 %v850
      %v1143 = vunpack.c.l.b16 %v851
      %v1144 = vunpack.c.h.b16 %v851
      %v1145 = vunpack.c.l.b16 %v852
      %v1146 = vunpack.c.h.b16 %v852
      %v1147 = vunpack.c.l.b16 %v853
      %v1148 = vunpack.c.h.b16 %v853
      %v1149 = vunpack.c.l.b16 %v854
      %v1150 = vunpack.c.h.b16 %v854
      %v1151 = vunpack.c.l.b16 %v855
      %v1152 = vunpack.c.h.b16 %v855
      %v1153 = vunpack.c.l.b16 %v856
      %v1154 = vunpack.c.h.b16 %v856
      %v1155 = vunpack.c.l.b16 %v857
      %v1156 = vunpack.c.h.b16 %v857
      %v1157 = vunpack.c.l.b16 %v858
      %v1158 = vunpack.c.h.b16 %v858
      %v1159 = vunpack.c.l.b16 %v859
      %v1160 = vunpack.c.h.b16 %v859
      %v1161 = vunpack.c.l.b16 %v860
      %v1162 = vunpack.c.h.b16 %v860
      %v1163 = vunpack.c.l.b16 %v861
      %v1164 = vunpack.c.h.b16 %v861
      %v1165 = vunpack.c.l.b16 %v862
      %v1166 = vunpack.c.h.b16 %v862
      %v1167 = vunpack.c.l.b16 %v863
      %v1168 = vunpack.c.h.b16 %v863
      %v1169 = vunpack.c.l.b16 %v864
      %v1170 = vunpack.c.h.b16 %v864
      %v1171 = vunpack.c.l.b16 %v865
      %v1172 = vunpack.c.h.b16 %v865
      %v1173 = vunpack.c.l.b16 %v866
      %v1174 = vunpack.c.h.b16 %v866
      %v1175 = vunpack.c.l.b16 %v867
      %v1176 = vunpack.c.h.b16 %v867
      %v1177 = vunpack.c.l.b16 %v868
      %v1178 = vunpack.c.h.b16 %v868
      %v1179 = vunpack.c.l.b16 %v869
      %v1180 = vunpack.c.h.b16 %v869
      %v1181 = vunpack.c.l.b16 %v870
      %v1182 = vunpack.c.h.b16 %v870
      %v1183 = vunpack.c.l.b16 %v871
      %v1184 = vunpack.c.h.b16 %v871
      %v1185 = vunpack.c.l.b16 %v872
      %v1186 = vunpack.c.h.b16 %v872
      %v1187 = vunpack.c.l.b16 %v873
      %v1188 = vunpack.c.h.b16 %v873
      %v1189 = vunpack.c.l.b16 %v874
      %v1190 = vunpack.c.h.b16 %v874
      %v1191 = vunpack.c.l.b16 %v875
      %v1192 = vunpack.c.h.b16 %v875
      %v1193 = vunpack.c.l.b16 %v876
      %v1194 = vunpack.c.h.b16 %v876
      %v1195 = vunpack.c.l.b16 %v877
      %v1196 = vunpack.c.h.b16 %v877
      %v1197 = vunpack.c.l.b16 %v878
      %v1198 = vunpack.c.h.b16 %v878
      %v1199 = vpack.c.b16 %v1079, %v1071
      %v1200 = vpack.c.b16 %v1080, %v1072
      %v1201 = vpack.c.b16 %v1081, %v1073
      %v1202 = vpack.c.b16 %v1082, %v1074
      %v1203 = vpack.c.b16 %v1083, %v1075
      %v1204 = vpack.c.b16 %v1084, %v1076
      %v1205 = vpack.c.b16 %v1085, %v1077
      %v1206 = vpack.c.b16 %v1086, %v1078
      %v1207 = vpack.c.b16 %v1095, %v1087
      %v1208 = vpack.c.b16 %v1096, %v1088
      %v1209 = vpack.c.b16 %v1097, %v1089
      %v1210 = vpack.c.b16 %v1098, %v1090
      %v1211 = vpack.c.b16 %v1099, %v1091
      %v1212 = vpack.c.b16 %v1100, %v1092
      %v1213 = vpack.c.b16 %v1101, %v1093
      %v1214 = vpack.c.b16 %v1102, %v1094
      %v1215 = vpack.c.b16 %v1111, %v1103
      %v1216 = vpack.c.b16 %v1112, %v1104
      %v1217 = vpack.c.b16 %v1113, %v1105
      %v1218 = vpack.c.b16 %v1114, %v1106
      %v1219 = vpack.c.b16 %v1115, %v1107
      %v1220 = vpack.c.b16 %v1116, %v1108
      %v1221 = vpack.c.b16 %v1117, %v1109
      %v1222 = vpack.c.b16 %v1118, %v1110
      %v1223 = vpack.c.b16 %v1127, %v1119
      %v1224 = vpack.c.b16 %v1128, %v1120
      %v1225 = vpack.c.b16 %v1129, %v1121
      %v1226 = vpack.c.b16 %v1130, %v1122
      %v1227 = vpack.c.b16 %v1131, %v1123
      %v1228 = vpack.c.b16 %v1132, %v1124
      %v1229 = vpack.c.b16 %v1133, %v1125
      %v1230 = vpack.c.b16 %v1134, %v1126
      %v1231 = vpack.c.b16 %v1143, %v1135
      %v1232 = vpack.c.b16 %v1144, %v1136
      %v1233 = vpack.c.b16 %v1145, %v1137
      %v1234 = vpack.c.b16 %v1146, %v1138
      %v1235 = vpack.c.b16 %v1147, %v1139
      %v1236 = vpack.c.b16 %v1148, %v1140
      %v1237 = vpack.c.b16 %v1149, %v1141
      %v1238 = vpack.c.b16 %v1150, %v1142
      %v1239 = vpack.c.b16 %v1159, %v1151
      %v1240 = vpack.c.b16 %v1160, %v1152
      %v1241 = vpack.c.b16 %v1161, %v1153
      %v1242 = vpack.c.b16 %v1162, %v1154
      %v1243 = vpack.c.b16 %v1163, %v1155
      %v1244 = vpack.c.b16 %v1164, %v1156
      %v1245 = vpack.c.b16 %v1165, %v1157
      %v1246 = vpack.c.b16 %v1166, %v1158
      %v1247 = vpack.c.b16 %v1175, %v1167
      %v1248 = vpack.c.b16 %v1176, %v1168
      %v1249 = vpack.c.b16 %v1177, %v1169
      %v1250 = vpack.c.b16 %v1178, %v1170
      %v1251 = vpack.c.b16 %v1179, %v1171
      %v1252 = vpack.c.b16 %v1180, %v1172
      %v1253 = vpack.c.b16 %v1181, %v1173
      %v1254 = vpack.c.b16 %v1182, %v1174
      %v1255 = vpack.c.b16 %v1191, %v1183
      %v1256 = vpack.c.b16 %v1192, %v1184
      %v1257 = vpack.c.b16 %v1193, %v1185
      %v1258 = vpack.c.b16 %v1194, %v1186
      %v1259 = vpack.c.b16 %v1195, %v1187
      %v1260 = vpack.c.b16 %v1196, %v1188
      %v1261 = vpack.c.b16 %v1197, %v1189
      %v1262 = vpack.c.b16 %v1198, %v1190
      %v1455 = vunpack.c.l.b16 %v879
      %v1456 = vunpack.c.l.b16 %v880
      %v1457 = vunpack.c.l.b16 %v881
      %v1458 = vunpack.c.l.b16 %v882
      %v1459 = vunpack.c.l.b16 %v883
      %v1460 = vunpack.c.l.b16 %v884
      %v1461 = vunpack.c.l.b16 %v885
      %v1462 = vunpack.c.l.b16 %v886
      %v1463 = vunpack.c.l.b16 %v887
      %v1464 = vunpack.c.l.b16 %v888
      %v1465 = vunpack.c.l.b16 %v889
      %v1466 = vunpack.c.l.b16 %v890
      %v1467 = vunpack.c.l.b16 %v891
      %v1468 = vunpack.c.l.b16 %v892
      %v1469 = vunpack.c.l.b16 %v893
      %v1470 = vunpack.c.l.b16 %v894
      %v1471 = vunpack.c.l.b16 %v895
      %v1472 = vunpack.c.l.b16 %v896
      %v1473 = vunpack.c.l.b16 %v897
      %v1474 = vunpack.c.l.b16 %v898
      %v1475 = vunpack.c.l.b16 %v899
      %v1476 = vunpack.c.l.b16 %v900
      %v1477 = vunpack.c.l.b16 %v901
      %v1478 = vunpack.c.l.b16 %v902
      %v1479 = vunpack.c.l.b16 %v903
      %v1480 = vunpack.c.l.b16 %v904
      %v1481 = vunpack.c.l.b16 %v905
      %v1482 = vunpack.c.l.b16 %v906
      %v1483 = vunpack.c.l.b16 %v907
      %v1484 = vunpack.c.l.b16 %v908
      %v1485 = vunpack.c.l.b16 %v909
      %v1486 = vunpack.c.l.b16 %v910
      %v1487 = vunpack.c.l.b16 %v911
      %v1488 = vunpack.c.l.b16 %v912
      %v1489 = vunpack.c.l.b16 %v913
      %v1490 = vunpack.c.l.b16 %v914
      %v1491 = vunpack.c.l.b16 %v915
      %v1492 = vunpack.c.l.b16 %v916
      %v1493 = vunpack.c.l.b16 %v917
      %v1494 = vunpack.c.l.b16 %v918
      %v1495 = vunpack.c.l.b16 %v919
      %v1496 = vunpack.c.l.b16 %v920
      %v1497 = vunpack.c.l.b16 %v921
      %v1498 = vunpack.c.l.b16 %v922
      %v1499 = vunpack.c.l.b16 %v923
      %v1500 = vunpack.c.l.b16 %v924
      %v1501 = vunpack.c.l.b16 %v925
      %v1502 = vunpack.c.l.b16 %v926
      %v1503 = vunpack.c.l.b16 %v927
      %v1504 = vunpack.c.l.b16 %v928
      %v1505 = vunpack.c.l.b16 %v929
      %v1506 = vunpack.c.l.b16 %v930
      %v1507 = vunpack.c.l.b16 %v931
      %v1508 = vunpack.c.l.b16 %v932
      %v1509 = vunpack.c.l.b16 %v933
      %v1510 = vunpack.c.l.b16 %v934
      %v1511 = vunpack.c.l.b16 %v935
      %v1512 = vunpack.c.l.b16 %v936
      %v1513 = vunpack.c.l.b16 %v937
      %v1514 = vunpack.c.l.b16 %v938
      %v1515 = vunpack.c.l.b16 %v939
      %v1516 = vunpack.c.l.b16 %v940
      %v1517 = vunpack.c.l.b16 %v941
      %v1518 = vunpack.c.l.b16 %v942
      %v1519 = vunpack.c.l.b16 %v943
      %v1520 = vunpack.c.l.b16 %v944
      %v1521 = vunpack.c.l.b16 %v945
      %v1522 = vunpack.c.l.b16 %v946
      %v1523 = vunpack.c.l.b16 %v947
      %v1524 = vunpack.c.l.b16 %v948
      %v1525 = vunpack.c.l.b16 %v949
      %v1526 = vunpack.c.l.b16 %v950
      %v1527 = vunpack.c.l.b16 %v951
      %v1528 = vunpack.c.l.b16 %v952
      %v1529 = vunpack.c.l.b16 %v953
      %v1530 = vunpack.c.l.b16 %v954
      %v1531 = vunpack.c.l.b16 %v955
      %v1532 = vunpack.c.l.b16 %v956
      %v1533 = vunpack.c.l.b16 %v957
      %v1534 = vunpack.c.l.b16 %v958
      %v1535 = vunpack.c.l.b16 %v959
      %v1536 = vunpack.c.l.b16 %v960
      %v1537 = vunpack.c.l.b16 %v961
      %v1538 = vunpack.c.l.b16 %v962
      %v1539 = vunpack.c.l.b16 %v963
      %v1540 = vunpack.c.l.b16 %v964
      %v1541 = vunpack.c.l.b16 %v965
      %v1542 = vunpack.c.l.b16 %v966
      %v1543 = vunpack.c.l.b16 %v967
      %v1544 = vunpack.c.l.b16 %v968
      %v1545 = vunpack.c.l.b16 %v969
      %v1546 = vunpack.c.l.b16 %v970
      %v1547 = vunpack.c.l.b16 %v971
      %v1548 = vunpack.c.l.b16 %v972
      %v1549 = vunpack.c.l.b16 %v973
      %v1550 = vunpack.c.l.b16 %v974
      %v1551 = vunpack.c.l.b16 %v975
      %v1552 = vunpack.c.l.b16 %v976
      %v1553 = vunpack.c.l.b16 %v977
      %v1554 = vunpack.c.l.b16 %v978
      %v1555 = vunpack.c.l.b16 %v979
      %v1556 = vunpack.c.l.b16 %v980
      %v1557 = vunpack.c.l.b16 %v981
      %v1558 = vunpack.c.l.b16 %v982
      %v1559 = vunpack.c.l.b16 %v983
      %v1560 = vunpack.c.l.b16 %v984
      %v1561 = vunpack.c.l.b16 %v985
      %v1562 = vunpack.c.l.b16 %v986
      %v1563 = vunpack.c.l.b16 %v987
      %v1564 = vunpack.c.l.b16 %v988
      %v1565 = vunpack.c.l.b16 %v989
      %v1566 = vunpack.c.l.b16 %v990
      %v1567 = vunpack.c.l.b16 %v991
      %v1568 = vunpack.c.l.b16 %v992
      %v1569 = vunpack.c.l.b16 %v993
      %v1570 = vunpack.c.l.b16 %v994
      %v1571 = vunpack.c.l.b16 %v995
      %v1572 = vunpack.c.l.b16 %v996
      %v1573 = vunpack.c.l.b16 %v997
      %v1574 = vunpack.c.l.b16 %v998
      %v1575 = vunpack.c.l.b16 %v999
      %v1576 = vunpack.c.l.b16 %v1000
      %v1577 = vunpack.c.l.b16 %v1001
      %v1578 = vunpack.c.l.b16 %v1002
      %v1579 = vunpack.c.l.b16 %v1003
      %v1580 = vunpack.c.l.b16 %v1004
      %v1581 = vunpack.c.l.b16 %v1005
      %v1582 = vunpack.c.l.b16 %v1006
      %v1583 = vpack.c.b16 %v1456, %v1455
      %v1584 = vpack.c.b16 %v1458, %v1457
      %v1585 = vpack.c.b16 %v1460, %v1459
      %v1586 = vpack.c.b16 %v1462, %v1461
      %v1587 = vpack.c.b16 %v1464, %v1463
      %v1588 = vpack.c.b16 %v1466, %v1465
      %v1589 = vpack.c.b16 %v1468, %v1467
      %v1590 = vpack.c.b16 %v1470, %v1469
      %v1591 = vpack.c.b16 %v1472, %v1471
      %v1592 = vpack.c.b16 %v1474, %v1473
      %v1593 = vpack.c.b16 %v1476, %v1475
      %v1594 = vpack.c.b16 %v1478, %v1477
      %v1595 = vpack.c.b16 %v1480, %v1479
      %v1596 = vpack.c.b16 %v1482, %v1481
      %v1597 = vpack.c.b16 %v1484, %v1483
      %v1598 = vpack.c.b16 %v1486, %v1485
      %v1599 = vpack.c.b16 %v1488, %v1487
      %v1600 = vpack.c.b16 %v1490, %v1489
      %v1601 = vpack.c.b16 %v1492, %v1491
      %v1602 = vpack.c.b16 %v1494, %v1493
      %v1603 = vpack.c.b16 %v1496, %v1495
      %v1604 = vpack.c.b16 %v1498, %v1497
      %v1605 = vpack.c.b16 %v1500, %v1499
      %v1606 = vpack.c.b16 %v1502, %v1501
      %v1607 = vpack.c.b16 %v1504, %v1503
      %v1608 = vpack.c.b16 %v1506, %v1505
      %v1609 = vpack.c.b16 %v1508, %v1507
      %v1610 = vpack.c.b16 %v1510, %v1509
      %v1611 = vpack.c.b16 %v1512, %v1511
      %v1612 = vpack.c.b16 %v1514, %v1513
      %v1613 = vpack.c.b16 %v1516, %v1515
      %v1614 = vpack.c.b16 %v1518, %v1517
      %v1615 = vpack.c.b16 %v1520, %v1519
      %v1616 = vpack.c.b16 %v1522, %v1521
      %v1617 = vpack.c.b16 %v1524, %v1523
      %v1618 = vpack.c.b16 %v1526, %v1525
      %v1619 = vpack.c.b16 %v1528, %v1527
      %v1620 = vpack.c.b16 %v1530, %v1529
      %v1621 = vpack.c.b16 %v1532, %v1531
      %v1622 = vpack.c.b16 %v1534, %v1533
      %v1623 = vpack.c.b16 %v1536, %v1535
      %v1624 = vpack.c.b16 %v1538, %v1537
      %v1625 = vpack.c.b16 %v1540, %v1539
      %v1626 = vpack.c.b16 %v1542, %v1541
      %v1627 = vpack.c.b16 %v1544, %v1543
      %v1628 = vpack.c.b16 %v1546, %v1545
      %v1629 = vpack.c.b16 %v1548, %v1547
      %v1630 = vpack.c.b16 %v1550, %v1549
      %v1631 = vpack.c.b16 %v1552, %v1551
      %v1632 = vpack.c.b16 %v1554, %v1553
      %v1633 = vpack.c.b16 %v1556, %v1555
      %v1634 = vpack.c.b16 %v1558, %v1557
      %v1635 = vpack.c.b16 %v1560, %v1559
      %v1636 = vpack.c.b16 %v1562, %v1561
      %v1637 = vpack.c.b16 %v1564, %v1563
      %v1638 = vpack.c.b16 %v1566, %v1565
      %v1639 = vpack.c.b16 %v1568, %v1567
      %v1640 = vpack.c.b16 %v1570, %v1569
      %v1641 = vpack.c.b16 %v1572, %v1571
      %v1642 = vpack.c.b16 %v1574, %v1573
      %v1643 = vpack.c.b16 %v1576, %v1575
      %v1644 = vpack.c.b16 %v1578, %v1577
      %v1645 = vpack.c.b16 %v1580, %v1579
      %v1646 = vpack.c.b16 %v1582, %v1581
      %1711 = vmatpush.bf16.msra.mxu0 %v1590
      %1712 = vmatpush.bf16.msra.mxu0 %v1589
      %1713 = vmatpush.bf16.msra.mxu0 %v1588
      %1714 = vmatpush.bf16.msra.mxu0 %v1587
      %1715 = vmatpush.bf16.msra.mxu0 %v1586
      %1716 = vmatpush.bf16.msra.mxu0 %v1585
      %1717 = vmatpush.bf16.msra.mxu0 %v1584
      %1718 = vmatpush.bf16.msra.mxu0 %v1583
      %1719 = vmatmul.bf16.gmra.mxu0 %v1199
      %v1720 = vpop.f32.mrf.mxu0
      %v1721 = vadd.f32 0.0, %v1720
      %v1722 = vpop.f32.mrf.mxu0
      %v1723 = vadd.f32 0.0, %v1722
      %1724 = vmatmul.bf16.gmra.mxu0 %v1207
      %v1725 = vpop.f32.mrf.mxu0
      %v1726 = vadd.f32 0.0, %v1725
      %v1727 = vpop.f32.mrf.mxu0
      %v1728 = vadd.f32 0.0, %v1727
      %1729 = vmatmul.bf16.gmra.mxu0 %v1215
      %v1730 = vpop.f32.mrf.mxu0
      %v1731 = vadd.f32 0.0, %v1730
      %v1732 = vpop.f32.mrf.mxu0
      %v1733 = vadd.f32 0.0, %v1732
      %1734 = vmatmul.bf16.gmra.mxu0 %v1223
      %v1735 = vpop.f32.mrf.mxu0
      %v1736 = vadd.f32 0.0, %v1735
      %v1737 = vpop.f32.mrf.mxu0
      %v1738 = vadd.f32 0.0, %v1737
      %1739 = vmatmul.bf16.gmra.mxu0 %v1231
      %v1740 = vpop.f32.mrf.mxu0
      %v1741 = vadd.f32 0.0, %v1740
      %v1742 = vpop.f32.mrf.mxu0
      %v1743 = vadd.f32 0.0, %v1742
      %1744 = vmatmul.bf16.gmra.mxu0 %v1239
      %v1745 = vpop.f32.mrf.mxu0
      %v1746 = vadd.f32 0.0, %v1745
      %v1747 = vpop.f32.mrf.mxu0
      %v1748 = vadd.f32 0.0, %v1747
      %1749 = vmatmul.bf16.gmra.mxu0 %v1247
      %v1750 = vpop.f32.mrf.mxu0
      %v1751 = vadd.f32 0.0, %v1750
      %v1752 = vpop.f32.mrf.mxu0
      %v1753 = vadd.f32 0.0, %v1752
      %1754 = vmatmul.bf16.gmra.mxu0 %v1255
      %v1755 = vpop.f32.mrf.mxu0
      %v1756 = vadd.f32 0.0, %v1755
      %v1757 = vpop.f32.mrf.mxu0
      %v1758 = vadd.f32 0.0, %v1757
      %1759 = vdwg.mxu0
      %1760 = vmatpush.bf16.msra.mxu0 %v1598
      %1761 = vmatpush.bf16.msra.mxu0 %v1597
      %1762 = vmatpush.bf16.msra.mxu0 %v1596
      %1763 = vmatpush.bf16.msra.mxu0 %v1595
      %1764 = vmatpush.bf16.msra.mxu0 %v1594
      %1765 = vmatpush.bf16.msra.mxu0 %v1593
      %1766 = vmatpush.bf16.msra.mxu0 %v1592
      %1767 = vmatpush.bf16.msra.mxu0 %v1591
      %1768 = vmatmul.bf16.gmra.mxu0 %v1200
      %v1769 = vpop.f32.mrf.mxu0
      %v1770 = vadd.f32 %v1721, %v1769
      %v1771 = vpop.f32.mrf.mxu0
      %v1772 = vadd.f32 %v1723, %v1771
      %1773 = vmatmul.bf16.gmra.mxu0 %v1208
      %v1774 = vpop.f32.mrf.mxu0
      %v1775 = vadd.f32 %v1726, %v1774
      %v1776 = vpop.f32.mrf.mxu0
      %v1777 = vadd.f32 %v1728, %v1776
      %1778 = vmatmul.bf16.gmra.mxu0 %v1216
      %v1779 = vpop.f32.mrf.mxu0
      %v1780 = vadd.f32 %v1731, %v1779
      %v1781 = vpop.f32.mrf.mxu0
      %v1782 = vadd.f32 %v1733, %v1781
      %1783 = vmatmul.bf16.gmra.mxu0 %v1224
      %v1784 = vpop.f32.mrf.mxu0
      %v1785 = vadd.f32 %v1736, %v1784
      %v1786 = vpop.f32.mrf.mxu0
      %v1787 = vadd.f32 %v1738, %v1786
      %1788 = vmatmul.bf16.gmra.mxu0 %v1232
      %v1789 = vpop.f32.mrf.mxu0
      %v1790 = vadd.f32 %v1741, %v1789
      %v1791 = vpop.f32.mrf.mxu0
      %v1792 = vadd.f32 %v1743, %v1791
      %1793 = vmatmul.bf16.gmra.mxu0 %v1240
      %v1794 = vpop.f32.mrf.mxu0
      %v1795 = vadd.f32 %v1746, %v1794
      %v1796 = vpop.f32.mrf.mxu0
      %v1797 = vadd.f32 %v1748, %v1796
      %1798 = vmatmul.bf16.gmra.mxu0 %v1248
      %v1799 = vpop.f32.mrf.mxu0
      %v1800 = vadd.f32 %v1751, %v1799
      %v1801 = vpop.f32.mrf.mxu0
      %v1802 = vadd.f32 %v1753, %v1801
      %1803 = vmatmul.bf16.gmra.mxu0 %v1256
      %v1804 = vpop.f32.mrf.mxu0
      %v1805 = vadd.f32 %v1756, %v1804
      %v1806 = vpop.f32.mrf.mxu0
      %v1807 = vadd.f32 %v1758, %v1806
      %1808 = vdwg.mxu0
      %1809 = vmatpush.bf16.msra.mxu0 %v1606
      %1810 = vmatpush.bf16.msra.mxu0 %v1605
      %1811 = vmatpush.bf16.msra.mxu0 %v1604
      %1812 = vmatpush.bf16.msra.mxu0 %v1603
      %1813 = vmatpush.bf16.msra.mxu0 %v1602
      %1814 = vmatpush.bf16.msra.mxu0 %v1601
      %1815 = vmatpush.bf16.msra.mxu0 %v1600
      %1816 = vmatpush.bf16.msra.mxu0 %v1599
      %1817 = vmatmul.bf16.gmra.mxu0 %v1201
      %v1818 = vpop.f32.mrf.mxu0
      %v1819 = vadd.f32 %v1770, %v1818
      %v1820 = vpop.f32.mrf.mxu0
      %v1821 = vadd.f32 %v1772, %v1820
      %1822 = vmatmul.bf16.gmra.mxu0 %v1209
      %v1823 = vpop.f32.mrf.mxu0
      %v1824 = vadd.f32 %v1775, %v1823
      %v1825 = vpop.f32.mrf.mxu0
      %v1826 = vadd.f32 %v1777, %v1825
      %1827 = vmatmul.bf16.gmra.mxu0 %v1217
      %v1828 = vpop.f32.mrf.mxu0
      %v1829 = vadd.f32 %v1780, %v1828
      %v1830 = vpop.f32.mrf.mxu0
      %v1831 = vadd.f32 %v1782, %v1830
      %1832 = vmatmul.bf16.gmra.mxu0 %v1225
      %v1833 = vpop.f32.mrf.mxu0
      %v1834 = vadd.f32 %v1785, %v1833
      %v1835 = vpop.f32.mrf.mxu0
      %v1836 = vadd.f32 %v1787, %v1835
      %1837 = vmatmul.bf16.gmra.mxu0 %v1233
      %v1838 = vpop.f32.mrf.mxu0
      %v1839 = vadd.f32 %v1790, %v1838
      %v1840 = vpop.f32.mrf.mxu0
      %v1841 = vadd.f32 %v1792, %v1840
      %1842 = vmatmul.bf16.gmra.mxu0 %v1241
      %v1843 = vpop.f32.mrf.mxu0
      %v1844 = vadd.f32 %v1795, %v1843
      %v1845 = vpop.f32.mrf.mxu0
      %v1846 = vadd.f32 %v1797, %v1845
      %1847 = vmatmul.bf16.gmra.mxu0 %v1249
      %v1848 = vpop.f32.mrf.mxu0
      %v1849 = vadd.f32 %v1800, %v1848
      %v1850 = vpop.f32.mrf.mxu0
      %v1851 = vadd.f32 %v1802, %v1850
      %1852 = vmatmul.bf16.gmra.mxu0 %v1257
      %v1853 = vpop.f32.mrf.mxu0
      %v1854 = vadd.f32 %v1805, %v1853
      %v1855 = vpop.f32.mrf.mxu0
      %v1856 = vadd.f32 %v1807, %v1855
      %1857 = vdwg.mxu0
      %1858 = vmatpush.bf16.msra.mxu0 %v1614
      %1859 = vmatpush.bf16.msra.mxu0 %v1613
      %1860 = vmatpush.bf16.msra.mxu0 %v1612
      %1861 = vmatpush.bf16.msra.mxu0 %v1611
      %1862 = vmatpush.bf16.msra.mxu0 %v1610
      %1863 = vmatpush.bf16.msra.mxu0 %v1609
      %1864 = vmatpush.bf16.msra.mxu0 %v1608
      %1865 = vmatpush.bf16.msra.mxu0 %v1607
      %1866 = vmatmul.bf16.gmra.mxu0 %v1202
      %v1867 = vpop.f32.mrf.mxu0
      %v1868 = vadd.f32 %v1819, %v1867
      %v1869 = vpop.f32.mrf.mxu0
      %v1870 = vadd.f32 %v1821, %v1869
      %1871 = vmatmul.bf16.gmra.mxu0 %v1210
      %v1872 = vpop.f32.mrf.mxu0
      %v1873 = vadd.f32 %v1824, %v1872
      %v1874 = vpop.f32.mrf.mxu0
      %v1875 = vadd.f32 %v1826, %v1874
      %1876 = vmatmul.bf16.gmra.mxu0 %v1218
      %v1877 = vpop.f32.mrf.mxu0
      %v1878 = vadd.f32 %v1829, %v1877
      %v1879 = vpop.f32.mrf.mxu0
      %v1880 = vadd.f32 %v1831, %v1879
      %1881 = vmatmul.bf16.gmra.mxu0 %v1226
      %v1882 = vpop.f32.mrf.mxu0
      %v1883 = vadd.f32 %v1834, %v1882
      %v1884 = vpop.f32.mrf.mxu0
      %v1885 = vadd.f32 %v1836, %v1884
      %1886 = vmatmul.bf16.gmra.mxu0 %v1234
      %v1887 = vpop.f32.mrf.mxu0
      %v1888 = vadd.f32 %v1839, %v1887
      %v1889 = vpop.f32.mrf.mxu0
      %v1890 = vadd.f32 %v1841, %v1889
      %1891 = vmatmul.bf16.gmra.mxu0 %v1242
      %v1892 = vpop.f32.mrf.mxu0
      %v1893 = vadd.f32 %v1844, %v1892
      %v1894 = vpop.f32.mrf.mxu0
      %v1895 = vadd.f32 %v1846, %v1894
      %1896 = vmatmul.bf16.gmra.mxu0 %v1250
      %v1897 = vpop.f32.mrf.mxu0
      %v1898 = vadd.f32 %v1849, %v1897
      %v1899 = vpop.f32.mrf.mxu0
      %v1900 = vadd.f32 %v1851, %v1899
      %1901 = vmatmul.bf16.gmra.mxu0 %v1258
      %v1902 = vpop.f32.mrf.mxu0
      %v1903 = vadd.f32 %v1854, %v1902
      %v1904 = vpop.f32.mrf.mxu0
      %v1905 = vadd.f32 %v1856, %v1904
      %1906 = vdwg.mxu0
      %1907 = vmatpush.bf16.msra.mxu0 %v1622
      %1908 = vmatpush.bf16.msra.mxu0 %v1621
      %1909 = vmatpush.bf16.msra.mxu0 %v1620
      %1910 = vmatpush.bf16.msra.mxu0 %v1619
      %1911 = vmatpush.bf16.msra.mxu0 %v1618
      %1912 = vmatpush.bf16.msra.mxu0 %v1617
      %1913 = vmatpush.bf16.msra.mxu0 %v1616
      %1914 = vmatpush.bf16.msra.mxu0 %v1615
      %1915 = vmatmul.bf16.gmra.mxu0 %v1203
      %v1916 = vpop.f32.mrf.mxu0
      %v1917 = vadd.f32 %v1868, %v1916
      %v1918 = vpop.f32.mrf.mxu0
      %v1919 = vadd.f32 %v1870, %v1918
      %1920 = vmatmul.bf16.gmra.mxu0 %v1211
      %v1921 = vpop.f32.mrf.mxu0
      %v1922 = vadd.f32 %v1873, %v1921
      %v1923 = vpop.f32.mrf.mxu0
      %v1924 = vadd.f32 %v1875, %v1923
      %1925 = vmatmul.bf16.gmra.mxu0 %v1219
      %v1926 = vpop.f32.mrf.mxu0
      %v1927 = vadd.f32 %v1878, %v1926
      %v1928 = vpop.f32.mrf.mxu0
      %v1929 = vadd.f32 %v1880, %v1928
      %1930 = vmatmul.bf16.gmra.mxu0 %v1227
      %v1931 = vpop.f32.mrf.mxu0
      %v1932 = vadd.f32 %v1883, %v1931
      %v1933 = vpop.f32.mrf.mxu0
      %v1934 = vadd.f32 %v1885, %v1933
      %1935 = vmatmul.bf16.gmra.mxu0 %v1235
      %v1936 = vpop.f32.mrf.mxu0
      %v1937 = vadd.f32 %v1888, %v1936
      %v1938 = vpop.f32.mrf.mxu0
      %v1939 = vadd.f32 %v1890, %v1938
      %1940 = vmatmul.bf16.gmra.mxu0 %v1243
      %v1941 = vpop.f32.mrf.mxu0
      %v1942 = vadd.f32 %v1893, %v1941
      %v1943 = vpop.f32.mrf.mxu0
      %v1944 = vadd.f32 %v1895, %v1943
      %1945 = vmatmul.bf16.gmra.mxu0 %v1251
      %v1946 = vpop.f32.mrf.mxu0
      %v1947 = vadd.f32 %v1898, %v1946
      %v1948 = vpop.f32.mrf.mxu0
      %v1949 = vadd.f32 %v1900, %v1948
      %1950 = vmatmul.bf16.gmra.mxu0 %v1259
      %v1951 = vpop.f32.mrf.mxu0
      %v1952 = vadd.f32 %v1903, %v1951
      %v1953 = vpop.f32.mrf.mxu0
      %v1954 = vadd.f32 %v1905, %v1953
      %1955 = vdwg.mxu0
      %1956 = vmatpush.bf16.msra.mxu0 %v1630
      %1957 = vmatpush.bf16.msra.mxu0 %v1629
      %1958 = vmatpush.bf16.msra.mxu0 %v1628
      %1959 = vmatpush.bf16.msra.mxu0 %v1627
      %1960 = vmatpush.bf16.msra.mxu0 %v1626
      %1961 = vmatpush.bf16.msra.mxu0 %v1625
      %1962 = vmatpush.bf16.msra.mxu0 %v1624
      %1963 = vmatpush.bf16.msra.mxu0 %v1623
      %1964 = vmatmul.bf16.gmra.mxu0 %v1204
      %v1965 = vpop.f32.mrf.mxu0
      %v1966 = vadd.f32 %v1917, %v1965
      %v1967 = vpop.f32.mrf.mxu0
      %v1968 = vadd.f32 %v1919, %v1967
      %1969 = vmatmul.bf16.gmra.mxu0 %v1212
      %v1970 = vpop.f32.mrf.mxu0
      %v1971 = vadd.f32 %v1922, %v1970
      %v1972 = vpop.f32.mrf.mxu0
      %v1973 = vadd.f32 %v1924, %v1972
      %1974 = vmatmul.bf16.gmra.mxu0 %v1220
      %v1975 = vpop.f32.mrf.mxu0
      %v1976 = vadd.f32 %v1927, %v1975
      %v1977 = vpop.f32.mrf.mxu0
      %v1978 = vadd.f32 %v1929, %v1977
      %1979 = vmatmul.bf16.gmra.mxu0 %v1228
      %v1980 = vpop.f32.mrf.mxu0
      %v1981 = vadd.f32 %v1932, %v1980
      %v1982 = vpop.f32.mrf.mxu0
      %v1983 = vadd.f32 %v1934, %v1982
      %1984 = vmatmul.bf16.gmra.mxu0 %v1236
      %v1985 = vpop.f32.mrf.mxu0
      %v1986 = vadd.f32 %v1937, %v1985
      %v1987 = vpop.f32.mrf.mxu0
      %v1988 = vadd.f32 %v1939, %v1987
      %1989 = vmatmul.bf16.gmra.mxu0 %v1244
      %v1990 = vpop.f32.mrf.mxu0
      %v1991 = vadd.f32 %v1942, %v1990
      %v1992 = vpop.f32.mrf.mxu0
      %v1993 = vadd.f32 %v1944, %v1992
      %1994 = vmatmul.bf16.gmra.mxu0 %v1252
      %v1995 = vpop.f32.mrf.mxu0
      %v1996 = vadd.f32 %v1947, %v1995
      %v1997 = vpop.f32.mrf.mxu0
      %v1998 = vadd.f32 %v1949, %v1997
      %1999 = vmatmul.bf16.gmra.mxu0 %v1260
      %v2000 = vpop.f32.mrf.mxu0
      %v2001 = vadd.f32 %v1952, %v2000
      %v2002 = vpop.f32.mrf.mxu0
      %v2003 = vadd.f32 %v1954, %v2002
      %2004 = vdwg.mxu0
      %2005 = vmatpush.bf16.msra.mxu0 %v1638
      %2006 = vmatpush.bf16.msra.mxu0 %v1637
      %2007 = vmatpush.bf16.msra.mxu0 %v1636
      %2008 = vmatpush.bf16.msra.mxu0 %v1635
      %2009 = vmatpush.bf16.msra.mxu0 %v1634
      %2010 = vmatpush.bf16.msra.mxu0 %v1633
      %2011 = vmatpush.bf16.msra.mxu0 %v1632
      %2012 = vmatpush.bf16.msra.mxu0 %v1631
      %2013 = vmatmul.bf16.gmra.mxu0 %v1205
      %v2014 = vpop.f32.mrf.mxu0
      %v2015 = vadd.f32 %v1966, %v2014
      %v2016 = vpop.f32.mrf.mxu0
      %v2017 = vadd.f32 %v1968, %v2016
      %2018 = vmatmul.bf16.gmra.mxu0 %v1213
      %v2019 = vpop.f32.mrf.mxu0
      %v2020 = vadd.f32 %v1971, %v2019
      %v2021 = vpop.f32.mrf.mxu0
      %v2022 = vadd.f32 %v1973, %v2021
      %2023 = vmatmul.bf16.gmra.mxu0 %v1221
      %v2024 = vpop.f32.mrf.mxu0
      %v2025 = vadd.f32 %v1976, %v2024
      %v2026 = vpop.f32.mrf.mxu0
      %v2027 = vadd.f32 %v1978, %v2026
      %2028 = vmatmul.bf16.gmra.mxu0 %v1229
      %v2029 = vpop.f32.mrf.mxu0
      %v2030 = vadd.f32 %v1981, %v2029
      %v2031 = vpop.f32.mrf.mxu0
      %v2032 = vadd.f32 %v1983, %v2031
      %2033 = vmatmul.bf16.gmra.mxu0 %v1237
      %v2034 = vpop.f32.mrf.mxu0
      %v2035 = vadd.f32 %v1986, %v2034
      %v2036 = vpop.f32.mrf.mxu0
      %v2037 = vadd.f32 %v1988, %v2036
      %2038 = vmatmul.bf16.gmra.mxu0 %v1245
      %v2039 = vpop.f32.mrf.mxu0
      %v2040 = vadd.f32 %v1991, %v2039
      %v2041 = vpop.f32.mrf.mxu0
      %v2042 = vadd.f32 %v1993, %v2041
      %2043 = vmatmul.bf16.gmra.mxu0 %v1253
      %v2044 = vpop.f32.mrf.mxu0
      %v2045 = vadd.f32 %v1996, %v2044
      %v2046 = vpop.f32.mrf.mxu0
      %v2047 = vadd.f32 %v1998, %v2046
      %2048 = vmatmul.bf16.gmra.mxu0 %v1261
      %v2049 = vpop.f32.mrf.mxu0
      %v2050 = vadd.f32 %v2001, %v2049
      %v2051 = vpop.f32.mrf.mxu0
      %v2052 = vadd.f32 %v2003, %v2051
      %2053 = vdwg.mxu0
      %2054 = vmatpush.bf16.msra.mxu0 %v1646
      %2055 = vmatpush.bf16.msra.mxu0 %v1645
      %2056 = vmatpush.bf16.msra.mxu0 %v1644
      %2057 = vmatpush.bf16.msra.mxu0 %v1643
      %2058 = vmatpush.bf16.msra.mxu0 %v1642
      %2059 = vmatpush.bf16.msra.mxu0 %v1641
      %2060 = vmatpush.bf16.msra.mxu0 %v1640
      %2061 = vmatpush.bf16.msra.mxu0 %v1639
      %2062 = vmatmul.bf16.gmra.mxu0 %v1206
      %v2063 = vpop.f32.mrf.mxu0
      %v2064 = vadd.f32 %v2015, %v2063
      %v2065 = vpop.f32.mrf.mxu0
      %v2066 = vadd.f32 %v2017, %v2065
      %2067 = vmatmul.bf16.gmra.mxu0 %v1214
      %v2068 = vpop.f32.mrf.mxu0
      %v2069 = vadd.f32 %v2020, %v2068
      %v2070 = vpop.f32.mrf.mxu0
      %v2071 = vadd.f32 %v2022, %v2070
      %2072 = vmatmul.bf16.gmra.mxu0 %v1222
      %v2073 = vpop.f32.mrf.mxu0
      %v2074 = vadd.f32 %v2025, %v2073
      %v2075 = vpop.f32.mrf.mxu0
      %v2076 = vadd.f32 %v2027, %v2075
      %2077 = vmatmul.bf16.gmra.mxu0 %v1230
      %v2078 = vpop.f32.mrf.mxu0
      %v2079 = vadd.f32 %v2030, %v2078
      %v2080 = vpop.f32.mrf.mxu0
      %v2081 = vadd.f32 %v2032, %v2080
      %2082 = vmatmul.bf16.gmra.mxu0 %v1238
      %v2083 = vpop.f32.mrf.mxu0
      %v2084 = vadd.f32 %v2035, %v2083
      %v2085 = vpop.f32.mrf.mxu0
      %v2086 = vadd.f32 %v2037, %v2085
      %2087 = vmatmul.bf16.gmra.mxu0 %v1246
      %v2088 = vpop.f32.mrf.mxu0
      %v2089 = vadd.f32 %v2040, %v2088
      %v2090 = vpop.f32.mrf.mxu0
      %v2091 = vadd.f32 %v2042, %v2090
      %2092 = vmatmul.bf16.gmra.mxu0 %v1254
      %v2093 = vpop.f32.mrf.mxu0
      %v2094 = vadd.f32 %v2045, %v2093
      %v2095 = vpop.f32.mrf.mxu0
      %v2096 = vadd.f32 %v2047, %v2095
      %2097 = vmatmul.bf16.gmra.mxu0 %v1262
      %v2098 = vpop.f32.mrf.mxu0
      %v2099 = vadd.f32 %v2050, %v2098
      %v2100 = vpop.f32.mrf.mxu0
      %v2101 = vadd.f32 %v2052, %v2100
      %2102 = vdwg.mxu0
      %v2135 = vunpack.c.l.b16 %v783
      %v2136 = vunpack.c.l.b16 %v784
      %v2137 = vunpack.c.l.b16 %v785
      %v2138 = vunpack.c.l.b16 %v786
      %v2139 = vunpack.c.l.b16 %v787
      %v2140 = vunpack.c.l.b16 %v788
      %v2141 = vunpack.c.l.b16 %v789
      %v2142 = vunpack.c.l.b16 %v790
      %v2143 = vunpack.c.l.b16 %v791
      %v2144 = vunpack.c.l.b16 %v792
      %v2145 = vunpack.c.l.b16 %v793
      %v2146 = vunpack.c.l.b16 %v794
      %v2147 = vunpack.c.l.b16 %v795
      %v2148 = vunpack.c.l.b16 %v796
      %v2149 = vunpack.c.l.b16 %v797
      %v2150 = vunpack.c.l.b16 %v798
      %v2151 = vunpack.c.l.b16 %v799
      %v2152 = vunpack.c.l.b16 %v800
      %v2153 = vunpack.c.l.b16 %v801
      %v2154 = vunpack.c.l.b16 %v802
      %v2155 = vunpack.c.l.b16 %v803
      %v2156 = vunpack.c.l.b16 %v804
      %v2157 = vunpack.c.l.b16 %v805
      %v2158 = vunpack.c.l.b16 %v806
      %v2159 = vunpack.c.l.b16 %v807
      %v2160 = vunpack.c.l.b16 %v808
      %v2161 = vunpack.c.l.b16 %v809
      %v2162 = vunpack.c.l.b16 %v810
      %v2163 = vunpack.c.l.b16 %v811
      %v2164 = vunpack.c.l.b16 %v812
      %v2165 = vunpack.c.l.b16 %v813
      %v2166 = vunpack.c.l.b16 %v814
      %v2167 = vpack.c.b16 %v2136, %v2135
      %v2168 = vpack.c.b16 %v2138, %v2137
      %v2169 = vpack.c.b16 %v2140, %v2139
      %v2170 = vpack.c.b16 %v2142, %v2141
      %v2171 = vpack.c.b16 %v2144, %v2143
      %v2172 = vpack.c.b16 %v2146, %v2145
      %v2173 = vpack.c.b16 %v2148, %v2147
      %v2174 = vpack.c.b16 %v2150, %v2149
      %v2175 = vpack.c.b16 %v2152, %v2151
      %v2176 = vpack.c.b16 %v2154, %v2153
      %v2177 = vpack.c.b16 %v2156, %v2155
      %v2178 = vpack.c.b16 %v2158, %v2157
      %v2179 = vpack.c.b16 %v2160, %v2159
      %v2180 = vpack.c.b16 %v2162, %v2161
      %v2181 = vpack.c.b16 %v2164, %v2163
      %v2182 = vpack.c.b16 %v2166, %v2165
      %2199 = vmatpush.bf16.msra.mxu0 %v2174
      %2200 = vmatpush.bf16.msra.mxu0 %v2173
      %2201 = vmatpush.bf16.msra.mxu0 %v2172
      %2202 = vmatpush.bf16.msra.mxu0 %v2171
      %2203 = vmatpush.bf16.msra.mxu0 %v2170
      %2204 = vmatpush.bf16.msra.mxu0 %v2169
      %2205 = vmatpush.bf16.msra.mxu0 %v2168
      %2206 = vmatpush.bf16.msra.mxu0 %v2167
      %2207 = vmatmul.bf16.gmra.mxu0 %v767
      %v2208 = vpop.f32.mrf.mxu0
      %v2209 = vadd.f32 %v2064, %v2208
      %v2210 = vpop.f32.mrf.mxu0
      %v2211 = vadd.f32 %v2066, %v2210
      %2212 = vmatmul.bf16.gmra.mxu0 %v769
      %v2213 = vpop.f32.mrf.mxu0
      %v2214 = vadd.f32 %v2069, %v2213
      %v2215 = vpop.f32.mrf.mxu0
      %v2216 = vadd.f32 %v2071, %v2215
      %2217 = vmatmul.bf16.gmra.mxu0 %v771
      %v2218 = vpop.f32.mrf.mxu0
      %v2219 = vadd.f32 %v2074, %v2218
      %v2220 = vpop.f32.mrf.mxu0
      %v2221 = vadd.f32 %v2076, %v2220
      %2222 = vmatmul.bf16.gmra.mxu0 %v773
      %v2223 = vpop.f32.mrf.mxu0
      %v2224 = vadd.f32 %v2079, %v2223
      %v2225 = vpop.f32.mrf.mxu0
      %v2226 = vadd.f32 %v2081, %v2225
      %2227 = vmatmul.bf16.gmra.mxu0 %v775
      %v2228 = vpop.f32.mrf.mxu0
      %v2229 = vadd.f32 %v2084, %v2228
      %v2230 = vpop.f32.mrf.mxu0
      %v2231 = vadd.f32 %v2086, %v2230
      %2232 = vmatmul.bf16.gmra.mxu0 %v777
      %v2233 = vpop.f32.mrf.mxu0
      %v2234 = vadd.f32 %v2089, %v2233
      %v2235 = vpop.f32.mrf.mxu0
      %v2236 = vadd.f32 %v2091, %v2235
      %2237 = vmatmul.bf16.gmra.mxu0 %v779
      %v2238 = vpop.f32.mrf.mxu0
      %v2239 = vadd.f32 %v2094, %v2238
      %v2240 = vpop.f32.mrf.mxu0
      %v2241 = vadd.f32 %v2096, %v2240
      %2242 = vmatmul.bf16.gmra.mxu0 %v781
      %v2243 = vpop.f32.mrf.mxu0
      %v2244 = vadd.f32 %v2099, %v2243
      %v2245 = vpop.f32.mrf.mxu0
      %v2246 = vadd.f32 %v2101, %v2245
      %2247 = vdwg.mxu0
      %2248 = vmatpush.bf16.msra.mxu0 %v2182
      %2249 = vmatpush.bf16.msra.mxu0 %v2181
      %2250 = vmatpush.bf16.msra.mxu0 %v2180
      %2251 = vmatpush.bf16.msra.mxu0 %v2179
      %2252 = vmatpush.bf16.msra.mxu0 %v2178
      %2253 = vmatpush.bf16.msra.mxu0 %v2177
      %2254 = vmatpush.bf16.msra.mxu0 %v2176
      %2255 = vmatpush.bf16.msra.mxu0 %v2175
      %2256 = vmatmul.bf16.gmra.mxu0 %v768
      %v2257 = vpop.f32.mrf.mxu0
      %v2258 = vadd.f32 %v2209, %v2257
      %v2259 = vpop.f32.mrf.mxu0
      %v2260 = vadd.f32 %v2211, %v2259
      %2261 = vmatmul.bf16.gmra.mxu0 %v770
      %v2262 = vpop.f32.mrf.mxu0
      %v2263 = vadd.f32 %v2214, %v2262
      %v2264 = vpop.f32.mrf.mxu0
      %v2265 = vadd.f32 %v2216, %v2264
      %2266 = vmatmul.bf16.gmra.mxu0 %v772
      %v2267 = vpop.f32.mrf.mxu0
      %v2268 = vadd.f32 %v2219, %v2267
      %v2269 = vpop.f32.mrf.mxu0
      %v2270 = vadd.f32 %v2221, %v2269
      %2271 = vmatmul.bf16.gmra.mxu0 %v774
      %v2272 = vpop.f32.mrf.mxu0
      %v2273 = vadd.f32 %v2224, %v2272
      %v2274 = vpop.f32.mrf.mxu0
      %v2275 = vadd.f32 %v2226, %v2274
      %2276 = vmatmul.bf16.gmra.mxu0 %v776
      %v2277 = vpop.f32.mrf.mxu0
      %v2278 = vadd.f32 %v2229, %v2277
      %v2279 = vpop.f32.mrf.mxu0
      %v2280 = vadd.f32 %v2231, %v2279
      %2281 = vmatmul.bf16.gmra.mxu0 %v778
      %v2282 = vpop.f32.mrf.mxu0
      %v2283 = vadd.f32 %v2234, %v2282
      %v2284 = vpop.f32.mrf.mxu0
      %v2285 = vadd.f32 %v2236, %v2284
      %2286 = vmatmul.bf16.gmra.mxu0 %v780
      %v2287 = vpop.f32.mrf.mxu0
      %v2288 = vadd.f32 %v2239, %v2287
      %v2289 = vpop.f32.mrf.mxu0
      %v2290 = vadd.f32 %v2241, %v2289
      %2291 = vmatmul.bf16.gmra.mxu0 %v782
      %v2292 = vpop.f32.mrf.mxu0
      %v2293 = vadd.f32 %v2244, %v2292
      %v2294 = vpop.f32.mrf.mxu0
      %v2295 = vadd.f32 %v2246, %v2294
      %2296 = vdwg.mxu0
      %v2297 = vld [vmem:[%s5] sm:$0x1]
      %v2299 = vperm.slane %v2297, 0
      %v2301 = vadd.f32 %v2258, %v2299
      %v2302 = vadd.f32 %v2260, %v2299
      %v2303 = vadd.f32 %v2263, %v2299
      %v2304 = vadd.f32 %v2265, %v2299
      %v2305 = vadd.f32 %v2268, %v2299
      %v2306 = vadd.f32 %v2270, %v2299
      %v2307 = vadd.f32 %v2273, %v2299
      %v2308 = vadd.f32 %v2275, %v2299
      %v2309 = vadd.f32 %v2278, %v2299
      %v2310 = vadd.f32 %v2280, %v2299
      %v2311 = vadd.f32 %v2283, %v2299
      %v2312 = vadd.f32 %v2285, %v2299
      %v2313 = vadd.f32 %v2288, %v2299
      %v2314 = vadd.f32 %v2290, %v2299
      %v2315 = vadd.f32 %v2293, %v2299
      %v2316 = vadd.f32 %v2295, %v2299
      %2317 = vst [vmem:[%s281] sm:$0xff] %v2301
      %2318 = vst [vmem:[%s281 + $0x8] sm:$0xff] %v2302
      %2319 = vst [vmem:[%s281 + $0x10] sm:$0xff] %v2303
      %2320 = vst [vmem:[%s281 + $0x18] sm:$0xff] %v2304
      %2321 = vst [vmem:[%s281 + $0x20] sm:$0xff] %v2305
      %2322 = vst [vmem:[%s281 + $0x28] sm:$0xff] %v2306
      %2323 = vst [vmem:[%s281 + $0x30] sm:$0xff] %v2307
      %2324 = vst [vmem:[%s281 + $0x38] sm:$0xff] %v2308
      %2325 = vst [vmem:[%s281 + $0x40] sm:$0xff] %v2309
      %2326 = vst [vmem:[%s281 + $0x48] sm:$0xff] %v2310
      %2327 = vst [vmem:[%s281 + $0x50] sm:$0xff] %v2311
      %2328 = vst [vmem:[%s281 + $0x58] sm:$0xff] %v2312
      %2329 = vst [vmem:[%s281 + $0x60] sm:$0xff] %v2313
      %2330 = vst [vmem:[%s281 + $0x68] sm:$0xff] %v2314
      %2331 = vst [vmem:[%s281 + $0x70] sm:$0xff] %v2315
      %2332 = vst [vmem:[%s281 + $0x78] sm:$0xff] %v2316
      %s2333 = smul.u32 16, %s17
      %p2334 = scmp.lt.s32.totalorder %s2333, 31
      %s2335 = scalar_select %p2334, %s2333, 31
      %s2336 = smul.addr %s2335, 8
      %s2337 = scalar_lea.vmem %s6, %s2336
      // Predicated region
      $region45: #{rgbn_bbox_head_forward.3} parent=43 // pred_check
        %p2338 = pneg %p171
      $region46: #{rgbn_bbox_head_forward.3} parent=43 // pred_check_branch
        %2340 = sbr.rel (%p2338) target = $region48
      $region47: #{rgbn_bbox_head_forward.3} parent=43 // pred_region
        %s2341 = smul.u32 16, %s17
      $region48: #{rgbn_bbox_head_forward.3} parent=43 // pred_fallthru
        _
    $region44: #{rgbn_bbox_head_forward.3} parent=5 // pred_fallthru
      _
    %p2342 = scmp.le.s32.totalorder 2, %s12
    // Predicated region
    $region49: #{rgbn_bbox_head_forward.3} parent=5 // pred_check
      %p2343 = pneg %p2342
    $region50: #{rgbn_bbox_head_forward.3} parent=5 // pred_check_branch
      %2345 = sbr.rel (%p2343) target = $region52
    $region51: #{rgbn_bbox_head_forward.3} parent=5 // pred_region
      %s2346 = ssub.s32 %s12, 2
      // Predicated region
      $region53: #{rgbn_bbox_head_forward.3} parent=51 // pred_check
        %p2347 = pneg %p177
      $region54: #{rgbn_bbox_head_forward.3} parent=51 // pred_check_branch
        %2349 = sbr.rel (%p2347) target = $region56
      $region55: #{rgbn_bbox_head_forward.3} parent=51 // pred_region
        %s2350 = smul.u32 16, %s18
        %p2351 = scmp.lt.s32.totalorder %s2350, 31
        %s2352 = scalar_select %p2351, %s2350, 31
        %s2353 = smul.addr %s2352, 8
        %s2354 = scalar_lea.vmem %s6, %s2353
      $region56: #{rgbn_bbox_head_forward.3} parent=51 // pred_fallthru
        _
    $region52: #{rgbn_bbox_head_forward.3} parent=5 // pred_fallthru
      _
  $region6: #{rgbn_bbox_head_forward.3} parent=0 // loop_footer
    %s16 = sadd.s32 1, %s12
  $region7: #{rgbn_bbox_head_forward.3} parent=0 // loop_footer_branch
    %11 = sbr.rel target = $region3
  $region8: #{rgbn_bbox_head_forward.3} parent=0 // loop_exit
    _

</llo_original>
